<compile_context>
chip_gen: v7x
topology: tpu7x:2x2x1
jax: 0.10.0
libtpu: 0.0.40
codegen_flags: <defaults>
</compile_context>

<pallas_src>
import jax
import jax.numpy as jnp
from jax.experimental import pallas as pl
from jax.experimental.pallas import tpu as pltpu


# ----------------------- static WISDM network dimensions --------------------
B = 8                                # samples per grid step (= one sublane block)
H_IN, W_IN = 200, 3                  # input (N, 1, 200, 3)
C1, C2, C3, NCLS = 64, 128, 256, 6
K1 = 9                               # 3x3 taps of the single-channel layer-1 conv
HO1, WO1 = 100, 2                    # layer-1 conv output (100, 2, 64)
Q1 = HO1 // 4                        # 25 rows per phase (ho mod 4)
GE = Q1 * B                          # 200 rows per layer-2 parity group
A1_ROWS = (4 * Q1 + 1) * B           # 808: [P0 | P1 | P2 | Z | P3] x B rows
HO3 = 26                             # layer-3 conv output rows
GO = HO3 * B                         # 208
A2_ROWS = (Q1 + 1 + 1 + Q1 + 1) * B  # 424: [pool_even(26) | Z | pool_odd(25) | Z] x B
P3H = HO3 + 1                        # 27 pooled rows -> 27*256 = 6912 FC features


# ------------------------------ fused kernel --------------------------------
def _wisdm_kernel(p1_ref, w1_ref, s1_ref, w2_ref, s2_ref, w3_ref, s3_ref,
                  wfc_ref, bfc_ref, out_ref, a1_ref, e2_ref, a2_ref, c3_ref):
    f32 = jnp.float32
    zrow = jnp.zeros((B, 2 * C1), f32)

    # ---- layer 1: single (800, 18) @ (18, 128) dot (wo planes lane-packed) ----
    y1 = jnp.dot(p1_ref[...], w1_ref[...], preferred_element_type=f32)
    y1 = jnp.maximum(y1 + s1_ref[...], 0.0)                       # (800, 128)
    # rows ordered (phase r = ho%4, m = ho//4, b); a1 = [P0 | P1 | P2 | Z | P3]
    a1_ref[0:3 * GE, :] = y1[0:3 * GE, :]
    a1_ref[3 * GE:3 * GE + B, :] = zrow
    a1_ref[3 * GE + B:4 * GE + B, :] = y1[3 * GE:4 * GE, :]

    # ---- layer 2: stride-2 conv, two parity groups x 3 aligned-slice dots ----
    def conv2_group(offs):
        acc = jnp.zeros((GE, C2), f32)
        for kh, off in enumerate(offs):
            acc = acc + jnp.dot(a1_ref[off:off + GE, :], w2_ref[kh],
                                preferred_element_type=f32)
        return jnp.maximum(acc + s2_ref[...], 0.0)                # (200, 128)

    # even rows ho2=2m use h=4m-1,4m,4m+1 -> taps (Z+P3[:-1], P0, P1)
    e2_ref[...] = conv2_group((3 * GE, 0, GE))
    # odd rows ho2=2m+1 use h=4m+1,4m+2,4m+3 -> taps (P1, P2, P3)
    o2 = conv2_group((GE, 2 * GE, 3 * GE + B))

    # ---- maxpool (2,1)/(1,1)/(1,0): a2 = [pool_even | Z | pool_odd | Z] ----
    a2_ref[0:B, :] = e2_ref[0:B, :]                                      # p2[0]
    a2_ref[B:GE, :] = jnp.maximum(o2[0:GE - B, :], e2_ref[B:GE, :])      # p2[2m]
    a2_ref[GE:GE + B, :] = o2[GE - B:GE, :]                              # p2[50]
    a2_ref[GE + B:GE + 2 * B, :] = zrow
    a2_ref[GE + 2 * B:2 * GE + 2 * B, :] = jnp.maximum(e2_ref[...], o2)  # p2[2m+1]
    a2_ref[2 * GE + 2 * B:2 * GE + 3 * B, :] = zrow

    # ---- layer 3: stride-2 conv, 3 dots of (208, 128) @ (128, 256) ----
    acc3 = jnp.zeros((GO, C3), f32)
    for kh, off in enumerate((GE + B, 0, GE + 2 * B)):
        acc3 = acc3 + jnp.dot(a2_ref[off:off + GO, :], w3_ref[kh],
                              preferred_element_type=f32)
    c3_ref[...] = jnp.maximum(acc3 + s3_ref[...], 0.0)            # (208, 256)

    # ---- maxpool + flatten + Linear(6912, 6): VPU multiply-accumulate ----
    accs = [jnp.zeros((B, C3), f32) for _ in range(NCLS)]
    for h in range(P3H):                                          # 27 pooled rows
        if h == 0:
            row = c3_ref[0:B, :]
        elif h == P3H - 1:
            row = c3_ref[GO - B:GO, :]
        else:
            row = jnp.maximum(c3_ref[(h - 1) * B:h * B, :],
                              c3_ref[h * B:(h + 1) * B, :])
        for cls in range(NCLS):
            r0 = cls * P3H + h
            accs[cls] = accs[cls] + row * wfc_ref[r0:r0 + 1, :]

    # one lane-dense (8, 128) output tile per step (bias padded to 128 lanes)
    lane = jax.lax.broadcasted_iota(jnp.int32, (B, 128), 1)
    out_val = jnp.zeros((B, 128), f32)
    for cls in range(NCLS):
        col = jnp.sum(accs[cls], axis=1, keepdims=True)           # (B, 1)
        out_val = jnp.where(lane == cls, col, out_val)
    out_ref[...] = out_val + bfc_ref[...]


# --------------------- trace-time prep (tiny, one-off) ----------------------
def _build_l1_patches(x):
    """(N,1,200,3) with N % B == 0  ->  (N//B * 800, 18) layer-1 im2col rows.

    Row order (block, phase r=ho%4, m=ho//4, b); per-row features are
    [9 taps for wo=0 | 9 taps for wo=1], so one kernel dot yields the
    phase-split, lane-packed layer-1 activation directly."""
    n = x.shape[0]
    xp = jnp.pad(x[:, 0], ((0, 0), (1, 1), (1, 1)))                  # (N, 202, 5)
    taps = [xp[:, kh:kh + 2 * HO1:2, kw:kw + 2 * WO1:2]              # (N, 100, 2)
            for kh in range(3) for kw in range(3)]
    pat = jnp.stack(taps, axis=-1)                                   # (N, ho, wo, 9)
    pat = pat.reshape(n, HO1, 2 * K1)                                # [wo0 | wo1] taps
    pat = pat.reshape(n, Q1, 4, 2 * K1).transpose(0, 2, 1, 3)        # (N, r, m, 18)
    nb = n // B
    pat = pat.reshape(nb, B, 4, Q1, 2 * K1).transpose(0, 2, 3, 1, 4)  # (blk,r,m,b,18)
    return pat.reshape(nb * 4 * Q1 * B, 2 * K1).astype(jnp.float32)


def _bn_fold(b, gamma, beta, mean, var, eps=1e-5):
    scale = gamma / jnp.sqrt(var + eps)
    shift = (b - mean) * scale + beta
    return scale, shift


def _fold_layer1(p):
    w, b, gamma, beta, mean, var = p
    scale, shift = _bn_fold(b, gamma, beta, mean, var)
    wmat = w.reshape(C1, K1).T * scale[None, :]                      # (9, 64)
    w1 = jnp.zeros((2 * K1, 2 * C1), jnp.float32)
    w1 = w1.at[0:K1, 0:C1].set(wmat).at[K1:2 * K1, C1:2 * C1].set(wmat)
    s1 = jnp.concatenate([shift, shift]).reshape(1, 2 * C1)
    return w1.astype(jnp.float32), s1.astype(jnp.float32)


def _fold_layer2(p):
    w, b, gamma, beta, mean, var = p
    scale, shift = _bn_fold(b, gamma, beta, mean, var)
    wt = jnp.transpose(w, (2, 3, 1, 0))                              # (kh, kw, cin, cout)
    w2 = jnp.concatenate([wt[:, 1], wt[:, 2]], axis=1)               # (3, 128, 128)
    w2 = w2 * scale[None, None, :]
    return w2.astype(jnp.float32), shift.reshape(1, C2).astype(jnp.float32)


def _fold_layer3(p):
    w, b, gamma, beta, mean, var = p
    scale, shift = _bn_fold(b, gamma, beta, mean, var)
    wt = jnp.transpose(w, (2, 3, 1, 0))[:, 1]                        # (3, 128, 256), kw=1 only
    wt = wt * scale[None, None, :]
    return wt.astype(jnp.float32), shift.reshape(1, C3).astype(jnp.float32)


# ------------------------------ forward pass --------------------------------
def convnet_2d_wisdm_forward(x, params):
    n, cin, h, w = x.shape
    assert (cin, h, w) == (1, H_IN, W_IN), "kernel specialised for WISDM input (1, 200, 3)"

    nb = -(-n // B)                       # pad batch to a multiple of B = 8
    n_pad = nb * B
    if n_pad != n:
        x = jnp.pad(x, ((0, n_pad - n), (0, 0), (0, 0), (0, 0)))

    p1 = _build_l1_patches(x)                                        # (nb*800, 18)
    w1e, s1 = _fold_layer1(params["layer1"])
    w2e, s2 = _fold_layer2(params["layer2"])
    w3e, s3 = _fold_layer3(params["layer3"])
    # FC weight lane-dense: row = cls*27 + h, 256 channel columns
    # (PyTorch NCHW flatten order: feature = c*27 + h).
    wfc = params["fc_w"].reshape(NCLS, C3, P3H).transpose(0, 2, 1)
    wfc = wfc.reshape(NCLS * P3H, C3).astype(jnp.float32)
    bfc = jnp.zeros((1, 128), jnp.float32).at[0, :NCLS].set(params["fc_b"])

    out = pl.pallas_call(
        _wisdm_kernel,
        out_shape=jax.ShapeDtypeStruct((n_pad, 128), jnp.float32),
        grid=(nb,),
        in_specs=[
            pl.BlockSpec((HO1 * B, 2 * K1), lambda i: (i, 0)),       # layer-1 patches
            pl.BlockSpec((2 * K1, 2 * C1), lambda i: (0, 0)),        # w1 (block-diag, BN folded)
            pl.BlockSpec((1, 2 * C1), lambda i: (0, 0)),             # shift1 (dup per wo half)
            pl.BlockSpec((3, 2 * C1, C2), lambda i: (0, 0, 0)),      # w2 taps (kh, 2*cin, cout)
            pl.BlockSpec((1, C2), lambda i: (0, 0)),                 # shift2
            pl.BlockSpec((3, C2, C3), lambda i: (0, 0, 0)),          # w3 taps (kw=1 only)
            pl.BlockSpec((1, C3), lambda i: (0, 0)),                 # shift3
            pl.BlockSpec((NCLS * P3H, C3), lambda i: (0, 0)),        # fc weight (lane dense)
            pl.BlockSpec((1, 128), lambda i: (0, 0)),                # fc bias (padded)
        ],
        out_specs=pl.BlockSpec((B, 128), lambda i: (i, 0)),
        scratch_shapes=[
            pltpu.VMEM((A1_ROWS, 2 * C1), jnp.float32),   # layer-1 act, phase-split
            pltpu.VMEM((GE, C2), jnp.float32),            # conv2 even-parity rows
            pltpu.VMEM((A2_ROWS, C2), jnp.float32),       # pooled layer-2 act, parity-split
            pltpu.VMEM((GO, C3), jnp.float32),            # layer-3 activation
        ],
        compiler_params=pltpu.CompilerParams(
            dimension_semantics=("parallel",)),
    )(p1, w1e, s1, w2e, s2, w3e, s3, wfc, bfc)

    return out[:n, :NCLS]


# --------------------------- parameter creation ------------------------------
def init_params(key, channel=(64, 128, 256, 6912)):
    def conv_block(k, cin, cout):
        k = jax.random.split(k, 6)
        w = 0.1 * jax.random.normal(k[0], (cout, cin, 3, 3), jnp.float32)
        b = 0.05 * jax.random.normal(k[1], (cout,), jnp.float32)
        gamma = 1.0 + 0.1 * jax.random.normal(k[2], (cout,), jnp.float32)
        beta = 0.05 * jax.random.normal(k[3], (cout,), jnp.float32)
        mean = 0.05 * jax.random.normal(k[4], (cout,), jnp.float32)
        var = 1.0 + 0.1 * jnp.abs(jax.random.normal(k[5], (cout,), jnp.float32))
        return (w, b, gamma, beta, mean, var)

    k1, k2, k3, k4, k5 = jax.random.split(key, 5)
    return {
        "layer1": conv_block(k1, 1, channel[0]),
        "layer2": conv_block(k2, channel[0], channel[1]),
        "layer3": conv_block(k3, channel[1], channel[2]),
        "fc_w": 0.02 * jax.random.normal(k4, (6, channel[3]), jnp.float32),
        "fc_b": 0.01 * jax.random.normal(k5, (6,), jnp.float32),
    }


# ----------------------------- pure-JAX reference ----------------------------
def reference_forward(x, params):
    hi = jax.lax.Precision.HIGHEST

    def conv_ref(x, p):
        w, b, gamma, beta, mean, var = p
        y = jax.lax.conv_general_dilated(
            x, w, window_strides=(2, 2), padding=((1, 1), (1, 1)),
            dimension_numbers=("NCHW", "OIHW", "NCHW"), precision=hi)
        y = y + b[None, :, None, None]
        scale = (gamma / jnp.sqrt(var + 1e-5))[None, :, None, None]
        y = (y - mean[None, :, None, None]) * scale + beta[None, :, None, None]
        return jnp.maximum(y, 0.0)

    def pool_ref(x):
        return jax.lax.reduce_window(
            x, -jnp.inf, jax.lax.max,
            window_dimensions=(1, 1, 2, 1), window_strides=(1, 1, 1, 1),
            padding=[(0, 0), (0, 0), (1, 1), (0, 0)])

    x = conv_ref(x, params["layer1"])
    x = pool_ref(conv_ref(x, params["layer2"]))
    x = pool_ref(conv_ref(x, params["layer3"]))
    x = x.reshape(x.shape[0], -1)
    return jnp.dot(x, params["fc_w"].T, precision=hi) + params["fc_b"]


# ----------------------------------- main ------------------------------------
if __name__ == "__main__":
    key = jax.random.PRNGKey(0)
    kx, kp = jax.random.split(key)

    # WISDM-style input: 1 channel, 200 time steps x 3 sensor axes.
    # batch=16 -> 2 grid steps of 8 samples each (both v7x TensorCores busy).
    x = jax.random.normal(kx, (16, 1, 200, 3), jnp.float32)
    params = init_params(kp)

    fwd = jax.jit(lambda inp: convnet_2d_wisdm_forward(inp, params))
    out = fwd(x)
    jax.block_until_ready(out)
    assert out.shape == (16, 6), out.shape

    ref = reference_forward(x, params)
    assert jnp.allclose(out, ref, atol=2e-3, rtol=2e-3), (
        f"max abs err {float(jnp.max(jnp.abs(out - ref)))}")

    print("KERNEL_OK")
</pallas_src>

<mosaic_0001>
module attributes {stable_mosaic.version = 11 : i64} {
  func.func @_wisdm_kernel(%arg0: i32, %arg1: memref<800x18xf32, #tpu.memory_space<vmem>>, %arg2: memref<18x128xf32, #tpu.memory_space<vmem>>, %arg3: memref<1x128xf32, #tpu.memory_space<vmem>>, %arg4: memref<3x128x128xf32, #tpu.memory_space<vmem>>, %arg5: memref<1x128xf32, #tpu.memory_space<vmem>>, %arg6: memref<3x128x256xf32, #tpu.memory_space<vmem>>, %arg7: memref<1x256xf32, #tpu.memory_space<vmem>>, %arg8: memref<162x256xf32, #tpu.memory_space<vmem>>, %arg9: memref<1x128xf32, #tpu.memory_space<vmem>>, %arg10: memref<8x128xf32, #tpu.memory_space<vmem>>, %arg11: memref<808x128xf32, #tpu.memory_space<vmem>>, %arg12: memref<200x128xf32, #tpu.memory_space<vmem>>, %arg13: memref<424x128xf32, #tpu.memory_space<vmem>>, %arg14: memref<208x256xf32, #tpu.memory_space<vmem>>) attributes {dimension_semantics = [#tpu.dimension_semantics<parallel>], iteration_bounds = array<i64: 2>, scalar_prefetch = 0 : i64, scratch_operands = 4 : i64, tpu.core_type = #tpu.core_type<tc>, window_params = [{transform_indices = @transform_0, window_bounds = array<i64: 800, 18>}, {pipeline_mode = #tpu.pipeline_mode<synchronous>, transform_indices = @transform_1, window_bounds = array<i64: 18, 128>}, {pipeline_mode = #tpu.pipeline_mode<synchronous>, transform_indices = @transform_2, window_bounds = array<i64: 1, 128>}, {pipeline_mode = #tpu.pipeline_mode<synchronous>, transform_indices = @transform_3, window_bounds = array<i64: 3, 128, 128>}, {pipeline_mode = #tpu.pipeline_mode<synchronous>, transform_indices = @transform_4, window_bounds = array<i64: 1, 128>}, {pipeline_mode = #tpu.pipeline_mode<synchronous>, transform_indices = @transform_5, window_bounds = array<i64: 3, 128, 256>}, {pipeline_mode = #tpu.pipeline_mode<synchronous>, transform_indices = @transform_6, window_bounds = array<i64: 1, 256>}, {pipeline_mode = #tpu.pipeline_mode<synchronous>, transform_indices = @transform_7, window_bounds = array<i64: 162, 256>}, {pipeline_mode = #tpu.pipeline_mode<synchronous>, transform_indices = @transform_8, window_bounds = array<i64: 1, 128>}, {transform_indices = @transform_9, window_bounds = array<i64: 8, 128>}]} {
    %cst = arith.constant 0.000000e+00 : f32
    %0 = vector.broadcast %cst : f32 to vector<8x128xf32>
    %c0 = arith.constant 0 : index
    %c0_0 = arith.constant 0 : index
    %1 = vector.load %arg1[%c0, %c0_0] : memref<800x18xf32, #tpu.memory_space<vmem>>, vector<800x18xf32>
    %c0_1 = arith.constant 0 : index
    %c0_2 = arith.constant 0 : index
    %2 = vector.load %arg2[%c0_1, %c0_2] : memref<18x128xf32, #tpu.memory_space<vmem>>, vector<18x128xf32>
    %cst_3 = arith.constant dense<0.000000e+00> : vector<800x128xf32>
    %3 = tpu.matmul %1, %2, %cst_3 {dimension_numbers = #tpu.dot_dimension_numbers<[1], [0], [0], [1], [0, 0, 1, 1], [], []>} : vector<800x18xf32>, vector<18x128xf32>, vector<800x128xf32> -> vector<800x128xf32>
    %c0_4 = arith.constant 0 : index
    %c0_5 = arith.constant 0 : index
    %4 = vector.load %arg3[%c0_4, %c0_5] : memref<1x128xf32, #tpu.memory_space<vmem>>, vector<1x128xf32>
    %5 = vector.broadcast %4 : vector<1x128xf32> to vector<800x128xf32>
    %6 = arith.addf %3, %5 : vector<800x128xf32>
    %cst_6 = arith.constant 0.000000e+00 : f32
    %7 = vector.broadcast %cst_6 : f32 to vector<800x128xf32>
    %8 = arith.maximumf %6, %7 : vector<800x128xf32>
    %9 = vector.extract_strided_slice %8 {offsets = [0, 0], sizes = [600, 128], strides = [1, 1]} : vector<800x128xf32> to vector<600x128xf32>
    %c0_7 = arith.constant 0 : index
    %c0_8 = arith.constant 0 : index
    %10 = vector.load %arg11[%c0_7, %c0_8] : memref<808x128xf32, #tpu.memory_space<vmem>>, vector<600x128xf32>
    tpu.vector_store %arg11[%c0_7, %c0_8], %9 {strides = array<i32>} : memref<808x128xf32, #tpu.memory_space<vmem>>, vector<600x128xf32>,
    %c600 = arith.constant 600 : index
    %c0_9 = arith.constant 0 : index
    %11 = vector.load %arg11[%c600, %c0_9] : memref<808x128xf32, #tpu.memory_space<vmem>>, vector<8x128xf32>
    tpu.vector_store %arg11[%c600, %c0_9], %0 {strides = array<i32>} : memref<808x128xf32, #tpu.memory_space<vmem>>, vector<8x128xf32>,
    %12 = vector.extract_strided_slice %8 {offsets = [600, 0], sizes = [200, 128], strides = [1, 1]} : vector<800x128xf32> to vector<200x128xf32>
    %c608 = arith.constant 608 : index
    %c0_10 = arith.constant 0 : index
    %13 = vector.load %arg11[%c608, %c0_10] : memref<808x128xf32, #tpu.memory_space<vmem>>, vector<200x128xf32>
    tpu.vector_store %arg11[%c608, %c0_10], %12 {strides = array<i32>} : memref<808x128xf32, #tpu.memory_space<vmem>>, vector<200x128xf32>,
    %cst_11 = arith.constant 0.000000e+00 : f32
    %14 = vector.broadcast %cst_11 : f32 to vector<200x128xf32>
    %c600_12 = arith.constant 600 : index
    %c0_13 = arith.constant 0 : index
    %15 = vector.load %arg11[%c600_12, %c0_13] : memref<808x128xf32, #tpu.memory_space<vmem>>, vector<200x128xf32>
    %c0_14 = arith.constant 0 : index
    %c0_15 = arith.constant 0 : index
    %c0_16 = arith.constant 0 : index
    %16 = vector.load %arg4[%c0_14, %c0_15, %c0_16] : memref<3x128x128xf32, #tpu.memory_space<vmem>>, vector<1x128x128xf32>
    %17 = vector.shape_cast %16 : vector<1x128x128xf32> to vector<128x128xf32>
    %cst_17 = arith.constant dense<0.000000e+00> : vector<200x128xf32>
    %18 = tpu.matmul %15, %17, %cst_17 {dimension_numbers = #tpu.dot_dimension_numbers<[1], [0], [0], [1], [0, 0, 1, 1], [], []>} : vector<200x128xf32>, vector<128x128xf32>, vector<200x128xf32> -> vector<200x128xf32>
    %19 = arith.addf %14, %18 : vector<200x128xf32>
    %c0_18 = arith.constant 0 : index
    %c0_19 = arith.constant 0 : index
    %20 = vector.load %arg11[%c0_18, %c0_19] : memref<808x128xf32, #tpu.memory_space<vmem>>, vector<200x128xf32>
    %c1 = arith.constant 1 : index
    %c0_20 = arith.constant 0 : index
    %c0_21 = arith.constant 0 : index
    %21 = vector.load %arg4[%c1, %c0_20, %c0_21] : memref<3x128x128xf32, #tpu.memory_space<vmem>>, vector<1x128x128xf32>
    %22 = vector.shape_cast %21 : vector<1x128x128xf32> to vector<128x128xf32>
    %cst_22 = arith.constant dense<0.000000e+00> : vector<200x128xf32>
    %23 = tpu.matmul %20, %22, %cst_22 {dimension_numbers = #tpu.dot_dimension_numbers<[1], [0], [0], [1], [0, 0, 1, 1], [], []>} : vector<200x128xf32>, vector<128x128xf32>, vector<200x128xf32> -> vector<200x128xf32>
    %24 = arith.addf %19, %23 : vector<200x128xf32>
    %c200 = arith.constant 200 : index
    %c0_23 = arith.constant 0 : index
    %25 = vector.load %arg11[%c200, %c0_23] : memref<808x128xf32, #tpu.memory_space<vmem>>, vector<200x128xf32>
    %c2 = arith.constant 2 : index
    %c0_24 = arith.constant 0 : index
    %c0_25 = arith.constant 0 : index
    %26 = vector.load %arg4[%c2, %c0_24, %c0_25] : memref<3x128x128xf32, #tpu.memory_space<vmem>>, vector<1x128x128xf32>
    %27 = vector.shape_cast %26 : vector<1x128x128xf32> to vector<128x128xf32>
    %cst_26 = arith.constant dense<0.000000e+00> : vector<200x128xf32>
    %28 = tpu.matmul %25, %27, %cst_26 {dimension_numbers = #tpu.dot_dimension_numbers<[1], [0], [0], [1], [0, 0, 1, 1], [], []>} : vector<200x128xf32>, vector<128x128xf32>, vector<200x128xf32> -> vector<200x128xf32>
    %29 = arith.addf %24, %28 : vector<200x128xf32>
    %c0_27 = arith.constant 0 : index
    %c0_28 = arith.constant 0 : index
    %30 = vector.load %arg5[%c0_27, %c0_28] : memref<1x128xf32, #tpu.memory_space<vmem>>, vector<1x128xf32>
    %31 = vector.broadcast %30 : vector<1x128xf32> to vector<200x128xf32>
    %32 = arith.addf %29, %31 : vector<200x128xf32>
    %cst_29 = arith.constant 0.000000e+00 : f32
    %33 = vector.broadcast %cst_29 : f32 to vector<200x128xf32>
    %34 = arith.maximumf %32, %33 : vector<200x128xf32>
    %c0_30 = arith.constant 0 : index
    %c0_31 = arith.constant 0 : index
    %35 = vector.load %arg12[%c0_30, %c0_31] : memref<200x128xf32, #tpu.memory_space<vmem>>, vector<200x128xf32>
    tpu.vector_store %arg12[%c0_30, %c0_31], %34 {strides = array<i32>} : memref<200x128xf32, #tpu.memory_space<vmem>>, vector<200x128xf32>,
    %cst_32 = arith.constant 0.000000e+00 : f32
    %36 = vector.broadcast %cst_32 : f32 to vector<200x128xf32>
    %c200_33 = arith.constant 200 : index
    %c0_34 = arith.constant 0 : index
    %37 = vector.load %arg11[%c200_33, %c0_34] : memref<808x128xf32, #tpu.memory_space<vmem>>, vector<200x128xf32>
    %c0_35 = arith.constant 0 : index
    %c0_36 = arith.constant 0 : index
    %c0_37 = arith.constant 0 : index
    %38 = vector.load %arg4[%c0_35, %c0_36, %c0_37] : memref<3x128x128xf32, #tpu.memory_space<vmem>>, vector<1x128x128xf32>
    %39 = vector.shape_cast %38 : vector<1x128x128xf32> to vector<128x128xf32>
    %cst_38 = arith.constant dense<0.000000e+00> : vector<200x128xf32>
    %40 = tpu.matmul %37, %39, %cst_38 {dimension_numbers = #tpu.dot_dimension_numbers<[1], [0], [0], [1], [0, 0, 1, 1], [], []>} : vector<200x128xf32>, vector<128x128xf32>, vector<200x128xf32> -> vector<200x128xf32>
    %41 = arith.addf %36, %40 : vector<200x128xf32>
    %c400 = arith.constant 400 : index
    %c0_39 = arith.constant 0 : index
    %42 = vector.load %arg11[%c400, %c0_39] : memref<808x128xf32, #tpu.memory_space<vmem>>, vector<200x128xf32>
    %c1_40 = arith.constant 1 : index
    %c0_41 = arith.constant 0 : index
    %c0_42 = arith.constant 0 : index
    %43 = vector.load %arg4[%c1_40, %c0_41, %c0_42] : memref<3x128x128xf32, #tpu.memory_space<vmem>>, vector<1x128x128xf32>
    %44 = vector.shape_cast %43 : vector<1x128x128xf32> to vector<128x128xf32>
    %cst_43 = arith.constant dense<0.000000e+00> : vector<200x128xf32>
    %45 = tpu.matmul %42, %44, %cst_43 {dimension_numbers = #tpu.dot_dimension_numbers<[1], [0], [0], [1], [0, 0, 1, 1], [], []>} : vector<200x128xf32>, vector<128x128xf32>, vector<200x128xf32> -> vector<200x128xf32>
    %46 = arith.addf %41, %45 : vector<200x128xf32>
    %c608_44 = arith.constant 608 : index
    %c0_45 = arith.constant 0 : index
    %47 = vector.load %arg11[%c608_44, %c0_45] : memref<808x128xf32, #tpu.memory_space<vmem>>, vector<200x128xf32>
    %c2_46 = arith.constant 2 : index
    %c0_47 = arith.constant 0 : index
    %c0_48 = arith.constant 0 : index
    %48 = vector.load %arg4[%c2_46, %c0_47, %c0_48] : memref<3x128x128xf32, #tpu.memory_space<vmem>>, vector<1x128x128xf32>
    %49 = vector.shape_cast %48 : vector<1x128x128xf32> to vector<128x128xf32>
    %cst_49 = arith.constant dense<0.000000e+00> : vector<200x128xf32>
    %50 = tpu.matmul %47, %49, %cst_49 {dimension_numbers = #tpu.dot_dimension_numbers<[1], [0], [0], [1], [0, 0, 1, 1], [], []>} : vector<200x128xf32>, vector<128x128xf32>, vector<200x128xf32> -> vector<200x128xf32>
    %51 = arith.addf %46, %50 : vector<200x128xf32>
    %c0_50 = arith.constant 0 : index
    %c0_51 = arith.constant 0 : index
    %52 = vector.load %arg5[%c0_50, %c0_51] : memref<1x128xf32, #tpu.memory_space<vmem>>, vector<1x128xf32>
    %53 = vector.broadcast %52 : vector<1x128xf32> to vector<200x128xf32>
    %54 = arith.addf %51, %53 : vector<200x128xf32>
    %cst_52 = arith.constant 0.000000e+00 : f32
    %55 = vector.broadcast %cst_52 : f32 to vector<200x128xf32>
    %56 = arith.maximumf %54, %55 : vector<200x128xf32>
    %c0_53 = arith.constant 0 : index
    %c0_54 = arith.constant 0 : index
    %57 = vector.load %arg12[%c0_53, %c0_54] : memref<200x128xf32, #tpu.memory_space<vmem>>, vector<8x128xf32>
    %c0_55 = arith.constant 0 : index
    %c0_56 = arith.constant 0 : index
    %58 = vector.load %arg13[%c0_55, %c0_56] : memref<424x128xf32, #tpu.memory_space<vmem>>, vector<8x128xf32>
    tpu.vector_store %arg13[%c0_55, %c0_56], %57 {strides = array<i32>} : memref<424x128xf32, #tpu.memory_space<vmem>>, vector<8x128xf32>,
    %59 = vector.extract_strided_slice %56 {offsets = [0, 0], sizes = [192, 128], strides = [1, 1]} : vector<200x128xf32> to vector<192x128xf32>
    %c8 = arith.constant 8 : index
    %c0_57 = arith.constant 0 : index
    %60 = vector.load %arg12[%c8, %c0_57] : memref<200x128xf32, #tpu.memory_space<vmem>>, vector<192x128xf32>
    %61 = arith.maximumf %59, %60 : vector<192x128xf32>
    %c8_58 = arith.constant 8 : index
    %c0_59 = arith.constant 0 : index
    %62 = vector.load %arg13[%c8_58, %c0_59] : memref<424x128xf32, #tpu.memory_space<vmem>>, vector<192x128xf32>
    tpu.vector_store %arg13[%c8_58, %c0_59], %61 {strides = array<i32>} : memref<424x128xf32, #tpu.memory_space<vmem>>, vector<192x128xf32>,
    %63 = vector.extract_strided_slice %56 {offsets = [192, 0], sizes = [8, 128], strides = [1, 1]} : vector<200x128xf32> to vector<8x128xf32>
    %c200_60 = arith.constant 200 : index
    %c0_61 = arith.constant 0 : index
    %64 = vector.load %arg13[%c200_60, %c0_61] : memref<424x128xf32, #tpu.memory_space<vmem>>, vector<8x128xf32>
    tpu.vector_store %arg13[%c200_60, %c0_61], %63 {strides = array<i32>} : memref<424x128xf32, #tpu.memory_space<vmem>>, vector<8x128xf32>,
    %c208 = arith.constant 208 : index
    %c0_62 = arith.constant 0 : index
    %65 = vector.load %arg13[%c208, %c0_62] : memref<424x128xf32, #tpu.memory_space<vmem>>, vector<8x128xf32>
    tpu.vector_store %arg13[%c208, %c0_62], %0 {strides = array<i32>} : memref<424x128xf32, #tpu.memory_space<vmem>>, vector<8x128xf32>,
    %c0_63 = arith.constant 0 : index
    %c0_64 = arith.constant 0 : index
    %66 = vector.load %arg12[%c0_63, %c0_64] : memref<200x128xf32, #tpu.memory_space<vmem>>, vector<200x128xf32>
    %67 = arith.maximumf %66, %56 : vector<200x128xf32>
    %c216 = arith.constant 216 : index
    %c0_65 = arith.constant 0 : index
    %68 = vector.load %arg13[%c216, %c0_65] : memref<424x128xf32, #tpu.memory_space<vmem>>, vector<200x128xf32>
    tpu.vector_store %arg13[%c216, %c0_65], %67 {strides = array<i32>} : memref<424x128xf32, #tpu.memory_space<vmem>>, vector<200x128xf32>,
    %c416 = arith.constant 416 : index
    %c0_66 = arith.constant 0 : index
    %69 = vector.load %arg13[%c416, %c0_66] : memref<424x128xf32, #tpu.memory_space<vmem>>, vector<8x128xf32>
    tpu.vector_store %arg13[%c416, %c0_66], %0 {strides = array<i32>} : memref<424x128xf32, #tpu.memory_space<vmem>>, vector<8x128xf32>,
    %cst_67 = arith.constant 0.000000e+00 : f32
    %70 = vector.broadcast %cst_67 : f32 to vector<208x256xf32>
    %c208_68 = arith.constant 208 : index
    %c0_69 = arith.constant 0 : index
    %71 = vector.load %arg13[%c208_68, %c0_69] : memref<424x128xf32, #tpu.memory_space<vmem>>, vector<208x128xf32>
    %c0_70 = arith.constant 0 : index
    %c0_71 = arith.constant 0 : index
    %c0_72 = arith.constant 0 : index
    %72 = vector.load %arg6[%c0_70, %c0_71, %c0_72] : memref<3x128x256xf32, #tpu.memory_space<vmem>>, vector<1x128x256xf32>
    %73 = vector.shape_cast %72 : vector<1x128x256xf32> to vector<128x256xf32>
    %cst_73 = arith.constant dense<0.000000e+00> : vector<208x256xf32>
    %74 = tpu.matmul %71, %73, %cst_73 {dimension_numbers = #tpu.dot_dimension_numbers<[1], [0], [0], [1], [0, 0, 1, 1], [], []>} : vector<208x128xf32>, vector<128x256xf32>, vector<208x256xf32> -> vector<208x256xf32>
    %75 = arith.addf %70, %74 : vector<208x256xf32>
    %c0_74 = arith.constant 0 : index
    %c0_75 = arith.constant 0 : index
    %76 = vector.load %arg13[%c0_74, %c0_75] : memref<424x128xf32, #tpu.memory_space<vmem>>, vector<208x128xf32>
    %c1_76 = arith.constant 1 : index
    %c0_77 = arith.constant 0 : index
    %c0_78 = arith.constant 0 : index
    %77 = vector.load %arg6[%c1_76, %c0_77, %c0_78] : memref<3x128x256xf32, #tpu.memory_space<vmem>>, vector<1x128x256xf32>
    %78 = vector.shape_cast %77 : vector<1x128x256xf32> to vector<128x256xf32>
    %cst_79 = arith.constant dense<0.000000e+00> : vector<208x256xf32>
    %79 = tpu.matmul %76, %78, %cst_79 {dimension_numbers = #tpu.dot_dimension_numbers<[1], [0], [0], [1], [0, 0, 1, 1], [], []>} : vector<208x128xf32>, vector<128x256xf32>, vector<208x256xf32> -> vector<208x256xf32>
    %80 = arith.addf %75, %79 : vector<208x256xf32>
    %c216_80 = arith.constant 216 : index
    %c0_81 = arith.constant 0 : index
    %81 = vector.load %arg13[%c216_80, %c0_81] : memref<424x128xf32, #tpu.memory_space<vmem>>, vector<208x128xf32>
    %c2_82 = arith.constant 2 : index
    %c0_83 = arith.constant 0 : index
    %c0_84 = arith.constant 0 : index
    %82 = vector.load %arg6[%c2_82, %c0_83, %c0_84] : memref<3x128x256xf32, #tpu.memory_space<vmem>>, vector<1x128x256xf32>
    %83 = vector.shape_cast %82 : vector<1x128x256xf32> to vector<128x256xf32>
    %cst_85 = arith.constant dense<0.000000e+00> : vector<208x256xf32>
    %84 = tpu.matmul %81, %83, %cst_85 {dimension_numbers = #tpu.dot_dimension_numbers<[1], [0], [0], [1], [0, 0, 1, 1], [], []>} : vector<208x128xf32>, vector<128x256xf32>, vector<208x256xf32> -> vector<208x256xf32>
    %85 = arith.addf %80, %84 : vector<208x256xf32>
    %c0_86 = arith.constant 0 : index
    %c0_87 = arith.constant 0 : index
    %86 = vector.load %arg7[%c0_86, %c0_87] : memref<1x256xf32, #tpu.memory_space<vmem>>, vector<1x256xf32>
    %87 = vector.broadcast %86 : vector<1x256xf32> to vector<208x256xf32>
    %88 = arith.addf %85, %87 : vector<208x256xf32>
    %cst_88 = arith.constant 0.000000e+00 : f32
    %89 = vector.broadcast %cst_88 : f32 to vector<208x256xf32>
    %90 = arith.maximumf %88, %89 : vector<208x256xf32>
    %c0_89 = arith.constant 0 : index
    %c0_90 = arith.constant 0 : index
    %91 = vector.load %arg14[%c0_89, %c0_90] : memref<208x256xf32, #tpu.memory_space<vmem>>, vector<208x256xf32>
    tpu.vector_store %arg14[%c0_89, %c0_90], %90 {strides = array<i32>} : memref<208x256xf32, #tpu.memory_space<vmem>>, vector<208x256xf32>,
    %cst_91 = arith.constant 0.000000e+00 : f32
    %92 = vector.broadcast %cst_91 : f32 to vector<8x256xf32>
    %cst_92 = arith.constant 0.000000e+00 : f32
    %93 = vector.broadcast %cst_92 : f32 to vector<8x256xf32>
    %cst_93 = arith.constant 0.000000e+00 : f32
    %94 = vector.broadcast %cst_93 : f32 to vector<8x256xf32>
    %cst_94 = arith.constant 0.000000e+00 : f32
    %95 = vector.broadcast %cst_94 : f32 to vector<8x256xf32>
    %cst_95 = arith.constant 0.000000e+00 : f32
    %96 = vector.broadcast %cst_95 : f32 to vector<8x256xf32>
    %cst_96 = arith.constant 0.000000e+00 : f32
    %97 = vector.broadcast %cst_96 : f32 to vector<8x256xf32>
    %c0_97 = arith.constant 0 : index
    %c0_98 = arith.constant 0 : index
    %98 = vector.load %arg14[%c0_97, %c0_98] : memref<208x256xf32, #tpu.memory_space<vmem>>, vector<8x256xf32>
    %c0_99 = arith.constant 0 : index
    %c0_100 = arith.constant 0 : index
    %99 = vector.load %arg8[%c0_99, %c0_100] : memref<162x256xf32, #tpu.memory_space<vmem>>, vector<1x256xf32>
    %100 = vector.broadcast %99 : vector<1x256xf32> to vector<8x256xf32>
    %101 = arith.mulf %98, %100 : vector<8x256xf32>
    %102 = arith.addf %92, %101 : vector<8x256xf32>
    %c27 = arith.constant 27 : index
    %c0_101 = arith.constant 0 : index
    %103 = vector.load %arg8[%c27, %c0_101] : memref<162x256xf32, #tpu.memory_space<vmem>>, vector<1x256xf32>
    %104 = vector.broadcast %103 : vector<1x256xf32> to vector<8x256xf32>
    %105 = arith.mulf %98, %104 : vector<8x256xf32>
    %106 = arith.addf %93, %105 : vector<8x256xf32>
    %c54 = arith.constant 54 : index
    %c0_102 = arith.constant 0 : index
    %107 = vector.load %arg8[%c54, %c0_102] : memref<162x256xf32, #tpu.memory_space<vmem>>, vector<1x256xf32>
    %108 = vector.broadcast %107 : vector<1x256xf32> to vector<8x256xf32>
    %109 = arith.mulf %98, %108 : vector<8x256xf32>
    %110 = arith.addf %94, %109 : vector<8x256xf32>
    %c81 = arith.constant 81 : index
    %c0_103 = arith.constant 0 : index
    %111 = vector.load %arg8[%c81, %c0_103] : memref<162x256xf32, #tpu.memory_space<vmem>>, vector<1x256xf32>
    %112 = vector.broadcast %111 : vector<1x256xf32> to vector<8x256xf32>
    %113 = arith.mulf %98, %112 : vector<8x256xf32>
    %114 = arith.addf %95, %113 : vector<8x256xf32>
    %c108 = arith.constant 108 : index
    %c0_104 = arith.constant 0 : index
    %115 = vector.load %arg8[%c108, %c0_104] : memref<162x256xf32, #tpu.memory_space<vmem>>, vector<1x256xf32>
    %116 = vector.broadcast %115 : vector<1x256xf32> to vector<8x256xf32>
    %117 = arith.mulf %98, %116 : vector<8x256xf32>
    %118 = arith.addf %96, %117 : vector<8x256xf32>
    %c135 = arith.constant 135 : index
    %c0_105 = arith.constant 0 : index
    %119 = vector.load %arg8[%c135, %c0_105] : memref<162x256xf32, #tpu.memory_space<vmem>>, vector<1x256xf32>
    %120 = vector.broadcast %119 : vector<1x256xf32> to vector<8x256xf32>
    %121 = arith.mulf %98, %120 : vector<8x256xf32>
    %122 = arith.addf %97, %121 : vector<8x256xf32>
    %c0_106 = arith.constant 0 : index
    %c0_107 = arith.constant 0 : index
    %123 = vector.load %arg14[%c0_106, %c0_107] : memref<208x256xf32, #tpu.memory_space<vmem>>, vector<8x256xf32>
    %c8_108 = arith.constant 8 : index
    %c0_109 = arith.constant 0 : index
    %124 = vector.load %arg14[%c8_108, %c0_109] : memref<208x256xf32, #tpu.memory_space<vmem>>, vector<8x256xf32>
    %125 = arith.maximumf %123, %124 : vector<8x256xf32>
    %c1_110 = arith.constant 1 : index
    %c0_111 = arith.constant 0 : index
    %126 = vector.load %arg8[%c1_110, %c0_111] : memref<162x256xf32, #tpu.memory_space<vmem>>, vector<1x256xf32>
    %127 = vector.broadcast %126 : vector<1x256xf32> to vector<8x256xf32>
    %128 = arith.mulf %125, %127 : vector<8x256xf32>
    %129 = arith.addf %102, %128 : vector<8x256xf32>
    %c28 = arith.constant 28 : index
    %c0_112 = arith.constant 0 : index
    %130 = vector.load %arg8[%c28, %c0_112] : memref<162x256xf32, #tpu.memory_space<vmem>>, vector<1x256xf32>
    %131 = vector.broadcast %130 : vector<1x256xf32> to vector<8x256xf32>
    %132 = arith.mulf %125, %131 : vector<8x256xf32>
    %133 = arith.addf %106, %132 : vector<8x256xf32>
    %c55 = arith.constant 55 : index
    %c0_113 = arith.constant 0 : index
    %134 = vector.load %arg8[%c55, %c0_113] : memref<162x256xf32, #tpu.memory_space<vmem>>, vector<1x256xf32>
    %135 = vector.broadcast %134 : vector<1x256xf32> to vector<8x256xf32>
    %136 = arith.mulf %125, %135 : vector<8x256xf32>
    %137 = arith.addf %110, %136 : vector<8x256xf32>
    %c82 = arith.constant 82 : index
    %c0_114 = arith.constant 0 : index
    %138 = vector.load %arg8[%c82, %c0_114] : memref<162x256xf32, #tpu.memory_space<vmem>>, vector<1x256xf32>
    %139 = vector.broadcast %138 : vector<1x256xf32> to vector<8x256xf32>
    %140 = arith.mulf %125, %139 : vector<8x256xf32>
    %141 = arith.addf %114, %140 : vector<8x256xf32>
    %c109 = arith.constant 109 : index
    %c0_115 = arith.constant 0 : index
    %142 = vector.load %arg8[%c109, %c0_115] : memref<162x256xf32, #tpu.memory_space<vmem>>, vector<1x256xf32>
    %143 = vector.broadcast %142 : vector<1x256xf32> to vector<8x256xf32>
    %144 = arith.mulf %125, %143 : vector<8x256xf32>
    %145 = arith.addf %118, %144 : vector<8x256xf32>
    %c136 = arith.constant 136 : index
    %c0_116 = arith.constant 0 : index
    %146 = vector.load %arg8[%c136, %c0_116] : memref<162x256xf32, #tpu.memory_space<vmem>>, vector<1x256xf32>
    %147 = vector.broadcast %146 : vector<1x256xf32> to vector<8x256xf32>
    %148 = arith.mulf %125, %147 : vector<8x256xf32>
    %149 = arith.addf %122, %148 : vector<8x256xf32>
    %c8_117 = arith.constant 8 : index
    %c0_118 = arith.constant 0 : index
    %150 = vector.load %arg14[%c8_117, %c0_118] : memref<208x256xf32, #tpu.memory_space<vmem>>, vector<8x256xf32>
    %c16 = arith.constant 16 : index
    %c0_119 = arith.constant 0 : index
    %151 = vector.load %arg14[%c16, %c0_119] : memref<208x256xf32, #tpu.memory_space<vmem>>, vector<8x256xf32>
    %152 = arith.maximumf %150, %151 : vector<8x256xf32>
    %c2_120 = arith.constant 2 : index
    %c0_121 = arith.constant 0 : index
    %153 = vector.load %arg8[%c2_120, %c0_121] : memref<162x256xf32, #tpu.memory_space<vmem>>, vector<1x256xf32>
    %154 = vector.broadcast %153 : vector<1x256xf32> to vector<8x256xf32>
    %155 = arith.mulf %152, %154 : vector<8x256xf32>
    %156 = arith.addf %129, %155 : vector<8x256xf32>
    %c29 = arith.constant 29 : index
    %c0_122 = arith.constant 0 : index
    %157 = vector.load %arg8[%c29, %c0_122] : memref<162x256xf32, #tpu.memory_space<vmem>>, vector<1x256xf32>
    %158 = vector.broadcast %157 : vector<1x256xf32> to vector<8x256xf32>
    %159 = arith.mulf %152, %158 : vector<8x256xf32>
    %160 = arith.addf %133, %159 : vector<8x256xf32>
    %c56 = arith.constant 56 : index
    %c0_123 = arith.constant 0 : index
    %161 = vector.load %arg8[%c56, %c0_123] : memref<162x256xf32, #tpu.memory_space<vmem>>, vector<1x256xf32>
    %162 = vector.broadcast %161 : vector<1x256xf32> to vector<8x256xf32>
    %163 = arith.mulf %152, %162 : vector<8x256xf32>
    %164 = arith.addf %137, %163 : vector<8x256xf32>
    %c83 = arith.constant 83 : index
    %c0_124 = arith.constant 0 : index
    %165 = vector.load %arg8[%c83, %c0_124] : memref<162x256xf32, #tpu.memory_space<vmem>>, vector<1x256xf32>
    %166 = vector.broadcast %165 : vector<1x256xf32> to vector<8x256xf32>
    %167 = arith.mulf %152, %166 : vector<8x256xf32>
    %168 = arith.addf %141, %167 : vector<8x256xf32>
    %c110 = arith.constant 110 : index
    %c0_125 = arith.constant 0 : index
    %169 = vector.load %arg8[%c110, %c0_125] : memref<162x256xf32, #tpu.memory_space<vmem>>, vector<1x256xf32>
    %170 = vector.broadcast %169 : vector<1x256xf32> to vector<8x256xf32>
    %171 = arith.mulf %152, %170 : vector<8x256xf32>
    %172 = arith.addf %145, %171 : vector<8x256xf32>
    %c137 = arith.constant 137 : index
    %c0_126 = arith.constant 0 : index
    %173 = vector.load %arg8[%c137, %c0_126] : memref<162x256xf32, #tpu.memory_space<vmem>>, vector<1x256xf32>
    %174 = vector.broadcast %173 : vector<1x256xf32> to vector<8x256xf32>
    %175 = arith.mulf %152, %174 : vector<8x256xf32>
    %176 = arith.addf %149, %175 : vector<8x256xf32>
    %c16_127 = arith.constant 16 : index
    %c0_128 = arith.constant 0 : index
    %177 = vector.load %arg14[%c16_127, %c0_128] : memref<208x256xf32, #tpu.memory_space<vmem>>, vector<8x256xf32>
    %c24 = arith.constant 24 : index
    %c0_129 = arith.constant 0 : index
    %178 = vector.load %arg14[%c24, %c0_129] : memref<208x256xf32, #tpu.memory_space<vmem>>, vector<8x256xf32>
    %179 = arith.maximumf %177, %178 : vector<8x256xf32>
    %c3 = arith.constant 3 : index
    %c0_130 = arith.constant 0 : index
    %180 = vector.load %arg8[%c3, %c0_130] : memref<162x256xf32, #tpu.memory_space<vmem>>, vector<1x256xf32>
    %181 = vector.broadcast %180 : vector<1x256xf32> to vector<8x256xf32>
    %182 = arith.mulf %179, %181 : vector<8x256xf32>
    %183 = arith.addf %156, %182 : vector<8x256xf32>
    %c30 = arith.constant 30 : index
    %c0_131 = arith.constant 0 : index
    %184 = vector.load %arg8[%c30, %c0_131] : memref<162x256xf32, #tpu.memory_space<vmem>>, vector<1x256xf32>
    %185 = vector.broadcast %184 : vector<1x256xf32> to vector<8x256xf32>
    %186 = arith.mulf %179, %185 : vector<8x256xf32>
    %187 = arith.addf %160, %186 : vector<8x256xf32>
    %c57 = arith.constant 57 : index
    %c0_132 = arith.constant 0 : index
    %188 = vector.load %arg8[%c57, %c0_132] : memref<162x256xf32, #tpu.memory_space<vmem>>, vector<1x256xf32>
    %189 = vector.broadcast %188 : vector<1x256xf32> to vector<8x256xf32>
    %190 = arith.mulf %179, %189 : vector<8x256xf32>
    %191 = arith.addf %164, %190 : vector<8x256xf32>
    %c84 = arith.constant 84 : index
    %c0_133 = arith.constant 0 : index
    %192 = vector.load %arg8[%c84, %c0_133] : memref<162x256xf32, #tpu.memory_space<vmem>>, vector<1x256xf32>
    %193 = vector.broadcast %192 : vector<1x256xf32> to vector<8x256xf32>
    %194 = arith.mulf %179, %193 : vector<8x256xf32>
    %195 = arith.addf %168, %194 : vector<8x256xf32>
    %c111 = arith.constant 111 : index
    %c0_134 = arith.constant 0 : index
    %196 = vector.load %arg8[%c111, %c0_134] : memref<162x256xf32, #tpu.memory_space<vmem>>, vector<1x256xf32>
    %197 = vector.broadcast %196 : vector<1x256xf32> to vector<8x256xf32>
    %198 = arith.mulf %179, %197 : vector<8x256xf32>
    %199 = arith.addf %172, %198 : vector<8x256xf32>
    %c138 = arith.constant 138 : index
    %c0_135 = arith.constant 0 : index
    %200 = vector.load %arg8[%c138, %c0_135] : memref<162x256xf32, #tpu.memory_space<vmem>>, vector<1x256xf32>
    %201 = vector.broadcast %200 : vector<1x256xf32> to vector<8x256xf32>
    %202 = arith.mulf %179, %201 : vector<8x256xf32>
    %203 = arith.addf %176, %202 : vector<8x256xf32>
    %c24_136 = arith.constant 24 : index
    %c0_137 = arith.constant 0 : index
    %204 = vector.load %arg14[%c24_136, %c0_137] : memref<208x256xf32, #tpu.memory_space<vmem>>, vector<8x256xf32>
    %c32 = arith.constant 32 : index
    %c0_138 = arith.constant 0 : index
    %205 = vector.load %arg14[%c32, %c0_138] : memref<208x256xf32, #tpu.memory_space<vmem>>, vector<8x256xf32>
    %206 = arith.maximumf %204, %205 : vector<8x256xf32>
    %c4 = arith.constant 4 : index
    %c0_139 = arith.constant 0 : index
    %207 = vector.load %arg8[%c4, %c0_139] : memref<162x256xf32, #tpu.memory_space<vmem>>, vector<1x256xf32>
    %208 = vector.broadcast %207 : vector<1x256xf32> to vector<8x256xf32>
    %209 = arith.mulf %206, %208 : vector<8x256xf32>
    %210 = arith.addf %183, %209 : vector<8x256xf32>
    %c31 = arith.constant 31 : index
    %c0_140 = arith.constant 0 : index
    %211 = vector.load %arg8[%c31, %c0_140] : memref<162x256xf32, #tpu.memory_space<vmem>>, vector<1x256xf32>
    %212 = vector.broadcast %211 : vector<1x256xf32> to vector<8x256xf32>
    %213 = arith.mulf %206, %212 : vector<8x256xf32>
    %214 = arith.addf %187, %213 : vector<8x256xf32>
    %c58 = arith.constant 58 : index
    %c0_141 = arith.constant 0 : index
    %215 = vector.load %arg8[%c58, %c0_141] : memref<162x256xf32, #tpu.memory_space<vmem>>, vector<1x256xf32>
    %216 = vector.broadcast %215 : vector<1x256xf32> to vector<8x256xf32>
    %217 = arith.mulf %206, %216 : vector<8x256xf32>
    %218 = arith.addf %191, %217 : vector<8x256xf32>
    %c85 = arith.constant 85 : index
    %c0_142 = arith.constant 0 : index
    %219 = vector.load %arg8[%c85, %c0_142] : memref<162x256xf32, #tpu.memory_space<vmem>>, vector<1x256xf32>
    %220 = vector.broadcast %219 : vector<1x256xf32> to vector<8x256xf32>
    %221 = arith.mulf %206, %220 : vector<8x256xf32>
    %222 = arith.addf %195, %221 : vector<8x256xf32>
    %c112 = arith.constant 112 : index
    %c0_143 = arith.constant 0 : index
    %223 = vector.load %arg8[%c112, %c0_143] : memref<162x256xf32, #tpu.memory_space<vmem>>, vector<1x256xf32>
    %224 = vector.broadcast %223 : vector<1x256xf32> to vector<8x256xf32>
    %225 = arith.mulf %206, %224 : vector<8x256xf32>
    %226 = arith.addf %199, %225 : vector<8x256xf32>
    %c139 = arith.constant 139 : index
    %c0_144 = arith.constant 0 : index
    %227 = vector.load %arg8[%c139, %c0_144] : memref<162x256xf32, #tpu.memory_space<vmem>>, vector<1x256xf32>
    %228 = vector.broadcast %227 : vector<1x256xf32> to vector<8x256xf32>
    %229 = arith.mulf %206, %228 : vector<8x256xf32>
    %230 = arith.addf %203, %229 : vector<8x256xf32>
    %c32_145 = arith.constant 32 : index
    %c0_146 = arith.constant 0 : index
    %231 = vector.load %arg14[%c32_145, %c0_146] : memref<208x256xf32, #tpu.memory_space<vmem>>, vector<8x256xf32>
    %c40 = arith.constant 40 : index
    %c0_147 = arith.constant 0 : index
    %232 = vector.load %arg14[%c40, %c0_147] : memref<208x256xf32, #tpu.memory_space<vmem>>, vector<8x256xf32>
    %233 = arith.maximumf %231, %232 : vector<8x256xf32>
    %c5 = arith.constant 5 : index
    %c0_148 = arith.constant 0 : index
    %234 = vector.load %arg8[%c5, %c0_148] : memref<162x256xf32, #tpu.memory_space<vmem>>, vector<1x256xf32>
    %235 = vector.broadcast %234 : vector<1x256xf32> to vector<8x256xf32>
    %236 = arith.mulf %233, %235 : vector<8x256xf32>
    %237 = arith.addf %210, %236 : vector<8x256xf32>
    %c32_149 = arith.constant 32 : index
    %c0_150 = arith.constant 0 : index
    %238 = vector.load %arg8[%c32_149, %c0_150] : memref<162x256xf32, #tpu.memory_space<vmem>>, vector<1x256xf32>
    %239 = vector.broadcast %238 : vector<1x256xf32> to vector<8x256xf32>
    %240 = arith.mulf %233, %239 : vector<8x256xf32>
    %241 = arith.addf %214, %240 : vector<8x256xf32>
    %c59 = arith.constant 59 : index
    %c0_151 = arith.constant 0 : index
    %242 = vector.load %arg8[%c59, %c0_151] : memref<162x256xf32, #tpu.memory_space<vmem>>, vector<1x256xf32>
    %243 = vector.broadcast %242 : vector<1x256xf32> to vector<8x256xf32>
    %244 = arith.mulf %233, %243 : vector<8x256xf32>
    %245 = arith.addf %218, %244 : vector<8x256xf32>
    %c86 = arith.constant 86 : index
    %c0_152 = arith.constant 0 : index
    %246 = vector.load %arg8[%c86, %c0_152] : memref<162x256xf32, #tpu.memory_space<vmem>>, vector<1x256xf32>
    %247 = vector.broadcast %246 : vector<1x256xf32> to vector<8x256xf32>
    %248 = arith.mulf %233, %247 : vector<8x256xf32>
    %249 = arith.addf %222, %248 : vector<8x256xf32>
    %c113 = arith.constant 113 : index
    %c0_153 = arith.constant 0 : index
    %250 = vector.load %arg8[%c113, %c0_153] : memref<162x256xf32, #tpu.memory_space<vmem>>, vector<1x256xf32>
    %251 = vector.broadcast %250 : vector<1x256xf32> to vector<8x256xf32>
    %252 = arith.mulf %233, %251 : vector<8x256xf32>
    %253 = arith.addf %226, %252 : vector<8x256xf32>
    %c140 = arith.constant 140 : index
    %c0_154 = arith.constant 0 : index
    %254 = vector.load %arg8[%c140, %c0_154] : memref<162x256xf32, #tpu.memory_space<vmem>>, vector<1x256xf32>
    %255 = vector.broadcast %254 : vector<1x256xf32> to vector<8x256xf32>
    %256 = arith.mulf %233, %255 : vector<8x256xf32>
    %257 = arith.addf %230, %256 : vector<8x256xf32>
    %c40_155 = arith.constant 40 : index
    %c0_156 = arith.constant 0 : index
    %258 = vector.load %arg14[%c40_155, %c0_156] : memref<208x256xf32, #tpu.memory_space<vmem>>, vector<8x256xf32>
    %c48 = arith.constant 48 : index
    %c0_157 = arith.constant 0 : index
    %259 = vector.load %arg14[%c48, %c0_157] : memref<208x256xf32, #tpu.memory_space<vmem>>, vector<8x256xf32>
    %260 = arith.maximumf %258, %259 : vector<8x256xf32>
    %c6 = arith.constant 6 : index
    %c0_158 = arith.constant 0 : index
    %261 = vector.load %arg8[%c6, %c0_158] : memref<162x256xf32, #tpu.memory_space<vmem>>, vector<1x256xf32>
    %262 = vector.broadcast %261 : vector<1x256xf32> to vector<8x256xf32>
    %263 = arith.mulf %260, %262 : vector<8x256xf32>
    %264 = arith.addf %237, %263 : vector<8x256xf32>
    %c33 = arith.constant 33 : index
    %c0_159 = arith.constant 0 : index
    %265 = vector.load %arg8[%c33, %c0_159] : memref<162x256xf32, #tpu.memory_space<vmem>>, vector<1x256xf32>
    %266 = vector.broadcast %265 : vector<1x256xf32> to vector<8x256xf32>
    %267 = arith.mulf %260, %266 : vector<8x256xf32>
    %268 = arith.addf %241, %267 : vector<8x256xf32>
    %c60 = arith.constant 60 : index
    %c0_160 = arith.constant 0 : index
    %269 = vector.load %arg8[%c60, %c0_160] : memref<162x256xf32, #tpu.memory_space<vmem>>, vector<1x256xf32>
    %270 = vector.broadcast %269 : vector<1x256xf32> to vector<8x256xf32>
    %271 = arith.mulf %260, %270 : vector<8x256xf32>
    %272 = arith.addf %245, %271 : vector<8x256xf32>
    %c87 = arith.constant 87 : index
    %c0_161 = arith.constant 0 : index
    %273 = vector.load %arg8[%c87, %c0_161] : memref<162x256xf32, #tpu.memory_space<vmem>>, vector<1x256xf32>
    %274 = vector.broadcast %273 : vector<1x256xf32> to vector<8x256xf32>
    %275 = arith.mulf %260, %274 : vector<8x256xf32>
    %276 = arith.addf %249, %275 : vector<8x256xf32>
    %c114 = arith.constant 114 : index
    %c0_162 = arith.constant 0 : index
    %277 = vector.load %arg8[%c114, %c0_162] : memref<162x256xf32, #tpu.memory_space<vmem>>, vector<1x256xf32>
    %278 = vector.broadcast %277 : vector<1x256xf32> to vector<8x256xf32>
    %279 = arith.mulf %260, %278 : vector<8x256xf32>
    %280 = arith.addf %253, %279 : vector<8x256xf32>
    %c141 = arith.constant 141 : index
    %c0_163 = arith.constant 0 : index
    %281 = vector.load %arg8[%c141, %c0_163] : memref<162x256xf32, #tpu.memory_space<vmem>>, vector<1x256xf32>
    %282 = vector.broadcast %281 : vector<1x256xf32> to vector<8x256xf32>
    %283 = arith.mulf %260, %282 : vector<8x256xf32>
    %284 = arith.addf %257, %283 : vector<8x256xf32>
    %c48_164 = arith.constant 48 : index
    %c0_165 = arith.constant 0 : index
    %285 = vector.load %arg14[%c48_164, %c0_165] : memref<208x256xf32, #tpu.memory_space<vmem>>, vector<8x256xf32>
    %c56_166 = arith.constant 56 : index
    %c0_167 = arith.constant 0 : index
    %286 = vector.load %arg14[%c56_166, %c0_167] : memref<208x256xf32, #tpu.memory_space<vmem>>, vector<8x256xf32>
    %287 = arith.maximumf %285, %286 : vector<8x256xf32>
    %c7 = arith.constant 7 : index
    %c0_168 = arith.constant 0 : index
    %288 = vector.load %arg8[%c7, %c0_168] : memref<162x256xf32, #tpu.memory_space<vmem>>, vector<1x256xf32>
    %289 = vector.broadcast %288 : vector<1x256xf32> to vector<8x256xf32>
    %290 = arith.mulf %287, %289 : vector<8x256xf32>
    %291 = arith.addf %264, %290 : vector<8x256xf32>
    %c34 = arith.constant 34 : index
    %c0_169 = arith.constant 0 : index
    %292 = vector.load %arg8[%c34, %c0_169] : memref<162x256xf32, #tpu.memory_space<vmem>>, vector<1x256xf32>
    %293 = vector.broadcast %292 : vector<1x256xf32> to vector<8x256xf32>
    %294 = arith.mulf %287, %293 : vector<8x256xf32>
    %295 = arith.addf %268, %294 : vector<8x256xf32>
    %c61 = arith.constant 61 : index
    %c0_170 = arith.constant 0 : index
    %296 = vector.load %arg8[%c61, %c0_170] : memref<162x256xf32, #tpu.memory_space<vmem>>, vector<1x256xf32>
    %297 = vector.broadcast %296 : vector<1x256xf32> to vector<8x256xf32>
    %298 = arith.mulf %287, %297 : vector<8x256xf32>
    %299 = arith.addf %272, %298 : vector<8x256xf32>
    %c88 = arith.constant 88 : index
    %c0_171 = arith.constant 0 : index
    %300 = vector.load %arg8[%c88, %c0_171] : memref<162x256xf32, #tpu.memory_space<vmem>>, vector<1x256xf32>
    %301 = vector.broadcast %300 : vector<1x256xf32> to vector<8x256xf32>
    %302 = arith.mulf %287, %301 : vector<8x256xf32>
    %303 = arith.addf %276, %302 : vector<8x256xf32>
    %c115 = arith.constant 115 : index
    %c0_172 = arith.constant 0 : index
    %304 = vector.load %arg8[%c115, %c0_172] : memref<162x256xf32, #tpu.memory_space<vmem>>, vector<1x256xf32>
    %305 = vector.broadcast %304 : vector<1x256xf32> to vector<8x256xf32>
    %306 = arith.mulf %287, %305 : vector<8x256xf32>
    %307 = arith.addf %280, %306 : vector<8x256xf32>
    %c142 = arith.constant 142 : index
    %c0_173 = arith.constant 0 : index
    %308 = vector.load %arg8[%c142, %c0_173] : memref<162x256xf32, #tpu.memory_space<vmem>>, vector<1x256xf32>
    %309 = vector.broadcast %308 : vector<1x256xf32> to vector<8x256xf32>
    %310 = arith.mulf %287, %309 : vector<8x256xf32>
    %311 = arith.addf %284, %310 : vector<8x256xf32>
    %c56_174 = arith.constant 56 : index
    %c0_175 = arith.constant 0 : index
    %312 = vector.load %arg14[%c56_174, %c0_175] : memref<208x256xf32, #tpu.memory_space<vmem>>, vector<8x256xf32>
    %c64 = arith.constant 64 : index
    %c0_176 = arith.constant 0 : index
    %313 = vector.load %arg14[%c64, %c0_176] : memref<208x256xf32, #tpu.memory_space<vmem>>, vector<8x256xf32>
    %314 = arith.maximumf %312, %313 : vector<8x256xf32>
    %c8_177 = arith.constant 8 : index
    %c0_178 = arith.constant 0 : index
    %315 = vector.load %arg8[%c8_177, %c0_178] : memref<162x256xf32, #tpu.memory_space<vmem>>, vector<1x256xf32>
    %316 = vector.broadcast %315 : vector<1x256xf32> to vector<8x256xf32>
    %317 = arith.mulf %314, %316 : vector<8x256xf32>
    %318 = arith.addf %291, %317 : vector<8x256xf32>
    %c35 = arith.constant 35 : index
    %c0_179 = arith.constant 0 : index
    %319 = vector.load %arg8[%c35, %c0_179] : memref<162x256xf32, #tpu.memory_space<vmem>>, vector<1x256xf32>
    %320 = vector.broadcast %319 : vector<1x256xf32> to vector<8x256xf32>
    %321 = arith.mulf %314, %320 : vector<8x256xf32>
    %322 = arith.addf %295, %321 : vector<8x256xf32>
    %c62 = arith.constant 62 : index
    %c0_180 = arith.constant 0 : index
    %323 = vector.load %arg8[%c62, %c0_180] : memref<162x256xf32, #tpu.memory_space<vmem>>, vector<1x256xf32>
    %324 = vector.broadcast %323 : vector<1x256xf32> to vector<8x256xf32>
    %325 = arith.mulf %314, %324 : vector<8x256xf32>
    %326 = arith.addf %299, %325 : vector<8x256xf32>
    %c89 = arith.constant 89 : index
    %c0_181 = arith.constant 0 : index
    %327 = vector.load %arg8[%c89, %c0_181] : memref<162x256xf32, #tpu.memory_space<vmem>>, vector<1x256xf32>
    %328 = vector.broadcast %327 : vector<1x256xf32> to vector<8x256xf32>
    %329 = arith.mulf %314, %328 : vector<8x256xf32>
    %330 = arith.addf %303, %329 : vector<8x256xf32>
    %c116 = arith.constant 116 : index
    %c0_182 = arith.constant 0 : index
    %331 = vector.load %arg8[%c116, %c0_182] : memref<162x256xf32, #tpu.memory_space<vmem>>, vector<1x256xf32>
    %332 = vector.broadcast %331 : vector<1x256xf32> to vector<8x256xf32>
    %333 = arith.mulf %314, %332 : vector<8x256xf32>
    %334 = arith.addf %307, %333 : vector<8x256xf32>
    %c143 = arith.constant 143 : index
    %c0_183 = arith.constant 0 : index
    %335 = vector.load %arg8[%c143, %c0_183] : memref<162x256xf32, #tpu.memory_space<vmem>>, vector<1x256xf32>
    %336 = vector.broadcast %335 : vector<1x256xf32> to vector<8x256xf32>
    %337 = arith.mulf %314, %336 : vector<8x256xf32>
    %338 = arith.addf %311, %337 : vector<8x256xf32>
    %c64_184 = arith.constant 64 : index
    %c0_185 = arith.constant 0 : index
    %339 = vector.load %arg14[%c64_184, %c0_185] : memref<208x256xf32, #tpu.memory_space<vmem>>, vector<8x256xf32>
    %c72 = arith.constant 72 : index
    %c0_186 = arith.constant 0 : index
    %340 = vector.load %arg14[%c72, %c0_186] : memref<208x256xf32, #tpu.memory_space<vmem>>, vector<8x256xf32>
    %341 = arith.maximumf %339, %340 : vector<8x256xf32>
    %c9 = arith.constant 9 : index
    %c0_187 = arith.constant 0 : index
    %342 = vector.load %arg8[%c9, %c0_187] : memref<162x256xf32, #tpu.memory_space<vmem>>, vector<1x256xf32>
    %343 = vector.broadcast %342 : vector<1x256xf32> to vector<8x256xf32>
    %344 = arith.mulf %341, %343 : vector<8x256xf32>
    %345 = arith.addf %318, %344 : vector<8x256xf32>
    %c36 = arith.constant 36 : index
    %c0_188 = arith.constant 0 : index
    %346 = vector.load %arg8[%c36, %c0_188] : memref<162x256xf32, #tpu.memory_space<vmem>>, vector<1x256xf32>
    %347 = vector.broadcast %346 : vector<1x256xf32> to vector<8x256xf32>
    %348 = arith.mulf %341, %347 : vector<8x256xf32>
    %349 = arith.addf %322, %348 : vector<8x256xf32>
    %c63 = arith.constant 63 : index
    %c0_189 = arith.constant 0 : index
    %350 = vector.load %arg8[%c63, %c0_189] : memref<162x256xf32, #tpu.memory_space<vmem>>, vector<1x256xf32>
    %351 = vector.broadcast %350 : vector<1x256xf32> to vector<8x256xf32>
    %352 = arith.mulf %341, %351 : vector<8x256xf32>
    %353 = arith.addf %326, %352 : vector<8x256xf32>
    %c90 = arith.constant 90 : index
    %c0_190 = arith.constant 0 : index
    %354 = vector.load %arg8[%c90, %c0_190] : memref<162x256xf32, #tpu.memory_space<vmem>>, vector<1x256xf32>
    %355 = vector.broadcast %354 : vector<1x256xf32> to vector<8x256xf32>
    %356 = arith.mulf %341, %355 : vector<8x256xf32>
    %357 = arith.addf %330, %356 : vector<8x256xf32>
    %c117 = arith.constant 117 : index
    %c0_191 = arith.constant 0 : index
    %358 = vector.load %arg8[%c117, %c0_191] : memref<162x256xf32, #tpu.memory_space<vmem>>, vector<1x256xf32>
    %359 = vector.broadcast %358 : vector<1x256xf32> to vector<8x256xf32>
    %360 = arith.mulf %341, %359 : vector<8x256xf32>
    %361 = arith.addf %334, %360 : vector<8x256xf32>
    %c144 = arith.constant 144 : index
    %c0_192 = arith.constant 0 : index
    %362 = vector.load %arg8[%c144, %c0_192] : memref<162x256xf32, #tpu.memory_space<vmem>>, vector<1x256xf32>
    %363 = vector.broadcast %362 : vector<1x256xf32> to vector<8x256xf32>
    %364 = arith.mulf %341, %363 : vector<8x256xf32>
    %365 = arith.addf %338, %364 : vector<8x256xf32>
    %c72_193 = arith.constant 72 : index
    %c0_194 = arith.constant 0 : index
    %366 = vector.load %arg14[%c72_193, %c0_194] : memref<208x256xf32, #tpu.memory_space<vmem>>, vector<8x256xf32>
    %c80 = arith.constant 80 : index
    %c0_195 = arith.constant 0 : index
    %367 = vector.load %arg14[%c80, %c0_195] : memref<208x256xf32, #tpu.memory_space<vmem>>, vector<8x256xf32>
    %368 = arith.maximumf %366, %367 : vector<8x256xf32>
    %c10 = arith.constant 10 : index
    %c0_196 = arith.constant 0 : index
    %369 = vector.load %arg8[%c10, %c0_196] : memref<162x256xf32, #tpu.memory_space<vmem>>, vector<1x256xf32>
    %370 = vector.broadcast %369 : vector<1x256xf32> to vector<8x256xf32>
    %371 = arith.mulf %368, %370 : vector<8x256xf32>
    %372 = arith.addf %345, %371 : vector<8x256xf32>
    %c37 = arith.constant 37 : index
    %c0_197 = arith.constant 0 : index
    %373 = vector.load %arg8[%c37, %c0_197] : memref<162x256xf32, #tpu.memory_space<vmem>>, vector<1x256xf32>
    %374 = vector.broadcast %373 : vector<1x256xf32> to vector<8x256xf32>
    %375 = arith.mulf %368, %374 : vector<8x256xf32>
    %376 = arith.addf %349, %375 : vector<8x256xf32>
    %c64_198 = arith.constant 64 : index
    %c0_199 = arith.constant 0 : index
    %377 = vector.load %arg8[%c64_198, %c0_199] : memref<162x256xf32, #tpu.memory_space<vmem>>, vector<1x256xf32>
    %378 = vector.broadcast %377 : vector<1x256xf32> to vector<8x256xf32>
    %379 = arith.mulf %368, %378 : vector<8x256xf32>
    %380 = arith.addf %353, %379 : vector<8x256xf32>
    %c91 = arith.constant 91 : index
    %c0_200 = arith.constant 0 : index
    %381 = vector.load %arg8[%c91, %c0_200] : memref<162x256xf32, #tpu.memory_space<vmem>>, vector<1x256xf32>
    %382 = vector.broadcast %381 : vector<1x256xf32> to vector<8x256xf32>
    %383 = arith.mulf %368, %382 : vector<8x256xf32>
    %384 = arith.addf %357, %383 : vector<8x256xf32>
    %c118 = arith.constant 118 : index
    %c0_201 = arith.constant 0 : index
    %385 = vector.load %arg8[%c118, %c0_201] : memref<162x256xf32, #tpu.memory_space<vmem>>, vector<1x256xf32>
    %386 = vector.broadcast %385 : vector<1x256xf32> to vector<8x256xf32>
    %387 = arith.mulf %368, %386 : vector<8x256xf32>
    %388 = arith.addf %361, %387 : vector<8x256xf32>
    %c145 = arith.constant 145 : index
    %c0_202 = arith.constant 0 : index
    %389 = vector.load %arg8[%c145, %c0_202] : memref<162x256xf32, #tpu.memory_space<vmem>>, vector<1x256xf32>
    %390 = vector.broadcast %389 : vector<1x256xf32> to vector<8x256xf32>
    %391 = arith.mulf %368, %390 : vector<8x256xf32>
    %392 = arith.addf %365, %391 : vector<8x256xf32>
    %c80_203 = arith.constant 80 : index
    %c0_204 = arith.constant 0 : index
    %393 = vector.load %arg14[%c80_203, %c0_204] : memref<208x256xf32, #tpu.memory_space<vmem>>, vector<8x256xf32>
    %c88_205 = arith.constant 88 : index
    %c0_206 = arith.constant 0 : index
    %394 = vector.load %arg14[%c88_205, %c0_206] : memref<208x256xf32, #tpu.memory_space<vmem>>, vector<8x256xf32>
    %395 = arith.maximumf %393, %394 : vector<8x256xf32>
    %c11 = arith.constant 11 : index
    %c0_207 = arith.constant 0 : index
    %396 = vector.load %arg8[%c11, %c0_207] : memref<162x256xf32, #tpu.memory_space<vmem>>, vector<1x256xf32>
    %397 = vector.broadcast %396 : vector<1x256xf32> to vector<8x256xf32>
    %398 = arith.mulf %395, %397 : vector<8x256xf32>
    %399 = arith.addf %372, %398 : vector<8x256xf32>
    %c38 = arith.constant 38 : index
    %c0_208 = arith.constant 0 : index
    %400 = vector.load %arg8[%c38, %c0_208] : memref<162x256xf32, #tpu.memory_space<vmem>>, vector<1x256xf32>
    %401 = vector.broadcast %400 : vector<1x256xf32> to vector<8x256xf32>
    %402 = arith.mulf %395, %401 : vector<8x256xf32>
    %403 = arith.addf %376, %402 : vector<8x256xf32>
    %c65 = arith.constant 65 : index
    %c0_209 = arith.constant 0 : index
    %404 = vector.load %arg8[%c65, %c0_209] : memref<162x256xf32, #tpu.memory_space<vmem>>, vector<1x256xf32>
    %405 = vector.broadcast %404 : vector<1x256xf32> to vector<8x256xf32>
    %406 = arith.mulf %395, %405 : vector<8x256xf32>
    %407 = arith.addf %380, %406 : vector<8x256xf32>
    %c92 = arith.constant 92 : index
    %c0_210 = arith.constant 0 : index
    %408 = vector.load %arg8[%c92, %c0_210] : memref<162x256xf32, #tpu.memory_space<vmem>>, vector<1x256xf32>
    %409 = vector.broadcast %408 : vector<1x256xf32> to vector<8x256xf32>
    %410 = arith.mulf %395, %409 : vector<8x256xf32>
    %411 = arith.addf %384, %410 : vector<8x256xf32>
    %c119 = arith.constant 119 : index
    %c0_211 = arith.constant 0 : index
    %412 = vector.load %arg8[%c119, %c0_211] : memref<162x256xf32, #tpu.memory_space<vmem>>, vector<1x256xf32>
    %413 = vector.broadcast %412 : vector<1x256xf32> to vector<8x256xf32>
    %414 = arith.mulf %395, %413 : vector<8x256xf32>
    %415 = arith.addf %388, %414 : vector<8x256xf32>
    %c146 = arith.constant 146 : index
    %c0_212 = arith.constant 0 : index
    %416 = vector.load %arg8[%c146, %c0_212] : memref<162x256xf32, #tpu.memory_space<vmem>>, vector<1x256xf32>
    %417 = vector.broadcast %416 : vector<1x256xf32> to vector<8x256xf32>
    %418 = arith.mulf %395, %417 : vector<8x256xf32>
    %419 = arith.addf %392, %418 : vector<8x256xf32>
    %c88_213 = arith.constant 88 : index
    %c0_214 = arith.constant 0 : index
    %420 = vector.load %arg14[%c88_213, %c0_214] : memref<208x256xf32, #tpu.memory_space<vmem>>, vector<8x256xf32>
    %c96 = arith.constant 96 : index
    %c0_215 = arith.constant 0 : index
    %421 = vector.load %arg14[%c96, %c0_215] : memref<208x256xf32, #tpu.memory_space<vmem>>, vector<8x256xf32>
    %422 = arith.maximumf %420, %421 : vector<8x256xf32>
    %c12 = arith.constant 12 : index
    %c0_216 = arith.constant 0 : index
    %423 = vector.load %arg8[%c12, %c0_216] : memref<162x256xf32, #tpu.memory_space<vmem>>, vector<1x256xf32>
    %424 = vector.broadcast %423 : vector<1x256xf32> to vector<8x256xf32>
    %425 = arith.mulf %422, %424 : vector<8x256xf32>
    %426 = arith.addf %399, %425 : vector<8x256xf32>
    %c39 = arith.constant 39 : index
    %c0_217 = arith.constant 0 : index
    %427 = vector.load %arg8[%c39, %c0_217] : memref<162x256xf32, #tpu.memory_space<vmem>>, vector<1x256xf32>
    %428 = vector.broadcast %427 : vector<1x256xf32> to vector<8x256xf32>
    %429 = arith.mulf %422, %428 : vector<8x256xf32>
    %430 = arith.addf %403, %429 : vector<8x256xf32>
    %c66 = arith.constant 66 : index
    %c0_218 = arith.constant 0 : index
    %431 = vector.load %arg8[%c66, %c0_218] : memref<162x256xf32, #tpu.memory_space<vmem>>, vector<1x256xf32>
    %432 = vector.broadcast %431 : vector<1x256xf32> to vector<8x256xf32>
    %433 = arith.mulf %422, %432 : vector<8x256xf32>
    %434 = arith.addf %407, %433 : vector<8x256xf32>
    %c93 = arith.constant 93 : index
    %c0_219 = arith.constant 0 : index
    %435 = vector.load %arg8[%c93, %c0_219] : memref<162x256xf32, #tpu.memory_space<vmem>>, vector<1x256xf32>
    %436 = vector.broadcast %435 : vector<1x256xf32> to vector<8x256xf32>
    %437 = arith.mulf %422, %436 : vector<8x256xf32>
    %438 = arith.addf %411, %437 : vector<8x256xf32>
    %c120 = arith.constant 120 : index
    %c0_220 = arith.constant 0 : index
    %439 = vector.load %arg8[%c120, %c0_220] : memref<162x256xf32, #tpu.memory_space<vmem>>, vector<1x256xf32>
    %440 = vector.broadcast %439 : vector<1x256xf32> to vector<8x256xf32>
    %441 = arith.mulf %422, %440 : vector<8x256xf32>
    %442 = arith.addf %415, %441 : vector<8x256xf32>
    %c147 = arith.constant 147 : index
    %c0_221 = arith.constant 0 : index
    %443 = vector.load %arg8[%c147, %c0_221] : memref<162x256xf32, #tpu.memory_space<vmem>>, vector<1x256xf32>
    %444 = vector.broadcast %443 : vector<1x256xf32> to vector<8x256xf32>
    %445 = arith.mulf %422, %444 : vector<8x256xf32>
    %446 = arith.addf %419, %445 : vector<8x256xf32>
    %c96_222 = arith.constant 96 : index
    %c0_223 = arith.constant 0 : index
    %447 = vector.load %arg14[%c96_222, %c0_223] : memref<208x256xf32, #tpu.memory_space<vmem>>, vector<8x256xf32>
    %c104 = arith.constant 104 : index
    %c0_224 = arith.constant 0 : index
    %448 = vector.load %arg14[%c104, %c0_224] : memref<208x256xf32, #tpu.memory_space<vmem>>, vector<8x256xf32>
    %449 = arith.maximumf %447, %448 : vector<8x256xf32>
    %c13 = arith.constant 13 : index
    %c0_225 = arith.constant 0 : index
    %450 = vector.load %arg8[%c13, %c0_225] : memref<162x256xf32, #tpu.memory_space<vmem>>, vector<1x256xf32>
    %451 = vector.broadcast %450 : vector<1x256xf32> to vector<8x256xf32>
    %452 = arith.mulf %449, %451 : vector<8x256xf32>
    %453 = arith.addf %426, %452 : vector<8x256xf32>
    %c40_226 = arith.constant 40 : index
    %c0_227 = arith.constant 0 : index
    %454 = vector.load %arg8[%c40_226, %c0_227] : memref<162x256xf32, #tpu.memory_space<vmem>>, vector<1x256xf32>
    %455 = vector.broadcast %454 : vector<1x256xf32> to vector<8x256xf32>
    %456 = arith.mulf %449, %455 : vector<8x256xf32>
    %457 = arith.addf %430, %456 : vector<8x256xf32>
    %c67 = arith.constant 67 : index
    %c0_228 = arith.constant 0 : index
    %458 = vector.load %arg8[%c67, %c0_228] : memref<162x256xf32, #tpu.memory_space<vmem>>, vector<1x256xf32>
    %459 = vector.broadcast %458 : vector<1x256xf32> to vector<8x256xf32>
    %460 = arith.mulf %449, %459 : vector<8x256xf32>
    %461 = arith.addf %434, %460 : vector<8x256xf32>
    %c94 = arith.constant 94 : index
    %c0_229 = arith.constant 0 : index
    %462 = vector.load %arg8[%c94, %c0_229] : memref<162x256xf32, #tpu.memory_space<vmem>>, vector<1x256xf32>
    %463 = vector.broadcast %462 : vector<1x256xf32> to vector<8x256xf32>
    %464 = arith.mulf %449, %463 : vector<8x256xf32>
    %465 = arith.addf %438, %464 : vector<8x256xf32>
    %c121 = arith.constant 121 : index
    %c0_230 = arith.constant 0 : index
    %466 = vector.load %arg8[%c121, %c0_230] : memref<162x256xf32, #tpu.memory_space<vmem>>, vector<1x256xf32>
    %467 = vector.broadcast %466 : vector<1x256xf32> to vector<8x256xf32>
    %468 = arith.mulf %449, %467 : vector<8x256xf32>
    %469 = arith.addf %442, %468 : vector<8x256xf32>
    %c148 = arith.constant 148 : index
    %c0_231 = arith.constant 0 : index
    %470 = vector.load %arg8[%c148, %c0_231] : memref<162x256xf32, #tpu.memory_space<vmem>>, vector<1x256xf32>
    %471 = vector.broadcast %470 : vector<1x256xf32> to vector<8x256xf32>
    %472 = arith.mulf %449, %471 : vector<8x256xf32>
    %473 = arith.addf %446, %472 : vector<8x256xf32>
    %c104_232 = arith.constant 104 : index
    %c0_233 = arith.constant 0 : index
    %474 = vector.load %arg14[%c104_232, %c0_233] : memref<208x256xf32, #tpu.memory_space<vmem>>, vector<8x256xf32>
    %c112_234 = arith.constant 112 : index
    %c0_235 = arith.constant 0 : index
    %475 = vector.load %arg14[%c112_234, %c0_235] : memref<208x256xf32, #tpu.memory_space<vmem>>, vector<8x256xf32>
    %476 = arith.maximumf %474, %475 : vector<8x256xf32>
    %c14 = arith.constant 14 : index
    %c0_236 = arith.constant 0 : index
    %477 = vector.load %arg8[%c14, %c0_236] : memref<162x256xf32, #tpu.memory_space<vmem>>, vector<1x256xf32>
    %478 = vector.broadcast %477 : vector<1x256xf32> to vector<8x256xf32>
    %479 = arith.mulf %476, %478 : vector<8x256xf32>
    %480 = arith.addf %453, %479 : vector<8x256xf32>
    %c41 = arith.constant 41 : index
    %c0_237 = arith.constant 0 : index
    %481 = vector.load %arg8[%c41, %c0_237] : memref<162x256xf32, #tpu.memory_space<vmem>>, vector<1x256xf32>
    %482 = vector.broadcast %481 : vector<1x256xf32> to vector<8x256xf32>
    %483 = arith.mulf %476, %482 : vector<8x256xf32>
    %484 = arith.addf %457, %483 : vector<8x256xf32>
    %c68 = arith.constant 68 : index
    %c0_238 = arith.constant 0 : index
    %485 = vector.load %arg8[%c68, %c0_238] : memref<162x256xf32, #tpu.memory_space<vmem>>, vector<1x256xf32>
    %486 = vector.broadcast %485 : vector<1x256xf32> to vector<8x256xf32>
    %487 = arith.mulf %476, %486 : vector<8x256xf32>
    %488 = arith.addf %461, %487 : vector<8x256xf32>
    %c95 = arith.constant 95 : index
    %c0_239 = arith.constant 0 : index
    %489 = vector.load %arg8[%c95, %c0_239] : memref<162x256xf32, #tpu.memory_space<vmem>>, vector<1x256xf32>
    %490 = vector.broadcast %489 : vector<1x256xf32> to vector<8x256xf32>
    %491 = arith.mulf %476, %490 : vector<8x256xf32>
    %492 = arith.addf %465, %491 : vector<8x256xf32>
    %c122 = arith.constant 122 : index
    %c0_240 = arith.constant 0 : index
    %493 = vector.load %arg8[%c122, %c0_240] : memref<162x256xf32, #tpu.memory_space<vmem>>, vector<1x256xf32>
    %494 = vector.broadcast %493 : vector<1x256xf32> to vector<8x256xf32>
    %495 = arith.mulf %476, %494 : vector<8x256xf32>
    %496 = arith.addf %469, %495 : vector<8x256xf32>
    %c149 = arith.constant 149 : index
    %c0_241 = arith.constant 0 : index
    %497 = vector.load %arg8[%c149, %c0_241] : memref<162x256xf32, #tpu.memory_space<vmem>>, vector<1x256xf32>
    %498 = vector.broadcast %497 : vector<1x256xf32> to vector<8x256xf32>
    %499 = arith.mulf %476, %498 : vector<8x256xf32>
    %500 = arith.addf %473, %499 : vector<8x256xf32>
    %c112_242 = arith.constant 112 : index
    %c0_243 = arith.constant 0 : index
    %501 = vector.load %arg14[%c112_242, %c0_243] : memref<208x256xf32, #tpu.memory_space<vmem>>, vector<8x256xf32>
    %c120_244 = arith.constant 120 : index
    %c0_245 = arith.constant 0 : index
    %502 = vector.load %arg14[%c120_244, %c0_245] : memref<208x256xf32, #tpu.memory_space<vmem>>, vector<8x256xf32>
    %503 = arith.maximumf %501, %502 : vector<8x256xf32>
    %c15 = arith.constant 15 : index
    %c0_246 = arith.constant 0 : index
    %504 = vector.load %arg8[%c15, %c0_246] : memref<162x256xf32, #tpu.memory_space<vmem>>, vector<1x256xf32>
    %505 = vector.broadcast %504 : vector<1x256xf32> to vector<8x256xf32>
    %506 = arith.mulf %503, %505 : vector<8x256xf32>
    %507 = arith.addf %480, %506 : vector<8x256xf32>
    %c42 = arith.constant 42 : index
    %c0_247 = arith.constant 0 : index
    %508 = vector.load %arg8[%c42, %c0_247] : memref<162x256xf32, #tpu.memory_space<vmem>>, vector<1x256xf32>
    %509 = vector.broadcast %508 : vector<1x256xf32> to vector<8x256xf32>
    %510 = arith.mulf %503, %509 : vector<8x256xf32>
    %511 = arith.addf %484, %510 : vector<8x256xf32>
    %c69 = arith.constant 69 : index
    %c0_248 = arith.constant 0 : index
    %512 = vector.load %arg8[%c69, %c0_248] : memref<162x256xf32, #tpu.memory_space<vmem>>, vector<1x256xf32>
    %513 = vector.broadcast %512 : vector<1x256xf32> to vector<8x256xf32>
    %514 = arith.mulf %503, %513 : vector<8x256xf32>
    %515 = arith.addf %488, %514 : vector<8x256xf32>
    %c96_249 = arith.constant 96 : index
    %c0_250 = arith.constant 0 : index
    %516 = vector.load %arg8[%c96_249, %c0_250] : memref<162x256xf32, #tpu.memory_space<vmem>>, vector<1x256xf32>
    %517 = vector.broadcast %516 : vector<1x256xf32> to vector<8x256xf32>
    %518 = arith.mulf %503, %517 : vector<8x256xf32>
    %519 = arith.addf %492, %518 : vector<8x256xf32>
    %c123 = arith.constant 123 : index
    %c0_251 = arith.constant 0 : index
    %520 = vector.load %arg8[%c123, %c0_251] : memref<162x256xf32, #tpu.memory_space<vmem>>, vector<1x256xf32>
    %521 = vector.broadcast %520 : vector<1x256xf32> to vector<8x256xf32>
    %522 = arith.mulf %503, %521 : vector<8x256xf32>
    %523 = arith.addf %496, %522 : vector<8x256xf32>
    %c150 = arith.constant 150 : index
    %c0_252 = arith.constant 0 : index
    %524 = vector.load %arg8[%c150, %c0_252] : memref<162x256xf32, #tpu.memory_space<vmem>>, vector<1x256xf32>
    %525 = vector.broadcast %524 : vector<1x256xf32> to vector<8x256xf32>
    %526 = arith.mulf %503, %525 : vector<8x256xf32>
    %527 = arith.addf %500, %526 : vector<8x256xf32>
    %c120_253 = arith.constant 120 : index
    %c0_254 = arith.constant 0 : index
    %528 = vector.load %arg14[%c120_253, %c0_254] : memref<208x256xf32, #tpu.memory_space<vmem>>, vector<8x256xf32>
    %c128 = arith.constant 128 : index
    %c0_255 = arith.constant 0 : index
    %529 = vector.load %arg14[%c128, %c0_255] : memref<208x256xf32, #tpu.memory_space<vmem>>, vector<8x256xf32>
    %530 = arith.maximumf %528, %529 : vector<8x256xf32>
    %c16_256 = arith.constant 16 : index
    %c0_257 = arith.constant 0 : index
    %531 = vector.load %arg8[%c16_256, %c0_257] : memref<162x256xf32, #tpu.memory_space<vmem>>, vector<1x256xf32>
    %532 = vector.broadcast %531 : vector<1x256xf32> to vector<8x256xf32>
    %533 = arith.mulf %530, %532 : vector<8x256xf32>
    %534 = arith.addf %507, %533 : vector<8x256xf32>
    %c43 = arith.constant 43 : index
    %c0_258 = arith.constant 0 : index
    %535 = vector.load %arg8[%c43, %c0_258] : memref<162x256xf32, #tpu.memory_space<vmem>>, vector<1x256xf32>
    %536 = vector.broadcast %535 : vector<1x256xf32> to vector<8x256xf32>
    %537 = arith.mulf %530, %536 : vector<8x256xf32>
    %538 = arith.addf %511, %537 : vector<8x256xf32>
    %c70 = arith.constant 70 : index
    %c0_259 = arith.constant 0 : index
    %539 = vector.load %arg8[%c70, %c0_259] : memref<162x256xf32, #tpu.memory_space<vmem>>, vector<1x256xf32>
    %540 = vector.broadcast %539 : vector<1x256xf32> to vector<8x256xf32>
    %541 = arith.mulf %530, %540 : vector<8x256xf32>
    %542 = arith.addf %515, %541 : vector<8x256xf32>
    %c97 = arith.constant 97 : index
    %c0_260 = arith.constant 0 : index
    %543 = vector.load %arg8[%c97, %c0_260] : memref<162x256xf32, #tpu.memory_space<vmem>>, vector<1x256xf32>
    %544 = vector.broadcast %543 : vector<1x256xf32> to vector<8x256xf32>
    %545 = arith.mulf %530, %544 : vector<8x256xf32>
    %546 = arith.addf %519, %545 : vector<8x256xf32>
    %c124 = arith.constant 124 : index
    %c0_261 = arith.constant 0 : index
    %547 = vector.load %arg8[%c124, %c0_261] : memref<162x256xf32, #tpu.memory_space<vmem>>, vector<1x256xf32>
    %548 = vector.broadcast %547 : vector<1x256xf32> to vector<8x256xf32>
    %549 = arith.mulf %530, %548 : vector<8x256xf32>
    %550 = arith.addf %523, %549 : vector<8x256xf32>
    %c151 = arith.constant 151 : index
    %c0_262 = arith.constant 0 : index
    %551 = vector.load %arg8[%c151, %c0_262] : memref<162x256xf32, #tpu.memory_space<vmem>>, vector<1x256xf32>
    %552 = vector.broadcast %551 : vector<1x256xf32> to vector<8x256xf32>
    %553 = arith.mulf %530, %552 : vector<8x256xf32>
    %554 = arith.addf %527, %553 : vector<8x256xf32>
    %c128_263 = arith.constant 128 : index
    %c0_264 = arith.constant 0 : index
    %555 = vector.load %arg14[%c128_263, %c0_264] : memref<208x256xf32, #tpu.memory_space<vmem>>, vector<8x256xf32>
    %c136_265 = arith.constant 136 : index
    %c0_266 = arith.constant 0 : index
    %556 = vector.load %arg14[%c136_265, %c0_266] : memref<208x256xf32, #tpu.memory_space<vmem>>, vector<8x256xf32>
    %557 = arith.maximumf %555, %556 : vector<8x256xf32>
    %c17 = arith.constant 17 : index
    %c0_267 = arith.constant 0 : index
    %558 = vector.load %arg8[%c17, %c0_267] : memref<162x256xf32, #tpu.memory_space<vmem>>, vector<1x256xf32>
    %559 = vector.broadcast %558 : vector<1x256xf32> to vector<8x256xf32>
    %560 = arith.mulf %557, %559 : vector<8x256xf32>
    %561 = arith.addf %534, %560 : vector<8x256xf32>
    %c44 = arith.constant 44 : index
    %c0_268 = arith.constant 0 : index
    %562 = vector.load %arg8[%c44, %c0_268] : memref<162x256xf32, #tpu.memory_space<vmem>>, vector<1x256xf32>
    %563 = vector.broadcast %562 : vector<1x256xf32> to vector<8x256xf32>
    %564 = arith.mulf %557, %563 : vector<8x256xf32>
    %565 = arith.addf %538, %564 : vector<8x256xf32>
    %c71 = arith.constant 71 : index
    %c0_269 = arith.constant 0 : index
    %566 = vector.load %arg8[%c71, %c0_269] : memref<162x256xf32, #tpu.memory_space<vmem>>, vector<1x256xf32>
    %567 = vector.broadcast %566 : vector<1x256xf32> to vector<8x256xf32>
    %568 = arith.mulf %557, %567 : vector<8x256xf32>
    %569 = arith.addf %542, %568 : vector<8x256xf32>
    %c98 = arith.constant 98 : index
    %c0_270 = arith.constant 0 : index
    %570 = vector.load %arg8[%c98, %c0_270] : memref<162x256xf32, #tpu.memory_space<vmem>>, vector<1x256xf32>
    %571 = vector.broadcast %570 : vector<1x256xf32> to vector<8x256xf32>
    %572 = arith.mulf %557, %571 : vector<8x256xf32>
    %573 = arith.addf %546, %572 : vector<8x256xf32>
    %c125 = arith.constant 125 : index
    %c0_271 = arith.constant 0 : index
    %574 = vector.load %arg8[%c125, %c0_271] : memref<162x256xf32, #tpu.memory_space<vmem>>, vector<1x256xf32>
    %575 = vector.broadcast %574 : vector<1x256xf32> to vector<8x256xf32>
    %576 = arith.mulf %557, %575 : vector<8x256xf32>
    %577 = arith.addf %550, %576 : vector<8x256xf32>
    %c152 = arith.constant 152 : index
    %c0_272 = arith.constant 0 : index
    %578 = vector.load %arg8[%c152, %c0_272] : memref<162x256xf32, #tpu.memory_space<vmem>>, vector<1x256xf32>
    %579 = vector.broadcast %578 : vector<1x256xf32> to vector<8x256xf32>
    %580 = arith.mulf %557, %579 : vector<8x256xf32>
    %581 = arith.addf %554, %580 : vector<8x256xf32>
    %c136_273 = arith.constant 136 : index
    %c0_274 = arith.constant 0 : index
    %582 = vector.load %arg14[%c136_273, %c0_274] : memref<208x256xf32, #tpu.memory_space<vmem>>, vector<8x256xf32>
    %c144_275 = arith.constant 144 : index
    %c0_276 = arith.constant 0 : index
    %583 = vector.load %arg14[%c144_275, %c0_276] : memref<208x256xf32, #tpu.memory_space<vmem>>, vector<8x256xf32>
    %584 = arith.maximumf %582, %583 : vector<8x256xf32>
    %c18 = arith.constant 18 : index
    %c0_277 = arith.constant 0 : index
    %585 = vector.load %arg8[%c18, %c0_277] : memref<162x256xf32, #tpu.memory_space<vmem>>, vector<1x256xf32>
    %586 = vector.broadcast %585 : vector<1x256xf32> to vector<8x256xf32>
    %587 = arith.mulf %584, %586 : vector<8x256xf32>
    %588 = arith.addf %561, %587 : vector<8x256xf32>
    %c45 = arith.constant 45 : index
    %c0_278 = arith.constant 0 : index
    %589 = vector.load %arg8[%c45, %c0_278] : memref<162x256xf32, #tpu.memory_space<vmem>>, vector<1x256xf32>
    %590 = vector.broadcast %589 : vector<1x256xf32> to vector<8x256xf32>
    %591 = arith.mulf %584, %590 : vector<8x256xf32>
    %592 = arith.addf %565, %591 : vector<8x256xf32>
    %c72_279 = arith.constant 72 : index
    %c0_280 = arith.constant 0 : index
    %593 = vector.load %arg8[%c72_279, %c0_280] : memref<162x256xf32, #tpu.memory_space<vmem>>, vector<1x256xf32>
    %594 = vector.broadcast %593 : vector<1x256xf32> to vector<8x256xf32>
    %595 = arith.mulf %584, %594 : vector<8x256xf32>
    %596 = arith.addf %569, %595 : vector<8x256xf32>
    %c99 = arith.constant 99 : index
    %c0_281 = arith.constant 0 : index
    %597 = vector.load %arg8[%c99, %c0_281] : memref<162x256xf32, #tpu.memory_space<vmem>>, vector<1x256xf32>
    %598 = vector.broadcast %597 : vector<1x256xf32> to vector<8x256xf32>
    %599 = arith.mulf %584, %598 : vector<8x256xf32>
    %600 = arith.addf %573, %599 : vector<8x256xf32>
    %c126 = arith.constant 126 : index
    %c0_282 = arith.constant 0 : index
    %601 = vector.load %arg8[%c126, %c0_282] : memref<162x256xf32, #tpu.memory_space<vmem>>, vector<1x256xf32>
    %602 = vector.broadcast %601 : vector<1x256xf32> to vector<8x256xf32>
    %603 = arith.mulf %584, %602 : vector<8x256xf32>
    %604 = arith.addf %577, %603 : vector<8x256xf32>
    %c153 = arith.constant 153 : index
    %c0_283 = arith.constant 0 : index
    %605 = vector.load %arg8[%c153, %c0_283] : memref<162x256xf32, #tpu.memory_space<vmem>>, vector<1x256xf32>
    %606 = vector.broadcast %605 : vector<1x256xf32> to vector<8x256xf32>
    %607 = arith.mulf %584, %606 : vector<8x256xf32>
    %608 = arith.addf %581, %607 : vector<8x256xf32>
    %c144_284 = arith.constant 144 : index
    %c0_285 = arith.constant 0 : index
    %609 = vector.load %arg14[%c144_284, %c0_285] : memref<208x256xf32, #tpu.memory_space<vmem>>, vector<8x256xf32>
    %c152_286 = arith.constant 152 : index
    %c0_287 = arith.constant 0 : index
    %610 = vector.load %arg14[%c152_286, %c0_287] : memref<208x256xf32, #tpu.memory_space<vmem>>, vector<8x256xf32>
    %611 = arith.maximumf %609, %610 : vector<8x256xf32>
    %c19 = arith.constant 19 : index
    %c0_288 = arith.constant 0 : index
    %612 = vector.load %arg8[%c19, %c0_288] : memref<162x256xf32, #tpu.memory_space<vmem>>, vector<1x256xf32>
    %613 = vector.broadcast %612 : vector<1x256xf32> to vector<8x256xf32>
    %614 = arith.mulf %611, %613 : vector<8x256xf32>
    %615 = arith.addf %588, %614 : vector<8x256xf32>
    %c46 = arith.constant 46 : index
    %c0_289 = arith.constant 0 : index
    %616 = vector.load %arg8[%c46, %c0_289] : memref<162x256xf32, #tpu.memory_space<vmem>>, vector<1x256xf32>
    %617 = vector.broadcast %616 : vector<1x256xf32> to vector<8x256xf32>
    %618 = arith.mulf %611, %617 : vector<8x256xf32>
    %619 = arith.addf %592, %618 : vector<8x256xf32>
    %c73 = arith.constant 73 : index
    %c0_290 = arith.constant 0 : index
    %620 = vector.load %arg8[%c73, %c0_290] : memref<162x256xf32, #tpu.memory_space<vmem>>, vector<1x256xf32>
    %621 = vector.broadcast %620 : vector<1x256xf32> to vector<8x256xf32>
    %622 = arith.mulf %611, %621 : vector<8x256xf32>
    %623 = arith.addf %596, %622 : vector<8x256xf32>
    %c100 = arith.constant 100 : index
    %c0_291 = arith.constant 0 : index
    %624 = vector.load %arg8[%c100, %c0_291] : memref<162x256xf32, #tpu.memory_space<vmem>>, vector<1x256xf32>
    %625 = vector.broadcast %624 : vector<1x256xf32> to vector<8x256xf32>
    %626 = arith.mulf %611, %625 : vector<8x256xf32>
    %627 = arith.addf %600, %626 : vector<8x256xf32>
    %c127 = arith.constant 127 : index
    %c0_292 = arith.constant 0 : index
    %628 = vector.load %arg8[%c127, %c0_292] : memref<162x256xf32, #tpu.memory_space<vmem>>, vector<1x256xf32>
    %629 = vector.broadcast %628 : vector<1x256xf32> to vector<8x256xf32>
    %630 = arith.mulf %611, %629 : vector<8x256xf32>
    %631 = arith.addf %604, %630 : vector<8x256xf32>
    %c154 = arith.constant 154 : index
    %c0_293 = arith.constant 0 : index
    %632 = vector.load %arg8[%c154, %c0_293] : memref<162x256xf32, #tpu.memory_space<vmem>>, vector<1x256xf32>
    %633 = vector.broadcast %632 : vector<1x256xf32> to vector<8x256xf32>
    %634 = arith.mulf %611, %633 : vector<8x256xf32>
    %635 = arith.addf %608, %634 : vector<8x256xf32>
    %c152_294 = arith.constant 152 : index
    %c0_295 = arith.constant 0 : index
    %636 = vector.load %arg14[%c152_294, %c0_295] : memref<208x256xf32, #tpu.memory_space<vmem>>, vector<8x256xf32>
    %c160 = arith.constant 160 : index
    %c0_296 = arith.constant 0 : index
    %637 = vector.load %arg14[%c160, %c0_296] : memref<208x256xf32, #tpu.memory_space<vmem>>, vector<8x256xf32>
    %638 = arith.maximumf %636, %637 : vector<8x256xf32>
    %c20 = arith.constant 20 : index
    %c0_297 = arith.constant 0 : index
    %639 = vector.load %arg8[%c20, %c0_297] : memref<162x256xf32, #tpu.memory_space<vmem>>, vector<1x256xf32>
    %640 = vector.broadcast %639 : vector<1x256xf32> to vector<8x256xf32>
    %641 = arith.mulf %638, %640 : vector<8x256xf32>
    %642 = arith.addf %615, %641 : vector<8x256xf32>
    %c47 = arith.constant 47 : index
    %c0_298 = arith.constant 0 : index
    %643 = vector.load %arg8[%c47, %c0_298] : memref<162x256xf32, #tpu.memory_space<vmem>>, vector<1x256xf32>
    %644 = vector.broadcast %643 : vector<1x256xf32> to vector<8x256xf32>
    %645 = arith.mulf %638, %644 : vector<8x256xf32>
    %646 = arith.addf %619, %645 : vector<8x256xf32>
    %c74 = arith.constant 74 : index
    %c0_299 = arith.constant 0 : index
    %647 = vector.load %arg8[%c74, %c0_299] : memref<162x256xf32, #tpu.memory_space<vmem>>, vector<1x256xf32>
    %648 = vector.broadcast %647 : vector<1x256xf32> to vector<8x256xf32>
    %649 = arith.mulf %638, %648 : vector<8x256xf32>
    %650 = arith.addf %623, %649 : vector<8x256xf32>
    %c101 = arith.constant 101 : index
    %c0_300 = arith.constant 0 : index
    %651 = vector.load %arg8[%c101, %c0_300] : memref<162x256xf32, #tpu.memory_space<vmem>>, vector<1x256xf32>
    %652 = vector.broadcast %651 : vector<1x256xf32> to vector<8x256xf32>
    %653 = arith.mulf %638, %652 : vector<8x256xf32>
    %654 = arith.addf %627, %653 : vector<8x256xf32>
    %c128_301 = arith.constant 128 : index
    %c0_302 = arith.constant 0 : index
    %655 = vector.load %arg8[%c128_301, %c0_302] : memref<162x256xf32, #tpu.memory_space<vmem>>, vector<1x256xf32>
    %656 = vector.broadcast %655 : vector<1x256xf32> to vector<8x256xf32>
    %657 = arith.mulf %638, %656 : vector<8x256xf32>
    %658 = arith.addf %631, %657 : vector<8x256xf32>
    %c155 = arith.constant 155 : index
    %c0_303 = arith.constant 0 : index
    %659 = vector.load %arg8[%c155, %c0_303] : memref<162x256xf32, #tpu.memory_space<vmem>>, vector<1x256xf32>
    %660 = vector.broadcast %659 : vector<1x256xf32> to vector<8x256xf32>
    %661 = arith.mulf %638, %660 : vector<8x256xf32>
    %662 = arith.addf %635, %661 : vector<8x256xf32>
    %c160_304 = arith.constant 160 : index
    %c0_305 = arith.constant 0 : index
    %663 = vector.load %arg14[%c160_304, %c0_305] : memref<208x256xf32, #tpu.memory_space<vmem>>, vector<8x256xf32>
    %c168 = arith.constant 168 : index
    %c0_306 = arith.constant 0 : index
    %664 = vector.load %arg14[%c168, %c0_306] : memref<208x256xf32, #tpu.memory_space<vmem>>, vector<8x256xf32>
    %665 = arith.maximumf %663, %664 : vector<8x256xf32>
    %c21 = arith.constant 21 : index
    %c0_307 = arith.constant 0 : index
    %666 = vector.load %arg8[%c21, %c0_307] : memref<162x256xf32, #tpu.memory_space<vmem>>, vector<1x256xf32>
    %667 = vector.broadcast %666 : vector<1x256xf32> to vector<8x256xf32>
    %668 = arith.mulf %665, %667 : vector<8x256xf32>
    %669 = arith.addf %642, %668 : vector<8x256xf32>
    %c48_308 = arith.constant 48 : index
    %c0_309 = arith.constant 0 : index
    %670 = vector.load %arg8[%c48_308, %c0_309] : memref<162x256xf32, #tpu.memory_space<vmem>>, vector<1x256xf32>
    %671 = vector.broadcast %670 : vector<1x256xf32> to vector<8x256xf32>
    %672 = arith.mulf %665, %671 : vector<8x256xf32>
    %673 = arith.addf %646, %672 : vector<8x256xf32>
    %c75 = arith.constant 75 : index
    %c0_310 = arith.constant 0 : index
    %674 = vector.load %arg8[%c75, %c0_310] : memref<162x256xf32, #tpu.memory_space<vmem>>, vector<1x256xf32>
    %675 = vector.broadcast %674 : vector<1x256xf32> to vector<8x256xf32>
    %676 = arith.mulf %665, %675 : vector<8x256xf32>
    %677 = arith.addf %650, %676 : vector<8x256xf32>
    %c102 = arith.constant 102 : index
    %c0_311 = arith.constant 0 : index
    %678 = vector.load %arg8[%c102, %c0_311] : memref<162x256xf32, #tpu.memory_space<vmem>>, vector<1x256xf32>
    %679 = vector.broadcast %678 : vector<1x256xf32> to vector<8x256xf32>
    %680 = arith.mulf %665, %679 : vector<8x256xf32>
    %681 = arith.addf %654, %680 : vector<8x256xf32>
    %c129 = arith.constant 129 : index
    %c0_312 = arith.constant 0 : index
    %682 = vector.load %arg8[%c129, %c0_312] : memref<162x256xf32, #tpu.memory_space<vmem>>, vector<1x256xf32>
    %683 = vector.broadcast %682 : vector<1x256xf32> to vector<8x256xf32>
    %684 = arith.mulf %665, %683 : vector<8x256xf32>
    %685 = arith.addf %658, %684 : vector<8x256xf32>
    %c156 = arith.constant 156 : index
    %c0_313 = arith.constant 0 : index
    %686 = vector.load %arg8[%c156, %c0_313] : memref<162x256xf32, #tpu.memory_space<vmem>>, vector<1x256xf32>
    %687 = vector.broadcast %686 : vector<1x256xf32> to vector<8x256xf32>
    %688 = arith.mulf %665, %687 : vector<8x256xf32>
    %689 = arith.addf %662, %688 : vector<8x256xf32>
    %c168_314 = arith.constant 168 : index
    %c0_315 = arith.constant 0 : index
    %690 = vector.load %arg14[%c168_314, %c0_315] : memref<208x256xf32, #tpu.memory_space<vmem>>, vector<8x256xf32>
    %c176 = arith.constant 176 : index
    %c0_316 = arith.constant 0 : index
    %691 = vector.load %arg14[%c176, %c0_316] : memref<208x256xf32, #tpu.memory_space<vmem>>, vector<8x256xf32>
    %692 = arith.maximumf %690, %691 : vector<8x256xf32>
    %c22 = arith.constant 22 : index
    %c0_317 = arith.constant 0 : index
    %693 = vector.load %arg8[%c22, %c0_317] : memref<162x256xf32, #tpu.memory_space<vmem>>, vector<1x256xf32>
    %694 = vector.broadcast %693 : vector<1x256xf32> to vector<8x256xf32>
    %695 = arith.mulf %692, %694 : vector<8x256xf32>
    %696 = arith.addf %669, %695 : vector<8x256xf32>
    %c49 = arith.constant 49 : index
    %c0_318 = arith.constant 0 : index
    %697 = vector.load %arg8[%c49, %c0_318] : memref<162x256xf32, #tpu.memory_space<vmem>>, vector<1x256xf32>
    %698 = vector.broadcast %697 : vector<1x256xf32> to vector<8x256xf32>
    %699 = arith.mulf %692, %698 : vector<8x256xf32>
    %700 = arith.addf %673, %699 : vector<8x256xf32>
    %c76 = arith.constant 76 : index
    %c0_319 = arith.constant 0 : index
    %701 = vector.load %arg8[%c76, %c0_319] : memref<162x256xf32, #tpu.memory_space<vmem>>, vector<1x256xf32>
    %702 = vector.broadcast %701 : vector<1x256xf32> to vector<8x256xf32>
    %703 = arith.mulf %692, %702 : vector<8x256xf32>
    %704 = arith.addf %677, %703 : vector<8x256xf32>
    %c103 = arith.constant 103 : index
    %c0_320 = arith.constant 0 : index
    %705 = vector.load %arg8[%c103, %c0_320] : memref<162x256xf32, #tpu.memory_space<vmem>>, vector<1x256xf32>
    %706 = vector.broadcast %705 : vector<1x256xf32> to vector<8x256xf32>
    %707 = arith.mulf %692, %706 : vector<8x256xf32>
    %708 = arith.addf %681, %707 : vector<8x256xf32>
    %c130 = arith.constant 130 : index
    %c0_321 = arith.constant 0 : index
    %709 = vector.load %arg8[%c130, %c0_321] : memref<162x256xf32, #tpu.memory_space<vmem>>, vector<1x256xf32>
    %710 = vector.broadcast %709 : vector<1x256xf32> to vector<8x256xf32>
    %711 = arith.mulf %692, %710 : vector<8x256xf32>
    %712 = arith.addf %685, %711 : vector<8x256xf32>
    %c157 = arith.constant 157 : index
    %c0_322 = arith.constant 0 : index
    %713 = vector.load %arg8[%c157, %c0_322] : memref<162x256xf32, #tpu.memory_space<vmem>>, vector<1x256xf32>
    %714 = vector.broadcast %713 : vector<1x256xf32> to vector<8x256xf32>
    %715 = arith.mulf %692, %714 : vector<8x256xf32>
    %716 = arith.addf %689, %715 : vector<8x256xf32>
    %c176_323 = arith.constant 176 : index
    %c0_324 = arith.constant 0 : index
    %717 = vector.load %arg14[%c176_323, %c0_324] : memref<208x256xf32, #tpu.memory_space<vmem>>, vector<8x256xf32>
    %c184 = arith.constant 184 : index
    %c0_325 = arith.constant 0 : index
    %718 = vector.load %arg14[%c184, %c0_325] : memref<208x256xf32, #tpu.memory_space<vmem>>, vector<8x256xf32>
    %719 = arith.maximumf %717, %718 : vector<8x256xf32>
    %c23 = arith.constant 23 : index
    %c0_326 = arith.constant 0 : index
    %720 = vector.load %arg8[%c23, %c0_326] : memref<162x256xf32, #tpu.memory_space<vmem>>, vector<1x256xf32>
    %721 = vector.broadcast %720 : vector<1x256xf32> to vector<8x256xf32>
    %722 = arith.mulf %719, %721 : vector<8x256xf32>
    %723 = arith.addf %696, %722 : vector<8x256xf32>
    %c50 = arith.constant 50 : index
    %c0_327 = arith.constant 0 : index
    %724 = vector.load %arg8[%c50, %c0_327] : memref<162x256xf32, #tpu.memory_space<vmem>>, vector<1x256xf32>
    %725 = vector.broadcast %724 : vector<1x256xf32> to vector<8x256xf32>
    %726 = arith.mulf %719, %725 : vector<8x256xf32>
    %727 = arith.addf %700, %726 : vector<8x256xf32>
    %c77 = arith.constant 77 : index
    %c0_328 = arith.constant 0 : index
    %728 = vector.load %arg8[%c77, %c0_328] : memref<162x256xf32, #tpu.memory_space<vmem>>, vector<1x256xf32>
    %729 = vector.broadcast %728 : vector<1x256xf32> to vector<8x256xf32>
    %730 = arith.mulf %719, %729 : vector<8x256xf32>
    %731 = arith.addf %704, %730 : vector<8x256xf32>
    %c104_329 = arith.constant 104 : index
    %c0_330 = arith.constant 0 : index
    %732 = vector.load %arg8[%c104_329, %c0_330] : memref<162x256xf32, #tpu.memory_space<vmem>>, vector<1x256xf32>
    %733 = vector.broadcast %732 : vector<1x256xf32> to vector<8x256xf32>
    %734 = arith.mulf %719, %733 : vector<8x256xf32>
    %735 = arith.addf %708, %734 : vector<8x256xf32>
    %c131 = arith.constant 131 : index
    %c0_331 = arith.constant 0 : index
    %736 = vector.load %arg8[%c131, %c0_331] : memref<162x256xf32, #tpu.memory_space<vmem>>, vector<1x256xf32>
    %737 = vector.broadcast %736 : vector<1x256xf32> to vector<8x256xf32>
    %738 = arith.mulf %719, %737 : vector<8x256xf32>
    %739 = arith.addf %712, %738 : vector<8x256xf32>
    %c158 = arith.constant 158 : index
    %c0_332 = arith.constant 0 : index
    %740 = vector.load %arg8[%c158, %c0_332] : memref<162x256xf32, #tpu.memory_space<vmem>>, vector<1x256xf32>
    %741 = vector.broadcast %740 : vector<1x256xf32> to vector<8x256xf32>
    %742 = arith.mulf %719, %741 : vector<8x256xf32>
    %743 = arith.addf %716, %742 : vector<8x256xf32>
    %c184_333 = arith.constant 184 : index
    %c0_334 = arith.constant 0 : index
    %744 = vector.load %arg14[%c184_333, %c0_334] : memref<208x256xf32, #tpu.memory_space<vmem>>, vector<8x256xf32>
    %c192 = arith.constant 192 : index
    %c0_335 = arith.constant 0 : index
    %745 = vector.load %arg14[%c192, %c0_335] : memref<208x256xf32, #tpu.memory_space<vmem>>, vector<8x256xf32>
    %746 = arith.maximumf %744, %745 : vector<8x256xf32>
    %c24_336 = arith.constant 24 : index
    %c0_337 = arith.constant 0 : index
    %747 = vector.load %arg8[%c24_336, %c0_337] : memref<162x256xf32, #tpu.memory_space<vmem>>, vector<1x256xf32>
    %748 = vector.broadcast %747 : vector<1x256xf32> to vector<8x256xf32>
    %749 = arith.mulf %746, %748 : vector<8x256xf32>
    %750 = arith.addf %723, %749 : vector<8x256xf32>
    %c51 = arith.constant 51 : index
    %c0_338 = arith.constant 0 : index
    %751 = vector.load %arg8[%c51, %c0_338] : memref<162x256xf32, #tpu.memory_space<vmem>>, vector<1x256xf32>
    %752 = vector.broadcast %751 : vector<1x256xf32> to vector<8x256xf32>
    %753 = arith.mulf %746, %752 : vector<8x256xf32>
    %754 = arith.addf %727, %753 : vector<8x256xf32>
    %c78 = arith.constant 78 : index
    %c0_339 = arith.constant 0 : index
    %755 = vector.load %arg8[%c78, %c0_339] : memref<162x256xf32, #tpu.memory_space<vmem>>, vector<1x256xf32>
    %756 = vector.broadcast %755 : vector<1x256xf32> to vector<8x256xf32>
    %757 = arith.mulf %746, %756 : vector<8x256xf32>
    %758 = arith.addf %731, %757 : vector<8x256xf32>
    %c105 = arith.constant 105 : index
    %c0_340 = arith.constant 0 : index
    %759 = vector.load %arg8[%c105, %c0_340] : memref<162x256xf32, #tpu.memory_space<vmem>>, vector<1x256xf32>
    %760 = vector.broadcast %759 : vector<1x256xf32> to vector<8x256xf32>
    %761 = arith.mulf %746, %760 : vector<8x256xf32>
    %762 = arith.addf %735, %761 : vector<8x256xf32>
    %c132 = arith.constant 132 : index
    %c0_341 = arith.constant 0 : index
    %763 = vector.load %arg8[%c132, %c0_341] : memref<162x256xf32, #tpu.memory_space<vmem>>, vector<1x256xf32>
    %764 = vector.broadcast %763 : vector<1x256xf32> to vector<8x256xf32>
    %765 = arith.mulf %746, %764 : vector<8x256xf32>
    %766 = arith.addf %739, %765 : vector<8x256xf32>
    %c159 = arith.constant 159 : index
    %c0_342 = arith.constant 0 : index
    %767 = vector.load %arg8[%c159, %c0_342] : memref<162x256xf32, #tpu.memory_space<vmem>>, vector<1x256xf32>
    %768 = vector.broadcast %767 : vector<1x256xf32> to vector<8x256xf32>
    %769 = arith.mulf %746, %768 : vector<8x256xf32>
    %770 = arith.addf %743, %769 : vector<8x256xf32>
    %c192_343 = arith.constant 192 : index
    %c0_344 = arith.constant 0 : index
    %771 = vector.load %arg14[%c192_343, %c0_344] : memref<208x256xf32, #tpu.memory_space<vmem>>, vector<8x256xf32>
    %c200_345 = arith.constant 200 : index
    %c0_346 = arith.constant 0 : index
    %772 = vector.load %arg14[%c200_345, %c0_346] : memref<208x256xf32, #tpu.memory_space<vmem>>, vector<8x256xf32>
    %773 = arith.maximumf %771, %772 : vector<8x256xf32>
    %c25 = arith.constant 25 : index
    %c0_347 = arith.constant 0 : index
    %774 = vector.load %arg8[%c25, %c0_347] : memref<162x256xf32, #tpu.memory_space<vmem>>, vector<1x256xf32>
    %775 = vector.broadcast %774 : vector<1x256xf32> to vector<8x256xf32>
    %776 = arith.mulf %773, %775 : vector<8x256xf32>
    %777 = arith.addf %750, %776 : vector<8x256xf32>
    %c52 = arith.constant 52 : index
    %c0_348 = arith.constant 0 : index
    %778 = vector.load %arg8[%c52, %c0_348] : memref<162x256xf32, #tpu.memory_space<vmem>>, vector<1x256xf32>
    %779 = vector.broadcast %778 : vector<1x256xf32> to vector<8x256xf32>
    %780 = arith.mulf %773, %779 : vector<8x256xf32>
    %781 = arith.addf %754, %780 : vector<8x256xf32>
    %c79 = arith.constant 79 : index
    %c0_349 = arith.constant 0 : index
    %782 = vector.load %arg8[%c79, %c0_349] : memref<162x256xf32, #tpu.memory_space<vmem>>, vector<1x256xf32>
    %783 = vector.broadcast %782 : vector<1x256xf32> to vector<8x256xf32>
    %784 = arith.mulf %773, %783 : vector<8x256xf32>
    %785 = arith.addf %758, %784 : vector<8x256xf32>
    %c106 = arith.constant 106 : index
    %c0_350 = arith.constant 0 : index
    %786 = vector.load %arg8[%c106, %c0_350] : memref<162x256xf32, #tpu.memory_space<vmem>>, vector<1x256xf32>
    %787 = vector.broadcast %786 : vector<1x256xf32> to vector<8x256xf32>
    %788 = arith.mulf %773, %787 : vector<8x256xf32>
    %789 = arith.addf %762, %788 : vector<8x256xf32>
    %c133 = arith.constant 133 : index
    %c0_351 = arith.constant 0 : index
    %790 = vector.load %arg8[%c133, %c0_351] : memref<162x256xf32, #tpu.memory_space<vmem>>, vector<1x256xf32>
    %791 = vector.broadcast %790 : vector<1x256xf32> to vector<8x256xf32>
    %792 = arith.mulf %773, %791 : vector<8x256xf32>
    %793 = arith.addf %766, %792 : vector<8x256xf32>
    %c160_352 = arith.constant 160 : index
    %c0_353 = arith.constant 0 : index
    %794 = vector.load %arg8[%c160_352, %c0_353] : memref<162x256xf32, #tpu.memory_space<vmem>>, vector<1x256xf32>
    %795 = vector.broadcast %794 : vector<1x256xf32> to vector<8x256xf32>
    %796 = arith.mulf %773, %795 : vector<8x256xf32>
    %797 = arith.addf %770, %796 : vector<8x256xf32>
    %c200_354 = arith.constant 200 : index
    %c0_355 = arith.constant 0 : index
    %798 = vector.load %arg14[%c200_354, %c0_355] : memref<208x256xf32, #tpu.memory_space<vmem>>, vector<8x256xf32>
    %c26 = arith.constant 26 : index
    %c0_356 = arith.constant 0 : index
    %799 = vector.load %arg8[%c26, %c0_356] : memref<162x256xf32, #tpu.memory_space<vmem>>, vector<1x256xf32>
    %800 = vector.broadcast %799 : vector<1x256xf32> to vector<8x256xf32>
    %801 = arith.mulf %798, %800 : vector<8x256xf32>
    %802 = arith.addf %777, %801 : vector<8x256xf32>
    %c53 = arith.constant 53 : index
    %c0_357 = arith.constant 0 : index
    %803 = vector.load %arg8[%c53, %c0_357] : memref<162x256xf32, #tpu.memory_space<vmem>>, vector<1x256xf32>
    %804 = vector.broadcast %803 : vector<1x256xf32> to vector<8x256xf32>
    %805 = arith.mulf %798, %804 : vector<8x256xf32>
    %806 = arith.addf %781, %805 : vector<8x256xf32>
    %c80_358 = arith.constant 80 : index
    %c0_359 = arith.constant 0 : index
    %807 = vector.load %arg8[%c80_358, %c0_359] : memref<162x256xf32, #tpu.memory_space<vmem>>, vector<1x256xf32>
    %808 = vector.broadcast %807 : vector<1x256xf32> to vector<8x256xf32>
    %809 = arith.mulf %798, %808 : vector<8x256xf32>
    %810 = arith.addf %785, %809 : vector<8x256xf32>
    %c107 = arith.constant 107 : index
    %c0_360 = arith.constant 0 : index
    %811 = vector.load %arg8[%c107, %c0_360] : memref<162x256xf32, #tpu.memory_space<vmem>>, vector<1x256xf32>
    %812 = vector.broadcast %811 : vector<1x256xf32> to vector<8x256xf32>
    %813 = arith.mulf %798, %812 : vector<8x256xf32>
    %814 = arith.addf %789, %813 : vector<8x256xf32>
    %c134 = arith.constant 134 : index
    %c0_361 = arith.constant 0 : index
    %815 = vector.load %arg8[%c134, %c0_361] : memref<162x256xf32, #tpu.memory_space<vmem>>, vector<1x256xf32>
    %816 = vector.broadcast %815 : vector<1x256xf32> to vector<8x256xf32>
    %817 = arith.mulf %798, %816 : vector<8x256xf32>
    %818 = arith.addf %793, %817 : vector<8x256xf32>
    %c161 = arith.constant 161 : index
    %c0_362 = arith.constant 0 : index
    %819 = vector.load %arg8[%c161, %c0_362] : memref<162x256xf32, #tpu.memory_space<vmem>>, vector<1x256xf32>
    %820 = vector.broadcast %819 : vector<1x256xf32> to vector<8x256xf32>
    %821 = arith.mulf %798, %820 : vector<8x256xf32>
    %822 = arith.addf %797, %821 : vector<8x256xf32>
    %823 = tpu.iota {dimensions = array<i32: 1>} : vector<8x128xi32>
    %cst_363 = arith.constant 0.000000e+00 : f32
    %824 = vector.broadcast %cst_363 : f32 to vector<8x128xf32>
    %cst_364 = arith.constant dense<0.000000e+00> : vector<8xf32>
    %825 = vector.multi_reduction <add>, %802, %cst_364 [1] : vector<8x256xf32> to vector<8xf32>
    %826 = vector.shape_cast %825 : vector<8xf32> to vector<8x1xf32>
    %c0_i32 = arith.constant 0 : i32
    %827 = vector.broadcast %c0_i32 : i32 to vector<8x128xi32>
    %828 = arith.cmpi eq, %823, %827 : vector<8x128xi32>
    %829 = vector.shape_cast %826 : vector<8x1xf32> to vector<8x1xf32>
    %830 = vector.broadcast %829 : vector<8x1xf32> to vector<8x128xf32>
    %831 = arith.select %828, %830, %824 : vector<8x128xi1>, vector<8x128xf32>
    %cst_365 = arith.constant dense<0.000000e+00> : vector<8xf32>
    %832 = vector.multi_reduction <add>, %806, %cst_365 [1] : vector<8x256xf32> to vector<8xf32>
    %833 = vector.shape_cast %832 : vector<8xf32> to vector<8x1xf32>
    %c1_i32 = arith.constant 1 : i32
    %834 = vector.broadcast %c1_i32 : i32 to vector<8x128xi32>
    %835 = arith.cmpi eq, %823, %834 : vector<8x128xi32>
    %836 = vector.shape_cast %833 : vector<8x1xf32> to vector<8x1xf32>
    %837 = vector.broadcast %836 : vector<8x1xf32> to vector<8x128xf32>
    %838 = arith.select %835, %837, %831 : vector<8x128xi1>, vector<8x128xf32>
    %cst_366 = arith.constant dense<0.000000e+00> : vector<8xf32>
    %839 = vector.multi_reduction <add>, %810, %cst_366 [1] : vector<8x256xf32> to vector<8xf32>
    %840 = vector.shape_cast %839 : vector<8xf32> to vector<8x1xf32>
    %c2_i32 = arith.constant 2 : i32
    %841 = vector.broadcast %c2_i32 : i32 to vector<8x128xi32>
    %842 = arith.cmpi eq, %823, %841 : vector<8x128xi32>
    %843 = vector.shape_cast %840 : vector<8x1xf32> to vector<8x1xf32>
    %844 = vector.broadcast %843 : vector<8x1xf32> to vector<8x128xf32>
    %845 = arith.select %842, %844, %838 : vector<8x128xi1>, vector<8x128xf32>
    %cst_367 = arith.constant dense<0.000000e+00> : vector<8xf32>
    %846 = vector.multi_reduction <add>, %814, %cst_367 [1] : vector<8x256xf32> to vector<8xf32>
    %847 = vector.shape_cast %846 : vector<8xf32> to vector<8x1xf32>
    %c3_i32 = arith.constant 3 : i32
    %848 = vector.broadcast %c3_i32 : i32 to vector<8x128xi32>
    %849 = arith.cmpi eq, %823, %848 : vector<8x128xi32>
    %850 = vector.shape_cast %847 : vector<8x1xf32> to vector<8x1xf32>
    %851 = vector.broadcast %850 : vector<8x1xf32> to vector<8x128xf32>
    %852 = arith.select %849, %851, %845 : vector<8x128xi1>, vector<8x128xf32>
    %cst_368 = arith.constant dense<0.000000e+00> : vector<8xf32>
    %853 = vector.multi_reduction <add>, %818, %cst_368 [1] : vector<8x256xf32> to vector<8xf32>
    %854 = vector.shape_cast %853 : vector<8xf32> to vector<8x1xf32>
    %c4_i32 = arith.constant 4 : i32
    %855 = vector.broadcast %c4_i32 : i32 to vector<8x128xi32>
    %856 = arith.cmpi eq, %823, %855 : vector<8x128xi32>
    %857 = vector.shape_cast %854 : vector<8x1xf32> to vector<8x1xf32>
    %858 = vector.broadcast %857 : vector<8x1xf32> to vector<8x128xf32>
    %859 = arith.select %856, %858, %852 : vector<8x128xi1>, vector<8x128xf32>
    %cst_369 = arith.constant dense<0.000000e+00> : vector<8xf32>
    %860 = vector.multi_reduction <add>, %822, %cst_369 [1] : vector<8x256xf32> to vector<8xf32>
    %861 = vector.shape_cast %860 : vector<8xf32> to vector<8x1xf32>
    %c5_i32 = arith.constant 5 : i32
    %862 = vector.broadcast %c5_i32 : i32 to vector<8x128xi32>
    %863 = arith.cmpi eq, %823, %862 : vector<8x128xi32>
    %864 = vector.shape_cast %861 : vector<8x1xf32> to vector<8x1xf32>
    %865 = vector.broadcast %864 : vector<8x1xf32> to vector<8x128xf32>
    %866 = arith.select %863, %865, %859 : vector<8x128xi1>, vector<8x128xf32>
    %c0_370 = arith.constant 0 : index
    %c0_371 = arith.constant 0 : index
    %867 = vector.load %arg9[%c0_370, %c0_371] : memref<1x128xf32, #tpu.memory_space<vmem>>, vector<1x128xf32>
    %868 = vector.broadcast %867 : vector<1x128xf32> to vector<8x128xf32>
    %869 = arith.addf %866, %868 : vector<8x128xf32>
    %c0_372 = arith.constant 0 : index
    %c0_373 = arith.constant 0 : index
    %870 = vector.load %arg10[%c0_372, %c0_373] : memref<8x128xf32, #tpu.memory_space<vmem>>, vector<8x128xf32>
    tpu.vector_store %arg10[%c0_372, %c0_373], %869 {strides = array<i32>} : memref<8x128xf32, #tpu.memory_space<vmem>>, vector<8x128xf32>,
    return
  }
  func.func @transform_0(%arg0: i32) -> (i32, i32) {
    %c0_i32 = arith.constant 0 : i32
    %c0_i32_0 = arith.constant 0 : i32
    return %arg0, %c0_i32 : i32, i32
  }
  func.func @transform_1(%arg0: i32) -> (i32, i32) {
    %c0_i32 = arith.constant 0 : i32
    %c0_i32_0 = arith.constant 0 : i32
    %c0_i32_1 = arith.constant 0 : i32
    return %c0_i32, %c0_i32_0 : i32, i32
  }
  func.func @transform_2(%arg0: i32) -> (i32, i32) {
    %c0_i32 = arith.constant 0 : i32
    %c0_i32_0 = arith.constant 0 : i32
    %c0_i32_1 = arith.constant 0 : i32
    return %c0_i32, %c0_i32_0 : i32, i32
  }
  func.func @transform_3(%arg0: i32) -> (i32, i32, i32) {
    %c0_i32 = arith.constant 0 : i32
    %c0_i32_0 = arith.constant 0 : i32
    %c0_i32_1 = arith.constant 0 : i32
    %c0_i32_2 = arith.constant 0 : i32
    return %c0_i32, %c0_i32_0, %c0_i32_1 : i32, i32, i32
  }
  func.func @transform_4(%arg0: i32) -> (i32, i32) {
    %c0_i32 = arith.constant 0 : i32
    %c0_i32_0 = arith.constant 0 : i32
    %c0_i32_1 = arith.constant 0 : i32
    return %c0_i32, %c0_i32_0 : i32, i32
  }
  func.func @transform_5(%arg0: i32) -> (i32, i32, i32) {
    %c0_i32 = arith.constant 0 : i32
    %c0_i32_0 = arith.constant 0 : i32
    %c0_i32_1 = arith.constant 0 : i32
    %c0_i32_2 = arith.constant 0 : i32
    return %c0_i32, %c0_i32_0, %c0_i32_1 : i32, i32, i32
  }
  func.func @transform_6(%arg0: i32) -> (i32, i32) {
    %c0_i32 = arith.constant 0 : i32
    %c0_i32_0 = arith.constant 0 : i32
    %c0_i32_1 = arith.constant 0 : i32
    return %c0_i32, %c0_i32_0 : i32, i32
  }
  func.func @transform_7(%arg0: i32) -> (i32, i32) {
    %c0_i32 = arith.constant 0 : i32
    %c0_i32_0 = arith.constant 0 : i32
    %c0_i32_1 = arith.constant 0 : i32
    return %c0_i32, %c0_i32_0 : i32, i32
  }
  func.func @transform_8(%arg0: i32) -> (i32, i32) {
    %c0_i32 = arith.constant 0 : i32
    %c0_i32_0 = arith.constant 0 : i32
    %c0_i32_1 = arith.constant 0 : i32
    return %c0_i32, %c0_i32_0 : i32, i32
  }
  func.func @transform_9(%arg0: i32) -> (i32, i32) {
    %c0_i32 = arith.constant 0 : i32
    %c0_i32_0 = arith.constant 0 : i32
    return %arg0, %c0_i32 : i32, i32
  }
}

</mosaic_0001>

<llo_original>
// kernel: _lambda_.1
$region0: #{_lambda_.1}
  #allocation0 [shape = 'u32[]', space=smem, size = 0x4, offset = 0x4, fixed_abs, tag = 'smem constant byte address 0x4 - core index']
  #allocation1 [shape = 'u32[144,128]{1,0:T(1,128)}', space=vmem, size = 0x12000, scoped, tag = 'internal scratch']
  #allocation2 [shape = 'f32[808,128]{1,0:T(8,128)}', space=vmem, size = 0x65000, scoped, tag = 'scratch operand']
  #allocation3 [shape = 'f32[200,128]{1,0:T(8,128)}', space=vmem, size = 0x19000, scoped, tag = 'scratch operand']
  #allocation4 [shape = 'f32[424,128]{1,0:T(8,128)}', space=vmem, size = 0x35000, scoped, tag = 'scratch operand']
  #allocation5 [shape = 'f32[208,256]{1,0:T(8,128)}', space=vmem, size = 0x34000, scoped, tag = 'scratch operand']
  %s0 = inlined_call_operand.vmem [shape: f32[1600,18], index: 0, kind: input, shape index: {}]
  %s1 = inlined_call_operand.vmem [shape: f32[18,128], index: 1, kind: input, shape index: {}]
  %s2 = inlined_call_operand.vmem [shape: f32[1,128], index: 2, kind: input, shape index: {}]
  %s3 = inlined_call_operand.vmem [shape: f32[3,128,128], index: 3, kind: input, shape index: {}]
  %s4 = inlined_call_operand.vmem [shape: f32[1,128], index: 4, kind: input, shape index: {}]
  %s5 = inlined_call_operand.vmem [shape: f32[3,128,256], index: 5, kind: input, shape index: {}]
  %s6 = inlined_call_operand.vmem [shape: f32[1,256], index: 6, kind: input, shape index: {}]
  %s7 = inlined_call_operand.vmem [shape: f32[162,256], index: 7, kind: input, shape index: {}]
  %s8 = inlined_call_operand.vmem [shape: f32[1,128], index: 8, kind: input, shape index: {}]
  %s9 = inlined_call_operand.vmem [shape: f32[16,128], index: 9, kind: output, shape index: {}]
  %s10 = sld [smem:[#allocation0]]
  $region69: #{_lambda_.1} parent=0
    _
  %s12 = ssub.s32 1, %s10
  %s13 = scalar_select 0, %s12, %s10
  loop: start=0, step=1, limit=4
  $region2: #{_lambda_.1} parent=0 // loop_pre_header
    _
  $region3: #{_lambda_.1} parent=0 // loop_header
    %s15 = sphi 0, %s19
    %p16 = scmp.ge.s32.totalorder %s15, 4
    %s25 = sphi 0, %s27
    %s28 = sphi 0, %s25
    %s29 = sphi 0, %s28
    %s45 = sphi 0, %s29
    %s49 = sphi 0, %s49
    %s51 = sphi 0, %s49
    %s52 = sphi 0, %s51
    %s66 = sphi 0, %s52
    %s70 = sphi 0, %s70
    %s72 = sphi 0, %s70
    %s73 = sphi 0, %s72
    %s87 = sphi 0, %s73
    %s91 = sphi 0, %s91
    %s93 = sphi 0, %s91
    %s94 = sphi 0, %s93
    %s108 = sphi 0, %s94
    %s112 = sphi 0, %s112
    %s114 = sphi 0, %s112
    %s115 = sphi 0, %s114
    %s129 = sphi 0, %s115
    %s133 = sphi 0, %s133
    %s135 = sphi 0, %s133
    %s136 = sphi 0, %s135
    %s150 = sphi 0, %s136
    %s154 = sphi 0, %s154
    %s156 = sphi 0, %s154
    %s157 = sphi 0, %s156
    %s171 = sphi 0, %s157
    %s175 = sphi 0, %s175
    %s177 = sphi 0, %s175
    %s178 = sphi 0, %s177
    %s192 = sphi 0, %s178
    %s196 = sphi 0, %s196
    %s198 = sphi 0, %s196
    %s199 = sphi 0, %s198
    %s213 = sphi 0, %s199
    %s219 = sphi 0, %s221
    %s222 = sphi 0, %s219
    %s223 = sphi 0, %s222
    %s239 = sphi 0, %s223
  $region4: #{_lambda_.1} parent=0 // loop_header_branch
    %18 = sbr.rel (%p16) target = $region8
  $region5: #{_lambda_.1} parent=0 // loop_body
    %s20 = ssub.s32 %s15, 1
    %s21 = ssub.s32 %s15, 2
    %s22 = sadd.s32 %s15, 1
    %s23 = ssub.s32 %s15, %s22
    %p24 = scmp.eq.s32.totalorder %s23, 0
    %s26 = sadd.s32 %s25, 1
    %s27 = scalar_select %p24, %s25, %s26
    %p30 = pneg %p24
    %p31 = scmp.eq.s32.totalorder %s15, 1
    %p32 = por %p30, %p31
    %p33 = scmp.ne.s32.totalorder %s25, %s28
    %p34 = scmp.eq.s32.totalorder %s15, 0
    %p35 = por %p33, %p34
    %p36 = scmp.ne.s32.totalorder %s25, %s28
    %p37 = scmp.eq.s32.totalorder %s20, 1
    %p38 = por %p36, %p37
    %p39 = scmp.ne.s32.totalorder %s28, %s29
    %p40 = scmp.eq.s32.totalorder %s20, 0
    %p41 = por %p39, %p40
    %p42 = scmp.ne.s32.totalorder %s28, %s29
    %p43 = scmp.eq.s32.totalorder %s21, 1
    %p44 = por %p42, %p43
    %p46 = scmp.ne.s32.totalorder %s29, %s45
    %p47 = scmp.eq.s32.totalorder %s21, 0
    %p48 = por %p46, %p47
    %s50 = sadd.s32 %s49, 1
    %p53 = scmp.eq.s32.totalorder %s15, 1
    %p54 = scmp.ne.s32.totalorder %s49, %s51
    %p55 = scmp.eq.s32.totalorder %s15, 0
    %p56 = por %p54, %p55
    %p57 = scmp.ne.s32.totalorder %s49, %s51
    %p58 = scmp.eq.s32.totalorder %s20, 1
    %p59 = por %p57, %p58
    %p60 = scmp.ne.s32.totalorder %s51, %s52
    %p61 = scmp.eq.s32.totalorder %s20, 0
    %p62 = por %p60, %p61
    %p63 = scmp.ne.s32.totalorder %s51, %s52
    %p64 = scmp.eq.s32.totalorder %s21, 1
    %p65 = por %p63, %p64
    %p67 = scmp.ne.s32.totalorder %s52, %s66
    %p68 = scmp.eq.s32.totalorder %s21, 0
    %p69 = por %p67, %p68
    %s71 = sadd.s32 %s70, 1
    %p74 = scmp.eq.s32.totalorder %s15, 1
    %p75 = scmp.ne.s32.totalorder %s70, %s72
    %p76 = scmp.eq.s32.totalorder %s15, 0
    %p77 = por %p75, %p76
    %p78 = scmp.ne.s32.totalorder %s70, %s72
    %p79 = scmp.eq.s32.totalorder %s20, 1
    %p80 = por %p78, %p79
    %p81 = scmp.ne.s32.totalorder %s72, %s73
    %p82 = scmp.eq.s32.totalorder %s20, 0
    %p83 = por %p81, %p82
    %p84 = scmp.ne.s32.totalorder %s72, %s73
    %p85 = scmp.eq.s32.totalorder %s21, 1
    %p86 = por %p84, %p85
    %p88 = scmp.ne.s32.totalorder %s73, %s87
    %p89 = scmp.eq.s32.totalorder %s21, 0
    %p90 = por %p88, %p89
    %s92 = sadd.s32 %s91, 1
    %p95 = scmp.eq.s32.totalorder %s15, 1
    %p96 = scmp.ne.s32.totalorder %s91, %s93
    %p97 = scmp.eq.s32.totalorder %s15, 0
    %p98 = por %p96, %p97
    %p99 = scmp.ne.s32.totalorder %s91, %s93
    %p100 = scmp.eq.s32.totalorder %s20, 1
    %p101 = por %p99, %p100
    %p102 = scmp.ne.s32.totalorder %s93, %s94
    %p103 = scmp.eq.s32.totalorder %s20, 0
    %p104 = por %p102, %p103
    %p105 = scmp.ne.s32.totalorder %s93, %s94
    %p106 = scmp.eq.s32.totalorder %s21, 1
    %p107 = por %p105, %p106
    %p109 = scmp.ne.s32.totalorder %s94, %s108
    %p110 = scmp.eq.s32.totalorder %s21, 0
    %p111 = por %p109, %p110
    %s113 = sadd.s32 %s112, 1
    %p116 = scmp.eq.s32.totalorder %s15, 1
    %p117 = scmp.ne.s32.totalorder %s112, %s114
    %p118 = scmp.eq.s32.totalorder %s15, 0
    %p119 = por %p117, %p118
    %p120 = scmp.ne.s32.totalorder %s112, %s114
    %p121 = scmp.eq.s32.totalorder %s20, 1
    %p122 = por %p120, %p121
    %p123 = scmp.ne.s32.totalorder %s114, %s115
    %p124 = scmp.eq.s32.totalorder %s20, 0
    %p125 = por %p123, %p124
    %p126 = scmp.ne.s32.totalorder %s114, %s115
    %p127 = scmp.eq.s32.totalorder %s21, 1
    %p128 = por %p126, %p127
    %p130 = scmp.ne.s32.totalorder %s115, %s129
    %p131 = scmp.eq.s32.totalorder %s21, 0
    %p132 = por %p130, %p131
    %s134 = sadd.s32 %s133, 1
    %p137 = scmp.eq.s32.totalorder %s15, 1
    %p138 = scmp.ne.s32.totalorder %s133, %s135
    %p139 = scmp.eq.s32.totalorder %s15, 0
    %p140 = por %p138, %p139
    %p141 = scmp.ne.s32.totalorder %s133, %s135
    %p142 = scmp.eq.s32.totalorder %s20, 1
    %p143 = por %p141, %p142
    %p144 = scmp.ne.s32.totalorder %s135, %s136
    %p145 = scmp.eq.s32.totalorder %s20, 0
    %p146 = por %p144, %p145
    %p147 = scmp.ne.s32.totalorder %s135, %s136
    %p148 = scmp.eq.s32.totalorder %s21, 1
    %p149 = por %p147, %p148
    %p151 = scmp.ne.s32.totalorder %s136, %s150
    %p152 = scmp.eq.s32.totalorder %s21, 0
    %p153 = por %p151, %p152
    %s155 = sadd.s32 %s154, 1
    %p158 = scmp.eq.s32.totalorder %s15, 1
    %p159 = scmp.ne.s32.totalorder %s154, %s156
    %p160 = scmp.eq.s32.totalorder %s15, 0
    %p161 = por %p159, %p160
    %p162 = scmp.ne.s32.totalorder %s154, %s156
    %p163 = scmp.eq.s32.totalorder %s20, 1
    %p164 = por %p162, %p163
    %p165 = scmp.ne.s32.totalorder %s156, %s157
    %p166 = scmp.eq.s32.totalorder %s20, 0
    %p167 = por %p165, %p166
    %p168 = scmp.ne.s32.totalorder %s156, %s157
    %p169 = scmp.eq.s32.totalorder %s21, 1
    %p170 = por %p168, %p169
    %p172 = scmp.ne.s32.totalorder %s157, %s171
    %p173 = scmp.eq.s32.totalorder %s21, 0
    %p174 = por %p172, %p173
    %s176 = sadd.s32 %s175, 1
    %p179 = scmp.eq.s32.totalorder %s15, 1
    %p180 = scmp.ne.s32.totalorder %s175, %s177
    %p181 = scmp.eq.s32.totalorder %s15, 0
    %p182 = por %p180, %p181
    %p183 = scmp.ne.s32.totalorder %s175, %s177
    %p184 = scmp.eq.s32.totalorder %s20, 1
    %p185 = por %p183, %p184
    %p186 = scmp.ne.s32.totalorder %s177, %s178
    %p187 = scmp.eq.s32.totalorder %s20, 0
    %p188 = por %p186, %p187
    %p189 = scmp.ne.s32.totalorder %s177, %s178
    %p190 = scmp.eq.s32.totalorder %s21, 1
    %p191 = por %p189, %p190
    %p193 = scmp.ne.s32.totalorder %s178, %s192
    %p194 = scmp.eq.s32.totalorder %s21, 0
    %p195 = por %p193, %p194
    %s197 = sadd.s32 %s196, 1
    %p200 = scmp.eq.s32.totalorder %s15, 1
    %p201 = scmp.ne.s32.totalorder %s196, %s198
    %p202 = scmp.eq.s32.totalorder %s15, 0
    %p203 = por %p201, %p202
    %p204 = scmp.ne.s32.totalorder %s196, %s198
    %p205 = scmp.eq.s32.totalorder %s20, 1
    %p206 = por %p204, %p205
    %p207 = scmp.ne.s32.totalorder %s198, %s199
    %p208 = scmp.eq.s32.totalorder %s20, 0
    %p209 = por %p207, %p208
    %p210 = scmp.ne.s32.totalorder %s198, %s199
    %p211 = scmp.eq.s32.totalorder %s21, 1
    %p212 = por %p210, %p211
    %p214 = scmp.ne.s32.totalorder %s199, %s213
    %p215 = scmp.eq.s32.totalorder %s21, 0
    %p216 = por %p214, %p215
    %s217 = ssub.s32 %s15, %s22
    %p218 = scmp.eq.s32.totalorder %s217, 0
    %s220 = sadd.s32 %s219, 1
    %s221 = scalar_select %p218, %s219, %s220
    %p224 = pneg %p218
    %p225 = scmp.eq.s32.totalorder %s15, 1
    %p226 = por %p224, %p225
    %p227 = scmp.ne.s32.totalorder %s219, %s222
    %p228 = scmp.eq.s32.totalorder %s15, 0
    %p229 = por %p227, %p228
    %p230 = scmp.ne.s32.totalorder %s219, %s222
    %p231 = scmp.eq.s32.totalorder %s20, 1
    %p232 = por %p230, %p231
    %p233 = scmp.ne.s32.totalorder %s222, %s223
    %p234 = scmp.eq.s32.totalorder %s20, 0
    %p235 = por %p233, %p234
    %p236 = scmp.ne.s32.totalorder %s222, %s223
    %p237 = scmp.eq.s32.totalorder %s21, 1
    %p238 = por %p236, %p237
    %p240 = scmp.ne.s32.totalorder %s223, %s239
    %p241 = scmp.eq.s32.totalorder %s21, 0
    %p242 = por %p240, %p241
    %p243 = scmp.le.s32.totalorder 1, %s15
    %p244 = scmp.lt.s32.totalorder %s15, 3
    %p245 = pnand %p243, %p244
    %p246 = pneg %p245
    // Predicated region
    $region9: #{_lambda_.1} parent=5 // pred_check
      _
    $region10: #{_lambda_.1} parent=5 // pred_check_branch
      %248 = sbr.rel (%p245) target = $region12
    $region11: #{_lambda_.1} parent=5 // pred_region
      %s249 = ssub.s32 %s15, 1
      // Predicated region
      $region13: #{_lambda_.1} parent=11 // pred_check
        %p250 = pneg %p62
      $region14: #{_lambda_.1} parent=11 // pred_check_branch
        %252 = sbr.rel (%p250) target = $region16
      $region15: #{_lambda_.1} parent=11 // pred_region
        _
      $region16: #{_lambda_.1} parent=11 // pred_fallthru
        _
      // Predicated region
      $region17: #{_lambda_.1} parent=11 // pred_check
        %p253 = pneg %p83
      $region18: #{_lambda_.1} parent=11 // pred_check_branch
        %255 = sbr.rel (%p253) target = $region20
      $region19: #{_lambda_.1} parent=11 // pred_region
        _
      $region20: #{_lambda_.1} parent=11 // pred_fallthru
        _
      // Predicated region
      $region21: #{_lambda_.1} parent=11 // pred_check
        %p256 = pneg %p104
      $region22: #{_lambda_.1} parent=11 // pred_check_branch
        %258 = sbr.rel (%p256) target = $region24
      $region23: #{_lambda_.1} parent=11 // pred_region
        _
      $region24: #{_lambda_.1} parent=11 // pred_fallthru
        _
      // Predicated region
      $region25: #{_lambda_.1} parent=11 // pred_check
        %p259 = pneg %p125
      $region26: #{_lambda_.1} parent=11 // pred_check_branch
        %261 = sbr.rel (%p259) target = $region28
      $region27: #{_lambda_.1} parent=11 // pred_region
        _
      $region28: #{_lambda_.1} parent=11 // pred_fallthru
        _
      // Predicated region
      $region29: #{_lambda_.1} parent=11 // pred_check
        %p262 = pneg %p146
      $region30: #{_lambda_.1} parent=11 // pred_check_branch
        %264 = sbr.rel (%p262) target = $region32
      $region31: #{_lambda_.1} parent=11 // pred_region
        _
      $region32: #{_lambda_.1} parent=11 // pred_fallthru
        _
      // Predicated region
      $region33: #{_lambda_.1} parent=11 // pred_check
        %p265 = pneg %p167
      $region34: #{_lambda_.1} parent=11 // pred_check_branch
        %267 = sbr.rel (%p265) target = $region36
      $region35: #{_lambda_.1} parent=11 // pred_region
        _
      $region36: #{_lambda_.1} parent=11 // pred_fallthru
        _
      // Predicated region
      $region37: #{_lambda_.1} parent=11 // pred_check
        %p268 = pneg %p188
      $region38: #{_lambda_.1} parent=11 // pred_check_branch
        %270 = sbr.rel (%p268) target = $region40
      $region39: #{_lambda_.1} parent=11 // pred_region
        _
      $region40: #{_lambda_.1} parent=11 // pred_fallthru
        _
      // Predicated region
      $region41: #{_lambda_.1} parent=11 // pred_check
        %p271 = pneg %p209
      $region42: #{_lambda_.1} parent=11 // pred_check_branch
        %273 = sbr.rel (%p271) target = $region44
      $region43: #{_lambda_.1} parent=11 // pred_region
        _
      $region44: #{_lambda_.1} parent=11 // pred_fallthru
        _
    $region12: #{_lambda_.1} parent=5 // pred_fallthru
      _
    %p274 = scmp.lt.s32.totalorder %s15, 2
    // Predicated region
    $region45: #{_lambda_.1} parent=5 // pred_check
      %p275 = pneg %p274
    $region46: #{_lambda_.1} parent=5 // pred_check_branch
      %277 = sbr.rel (%p275) target = $region48
    $region47: #{_lambda_.1} parent=5 // pred_region
      // Predicated region
      $region49: #{_lambda_.1} parent=47 // pred_check
        %p278 = pneg %p35
      $region50: #{_lambda_.1} parent=47 // pred_check_branch
        %280 = sbr.rel (%p278) target = $region52
      $region51: #{_lambda_.1} parent=47 // pred_region
        %s281 = smul.u32 100, %s15
        %p282 = scmp.lt.s32.totalorder %s281, 199
        %s283 = scalar_select %p282, %s281, 199
        %s284 = smul.addr %s283, 8
        %s285 = scalar_lea.vmem %s0, %s284
        %s286 = smul.u32 100, %s15
      $region52: #{_lambda_.1} parent=47 // pred_fallthru
        _
    $region48: #{_lambda_.1} parent=5 // pred_fallthru
      _
    %p287 = scmp.le.s32.totalorder 1, %s15
    %p288 = scmp.lt.s32.totalorder %s15, 3
    %p289 = pnand %p287, %p288
    %p290 = pneg %p289
    // Predicated region
    $region53: #{_lambda_.1} parent=5 // pred_check
      _
    $region54: #{_lambda_.1} parent=5 // pred_check_branch
      %292 = sbr.rel (%p289) target = $region56
    $region55: #{_lambda_.1} parent=5 // pred_region
      %s293 = ssub.s32 %s15, 1
      %s294 = smul.u32 100, %s20
      %p295 = scmp.lt.s32.totalorder %s294, 199
      %s296 = scalar_select %p295, %s294, 199
      %s297 = smul.addr %s296, 8
      %s298 = scalar_lea.vmem %s0, %s297
      %p299 = pneg %p41
      %p300 = pneg %p38
      %p301 = pneg %p62
      %p302 = pneg %p59
      %p303 = pneg %p83
      %p304 = pneg %p80
      %p305 = pneg %p104
      %p306 = pneg %p101
      %p307 = pneg %p125
      %p308 = pneg %p122
      %p309 = pneg %p146
      %p310 = pneg %p143
      %p311 = pneg %p167
      %p312 = pneg %p164
      %p313 = pneg %p188
      %p314 = pneg %p185
      %p315 = pneg %p209
      %p316 = pneg %p206
      %p317 = pneg %p235
      %p318 = pneg %p232
      %p319 = scmp.lt.s32.totalorder %s20, 1
      %s320 = scalar_select %p319, %s20, 1
      %s321 = smul.addr %s320, 8
      %s322 = scalar_lea.vmem %s9, %s321
      %s323 = smul.u32 100, %s20
      %p324 = scmp.lt.s32.totalorder %s323, 199
      %s325 = scalar_select %p324, %s323, 199
      %s326 = smul.addr %s325, 8
      %s327 = scalar_lea.vmem %s0, %s326
      %s328 = smul.u32 100, %s20
      %p329 = scmp.lt.s32.totalorder %s20, 1
      %s330 = scalar_select %p329, %s20, 1
      %s331 = smul.addr %s330, 8
      %s332 = scalar_lea.vmem %s9, %s331
      %v333 = vld [vmem:[%s327] sm:$0xff]
      %v334 = vld [vmem:[%s327 + $0x8] sm:$0xff]
      %v335 = vld [vmem:[%s327 + $0x10] sm:$0xff]
      %v336 = vld [vmem:[%s327 + $0x18] sm:$0xff]
      %v337 = vld [vmem:[%s327 + $0x20] sm:$0xff]
      %v338 = vld [vmem:[%s327 + $0x28] sm:$0xff]
      %v339 = vld [vmem:[%s327 + $0x30] sm:$0xff]
      %v340 = vld [vmem:[%s327 + $0x38] sm:$0xff]
      %v341 = vld [vmem:[%s327 + $0x40] sm:$0xff]
      %v342 = vld [vmem:[%s327 + $0x48] sm:$0xff]
      %v343 = vld [vmem:[%s327 + $0x50] sm:$0xff]
      %v344 = vld [vmem:[%s327 + $0x58] sm:$0xff]
      %v345 = vld [vmem:[%s327 + $0x60] sm:$0xff]
      %v346 = vld [vmem:[%s327 + $0x68] sm:$0xff]
      %v347 = vld [vmem:[%s327 + $0x70] sm:$0xff]
      %v348 = vld [vmem:[%s327 + $0x78] sm:$0xff]
      %v349 = vld [vmem:[%s327 + $0x80] sm:$0xff]
      %v350 = vld [vmem:[%s327 + $0x88] sm:$0xff]
      %v351 = vld [vmem:[%s327 + $0x90] sm:$0xff]
      %v352 = vld [vmem:[%s327 + $0x98] sm:$0xff]
      %v353 = vld [vmem:[%s327 + $0xa0] sm:$0xff]
      %v354 = vld [vmem:[%s327 + $0xa8] sm:$0xff]
      %v355 = vld [vmem:[%s327 + $0xb0] sm:$0xff]
      %v356 = vld [vmem:[%s327 + $0xb8] sm:$0xff]
      %v357 = vld [vmem:[%s327 + $0xc0] sm:$0xff]
      %v358 = vld [vmem:[%s327 + $0xc8] sm:$0xff]
      %v359 = vld [vmem:[%s327 + $0xd0] sm:$0xff]
      %v360 = vld [vmem:[%s327 + $0xd8] sm:$0xff]
      %v361 = vld [vmem:[%s327 + $0xe0] sm:$0xff]
      %v362 = vld [vmem:[%s327 + $0xe8] sm:$0xff]
      %v363 = vld [vmem:[%s327 + $0xf0] sm:$0xff]
      %v364 = vld [vmem:[%s327 + $0xf8] sm:$0xff]
      %v365 = vld [vmem:[%s327 + $0x100] sm:$0xff]
      %v366 = vld [vmem:[%s327 + $0x108] sm:$0xff]
      %v367 = vld [vmem:[%s327 + $0x110] sm:$0xff]
      %v368 = vld [vmem:[%s327 + $0x118] sm:$0xff]
      %v369 = vld [vmem:[%s327 + $0x120] sm:$0xff]
      %v370 = vld [vmem:[%s327 + $0x128] sm:$0xff]
      %v371 = vld [vmem:[%s327 + $0x130] sm:$0xff]
      %v372 = vld [vmem:[%s327 + $0x138] sm:$0xff]
      %v373 = vld [vmem:[%s327 + $0x140] sm:$0xff]
      %v374 = vld [vmem:[%s327 + $0x148] sm:$0xff]
      %v375 = vld [vmem:[%s327 + $0x150] sm:$0xff]
      %v376 = vld [vmem:[%s327 + $0x158] sm:$0xff]
      %v377 = vld [vmem:[%s327 + $0x160] sm:$0xff]
      %v378 = vld [vmem:[%s327 + $0x168] sm:$0xff]
      %v379 = vld [vmem:[%s327 + $0x170] sm:$0xff]
      %v380 = vld [vmem:[%s327 + $0x178] sm:$0xff]
      %v381 = vld [vmem:[%s327 + $0x180] sm:$0xff]
      %v382 = vld [vmem:[%s327 + $0x188] sm:$0xff]
      %v383 = vld [vmem:[%s327 + $0x190] sm:$0xff]
      %v384 = vld [vmem:[%s327 + $0x198] sm:$0xff]
      %v385 = vld [vmem:[%s327 + $0x1a0] sm:$0xff]
      %v386 = vld [vmem:[%s327 + $0x1a8] sm:$0xff]
      %v387 = vld [vmem:[%s327 + $0x1b0] sm:$0xff]
      %v388 = vld [vmem:[%s327 + $0x1b8] sm:$0xff]
      %v389 = vld [vmem:[%s327 + $0x1c0] sm:$0xff]
      %v390 = vld [vmem:[%s327 + $0x1c8] sm:$0xff]
      %v391 = vld [vmem:[%s327 + $0x1d0] sm:$0xff]
      %v392 = vld [vmem:[%s327 + $0x1d8] sm:$0xff]
      %v393 = vld [vmem:[%s327 + $0x1e0] sm:$0xff]
      %v394 = vld [vmem:[%s327 + $0x1e8] sm:$0xff]
      %v395 = vld [vmem:[%s327 + $0x1f0] sm:$0xff]
      %v396 = vld [vmem:[%s327 + $0x1f8] sm:$0xff]
      %v397 = vld [vmem:[%s327 + $0x200] sm:$0xff]
      %v398 = vld [vmem:[%s327 + $0x208] sm:$0xff]
      %v399 = vld [vmem:[%s327 + $0x210] sm:$0xff]
      %v400 = vld [vmem:[%s327 + $0x218] sm:$0xff]
      %v401 = vld [vmem:[%s327 + $0x220] sm:$0xff]
      %v402 = vld [vmem:[%s327 + $0x228] sm:$0xff]
      %v403 = vld [vmem:[%s327 + $0x230] sm:$0xff]
      %v404 = vld [vmem:[%s327 + $0x238] sm:$0xff]
      %v405 = vld [vmem:[%s327 + $0x240] sm:$0xff]
      %v406 = vld [vmem:[%s327 + $0x248] sm:$0xff]
      %v407 = vld [vmem:[%s327 + $0x250] sm:$0xff]
      %v408 = vld [vmem:[%s327 + $0x258] sm:$0xff]
      %v409 = vld [vmem:[%s327 + $0x260] sm:$0xff]
      %v410 = vld [vmem:[%s327 + $0x268] sm:$0xff]
      %v411 = vld [vmem:[%s327 + $0x270] sm:$0xff]
      %v412 = vld [vmem:[%s327 + $0x278] sm:$0xff]
      %v413 = vld [vmem:[%s327 + $0x280] sm:$0xff]
      %v414 = vld [vmem:[%s327 + $0x288] sm:$0xff]
      %v415 = vld [vmem:[%s327 + $0x290] sm:$0xff]
      %v416 = vld [vmem:[%s327 + $0x298] sm:$0xff]
      %v417 = vld [vmem:[%s327 + $0x2a0] sm:$0xff]
      %v418 = vld [vmem:[%s327 + $0x2a8] sm:$0xff]
      %v419 = vld [vmem:[%s327 + $0x2b0] sm:$0xff]
      %v420 = vld [vmem:[%s327 + $0x2b8] sm:$0xff]
      %v421 = vld [vmem:[%s327 + $0x2c0] sm:$0xff]
      %v422 = vld [vmem:[%s327 + $0x2c8] sm:$0xff]
      %v423 = vld [vmem:[%s327 + $0x2d0] sm:$0xff]
      %v424 = vld [vmem:[%s327 + $0x2d8] sm:$0xff]
      %v425 = vld [vmem:[%s327 + $0x2e0] sm:$0xff]
      %v426 = vld [vmem:[%s327 + $0x2e8] sm:$0xff]
      %v427 = vld [vmem:[%s327 + $0x2f0] sm:$0xff]
      %v428 = vld [vmem:[%s327 + $0x2f8] sm:$0xff]
      %v429 = vld [vmem:[%s327 + $0x300] sm:$0xff]
      %v430 = vld [vmem:[%s327 + $0x308] sm:$0xff]
      %v431 = vld [vmem:[%s327 + $0x310] sm:$0xff]
      %v432 = vld [vmem:[%s327 + $0x318] sm:$0xff]
      %v433 = vld [vmem:[%s1] sm:$0xff]
      %v434 = vld [vmem:[%s1 + $0x8] sm:$0xff]
      %v435 = vld [vmem:[%s1 + $0x10] sm:$0x3]
      %v436 = vld [vmem:[%s2] sm:$0x1]
      %v438 = vlaneseq
      %v439 = vshrl.u32 %v438, 7
      %v440 = vsub.s32 0, %v439
      %v441 = vrot.slane %v436, %v440
      %vm443 = vcmask 146432
      %v445 = vsel %vm443, %v333, 0
      %v448 = vsel %vm443, %v334, 0
      %v451 = vsel %vm443, %v335, 0
      %v454 = vsel %vm443, %v336, 0
      %v457 = vsel %vm443, %v337, 0
      %v460 = vsel %vm443, %v338, 0
      %v463 = vsel %vm443, %v339, 0
      %v466 = vsel %vm443, %v340, 0
      %v469 = vsel %vm443, %v341, 0
      %v472 = vsel %vm443, %v342, 0
      %v475 = vsel %vm443, %v343, 0
      %v478 = vsel %vm443, %v344, 0
      %v481 = vsel %vm443, %v345, 0
      %v484 = vsel %vm443, %v346, 0
      %v487 = vsel %vm443, %v347, 0
      %v490 = vsel %vm443, %v348, 0
      %v493 = vsel %vm443, %v349, 0
      %v496 = vsel %vm443, %v350, 0
      %v499 = vsel %vm443, %v351, 0
      %v502 = vsel %vm443, %v352, 0
      %v505 = vsel %vm443, %v353, 0
      %v508 = vsel %vm443, %v354, 0
      %v511 = vsel %vm443, %v355, 0
      %v514 = vsel %vm443, %v356, 0
      %v517 = vsel %vm443, %v357, 0
      %v520 = vsel %vm443, %v358, 0
      %v523 = vsel %vm443, %v359, 0
      %v526 = vsel %vm443, %v360, 0
      %v529 = vsel %vm443, %v361, 0
      %v532 = vsel %vm443, %v362, 0
      %v535 = vsel %vm443, %v363, 0
      %v538 = vsel %vm443, %v364, 0
      %v541 = vsel %vm443, %v365, 0
      %v544 = vsel %vm443, %v366, 0
      %v547 = vsel %vm443, %v367, 0
      %v550 = vsel %vm443, %v368, 0
      %v553 = vsel %vm443, %v369, 0
      %v556 = vsel %vm443, %v370, 0
      %v559 = vsel %vm443, %v371, 0
      %v562 = vsel %vm443, %v372, 0
      %v565 = vsel %vm443, %v373, 0
      %v568 = vsel %vm443, %v374, 0
      %v571 = vsel %vm443, %v375, 0
      %v574 = vsel %vm443, %v376, 0
      %v577 = vsel %vm443, %v377, 0
      %v580 = vsel %vm443, %v378, 0
      %v583 = vsel %vm443, %v379, 0
      %v586 = vsel %vm443, %v380, 0
      %v589 = vsel %vm443, %v381, 0
      %v592 = vsel %vm443, %v382, 0
      %v595 = vsel %vm443, %v383, 0
      %v598 = vsel %vm443, %v384, 0
      %v601 = vsel %vm443, %v385, 0
      %v604 = vsel %vm443, %v386, 0
      %v607 = vsel %vm443, %v387, 0
      %v610 = vsel %vm443, %v388, 0
      %v613 = vsel %vm443, %v389, 0
      %v616 = vsel %vm443, %v390, 0
      %v619 = vsel %vm443, %v391, 0
      %v622 = vsel %vm443, %v392, 0
      %v625 = vsel %vm443, %v393, 0
      %v628 = vsel %vm443, %v394, 0
      %v631 = vsel %vm443, %v395, 0
      %v634 = vsel %vm443, %v396, 0
      %v637 = vsel %vm443, %v397, 0
      %v640 = vsel %vm443, %v398, 0
      %v643 = vsel %vm443, %v399, 0
      %v646 = vsel %vm443, %v400, 0
      %v649 = vsel %vm443, %v401, 0
      %v652 = vsel %vm443, %v402, 0
      %v655 = vsel %vm443, %v403, 0
      %v658 = vsel %vm443, %v404, 0
      %v661 = vsel %vm443, %v405, 0
      %v664 = vsel %vm443, %v406, 0
      %v667 = vsel %vm443, %v407, 0
      %v670 = vsel %vm443, %v408, 0
      %v673 = vsel %vm443, %v409, 0
      %v676 = vsel %vm443, %v410, 0
      %v679 = vsel %vm443, %v411, 0
      %v682 = vsel %vm443, %v412, 0
      %v685 = vsel %vm443, %v413, 0
      %v688 = vsel %vm443, %v414, 0
      %v691 = vsel %vm443, %v415, 0
      %v694 = vsel %vm443, %v416, 0
      %v697 = vsel %vm443, %v417, 0
      %v700 = vsel %vm443, %v418, 0
      %v703 = vsel %vm443, %v419, 0
      %v706 = vsel %vm443, %v420, 0
      %v709 = vsel %vm443, %v421, 0
      %v712 = vsel %vm443, %v422, 0
      %v715 = vsel %vm443, %v423, 0
      %v718 = vsel %vm443, %v424, 0
      %v721 = vsel %vm443, %v425, 0
      %v724 = vsel %vm443, %v426, 0
      %v727 = vsel %vm443, %v427, 0
      %v730 = vsel %vm443, %v428, 0
      %v733 = vsel %vm443, %v429, 0
      %v736 = vsel %vm443, %v430, 0
      %v739 = vsel %vm443, %v431, 0
      %v742 = vsel %vm443, %v432, 0
      %vm744 = vcmask 1041408
      %v746 = vsel %vm744, %v435, 0
      %748 = vmatprep.subr.mxu0 0.0
      %749 = vmatpush1.msra.mxu0 %v433
      %750 = vmatprep.subr.mxu0 0.0
      %751 = vmatpush1.msra.mxu0 %v434
      %752 = vmatprep.subr.mxu0 0.0
      %753 = vmatpush1.msra.mxu0 %v746
      %754 = vmatprep.subr.mxu0 0.0
      %755 = vmatpush1.msra.mxu0 0.0
      %756 = vmatprep.subr.mxu0 0.0
      %757 = vmatpush1.msra.mxu0 0.0
      %758 = vmatprep.subr.mxu0 0.0
      %759 = vmatpush1.msra.mxu0 0.0
      %760 = vmatprep.subr.mxu0 0.0
      %761 = vmatpush1.msra.mxu0 0.0
      %762 = vmatprep.subr.mxu0 0.0
      %763 = vmatpush1.msra.mxu0 0.0
      %764 = vmatprep.subr.mxu0 0.0
      %765 = vmatpush1.msra.mxu0 0.0
      %766 = vmatprep.subr.mxu0 0.0
      %767 = vmatpush1.msra.mxu0 0.0
      %768 = vmatprep.subr.mxu0 0.0
      %769 = vmatpush1.msra.mxu0 0.0
      %770 = vmatprep.subr.mxu0 0.0
      %771 = vmatpush1.msra.mxu0 0.0
      %772 = vmatprep.subr.mxu0 0.0
      %773 = vmatpush1.msra.mxu0 0.0
      %774 = vmatprep.subr.mxu0 0.0
      %775 = vmatpush1.msra.mxu0 0.0
      %776 = vmatprep.subr.mxu0 0.0
      %777 = vmatpush1.msra.mxu0 0.0
      %778 = vmatprep.subr.mxu0 0.0
      %779 = vmatpush1.msra.mxu0 0.0
      %780 = vmatprep.subr.mxu0 0.0
      %781 = vmatpush1.msra.mxu0 0.0
      %782 = vmatprep.subr.mxu0 0.0
      %783 = vmatpush1.msra.mxu0 0.0
      %784 = vmatprep.subr.mxu0 0.0
      %785 = vmatpush1.msra.mxu0 0.0
      %786 = vmatprep.subr.mxu0 0.0
      %787 = vmatpush1.msra.mxu0 0.0
      %788 = vmatprep.subr.mxu0 0.0
      %789 = vmatpush1.msra.mxu0 0.0
      %790 = vmatprep.subr.mxu0 0.0
      %791 = vmatpush1.msra.mxu0 0.0
      %792 = vmatprep.subr.mxu0 0.0
      %793 = vmatpush1.msra.mxu0 0.0
      %794 = vmatprep.subr.mxu0 0.0
      %795 = vmatpush1.msra.mxu0 0.0
      %796 = vmatprep.subr.mxu0 0.0
      %797 = vmatpush1.msra.mxu0 0.0
      %798 = vmatprep.subr.mxu0 0.0
      %799 = vmatpush1.msra.mxu0 0.0
      %800 = vmatprep.subr.mxu0 0.0
      %801 = vmatpush1.msra.mxu0 0.0
      %802 = vmatprep.subr.mxu0 0.0
      %803 = vmatpush1.msra.mxu0 0.0
      %804 = vmatprep.subr.mxu0 0.0
      %805 = vmatpush1.msra.mxu0 0.0
      %806 = vmatprep.subr.mxu0 0.0
      %807 = vmatpush1.msra.mxu0 0.0
      %808 = vmatprep.subr.mxu0 0.0
      %809 = vmatpush1.msra.mxu0 0.0
      %810 = vmatprep.subr.mxu0 0.0
      %811 = vmatpush1.msra.mxu0 0.0
      %812 = vmatprep.mubr.f32.mxu0 0.0
      %813 = vmatmul.mubr.f32.gmra.mrb[0].mxu0 %v445
      %v814 = vpop.f32.mrb[0].mxu0
      %v815 = vadd.f32 %v441, %v814
      %v816 = vpop.f32.mrb[0].mxu0
      %817 = vmatprep.mubr.f32.mxu0 0.0
      %818 = vmatmul.mubr.f32.gmra.mrb[0].mxu0 %v448
      %v819 = vpop.f32.mrb[0].mxu0
      %v820 = vadd.f32 %v441, %v819
      %v821 = vpop.f32.mrb[0].mxu0
      %822 = vmatprep.mubr.f32.mxu0 0.0
      %823 = vmatmul.mubr.f32.gmra.mrb[0].mxu0 %v451
      %v824 = vpop.f32.mrb[0].mxu0
      %v825 = vadd.f32 %v441, %v824
      %v826 = vpop.f32.mrb[0].mxu0
      %827 = vmatprep.mubr.f32.mxu0 0.0
      %828 = vmatmul.mubr.f32.gmra.mrb[0].mxu0 %v454
      %v829 = vpop.f32.mrb[0].mxu0
      %v830 = vadd.f32 %v441, %v829
      %v831 = vpop.f32.mrb[0].mxu0
      %832 = vmatprep.mubr.f32.mxu0 0.0
      %833 = vmatmul.mubr.f32.gmra.mrb[0].mxu0 %v457
      %v834 = vpop.f32.mrb[0].mxu0
      %v835 = vadd.f32 %v441, %v834
      %v836 = vpop.f32.mrb[0].mxu0
      %837 = vmatprep.mubr.f32.mxu0 0.0
      %838 = vmatmul.mubr.f32.gmra.mrb[0].mxu0 %v460
      %v839 = vpop.f32.mrb[0].mxu0
      %v840 = vadd.f32 %v441, %v839
      %v841 = vpop.f32.mrb[0].mxu0
      %842 = vmatprep.mubr.f32.mxu0 0.0
      %843 = vmatmul.mubr.f32.gmra.mrb[0].mxu0 %v463
      %v844 = vpop.f32.mrb[0].mxu0
      %v845 = vadd.f32 %v441, %v844
      %v846 = vpop.f32.mrb[0].mxu0
      %847 = vmatprep.mubr.f32.mxu0 0.0
      %848 = vmatmul.mubr.f32.gmra.mrb[0].mxu0 %v466
      %v849 = vpop.f32.mrb[0].mxu0
      %v850 = vadd.f32 %v441, %v849
      %v851 = vpop.f32.mrb[0].mxu0
      %852 = vmatprep.mubr.f32.mxu0 0.0
      %853 = vmatmul.mubr.f32.gmra.mrb[0].mxu0 %v469
      %v854 = vpop.f32.mrb[0].mxu0
      %v855 = vadd.f32 %v441, %v854
      %v856 = vpop.f32.mrb[0].mxu0
      %857 = vmatprep.mubr.f32.mxu0 0.0
      %858 = vmatmul.mubr.f32.gmra.mrb[0].mxu0 %v472
      %v859 = vpop.f32.mrb[0].mxu0
      %v860 = vadd.f32 %v441, %v859
      %v861 = vpop.f32.mrb[0].mxu0
      %862 = vmatprep.mubr.f32.mxu0 0.0
      %863 = vmatmul.mubr.f32.gmra.mrb[0].mxu0 %v475
      %v864 = vpop.f32.mrb[0].mxu0
      %v865 = vadd.f32 %v441, %v864
      %v866 = vpop.f32.mrb[0].mxu0
      %867 = vmatprep.mubr.f32.mxu0 0.0
      %868 = vmatmul.mubr.f32.gmra.mrb[0].mxu0 %v478
      %v869 = vpop.f32.mrb[0].mxu0
      %v870 = vadd.f32 %v441, %v869
      %v871 = vpop.f32.mrb[0].mxu0
      %872 = vmatprep.mubr.f32.mxu0 0.0
      %873 = vmatmul.mubr.f32.gmra.mrb[0].mxu0 %v481
      %v874 = vpop.f32.mrb[0].mxu0
      %v875 = vadd.f32 %v441, %v874
      %v876 = vpop.f32.mrb[0].mxu0
      %877 = vmatprep.mubr.f32.mxu0 0.0
      %878 = vmatmul.mubr.f32.gmra.mrb[0].mxu0 %v484
      %v879 = vpop.f32.mrb[0].mxu0
      %v880 = vadd.f32 %v441, %v879
      %v881 = vpop.f32.mrb[0].mxu0
      %882 = vmatprep.mubr.f32.mxu0 0.0
      %883 = vmatmul.mubr.f32.gmra.mrb[0].mxu0 %v487
      %v884 = vpop.f32.mrb[0].mxu0
      %v885 = vadd.f32 %v441, %v884
      %v886 = vpop.f32.mrb[0].mxu0
      %887 = vmatprep.mubr.f32.mxu0 0.0
      %888 = vmatmul.mubr.f32.gmra.mrb[0].mxu0 %v490
      %v889 = vpop.f32.mrb[0].mxu0
      %v890 = vadd.f32 %v441, %v889
      %v891 = vpop.f32.mrb[0].mxu0
      %892 = vmatprep.mubr.f32.mxu0 0.0
      %893 = vmatmul.mubr.f32.gmra.mrb[0].mxu0 %v493
      %v894 = vpop.f32.mrb[0].mxu0
      %v895 = vadd.f32 %v441, %v894
      %v896 = vpop.f32.mrb[0].mxu0
      %897 = vmatprep.mubr.f32.mxu0 0.0
      %898 = vmatmul.mubr.f32.gmra.mrb[0].mxu0 %v496
      %v899 = vpop.f32.mrb[0].mxu0
      %v900 = vadd.f32 %v441, %v899
      %v901 = vpop.f32.mrb[0].mxu0
      %902 = vmatprep.mubr.f32.mxu0 0.0
      %903 = vmatmul.mubr.f32.gmra.mrb[0].mxu0 %v499
      %v904 = vpop.f32.mrb[0].mxu0
      %v905 = vadd.f32 %v441, %v904
      %v906 = vpop.f32.mrb[0].mxu0
      %907 = vmatprep.mubr.f32.mxu0 0.0
      %908 = vmatmul.mubr.f32.gmra.mrb[0].mxu0 %v502
      %v909 = vpop.f32.mrb[0].mxu0
      %v910 = vadd.f32 %v441, %v909
      %v911 = vpop.f32.mrb[0].mxu0
      %912 = vmatprep.mubr.f32.mxu0 0.0
      %913 = vmatmul.mubr.f32.gmra.mrb[0].mxu0 %v505
      %v914 = vpop.f32.mrb[0].mxu0
      %v915 = vadd.f32 %v441, %v914
      %v916 = vpop.f32.mrb[0].mxu0
      %917 = vmatprep.mubr.f32.mxu0 0.0
      %918 = vmatmul.mubr.f32.gmra.mrb[0].mxu0 %v508
      %v919 = vpop.f32.mrb[0].mxu0
      %v920 = vadd.f32 %v441, %v919
      %v921 = vpop.f32.mrb[0].mxu0
      %922 = vmatprep.mubr.f32.mxu0 0.0
      %923 = vmatmul.mubr.f32.gmra.mrb[0].mxu0 %v511
      %v924 = vpop.f32.mrb[0].mxu0
      %v925 = vadd.f32 %v441, %v924
      %v926 = vpop.f32.mrb[0].mxu0
      %927 = vmatprep.mubr.f32.mxu0 0.0
      %928 = vmatmul.mubr.f32.gmra.mrb[0].mxu0 %v514
      %v929 = vpop.f32.mrb[0].mxu0
      %v930 = vadd.f32 %v441, %v929
      %v931 = vpop.f32.mrb[0].mxu0
      %932 = vmatprep.mubr.f32.mxu0 0.0
      %933 = vmatmul.mubr.f32.gmra.mrb[0].mxu0 %v517
      %v934 = vpop.f32.mrb[0].mxu0
      %v935 = vadd.f32 %v441, %v934
      %v936 = vpop.f32.mrb[0].mxu0
      %937 = vmatprep.mubr.f32.mxu0 0.0
      %938 = vmatmul.mubr.f32.gmra.mrb[0].mxu0 %v520
      %v939 = vpop.f32.mrb[0].mxu0
      %v940 = vadd.f32 %v441, %v939
      %v941 = vpop.f32.mrb[0].mxu0
      %942 = vmatprep.mubr.f32.mxu0 0.0
      %943 = vmatmul.mubr.f32.gmra.mrb[0].mxu0 %v523
      %v944 = vpop.f32.mrb[0].mxu0
      %v945 = vadd.f32 %v441, %v944
      %v946 = vpop.f32.mrb[0].mxu0
      %947 = vmatprep.mubr.f32.mxu0 0.0
      %948 = vmatmul.mubr.f32.gmra.mrb[0].mxu0 %v526
      %v949 = vpop.f32.mrb[0].mxu0
      %v950 = vadd.f32 %v441, %v949
      %v951 = vpop.f32.mrb[0].mxu0
      %952 = vmatprep.mubr.f32.mxu0 0.0
      %953 = vmatmul.mubr.f32.gmra.mrb[0].mxu0 %v529
      %v954 = vpop.f32.mrb[0].mxu0
      %v955 = vadd.f32 %v441, %v954
      %v956 = vpop.f32.mrb[0].mxu0
      %957 = vmatprep.mubr.f32.mxu0 0.0
      %958 = vmatmul.mubr.f32.gmra.mrb[0].mxu0 %v532
      %v959 = vpop.f32.mrb[0].mxu0
      %v960 = vadd.f32 %v441, %v959
      %v961 = vpop.f32.mrb[0].mxu0
      %962 = vmatprep.mubr.f32.mxu0 0.0
      %963 = vmatmul.mubr.f32.gmra.mrb[0].mxu0 %v535
      %v964 = vpop.f32.mrb[0].mxu0
      %v965 = vadd.f32 %v441, %v964
      %v966 = vpop.f32.mrb[0].mxu0
      %967 = vmatprep.mubr.f32.mxu0 0.0
      %968 = vmatmul.mubr.f32.gmra.mrb[0].mxu0 %v538
      %v969 = vpop.f32.mrb[0].mxu0
      %v970 = vadd.f32 %v441, %v969
      %v971 = vpop.f32.mrb[0].mxu0
      %972 = vmatprep.mubr.f32.mxu0 0.0
      %973 = vmatmul.mubr.f32.gmra.mrb[0].mxu0 %v541
      %v974 = vpop.f32.mrb[0].mxu0
      %v975 = vadd.f32 %v441, %v974
      %v976 = vpop.f32.mrb[0].mxu0
      %977 = vmatprep.mubr.f32.mxu0 0.0
      %978 = vmatmul.mubr.f32.gmra.mrb[0].mxu0 %v544
      %v979 = vpop.f32.mrb[0].mxu0
      %v980 = vadd.f32 %v441, %v979
      %v981 = vpop.f32.mrb[0].mxu0
      %982 = vmatprep.mubr.f32.mxu0 0.0
      %983 = vmatmul.mubr.f32.gmra.mrb[0].mxu0 %v547
      %v984 = vpop.f32.mrb[0].mxu0
      %v985 = vadd.f32 %v441, %v984
      %v986 = vpop.f32.mrb[0].mxu0
      %987 = vmatprep.mubr.f32.mxu0 0.0
      %988 = vmatmul.mubr.f32.gmra.mrb[0].mxu0 %v550
      %v989 = vpop.f32.mrb[0].mxu0
      %v990 = vadd.f32 %v441, %v989
      %v991 = vpop.f32.mrb[0].mxu0
      %992 = vmatprep.mubr.f32.mxu0 0.0
      %993 = vmatmul.mubr.f32.gmra.mrb[0].mxu0 %v553
      %v994 = vpop.f32.mrb[0].mxu0
      %v995 = vadd.f32 %v441, %v994
      %v996 = vpop.f32.mrb[0].mxu0
      %997 = vmatprep.mubr.f32.mxu0 0.0
      %998 = vmatmul.mubr.f32.gmra.mrb[0].mxu0 %v556
      %v999 = vpop.f32.mrb[0].mxu0
      %v1000 = vadd.f32 %v441, %v999
      %v1001 = vpop.f32.mrb[0].mxu0
      %1002 = vmatprep.mubr.f32.mxu0 0.0
      %1003 = vmatmul.mubr.f32.gmra.mrb[0].mxu0 %v559
      %v1004 = vpop.f32.mrb[0].mxu0
      %v1005 = vadd.f32 %v441, %v1004
      %v1006 = vpop.f32.mrb[0].mxu0
      %1007 = vmatprep.mubr.f32.mxu0 0.0
      %1008 = vmatmul.mubr.f32.gmra.mrb[0].mxu0 %v562
      %v1009 = vpop.f32.mrb[0].mxu0
      %v1010 = vadd.f32 %v441, %v1009
      %v1011 = vpop.f32.mrb[0].mxu0
      %1012 = vmatprep.mubr.f32.mxu0 0.0
      %1013 = vmatmul.mubr.f32.gmra.mrb[0].mxu0 %v565
      %v1014 = vpop.f32.mrb[0].mxu0
      %v1015 = vadd.f32 %v441, %v1014
      %v1016 = vpop.f32.mrb[0].mxu0
      %1017 = vmatprep.mubr.f32.mxu0 0.0
      %1018 = vmatmul.mubr.f32.gmra.mrb[0].mxu0 %v568
      %v1019 = vpop.f32.mrb[0].mxu0
      %v1020 = vadd.f32 %v441, %v1019
      %v1021 = vpop.f32.mrb[0].mxu0
      %1022 = vmatprep.mubr.f32.mxu0 0.0
      %1023 = vmatmul.mubr.f32.gmra.mrb[0].mxu0 %v571
      %v1024 = vpop.f32.mrb[0].mxu0
      %v1025 = vadd.f32 %v441, %v1024
      %v1026 = vpop.f32.mrb[0].mxu0
      %1027 = vmatprep.mubr.f32.mxu0 0.0
      %1028 = vmatmul.mubr.f32.gmra.mrb[0].mxu0 %v574
      %v1029 = vpop.f32.mrb[0].mxu0
      %v1030 = vadd.f32 %v441, %v1029
      %v1031 = vpop.f32.mrb[0].mxu0
      %1032 = vmatprep.mubr.f32.mxu0 0.0
      %1033 = vmatmul.mubr.f32.gmra.mrb[0].mxu0 %v577
      %v1034 = vpop.f32.mrb[0].mxu0
      %v1035 = vadd.f32 %v441, %v1034
      %v1036 = vpop.f32.mrb[0].mxu0
      %1037 = vmatprep.mubr.f32.mxu0 0.0
      %1038 = vmatmul.mubr.f32.gmra.mrb[0].mxu0 %v580
      %v1039 = vpop.f32.mrb[0].mxu0
      %v1040 = vadd.f32 %v441, %v1039
      %v1041 = vpop.f32.mrb[0].mxu0
      %1042 = vmatprep.mubr.f32.mxu0 0.0
      %1043 = vmatmul.mubr.f32.gmra.mrb[0].mxu0 %v583
      %v1044 = vpop.f32.mrb[0].mxu0
      %v1045 = vadd.f32 %v441, %v1044
      %v1046 = vpop.f32.mrb[0].mxu0
      %1047 = vmatprep.mubr.f32.mxu0 0.0
      %1048 = vmatmul.mubr.f32.gmra.mrb[0].mxu0 %v586
      %v1049 = vpop.f32.mrb[0].mxu0
      %v1050 = vadd.f32 %v441, %v1049
      %v1051 = vpop.f32.mrb[0].mxu0
      %1052 = vmatprep.mubr.f32.mxu0 0.0
      %1053 = vmatmul.mubr.f32.gmra.mrb[0].mxu0 %v589
      %v1054 = vpop.f32.mrb[0].mxu0
      %v1055 = vadd.f32 %v441, %v1054
      %v1056 = vpop.f32.mrb[0].mxu0
      %1057 = vmatprep.mubr.f32.mxu0 0.0
      %1058 = vmatmul.mubr.f32.gmra.mrb[0].mxu0 %v592
      %v1059 = vpop.f32.mrb[0].mxu0
      %v1060 = vadd.f32 %v441, %v1059
      %v1061 = vpop.f32.mrb[0].mxu0
      %1062 = vmatprep.mubr.f32.mxu0 0.0
      %1063 = vmatmul.mubr.f32.gmra.mrb[0].mxu0 %v595
      %v1064 = vpop.f32.mrb[0].mxu0
      %v1065 = vadd.f32 %v441, %v1064
      %v1066 = vpop.f32.mrb[0].mxu0
      %1067 = vmatprep.mubr.f32.mxu0 0.0
      %1068 = vmatmul.mubr.f32.gmra.mrb[0].mxu0 %v598
      %v1069 = vpop.f32.mrb[0].mxu0
      %v1070 = vadd.f32 %v441, %v1069
      %v1071 = vpop.f32.mrb[0].mxu0
      %1072 = vmatprep.mubr.f32.mxu0 0.0
      %1073 = vmatmul.mubr.f32.gmra.mrb[0].mxu0 %v601
      %v1074 = vpop.f32.mrb[0].mxu0
      %v1075 = vadd.f32 %v441, %v1074
      %v1076 = vpop.f32.mrb[0].mxu0
      %1077 = vmatprep.mubr.f32.mxu0 0.0
      %1078 = vmatmul.mubr.f32.gmra.mrb[0].mxu0 %v604
      %v1079 = vpop.f32.mrb[0].mxu0
      %v1080 = vadd.f32 %v441, %v1079
      %v1081 = vpop.f32.mrb[0].mxu0
      %1082 = vmatprep.mubr.f32.mxu0 0.0
      %1083 = vmatmul.mubr.f32.gmra.mrb[0].mxu0 %v607
      %v1084 = vpop.f32.mrb[0].mxu0
      %v1085 = vadd.f32 %v441, %v1084
      %v1086 = vpop.f32.mrb[0].mxu0
      %1087 = vmatprep.mubr.f32.mxu0 0.0
      %1088 = vmatmul.mubr.f32.gmra.mrb[0].mxu0 %v610
      %v1089 = vpop.f32.mrb[0].mxu0
      %v1090 = vadd.f32 %v441, %v1089
      %v1091 = vpop.f32.mrb[0].mxu0
      %1092 = vmatprep.mubr.f32.mxu0 0.0
      %1093 = vmatmul.mubr.f32.gmra.mrb[0].mxu0 %v613
      %v1094 = vpop.f32.mrb[0].mxu0
      %v1095 = vadd.f32 %v441, %v1094
      %v1096 = vpop.f32.mrb[0].mxu0
      %1097 = vmatprep.mubr.f32.mxu0 0.0
      %1098 = vmatmul.mubr.f32.gmra.mrb[0].mxu0 %v616
      %v1099 = vpop.f32.mrb[0].mxu0
      %v1100 = vadd.f32 %v441, %v1099
      %v1101 = vpop.f32.mrb[0].mxu0
      %1102 = vmatprep.mubr.f32.mxu0 0.0
      %1103 = vmatmul.mubr.f32.gmra.mrb[0].mxu0 %v619
      %v1104 = vpop.f32.mrb[0].mxu0
      %v1105 = vadd.f32 %v441, %v1104
      %v1106 = vpop.f32.mrb[0].mxu0
      %1107 = vmatprep.mubr.f32.mxu0 0.0
      %1108 = vmatmul.mubr.f32.gmra.mrb[0].mxu0 %v622
      %v1109 = vpop.f32.mrb[0].mxu0
      %v1110 = vadd.f32 %v441, %v1109
      %v1111 = vpop.f32.mrb[0].mxu0
      %1112 = vmatprep.mubr.f32.mxu0 0.0
      %1113 = vmatmul.mubr.f32.gmra.mrb[0].mxu0 %v625
      %v1114 = vpop.f32.mrb[0].mxu0
      %v1115 = vadd.f32 %v441, %v1114
      %v1116 = vpop.f32.mrb[0].mxu0
      %1117 = vmatprep.mubr.f32.mxu0 0.0
      %1118 = vmatmul.mubr.f32.gmra.mrb[0].mxu0 %v628
      %v1119 = vpop.f32.mrb[0].mxu0
      %v1120 = vadd.f32 %v441, %v1119
      %v1121 = vpop.f32.mrb[0].mxu0
      %1122 = vmatprep.mubr.f32.mxu0 0.0
      %1123 = vmatmul.mubr.f32.gmra.mrb[0].mxu0 %v631
      %v1124 = vpop.f32.mrb[0].mxu0
      %v1125 = vadd.f32 %v441, %v1124
      %v1126 = vpop.f32.mrb[0].mxu0
      %1127 = vmatprep.mubr.f32.mxu0 0.0
      %1128 = vmatmul.mubr.f32.gmra.mrb[0].mxu0 %v634
      %v1129 = vpop.f32.mrb[0].mxu0
      %v1130 = vadd.f32 %v441, %v1129
      %v1131 = vpop.f32.mrb[0].mxu0
      %1132 = vmatprep.mubr.f32.mxu0 0.0
      %1133 = vmatmul.mubr.f32.gmra.mrb[0].mxu0 %v637
      %v1134 = vpop.f32.mrb[0].mxu0
      %v1135 = vadd.f32 %v441, %v1134
      %v1136 = vpop.f32.mrb[0].mxu0
      %1137 = vmatprep.mubr.f32.mxu0 0.0
      %1138 = vmatmul.mubr.f32.gmra.mrb[0].mxu0 %v640
      %v1139 = vpop.f32.mrb[0].mxu0
      %v1140 = vadd.f32 %v441, %v1139
      %v1141 = vpop.f32.mrb[0].mxu0
      %1142 = vmatprep.mubr.f32.mxu0 0.0
      %1143 = vmatmul.mubr.f32.gmra.mrb[0].mxu0 %v643
      %v1144 = vpop.f32.mrb[0].mxu0
      %v1145 = vadd.f32 %v441, %v1144
      %v1146 = vpop.f32.mrb[0].mxu0
      %1147 = vmatprep.mubr.f32.mxu0 0.0
      %1148 = vmatmul.mubr.f32.gmra.mrb[0].mxu0 %v646
      %v1149 = vpop.f32.mrb[0].mxu0
      %v1150 = vadd.f32 %v441, %v1149
      %v1151 = vpop.f32.mrb[0].mxu0
      %1152 = vmatprep.mubr.f32.mxu0 0.0
      %1153 = vmatmul.mubr.f32.gmra.mrb[0].mxu0 %v649
      %v1154 = vpop.f32.mrb[0].mxu0
      %v1155 = vadd.f32 %v441, %v1154
      %v1156 = vpop.f32.mrb[0].mxu0
      %1157 = vmatprep.mubr.f32.mxu0 0.0
      %1158 = vmatmul.mubr.f32.gmra.mrb[0].mxu0 %v652
      %v1159 = vpop.f32.mrb[0].mxu0
      %v1160 = vadd.f32 %v441, %v1159
      %v1161 = vpop.f32.mrb[0].mxu0
      %1162 = vmatprep.mubr.f32.mxu0 0.0
      %1163 = vmatmul.mubr.f32.gmra.mrb[0].mxu0 %v655
      %v1164 = vpop.f32.mrb[0].mxu0
      %v1165 = vadd.f32 %v441, %v1164
      %v1166 = vpop.f32.mrb[0].mxu0
      %1167 = vmatprep.mubr.f32.mxu0 0.0
      %1168 = vmatmul.mubr.f32.gmra.mrb[0].mxu0 %v658
      %v1169 = vpop.f32.mrb[0].mxu0
      %v1170 = vadd.f32 %v441, %v1169
      %v1171 = vpop.f32.mrb[0].mxu0
      %1172 = vmatprep.mubr.f32.mxu0 0.0
      %1173 = vmatmul.mubr.f32.gmra.mrb[0].mxu0 %v661
      %v1174 = vpop.f32.mrb[0].mxu0
      %v1175 = vadd.f32 %v441, %v1174
      %v1176 = vpop.f32.mrb[0].mxu0
      %1177 = vmatprep.mubr.f32.mxu0 0.0
      %1178 = vmatmul.mubr.f32.gmra.mrb[0].mxu0 %v664
      %v1179 = vpop.f32.mrb[0].mxu0
      %v1180 = vadd.f32 %v441, %v1179
      %v1181 = vpop.f32.mrb[0].mxu0
      %1182 = vmatprep.mubr.f32.mxu0 0.0
      %1183 = vmatmul.mubr.f32.gmra.mrb[0].mxu0 %v667
      %v1184 = vpop.f32.mrb[0].mxu0
      %v1185 = vadd.f32 %v441, %v1184
      %v1186 = vpop.f32.mrb[0].mxu0
      %1187 = vmatprep.mubr.f32.mxu0 0.0
      %1188 = vmatmul.mubr.f32.gmra.mrb[0].mxu0 %v670
      %v1189 = vpop.f32.mrb[0].mxu0
      %v1190 = vadd.f32 %v441, %v1189
      %v1191 = vpop.f32.mrb[0].mxu0
      %1192 = vmatprep.mubr.f32.mxu0 0.0
      %1193 = vmatmul.mubr.f32.gmra.mrb[0].mxu0 %v673
      %v1194 = vpop.f32.mrb[0].mxu0
      %v1195 = vadd.f32 %v441, %v1194
      %v1196 = vpop.f32.mrb[0].mxu0
      %1197 = vmatprep.mubr.f32.mxu0 0.0
      %1198 = vmatmul.mubr.f32.gmra.mrb[0].mxu0 %v676
      %v1199 = vpop.f32.mrb[0].mxu0
      %v1200 = vadd.f32 %v441, %v1199
      %v1201 = vpop.f32.mrb[0].mxu0
      %1202 = vmatprep.mubr.f32.mxu0 0.0
      %1203 = vmatmul.mubr.f32.gmra.mrb[0].mxu0 %v679
      %v1204 = vpop.f32.mrb[0].mxu0
      %v1205 = vadd.f32 %v441, %v1204
      %v1206 = vpop.f32.mrb[0].mxu0
      %1207 = vmatprep.mubr.f32.mxu0 0.0
      %1208 = vmatmul.mubr.f32.gmra.mrb[0].mxu0 %v682
      %v1209 = vpop.f32.mrb[0].mxu0
      %v1210 = vadd.f32 %v441, %v1209
      %v1211 = vpop.f32.mrb[0].mxu0
      %1212 = vmatprep.mubr.f32.mxu0 0.0
      %1213 = vmatmul.mubr.f32.gmra.mrb[0].mxu0 %v685
      %v1214 = vpop.f32.mrb[0].mxu0
      %v1215 = vadd.f32 %v441, %v1214
      %v1216 = vpop.f32.mrb[0].mxu0
      %1217 = vmatprep.mubr.f32.mxu0 0.0
      %1218 = vmatmul.mubr.f32.gmra.mrb[0].mxu0 %v688
      %v1219 = vpop.f32.mrb[0].mxu0
      %v1220 = vadd.f32 %v441, %v1219
      %v1221 = vpop.f32.mrb[0].mxu0
      %1222 = vmatprep.mubr.f32.mxu0 0.0
      %1223 = vmatmul.mubr.f32.gmra.mrb[0].mxu0 %v691
      %v1224 = vpop.f32.mrb[0].mxu0
      %v1225 = vadd.f32 %v441, %v1224
      %v1226 = vpop.f32.mrb[0].mxu0
      %1227 = vmatprep.mubr.f32.mxu0 0.0
      %1228 = vmatmul.mubr.f32.gmra.mrb[0].mxu0 %v694
      %v1229 = vpop.f32.mrb[0].mxu0
      %v1230 = vadd.f32 %v441, %v1229
      %v1231 = vpop.f32.mrb[0].mxu0
      %1232 = vmatprep.mubr.f32.mxu0 0.0
      %1233 = vmatmul.mubr.f32.gmra.mrb[0].mxu0 %v697
      %v1234 = vpop.f32.mrb[0].mxu0
      %v1235 = vadd.f32 %v441, %v1234
      %v1236 = vpop.f32.mrb[0].mxu0
      %1237 = vmatprep.mubr.f32.mxu0 0.0
      %1238 = vmatmul.mubr.f32.gmra.mrb[0].mxu0 %v700
      %v1239 = vpop.f32.mrb[0].mxu0
      %v1240 = vadd.f32 %v441, %v1239
      %v1241 = vpop.f32.mrb[0].mxu0
      %1242 = vmatprep.mubr.f32.mxu0 0.0
      %1243 = vmatmul.mubr.f32.gmra.mrb[0].mxu0 %v703
      %v1244 = vpop.f32.mrb[0].mxu0
      %v1245 = vadd.f32 %v441, %v1244
      %v1246 = vpop.f32.mrb[0].mxu0
      %1247 = vmatprep.mubr.f32.mxu0 0.0
      %1248 = vmatmul.mubr.f32.gmra.mrb[0].mxu0 %v706
      %v1249 = vpop.f32.mrb[0].mxu0
      %v1250 = vadd.f32 %v441, %v1249
      %v1251 = vpop.f32.mrb[0].mxu0
      %1252 = vmatprep.mubr.f32.mxu0 0.0
      %1253 = vmatmul.mubr.f32.gmra.mrb[0].mxu0 %v709
      %v1254 = vpop.f32.mrb[0].mxu0
      %v1255 = vadd.f32 %v441, %v1254
      %v1256 = vpop.f32.mrb[0].mxu0
      %1257 = vmatprep.mubr.f32.mxu0 0.0
      %1258 = vmatmul.mubr.f32.gmra.mrb[0].mxu0 %v712
      %v1259 = vpop.f32.mrb[0].mxu0
      %v1260 = vadd.f32 %v441, %v1259
      %v1261 = vpop.f32.mrb[0].mxu0
      %1262 = vmatprep.mubr.f32.mxu0 0.0
      %1263 = vmatmul.mubr.f32.gmra.mrb[0].mxu0 %v715
      %v1264 = vpop.f32.mrb[0].mxu0
      %v1265 = vadd.f32 %v441, %v1264
      %v1266 = vpop.f32.mrb[0].mxu0
      %1267 = vmatprep.mubr.f32.mxu0 0.0
      %1268 = vmatmul.mubr.f32.gmra.mrb[0].mxu0 %v718
      %v1269 = vpop.f32.mrb[0].mxu0
      %v1270 = vadd.f32 %v441, %v1269
      %v1271 = vpop.f32.mrb[0].mxu0
      %1272 = vmatprep.mubr.f32.mxu0 0.0
      %1273 = vmatmul.mubr.f32.gmra.mrb[0].mxu0 %v721
      %v1274 = vpop.f32.mrb[0].mxu0
      %v1275 = vadd.f32 %v441, %v1274
      %v1276 = vpop.f32.mrb[0].mxu0
      %1277 = vmatprep.mubr.f32.mxu0 0.0
      %1278 = vmatmul.mubr.f32.gmra.mrb[0].mxu0 %v724
      %v1279 = vpop.f32.mrb[0].mxu0
      %v1280 = vadd.f32 %v441, %v1279
      %v1281 = vpop.f32.mrb[0].mxu0
      %1282 = vmatprep.mubr.f32.mxu0 0.0
      %1283 = vmatmul.mubr.f32.gmra.mrb[0].mxu0 %v727
      %v1284 = vpop.f32.mrb[0].mxu0
      %v1285 = vadd.f32 %v441, %v1284
      %v1286 = vpop.f32.mrb[0].mxu0
      %1287 = vmatprep.mubr.f32.mxu0 0.0
      %1288 = vmatmul.mubr.f32.gmra.mrb[0].mxu0 %v730
      %v1289 = vpop.f32.mrb[0].mxu0
      %v1290 = vadd.f32 %v441, %v1289
      %v1291 = vpop.f32.mrb[0].mxu0
      %1292 = vmatprep.mubr.f32.mxu0 0.0
      %1293 = vmatmul.mubr.f32.gmra.mrb[0].mxu0 %v733
      %v1294 = vpop.f32.mrb[0].mxu0
      %v1295 = vadd.f32 %v441, %v1294
      %v1296 = vpop.f32.mrb[0].mxu0
      %1297 = vmatprep.mubr.f32.mxu0 0.0
      %1298 = vmatmul.mubr.f32.gmra.mrb[0].mxu0 %v736
      %v1299 = vpop.f32.mrb[0].mxu0
      %v1300 = vadd.f32 %v441, %v1299
      %v1301 = vpop.f32.mrb[0].mxu0
      %1302 = vmatprep.mubr.f32.mxu0 0.0
      %1303 = vmatmul.mubr.f32.gmra.mrb[0].mxu0 %v739
      %v1304 = vpop.f32.mrb[0].mxu0
      %v1305 = vadd.f32 %v441, %v1304
      %v1306 = vpop.f32.mrb[0].mxu0
      %1307 = vmatprep.mubr.f32.mxu0 0.0
      %1308 = vmatmul.mubr.f32.gmra.mrb[0].mxu0 %v742
      %v1309 = vpop.f32.mrb[0].mxu0
      %v1310 = vadd.f32 %v441, %v1309
      %v1311 = vpop.f32.mrb[0].mxu0
      %1312 = vdwg.mxu0
      %v1313 = vmax.f32 %v815, 0.0
      %v1314 = vmax.f32 %v820, 0.0
      %v1315 = vmax.f32 %v825, 0.0
      %v1316 = vmax.f32 %v830, 0.0
      %v1317 = vmax.f32 %v835, 0.0
      %v1318 = vmax.f32 %v840, 0.0
      %v1319 = vmax.f32 %v845, 0.0
      %v1320 = vmax.f32 %v850, 0.0
      %v1321 = vmax.f32 %v855, 0.0
      %v1322 = vmax.f32 %v860, 0.0
      %v1323 = vmax.f32 %v865, 0.0
      %v1324 = vmax.f32 %v870, 0.0
      %v1325 = vmax.f32 %v875, 0.0
      %v1326 = vmax.f32 %v880, 0.0
      %v1327 = vmax.f32 %v885, 0.0
      %v1328 = vmax.f32 %v890, 0.0
      %v1329 = vmax.f32 %v895, 0.0
      %v1330 = vmax.f32 %v900, 0.0
      %v1331 = vmax.f32 %v905, 0.0
      %v1332 = vmax.f32 %v910, 0.0
      %v1333 = vmax.f32 %v915, 0.0
      %v1334 = vmax.f32 %v920, 0.0
      %v1335 = vmax.f32 %v925, 0.0
      %v1336 = vmax.f32 %v930, 0.0
      %v1337 = vmax.f32 %v935, 0.0
      %v1338 = vmax.f32 %v940, 0.0
      %v1339 = vmax.f32 %v945, 0.0
      %v1340 = vmax.f32 %v950, 0.0
      %v1341 = vmax.f32 %v955, 0.0
      %v1342 = vmax.f32 %v960, 0.0
      %v1343 = vmax.f32 %v965, 0.0
      %v1344 = vmax.f32 %v970, 0.0
      %v1345 = vmax.f32 %v975, 0.0
      %v1346 = vmax.f32 %v980, 0.0
      %v1347 = vmax.f32 %v985, 0.0
      %v1348 = vmax.f32 %v990, 0.0
      %v1349 = vmax.f32 %v995, 0.0
      %v1350 = vmax.f32 %v1000, 0.0
      %v1351 = vmax.f32 %v1005, 0.0
      %v1352 = vmax.f32 %v1010, 0.0
      %v1353 = vmax.f32 %v1015, 0.0
      %v1354 = vmax.f32 %v1020, 0.0
      %v1355 = vmax.f32 %v1025, 0.0
      %v1356 = vmax.f32 %v1030, 0.0
      %v1357 = vmax.f32 %v1035, 0.0
      %v1358 = vmax.f32 %v1040, 0.0
      %v1359 = vmax.f32 %v1045, 0.0
      %v1360 = vmax.f32 %v1050, 0.0
      %v1361 = vmax.f32 %v1055, 0.0
      %v1362 = vmax.f32 %v1060, 0.0
      %v1363 = vmax.f32 %v1065, 0.0
      %v1364 = vmax.f32 %v1070, 0.0
      %v1365 = vmax.f32 %v1075, 0.0
      %v1366 = vmax.f32 %v1080, 0.0
      %v1367 = vmax.f32 %v1085, 0.0
      %v1368 = vmax.f32 %v1090, 0.0
      %v1369 = vmax.f32 %v1095, 0.0
      %v1370 = vmax.f32 %v1100, 0.0
      %v1371 = vmax.f32 %v1105, 0.0
      %v1372 = vmax.f32 %v1110, 0.0
      %v1373 = vmax.f32 %v1115, 0.0
      %v1374 = vmax.f32 %v1120, 0.0
      %v1375 = vmax.f32 %v1125, 0.0
      %v1376 = vmax.f32 %v1130, 0.0
      %v1377 = vmax.f32 %v1135, 0.0
      %v1378 = vmax.f32 %v1140, 0.0
      %v1379 = vmax.f32 %v1145, 0.0
      %v1380 = vmax.f32 %v1150, 0.0
      %v1381 = vmax.f32 %v1155, 0.0
      %v1382 = vmax.f32 %v1160, 0.0
      %v1383 = vmax.f32 %v1165, 0.0
      %v1384 = vmax.f32 %v1170, 0.0
      %v1385 = vmax.f32 %v1175, 0.0
      %v1386 = vmax.f32 %v1180, 0.0
      %v1387 = vmax.f32 %v1185, 0.0
      %v1388 = vmax.f32 %v1190, 0.0
      %v1389 = vmax.f32 %v1195, 0.0
      %v1390 = vmax.f32 %v1200, 0.0
      %v1391 = vmax.f32 %v1205, 0.0
      %v1392 = vmax.f32 %v1210, 0.0
      %v1393 = vmax.f32 %v1215, 0.0
      %v1394 = vmax.f32 %v1220, 0.0
      %v1395 = vmax.f32 %v1225, 0.0
      %v1396 = vmax.f32 %v1230, 0.0
      %v1397 = vmax.f32 %v1235, 0.0
      %v1398 = vmax.f32 %v1240, 0.0
      %v1399 = vmax.f32 %v1245, 0.0
      %v1400 = vmax.f32 %v1250, 0.0
      %v1401 = vmax.f32 %v1255, 0.0
      %v1402 = vmax.f32 %v1260, 0.0
      %v1403 = vmax.f32 %v1265, 0.0
      %v1404 = vmax.f32 %v1270, 0.0
      %v1405 = vmax.f32 %v1275, 0.0
      %v1406 = vmax.f32 %v1280, 0.0
      %v1407 = vmax.f32 %v1285, 0.0
      %v1408 = vmax.f32 %v1290, 0.0
      %v1409 = vmax.f32 %v1295, 0.0
      %v1410 = vmax.f32 %v1300, 0.0
      %v1411 = vmax.f32 %v1305, 0.0
      %v1412 = vmax.f32 %v1310, 0.0
      %1413 = vst [vmem:[#allocation2] sm:$0xff] %v1313
      %1414 = vst [vmem:[#allocation2 + $0x8] sm:$0xff] %v1314
      %1415 = vst [vmem:[#allocation2 + $0x10] sm:$0xff] %v1315
      %1416 = vst [vmem:[#allocation2 + $0x18] sm:$0xff] %v1316
      %1417 = vst [vmem:[#allocation2 + $0x20] sm:$0xff] %v1317
      %1418 = vst [vmem:[#allocation2 + $0x28] sm:$0xff] %v1318
      %1419 = vst [vmem:[#allocation2 + $0x30] sm:$0xff] %v1319
      %1420 = vst [vmem:[#allocation2 + $0x38] sm:$0xff] %v1320
      %1421 = vst [vmem:[#allocation2 + $0x40] sm:$0xff] %v1321
      %1422 = vst [vmem:[#allocation2 + $0x48] sm:$0xff] %v1322
      %1423 = vst [vmem:[#allocation2 + $0x50] sm:$0xff] %v1323
      %1424 = vst [vmem:[#allocation2 + $0x58] sm:$0xff] %v1324
      %1425 = vst [vmem:[#allocation2 + $0x60] sm:$0xff] %v1325
      %1426 = vst [vmem:[#allocation2 + $0x68] sm:$0xff] %v1326
      %1427 = vst [vmem:[#allocation2 + $0x70] sm:$0xff] %v1327
      %1428 = vst [vmem:[#allocation2 + $0x78] sm:$0xff] %v1328
      %1429 = vst [vmem:[#allocation2 + $0x80] sm:$0xff] %v1329
      %1430 = vst [vmem:[#allocation2 + $0x88] sm:$0xff] %v1330
      %1431 = vst [vmem:[#allocation2 + $0x90] sm:$0xff] %v1331
      %1432 = vst [vmem:[#allocation2 + $0x98] sm:$0xff] %v1332
      %1433 = vst [vmem:[#allocation2 + $0xa0] sm:$0xff] %v1333
      %1434 = vst [vmem:[#allocation2 + $0xa8] sm:$0xff] %v1334
      %1435 = vst [vmem:[#allocation2 + $0xb0] sm:$0xff] %v1335
      %1436 = vst [vmem:[#allocation2 + $0xb8] sm:$0xff] %v1336
      %1437 = vst [vmem:[#allocation2 + $0xc0] sm:$0xff] %v1337
      %1438 = vst [vmem:[#allocation2 + $0xc8] sm:$0xff] %v1338
      %1439 = vst [vmem:[#allocation2 + $0xd0] sm:$0xff] %v1339
      %1440 = vst [vmem:[#allocation2 + $0xd8] sm:$0xff] %v1340
      %1441 = vst [vmem:[#allocation2 + $0xe0] sm:$0xff] %v1341
      %1442 = vst [vmem:[#allocation2 + $0xe8] sm:$0xff] %v1342
      %1443 = vst [vmem:[#allocation2 + $0xf0] sm:$0xff] %v1343
      %1444 = vst [vmem:[#allocation2 + $0xf8] sm:$0xff] %v1344
      %1445 = vst [vmem:[#allocation2 + $0x100] sm:$0xff] %v1345
      %1446 = vst [vmem:[#allocation2 + $0x108] sm:$0xff] %v1346
      %1447 = vst [vmem:[#allocation2 + $0x110] sm:$0xff] %v1347
      %1448 = vst [vmem:[#allocation2 + $0x118] sm:$0xff] %v1348
      %1449 = vst [vmem:[#allocation2 + $0x120] sm:$0xff] %v1349
      %1450 = vst [vmem:[#allocation2 + $0x128] sm:$0xff] %v1350
      %1451 = vst [vmem:[#allocation2 + $0x130] sm:$0xff] %v1351
      %1452 = vst [vmem:[#allocation2 + $0x138] sm:$0xff] %v1352
      %1453 = vst [vmem:[#allocation2 + $0x140] sm:$0xff] %v1353
      %1454 = vst [vmem:[#allocation2 + $0x148] sm:$0xff] %v1354
      %1455 = vst [vmem:[#allocation2 + $0x150] sm:$0xff] %v1355
      %1456 = vst [vmem:[#allocation2 + $0x158] sm:$0xff] %v1356
      %1457 = vst [vmem:[#allocation2 + $0x160] sm:$0xff] %v1357
      %1458 = vst [vmem:[#allocation2 + $0x168] sm:$0xff] %v1358
      %1459 = vst [vmem:[#allocation2 + $0x170] sm:$0xff] %v1359
      %1460 = vst [vmem:[#allocation2 + $0x178] sm:$0xff] %v1360
      %1461 = vst [vmem:[#allocation2 + $0x180] sm:$0xff] %v1361
      %1462 = vst [vmem:[#allocation2 + $0x188] sm:$0xff] %v1362
      %1463 = vst [vmem:[#allocation2 + $0x190] sm:$0xff] %v1363
      %1464 = vst [vmem:[#allocation2 + $0x198] sm:$0xff] %v1364
      %1465 = vst [vmem:[#allocation2 + $0x1a0] sm:$0xff] %v1365
      %1466 = vst [vmem:[#allocation2 + $0x1a8] sm:$0xff] %v1366
      %1467 = vst [vmem:[#allocation2 + $0x1b0] sm:$0xff] %v1367
      %1468 = vst [vmem:[#allocation2 + $0x1b8] sm:$0xff] %v1368
      %1469 = vst [vmem:[#allocation2 + $0x1c0] sm:$0xff] %v1369
      %1470 = vst [vmem:[#allocation2 + $0x1c8] sm:$0xff] %v1370
      %1471 = vst [vmem:[#allocation2 + $0x1d0] sm:$0xff] %v1371
      %1472 = vst [vmem:[#allocation2 + $0x1d8] sm:$0xff] %v1372
      %1473 = vst [vmem:[#allocation2 + $0x1e0] sm:$0xff] %v1373
      %1474 = vst [vmem:[#allocation2 + $0x1e8] sm:$0xff] %v1374
      %1475 = vst [vmem:[#allocation2 + $0x1f0] sm:$0xff] %v1375
      %1476 = vst [vmem:[#allocation2 + $0x1f8] sm:$0xff] %v1376
      %1477 = vst [vmem:[#allocation2 + $0x200] sm:$0xff] %v1377
      %1478 = vst [vmem:[#allocation2 + $0x208] sm:$0xff] %v1378
      %1479 = vst [vmem:[#allocation2 + $0x210] sm:$0xff] %v1379
      %1480 = vst [vmem:[#allocation2 + $0x218] sm:$0xff] %v1380
      %1481 = vst [vmem:[#allocation2 + $0x220] sm:$0xff] %v1381
      %1482 = vst [vmem:[#allocation2 + $0x228] sm:$0xff] %v1382
      %1483 = vst [vmem:[#allocation2 + $0x230] sm:$0xff] %v1383
      %1484 = vst [vmem:[#allocation2 + $0x238] sm:$0xff] %v1384
      %1485 = vst [vmem:[#allocation2 + $0x240] sm:$0xff] %v1385
      %1486 = vst [vmem:[#allocation2 + $0x248] sm:$0xff] %v1386
      %1487 = vst [vmem:[#allocation2 + $0x250] sm:$0xff] %v1387
      %1488 = vst [vmem:[#allocation2 + $0x258] sm:$0xff] 0.0
      %1489 = vst [vmem:[#allocation2 + $0x260] sm:$0xff] %v1388
      %1490 = vst [vmem:[#allocation2 + $0x268] sm:$0xff] %v1389
      %1491 = vst [vmem:[#allocation2 + $0x270] sm:$0xff] %v1390
      %1492 = vst [vmem:[#allocation2 + $0x278] sm:$0xff] %v1391
      %1493 = vst [vmem:[#allocation2 + $0x280] sm:$0xff] %v1392
      %1494 = vst [vmem:[#allocation2 + $0x288] sm:$0xff] %v1393
      %1495 = vst [vmem:[#allocation2 + $0x290] sm:$0xff] %v1394
      %1496 = vst [vmem:[#allocation2 + $0x298] sm:$0xff] %v1395
      %1497 = vst [vmem:[#allocation2 + $0x2a0] sm:$0xff] %v1396
      %1498 = vst [vmem:[#allocation2 + $0x2a8] sm:$0xff] %v1397
      %1499 = vst [vmem:[#allocation2 + $0x2b0] sm:$0xff] %v1398
      %1500 = vst [vmem:[#allocation2 + $0x2b8] sm:$0xff] %v1399
      %1501 = vst [vmem:[#allocation2 + $0x2c0] sm:$0xff] %v1400
      %1502 = vst [vmem:[#allocation2 + $0x2c8] sm:$0xff] %v1401
      %1503 = vst [vmem:[#allocation2 + $0x2d0] sm:$0xff] %v1402
      %1504 = vst [vmem:[#allocation2 + $0x2d8] sm:$0xff] %v1403
      %1505 = vst [vmem:[#allocation2 + $0x2e0] sm:$0xff] %v1404
      %1506 = vst [vmem:[#allocation2 + $0x2e8] sm:$0xff] %v1405
      %1507 = vst [vmem:[#allocation2 + $0x2f0] sm:$0xff] %v1406
      %1508 = vst [vmem:[#allocation2 + $0x2f8] sm:$0xff] %v1407
      %1509 = vst [vmem:[#allocation2 + $0x300] sm:$0xff] %v1408
      %1510 = vst [vmem:[#allocation2 + $0x308] sm:$0xff] %v1409
      %1511 = vst [vmem:[#allocation2 + $0x310] sm:$0xff] %v1410
      %1512 = vst [vmem:[#allocation2 + $0x318] sm:$0xff] %v1411
      %1513 = vst [vmem:[#allocation2 + $0x320] sm:$0xff] %v1412
      %v1514 = vld [vmem:[#allocation2 + $0x258] sm:$0xff]
      %v1515 = vld [vmem:[#allocation2 + $0x260] sm:$0xff]
      %v1516 = vld [vmem:[#allocation2 + $0x268] sm:$0xff]
      %v1517 = vld [vmem:[#allocation2 + $0x270] sm:$0xff]
      %v1518 = vld [vmem:[#allocation2 + $0x278] sm:$0xff]
      %v1519 = vld [vmem:[#allocation2 + $0x280] sm:$0xff]
      %v1520 = vld [vmem:[#allocation2 + $0x288] sm:$0xff]
      %v1521 = vld [vmem:[#allocation2 + $0x290] sm:$0xff]
      %v1522 = vld [vmem:[#allocation2 + $0x298] sm:$0xff]
      %v1523 = vld [vmem:[#allocation2 + $0x2a0] sm:$0xff]
      %v1524 = vld [vmem:[#allocation2 + $0x2a8] sm:$0xff]
      %v1525 = vld [vmem:[#allocation2 + $0x2b0] sm:$0xff]
      %v1526 = vld [vmem:[#allocation2 + $0x2b8] sm:$0xff]
      %v1527 = vld [vmem:[#allocation2 + $0x2c0] sm:$0xff]
      %v1528 = vld [vmem:[#allocation2 + $0x2c8] sm:$0xff]
      %v1529 = vld [vmem:[#allocation2 + $0x2d0] sm:$0xff]
      %v1530 = vld [vmem:[#allocation2 + $0x2d8] sm:$0xff]
      %v1531 = vld [vmem:[#allocation2 + $0x2e0] sm:$0xff]
      %v1532 = vld [vmem:[#allocation2 + $0x2e8] sm:$0xff]
      %v1533 = vld [vmem:[#allocation2 + $0x2f0] sm:$0xff]
      %v1534 = vld [vmem:[#allocation2 + $0x2f8] sm:$0xff]
      %v1535 = vld [vmem:[#allocation2 + $0x300] sm:$0xff]
      %v1536 = vld [vmem:[#allocation2 + $0x308] sm:$0xff]
      %v1537 = vld [vmem:[#allocation2 + $0x310] sm:$0xff]
      %v1538 = vld [vmem:[#allocation2 + $0x318] sm:$0xff]
      %v1539 = vld [vmem:[%s3] sm:$0xff]
      %v1540 = vld [vmem:[%s3 + $0x8] sm:$0xff]
      %v1541 = vld [vmem:[%s3 + $0x10] sm:$0xff]
      %v1542 = vld [vmem:[%s3 + $0x18] sm:$0xff]
      %v1543 = vld [vmem:[%s3 + $0x20] sm:$0xff]
      %v1544 = vld [vmem:[%s3 + $0x28] sm:$0xff]
      %v1545 = vld [vmem:[%s3 + $0x30] sm:$0xff]
      %v1546 = vld [vmem:[%s3 + $0x38] sm:$0xff]
      %v1547 = vld [vmem:[%s3 + $0x40] sm:$0xff]
      %v1548 = vld [vmem:[%s3 + $0x48] sm:$0xff]
      %v1549 = vld [vmem:[%s3 + $0x50] sm:$0xff]
      %v1550 = vld [vmem:[%s3 + $0x58] sm:$0xff]
      %v1551 = vld [vmem:[%s3 + $0x60] sm:$0xff]
      %v1552 = vld [vmem:[%s3 + $0x68] sm:$0xff]
      %v1553 = vld [vmem:[%s3 + $0x70] sm:$0xff]
      %v1554 = vld [vmem:[%s3 + $0x78] sm:$0xff]
      %v1555 = vld [vmem:[#allocation2] sm:$0xff]
      %v1556 = vld [vmem:[#allocation2 + $0x8] sm:$0xff]
      %v1557 = vld [vmem:[#allocation2 + $0x10] sm:$0xff]
      %v1558 = vld [vmem:[#allocation2 + $0x18] sm:$0xff]
      %v1559 = vld [vmem:[#allocation2 + $0x20] sm:$0xff]
      %v1560 = vld [vmem:[#allocation2 + $0x28] sm:$0xff]
      %v1561 = vld [vmem:[#allocation2 + $0x30] sm:$0xff]
      %v1562 = vld [vmem:[#allocation2 + $0x38] sm:$0xff]
      %v1563 = vld [vmem:[#allocation2 + $0x40] sm:$0xff]
      %v1564 = vld [vmem:[#allocation2 + $0x48] sm:$0xff]
      %v1565 = vld [vmem:[#allocation2 + $0x50] sm:$0xff]
      %v1566 = vld [vmem:[#allocation2 + $0x58] sm:$0xff]
      %v1567 = vld [vmem:[#allocation2 + $0x60] sm:$0xff]
      %v1568 = vld [vmem:[#allocation2 + $0x68] sm:$0xff]
      %v1569 = vld [vmem:[#allocation2 + $0x70] sm:$0xff]
      %v1570 = vld [vmem:[#allocation2 + $0x78] sm:$0xff]
      %v1571 = vld [vmem:[#allocation2 + $0x80] sm:$0xff]
      %v1572 = vld [vmem:[#allocation2 + $0x88] sm:$0xff]
      %v1573 = vld [vmem:[#allocation2 + $0x90] sm:$0xff]
      %v1574 = vld [vmem:[#allocation2 + $0x98] sm:$0xff]
      %v1575 = vld [vmem:[#allocation2 + $0xa0] sm:$0xff]
      %v1576 = vld [vmem:[#allocation2 + $0xa8] sm:$0xff]
      %v1577 = vld [vmem:[#allocation2 + $0xb0] sm:$0xff]
      %v1578 = vld [vmem:[#allocation2 + $0xb8] sm:$0xff]
      %v1579 = vld [vmem:[#allocation2 + $0xc0] sm:$0xff]
      %s1580 = scalar_lea.vmem %s3, 128
      %v1581 = vld [vmem:[%s1580] sm:$0xff]
      %v1582 = vld [vmem:[%s1580 + $0x8] sm:$0xff]
      %v1583 = vld [vmem:[%s1580 + $0x10] sm:$0xff]
      %v1584 = vld [vmem:[%s1580 + $0x18] sm:$0xff]
      %v1585 = vld [vmem:[%s1580 + $0x20] sm:$0xff]
      %v1586 = vld [vmem:[%s1580 + $0x28] sm:$0xff]
      %v1587 = vld [vmem:[%s1580 + $0x30] sm:$0xff]
      %v1588 = vld [vmem:[%s1580 + $0x38] sm:$0xff]
      %v1589 = vld [vmem:[%s1580 + $0x40] sm:$0xff]
      %v1590 = vld [vmem:[%s1580 + $0x48] sm:$0xff]
      %v1591 = vld [vmem:[%s1580 + $0x50] sm:$0xff]
      %v1592 = vld [vmem:[%s1580 + $0x58] sm:$0xff]
      %v1593 = vld [vmem:[%s1580 + $0x60] sm:$0xff]
      %v1594 = vld [vmem:[%s1580 + $0x68] sm:$0xff]
      %v1595 = vld [vmem:[%s1580 + $0x70] sm:$0xff]
      %v1596 = vld [vmem:[%s1580 + $0x78] sm:$0xff]
      %1597 = vmatprep.subr.mxu0 0.0
      %1598 = vmatpush1.msra.mxu0 %v1581
      %1599 = vmatprep.subr.mxu0 0.0
      %1600 = vmatpush1.msra.mxu0 %v1582
      %1601 = vmatprep.subr.mxu0 0.0
      %1602 = vmatpush1.msra.mxu0 %v1583
      %1603 = vmatprep.subr.mxu0 0.0
      %1604 = vmatpush1.msra.mxu0 %v1584
      %1605 = vmatprep.subr.mxu0 0.0
      %1606 = vmatpush1.msra.mxu0 %v1585
      %1607 = vmatprep.subr.mxu0 0.0
      %1608 = vmatpush1.msra.mxu0 %v1586
      %1609 = vmatprep.subr.mxu0 0.0
      %1610 = vmatpush1.msra.mxu0 %v1587
      %1611 = vmatprep.subr.mxu0 0.0
      %1612 = vmatpush1.msra.mxu0 %v1588
      %1613 = vmatprep.subr.mxu0 0.0
      %1614 = vmatpush1.msra.mxu0 %v1589
      %1615 = vmatprep.subr.mxu0 0.0
      %1616 = vmatpush1.msra.mxu0 %v1590
      %1617 = vmatprep.subr.mxu0 0.0
      %1618 = vmatpush1.msra.mxu0 %v1591
      %1619 = vmatprep.subr.mxu0 0.0
      %1620 = vmatpush1.msra.mxu0 %v1592
      %1621 = vmatprep.subr.mxu0 0.0
      %1622 = vmatpush1.msra.mxu0 %v1593
      %1623 = vmatprep.subr.mxu0 0.0
      %1624 = vmatpush1.msra.mxu0 %v1594
      %1625 = vmatprep.subr.mxu0 0.0
      %1626 = vmatpush1.msra.mxu0 %v1595
      %1627 = vmatprep.subr.mxu0 0.0
      %1628 = vmatpush1.msra.mxu0 %v1596
      %1629 = vmatprep.subr.mxu0 0.0
      %1630 = vmatpush1.msra.mxu0 0.0
      %1631 = vmatprep.subr.mxu0 0.0
      %1632 = vmatpush1.msra.mxu0 0.0
      %1633 = vmatprep.subr.mxu0 0.0
      %1634 = vmatpush1.msra.mxu0 0.0
      %1635 = vmatprep.subr.mxu0 0.0
      %1636 = vmatpush1.msra.mxu0 0.0
      %1637 = vmatprep.subr.mxu0 0.0
      %1638 = vmatpush1.msra.mxu0 0.0
      %1639 = vmatprep.subr.mxu0 0.0
      %1640 = vmatpush1.msra.mxu0 0.0
      %1641 = vmatprep.subr.mxu0 0.0
      %1642 = vmatpush1.msra.mxu0 0.0
      %1643 = vmatprep.subr.mxu0 0.0
      %1644 = vmatpush1.msra.mxu0 0.0
      %1645 = vmatprep.subr.mxu0 0.0
      %1646 = vmatpush1.msra.mxu0 0.0
      %1647 = vmatprep.subr.mxu0 0.0
      %1648 = vmatpush1.msra.mxu0 0.0
      %1649 = vmatprep.subr.mxu0 0.0
      %1650 = vmatpush1.msra.mxu0 0.0
      %1651 = vmatprep.subr.mxu0 0.0
      %1652 = vmatpush1.msra.mxu0 0.0
      %1653 = vmatprep.subr.mxu0 0.0
      %1654 = vmatpush1.msra.mxu0 0.0
      %1655 = vmatprep.subr.mxu0 0.0
      %1656 = vmatpush1.msra.mxu0 0.0
      %1657 = vmatprep.subr.mxu0 0.0
      %1658 = vmatpush1.msra.mxu0 0.0
      %1659 = vmatprep.subr.mxu0 0.0
      %1660 = vmatpush1.msra.mxu0 0.0
      %1661 = vmatprep.mubr.f32.mxu0 0.0
      %1662 = vmatmul.mubr.f32.gmra.mrb[0].mxu0 %v1555
      %v1663 = vpop.f32.mrb[0].mxu0
      %v1664 = vadd.f32 0.0, %v1663
      %v1665 = vpop.f32.mrb[0].mxu0
      %1666 = vmatprep.mubr.f32.mxu0 0.0
      %1667 = vmatmul.mubr.f32.gmra.mrb[0].mxu0 %v1556
      %v1668 = vpop.f32.mrb[0].mxu0
      %v1669 = vadd.f32 0.0, %v1668
      %v1670 = vpop.f32.mrb[0].mxu0
      %1671 = vmatprep.mubr.f32.mxu0 0.0
      %1672 = vmatmul.mubr.f32.gmra.mrb[0].mxu0 %v1557
      %v1673 = vpop.f32.mrb[0].mxu0
      %v1674 = vadd.f32 0.0, %v1673
      %v1675 = vpop.f32.mrb[0].mxu0
      %1676 = vmatprep.mubr.f32.mxu0 0.0
      %1677 = vmatmul.mubr.f32.gmra.mrb[0].mxu0 %v1558
      %v1678 = vpop.f32.mrb[0].mxu0
      %v1679 = vadd.f32 0.0, %v1678
      %v1680 = vpop.f32.mrb[0].mxu0
      %1681 = vmatprep.mubr.f32.mxu0 0.0
      %1682 = vmatmul.mubr.f32.gmra.mrb[0].mxu0 %v1559
      %v1683 = vpop.f32.mrb[0].mxu0
      %v1684 = vadd.f32 0.0, %v1683
      %v1685 = vpop.f32.mrb[0].mxu0
      %1686 = vmatprep.mubr.f32.mxu0 0.0
      %1687 = vmatmul.mubr.f32.gmra.mrb[0].mxu0 %v1560
      %v1688 = vpop.f32.mrb[0].mxu0
      %v1689 = vadd.f32 0.0, %v1688
      %v1690 = vpop.f32.mrb[0].mxu0
      %1691 = vmatprep.mubr.f32.mxu0 0.0
      %1692 = vmatmul.mubr.f32.gmra.mrb[0].mxu0 %v1561
      %v1693 = vpop.f32.mrb[0].mxu0
      %v1694 = vadd.f32 0.0, %v1693
      %v1695 = vpop.f32.mrb[0].mxu0
      %1696 = vmatprep.mubr.f32.mxu0 0.0
      %1697 = vmatmul.mubr.f32.gmra.mrb[0].mxu0 %v1562
      %v1698 = vpop.f32.mrb[0].mxu0
      %v1699 = vadd.f32 0.0, %v1698
      %v1700 = vpop.f32.mrb[0].mxu0
      %1701 = vmatprep.mubr.f32.mxu0 0.0
      %1702 = vmatmul.mubr.f32.gmra.mrb[0].mxu0 %v1563
      %v1703 = vpop.f32.mrb[0].mxu0
      %v1704 = vadd.f32 0.0, %v1703
      %v1705 = vpop.f32.mrb[0].mxu0
      %1706 = vmatprep.mubr.f32.mxu0 0.0
      %1707 = vmatmul.mubr.f32.gmra.mrb[0].mxu0 %v1564
      %v1708 = vpop.f32.mrb[0].mxu0
      %v1709 = vadd.f32 0.0, %v1708
      %v1710 = vpop.f32.mrb[0].mxu0
      %1711 = vmatprep.mubr.f32.mxu0 0.0
      %1712 = vmatmul.mubr.f32.gmra.mrb[0].mxu0 %v1565
      %v1713 = vpop.f32.mrb[0].mxu0
      %v1714 = vadd.f32 0.0, %v1713
      %v1715 = vpop.f32.mrb[0].mxu0
      %1716 = vmatprep.mubr.f32.mxu0 0.0
      %1717 = vmatmul.mubr.f32.gmra.mrb[0].mxu0 %v1566
      %v1718 = vpop.f32.mrb[0].mxu0
      %v1719 = vadd.f32 0.0, %v1718
      %v1720 = vpop.f32.mrb[0].mxu0
      %1721 = vmatprep.mubr.f32.mxu0 0.0
      %1722 = vmatmul.mubr.f32.gmra.mrb[0].mxu0 %v1567
      %v1723 = vpop.f32.mrb[0].mxu0
      %v1724 = vadd.f32 0.0, %v1723
      %v1725 = vpop.f32.mrb[0].mxu0
      %1726 = vmatprep.mubr.f32.mxu0 0.0
      %1727 = vmatmul.mubr.f32.gmra.mrb[0].mxu0 %v1568
      %v1728 = vpop.f32.mrb[0].mxu0
      %v1729 = vadd.f32 0.0, %v1728
      %v1730 = vpop.f32.mrb[0].mxu0
      %1731 = vmatprep.mubr.f32.mxu0 0.0
      %1732 = vmatmul.mubr.f32.gmra.mrb[0].mxu0 %v1569
      %v1733 = vpop.f32.mrb[0].mxu0
      %v1734 = vadd.f32 0.0, %v1733
      %v1735 = vpop.f32.mrb[0].mxu0
      %1736 = vmatprep.mubr.f32.mxu0 0.0
      %1737 = vmatmul.mubr.f32.gmra.mrb[0].mxu0 %v1570
      %v1738 = vpop.f32.mrb[0].mxu0
      %v1739 = vadd.f32 0.0, %v1738
      %v1740 = vpop.f32.mrb[0].mxu0
      %1741 = vmatprep.mubr.f32.mxu0 0.0
      %1742 = vmatmul.mubr.f32.gmra.mrb[0].mxu0 %v1571
      %v1743 = vpop.f32.mrb[0].mxu0
      %v1744 = vadd.f32 0.0, %v1743
      %v1745 = vpop.f32.mrb[0].mxu0
      %1746 = vmatprep.mubr.f32.mxu0 0.0
      %1747 = vmatmul.mubr.f32.gmra.mrb[0].mxu0 %v1572
      %v1748 = vpop.f32.mrb[0].mxu0
      %v1749 = vadd.f32 0.0, %v1748
      %v1750 = vpop.f32.mrb[0].mxu0
      %1751 = vmatprep.mubr.f32.mxu0 0.0
      %1752 = vmatmul.mubr.f32.gmra.mrb[0].mxu0 %v1573
      %v1753 = vpop.f32.mrb[0].mxu0
      %v1754 = vadd.f32 0.0, %v1753
      %v1755 = vpop.f32.mrb[0].mxu0
      %1756 = vmatprep.mubr.f32.mxu0 0.0
      %1757 = vmatmul.mubr.f32.gmra.mrb[0].mxu0 %v1574
      %v1758 = vpop.f32.mrb[0].mxu0
      %v1759 = vadd.f32 0.0, %v1758
      %v1760 = vpop.f32.mrb[0].mxu0
      %1761 = vmatprep.mubr.f32.mxu0 0.0
      %1762 = vmatmul.mubr.f32.gmra.mrb[0].mxu0 %v1575
      %v1763 = vpop.f32.mrb[0].mxu0
      %v1764 = vadd.f32 0.0, %v1763
      %v1765 = vpop.f32.mrb[0].mxu0
      %1766 = vmatprep.mubr.f32.mxu0 0.0
      %1767 = vmatmul.mubr.f32.gmra.mrb[0].mxu0 %v1576
      %v1768 = vpop.f32.mrb[0].mxu0
      %v1769 = vadd.f32 0.0, %v1768
      %v1770 = vpop.f32.mrb[0].mxu0
      %1771 = vmatprep.mubr.f32.mxu0 0.0
      %1772 = vmatmul.mubr.f32.gmra.mrb[0].mxu0 %v1577
      %v1773 = vpop.f32.mrb[0].mxu0
      %v1774 = vadd.f32 0.0, %v1773
      %v1775 = vpop.f32.mrb[0].mxu0
      %1776 = vmatprep.mubr.f32.mxu0 0.0
      %1777 = vmatmul.mubr.f32.gmra.mrb[0].mxu0 %v1578
      %v1778 = vpop.f32.mrb[0].mxu0
      %v1779 = vadd.f32 0.0, %v1778
      %v1780 = vpop.f32.mrb[0].mxu0
      %1781 = vmatprep.mubr.f32.mxu0 0.0
      %1782 = vmatmul.mubr.f32.gmra.mrb[0].mxu0 %v1579
      %v1783 = vpop.f32.mrb[0].mxu0
      %v1784 = vadd.f32 0.0, %v1783
      %v1785 = vpop.f32.mrb[0].mxu0
      %1786 = vdwg.mxu0
      %1787 = vmatprep.subr.mxu0 0.0
      %1788 = vmatpush1.msra.mxu0 %v1539
      %1789 = vmatprep.subr.mxu0 0.0
      %1790 = vmatpush1.msra.mxu0 %v1540
      %1791 = vmatprep.subr.mxu0 0.0
      %1792 = vmatpush1.msra.mxu0 %v1541
      %1793 = vmatprep.subr.mxu0 0.0
      %1794 = vmatpush1.msra.mxu0 %v1542
      %1795 = vmatprep.subr.mxu0 0.0
      %1796 = vmatpush1.msra.mxu0 %v1543
      %1797 = vmatprep.subr.mxu0 0.0
      %1798 = vmatpush1.msra.mxu0 %v1544
      %1799 = vmatprep.subr.mxu0 0.0
      %1800 = vmatpush1.msra.mxu0 %v1545
      %1801 = vmatprep.subr.mxu0 0.0
      %1802 = vmatpush1.msra.mxu0 %v1546
      %1803 = vmatprep.subr.mxu0 0.0
      %1804 = vmatpush1.msra.mxu0 %v1547
      %1805 = vmatprep.subr.mxu0 0.0
      %1806 = vmatpush1.msra.mxu0 %v1548
      %1807 = vmatprep.subr.mxu0 0.0
      %1808 = vmatpush1.msra.mxu0 %v1549
      %1809 = vmatprep.subr.mxu0 0.0
      %1810 = vmatpush1.msra.mxu0 %v1550
      %1811 = vmatprep.subr.mxu0 0.0
      %1812 = vmatpush1.msra.mxu0 %v1551
      %1813 = vmatprep.subr.mxu0 0.0
      %1814 = vmatpush1.msra.mxu0 %v1552
      %1815 = vmatprep.subr.mxu0 0.0
      %1816 = vmatpush1.msra.mxu0 %v1553
      %1817 = vmatprep.subr.mxu0 0.0
      %1818 = vmatpush1.msra.mxu0 %v1554
      %1819 = vmatprep.subr.mxu0 0.0
      %1820 = vmatpush1.msra.mxu0 0.0
      %1821 = vmatprep.subr.mxu0 0.0
      %1822 = vmatpush1.msra.mxu0 0.0
      %1823 = vmatprep.subr.mxu0 0.0
      %1824 = vmatpush1.msra.mxu0 0.0
      %1825 = vmatprep.subr.mxu0 0.0
      %1826 = vmatpush1.msra.mxu0 0.0
      %1827 = vmatprep.subr.mxu0 0.0
      %1828 = vmatpush1.msra.mxu0 0.0
      %1829 = vmatprep.subr.mxu0 0.0
      %1830 = vmatpush1.msra.mxu0 0.0
      %1831 = vmatprep.subr.mxu0 0.0
      %1832 = vmatpush1.msra.mxu0 0.0
      %1833 = vmatprep.subr.mxu0 0.0
      %1834 = vmatpush1.msra.mxu0 0.0
      %1835 = vmatprep.subr.mxu0 0.0
      %1836 = vmatpush1.msra.mxu0 0.0
      %1837 = vmatprep.subr.mxu0 0.0
      %1838 = vmatpush1.msra.mxu0 0.0
      %1839 = vmatprep.subr.mxu0 0.0
      %1840 = vmatpush1.msra.mxu0 0.0
      %1841 = vmatprep.subr.mxu0 0.0
      %1842 = vmatpush1.msra.mxu0 0.0
      %1843 = vmatprep.subr.mxu0 0.0
      %1844 = vmatpush1.msra.mxu0 0.0
      %1845 = vmatprep.subr.mxu0 0.0
      %1846 = vmatpush1.msra.mxu0 0.0
      %1847 = vmatprep.subr.mxu0 0.0
      %1848 = vmatpush1.msra.mxu0 0.0
      %1849 = vmatprep.subr.mxu0 0.0
      %1850 = vmatpush1.msra.mxu0 0.0
      %1851 = vmatprep.mubr.f32.mxu0 0.0
      %1852 = vmatmul.mubr.f32.gmra.mrb[0].mxu0 %v1514
      %v1853 = vpop.f32.mrb[0].mxu0
      %v1854 = vadd.f32 %v1664, %v1853
      %v1855 = vpop.f32.mrb[0].mxu0
      %1856 = vmatprep.mubr.f32.mxu0 0.0
      %1857 = vmatmul.mubr.f32.gmra.mrb[0].mxu0 %v1515
      %v1858 = vpop.f32.mrb[0].mxu0
      %v1859 = vadd.f32 %v1669, %v1858
      %v1860 = vpop.f32.mrb[0].mxu0
      %1861 = vmatprep.mubr.f32.mxu0 0.0
      %1862 = vmatmul.mubr.f32.gmra.mrb[0].mxu0 %v1516
      %v1863 = vpop.f32.mrb[0].mxu0
      %v1864 = vadd.f32 %v1674, %v1863
      %v1865 = vpop.f32.mrb[0].mxu0
      %1866 = vmatprep.mubr.f32.mxu0 0.0
      %1867 = vmatmul.mubr.f32.gmra.mrb[0].mxu0 %v1517
      %v1868 = vpop.f32.mrb[0].mxu0
      %v1869 = vadd.f32 %v1679, %v1868
      %v1870 = vpop.f32.mrb[0].mxu0
      %1871 = vmatprep.mubr.f32.mxu0 0.0
      %1872 = vmatmul.mubr.f32.gmra.mrb[0].mxu0 %v1518
      %v1873 = vpop.f32.mrb[0].mxu0
      %v1874 = vadd.f32 %v1684, %v1873
      %v1875 = vpop.f32.mrb[0].mxu0
      %1876 = vmatprep.mubr.f32.mxu0 0.0
      %1877 = vmatmul.mubr.f32.gmra.mrb[0].mxu0 %v1519
      %v1878 = vpop.f32.mrb[0].mxu0
      %v1879 = vadd.f32 %v1689, %v1878
      %v1880 = vpop.f32.mrb[0].mxu0
      %1881 = vmatprep.mubr.f32.mxu0 0.0
      %1882 = vmatmul.mubr.f32.gmra.mrb[0].mxu0 %v1520
      %v1883 = vpop.f32.mrb[0].mxu0
      %v1884 = vadd.f32 %v1694, %v1883
      %v1885 = vpop.f32.mrb[0].mxu0
      %1886 = vmatprep.mubr.f32.mxu0 0.0
      %1887 = vmatmul.mubr.f32.gmra.mrb[0].mxu0 %v1521
      %v1888 = vpop.f32.mrb[0].mxu0
      %v1889 = vadd.f32 %v1699, %v1888
      %v1890 = vpop.f32.mrb[0].mxu0
      %1891 = vmatprep.mubr.f32.mxu0 0.0
      %1892 = vmatmul.mubr.f32.gmra.mrb[0].mxu0 %v1522
      %v1893 = vpop.f32.mrb[0].mxu0
      %v1894 = vadd.f32 %v1704, %v1893
      %v1895 = vpop.f32.mrb[0].mxu0
      %1896 = vmatprep.mubr.f32.mxu0 0.0
      %1897 = vmatmul.mubr.f32.gmra.mrb[0].mxu0 %v1523
      %v1898 = vpop.f32.mrb[0].mxu0
      %v1899 = vadd.f32 %v1709, %v1898
      %v1900 = vpop.f32.mrb[0].mxu0
      %1901 = vmatprep.mubr.f32.mxu0 0.0
      %1902 = vmatmul.mubr.f32.gmra.mrb[0].mxu0 %v1524
      %v1903 = vpop.f32.mrb[0].mxu0
      %v1904 = vadd.f32 %v1714, %v1903
      %v1905 = vpop.f32.mrb[0].mxu0
      %1906 = vmatprep.mubr.f32.mxu0 0.0
      %1907 = vmatmul.mubr.f32.gmra.mrb[0].mxu0 %v1525
      %v1908 = vpop.f32.mrb[0].mxu0
      %v1909 = vadd.f32 %v1719, %v1908
      %v1910 = vpop.f32.mrb[0].mxu0
      %1911 = vmatprep.mubr.f32.mxu0 0.0
      %1912 = vmatmul.mubr.f32.gmra.mrb[0].mxu0 %v1526
      %v1913 = vpop.f32.mrb[0].mxu0
      %v1914 = vadd.f32 %v1724, %v1913
      %v1915 = vpop.f32.mrb[0].mxu0
      %1916 = vmatprep.mubr.f32.mxu0 0.0
      %1917 = vmatmul.mubr.f32.gmra.mrb[0].mxu0 %v1527
      %v1918 = vpop.f32.mrb[0].mxu0
      %v1919 = vadd.f32 %v1729, %v1918
      %v1920 = vpop.f32.mrb[0].mxu0
      %1921 = vmatprep.mubr.f32.mxu0 0.0
      %1922 = vmatmul.mubr.f32.gmra.mrb[0].mxu0 %v1528
      %v1923 = vpop.f32.mrb[0].mxu0
      %v1924 = vadd.f32 %v1734, %v1923
      %v1925 = vpop.f32.mrb[0].mxu0
      %1926 = vmatprep.mubr.f32.mxu0 0.0
      %1927 = vmatmul.mubr.f32.gmra.mrb[0].mxu0 %v1529
      %v1928 = vpop.f32.mrb[0].mxu0
      %v1929 = vadd.f32 %v1739, %v1928
      %v1930 = vpop.f32.mrb[0].mxu0
      %1931 = vmatprep.mubr.f32.mxu0 0.0
      %1932 = vmatmul.mubr.f32.gmra.mrb[0].mxu0 %v1530
      %v1933 = vpop.f32.mrb[0].mxu0
      %v1934 = vadd.f32 %v1744, %v1933
      %v1935 = vpop.f32.mrb[0].mxu0
      %1936 = vmatprep.mubr.f32.mxu0 0.0
      %1937 = vmatmul.mubr.f32.gmra.mrb[0].mxu0 %v1531
      %v1938 = vpop.f32.mrb[0].mxu0
      %v1939 = vadd.f32 %v1749, %v1938
      %v1940 = vpop.f32.mrb[0].mxu0
      %1941 = vmatprep.mubr.f32.mxu0 0.0
      %1942 = vmatmul.mubr.f32.gmra.mrb[0].mxu0 %v1532
      %v1943 = vpop.f32.mrb[0].mxu0
      %v1944 = vadd.f32 %v1754, %v1943
      %v1945 = vpop.f32.mrb[0].mxu0
      %1946 = vmatprep.mubr.f32.mxu0 0.0
      %1947 = vmatmul.mubr.f32.gmra.mrb[0].mxu0 %v1533
      %v1948 = vpop.f32.mrb[0].mxu0
      %v1949 = vadd.f32 %v1759, %v1948
      %v1950 = vpop.f32.mrb[0].mxu0
      %1951 = vmatprep.mubr.f32.mxu0 0.0
      %1952 = vmatmul.mubr.f32.gmra.mrb[0].mxu0 %v1534
      %v1953 = vpop.f32.mrb[0].mxu0
      %v1954 = vadd.f32 %v1764, %v1953
      %v1955 = vpop.f32.mrb[0].mxu0
      %1956 = vmatprep.mubr.f32.mxu0 0.0
      %1957 = vmatmul.mubr.f32.gmra.mrb[0].mxu0 %v1535
      %v1958 = vpop.f32.mrb[0].mxu0
      %v1959 = vadd.f32 %v1769, %v1958
      %v1960 = vpop.f32.mrb[0].mxu0
      %1961 = vmatprep.mubr.f32.mxu0 0.0
      %1962 = vmatmul.mubr.f32.gmra.mrb[0].mxu0 %v1536
      %v1963 = vpop.f32.mrb[0].mxu0
      %v1964 = vadd.f32 %v1774, %v1963
      %v1965 = vpop.f32.mrb[0].mxu0
      %1966 = vmatprep.mubr.f32.mxu0 0.0
      %1967 = vmatmul.mubr.f32.gmra.mrb[0].mxu0 %v1537
      %v1968 = vpop.f32.mrb[0].mxu0
      %v1969 = vadd.f32 %v1779, %v1968
      %v1970 = vpop.f32.mrb[0].mxu0
      %1971 = vmatprep.mubr.f32.mxu0 0.0
      %1972 = vmatmul.mubr.f32.gmra.mrb[0].mxu0 %v1538
      %v1973 = vpop.f32.mrb[0].mxu0
      %v1974 = vadd.f32 %v1784, %v1973
      %v1975 = vpop.f32.mrb[0].mxu0
      %1976 = vdwg.mxu0
      %v1977 = vld [vmem:[#allocation2 + $0xc8] sm:$0xff]
      %v1978 = vld [vmem:[#allocation2 + $0xd0] sm:$0xff]
      %v1979 = vld [vmem:[#allocation2 + $0xd8] sm:$0xff]
      %v1980 = vld [vmem:[#allocation2 + $0xe0] sm:$0xff]
      %v1981 = vld [vmem:[#allocation2 + $0xe8] sm:$0xff]
      %v1982 = vld [vmem:[#allocation2 + $0xf0] sm:$0xff]
      %v1983 = vld [vmem:[#allocation2 + $0xf8] sm:$0xff]
      %v1984 = vld [vmem:[#allocation2 + $0x100] sm:$0xff]
      %v1985 = vld [vmem:[#allocation2 + $0x108] sm:$0xff]
      %v1986 = vld [vmem:[#allocation2 + $0x110] sm:$0xff]
      %v1987 = vld [vmem:[#allocation2 + $0x118] sm:$0xff]
      %v1988 = vld [vmem:[#allocation2 + $0x120] sm:$0xff]
      %v1989 = vld [vmem:[#allocation2 + $0x128] sm:$0xff]
      %v1990 = vld [vmem:[#allocation2 + $0x130] sm:$0xff]
      %v1991 = vld [vmem:[#allocation2 + $0x138] sm:$0xff]
      %v1992 = vld [vmem:[#allocation2 + $0x140] sm:$0xff]
      %v1993 = vld [vmem:[#allocation2 + $0x148] sm:$0xff]
      %v1994 = vld [vmem:[#allocation2 + $0x150] sm:$0xff]
      %v1995 = vld [vmem:[#allocation2 + $0x158] sm:$0xff]
      %v1996 = vld [vmem:[#allocation2 + $0x160] sm:$0xff]
      %v1997 = vld [vmem:[#allocation2 + $0x168] sm:$0xff]
      %v1998 = vld [vmem:[#allocation2 + $0x170] sm:$0xff]
      %v1999 = vld [vmem:[#allocation2 + $0x178] sm:$0xff]
      %v2000 = vld [vmem:[#allocation2 + $0x180] sm:$0xff]
      %v2001 = vld [vmem:[#allocation2 + $0x188] sm:$0xff]
      %s2002 = scalar_lea.vmem %s3, 256
      %v2003 = vld [vmem:[%s2002] sm:$0xff]
      %v2004 = vld [vmem:[%s2002 + $0x8] sm:$0xff]
      %v2005 = vld [vmem:[%s2002 + $0x10] sm:$0xff]
      %v2006 = vld [vmem:[%s2002 + $0x18] sm:$0xff]
      %v2007 = vld [vmem:[%s2002 + $0x20] sm:$0xff]
      %v2008 = vld [vmem:[%s2002 + $0x28] sm:$0xff]
      %v2009 = vld [vmem:[%s2002 + $0x30] sm:$0xff]
      %v2010 = vld [vmem:[%s2002 + $0x38] sm:$0xff]
      %v2011 = vld [vmem:[%s2002 + $0x40] sm:$0xff]
      %v2012 = vld [vmem:[%s2002 + $0x48] sm:$0xff]
      %v2013 = vld [vmem:[%s2002 + $0x50] sm:$0xff]
      %v2014 = vld [vmem:[%s2002 + $0x58] sm:$0xff]
      %v2015 = vld [vmem:[%s2002 + $0x60] sm:$0xff]
      %v2016 = vld [vmem:[%s2002 + $0x68] sm:$0xff]
      %v2017 = vld [vmem:[%s2002 + $0x70] sm:$0xff]
      %v2018 = vld [vmem:[%s2002 + $0x78] sm:$0xff]
      %2019 = vmatprep.subr.mxu0 0.0
      %2020 = vmatpush1.msra.mxu0 %v2003
      %2021 = vmatprep.subr.mxu0 0.0
      %2022 = vmatpush1.msra.mxu0 %v2004
      %2023 = vmatprep.subr.mxu0 0.0
      %2024 = vmatpush1.msra.mxu0 %v2005
      %2025 = vmatprep.subr.mxu0 0.0
      %2026 = vmatpush1.msra.mxu0 %v2006
      %2027 = vmatprep.subr.mxu0 0.0
      %2028 = vmatpush1.msra.mxu0 %v2007
      %2029 = vmatprep.subr.mxu0 0.0
      %2030 = vmatpush1.msra.mxu0 %v2008
      %2031 = vmatprep.subr.mxu0 0.0
      %2032 = vmatpush1.msra.mxu0 %v2009
      %2033 = vmatprep.subr.mxu0 0.0
      %2034 = vmatpush1.msra.mxu0 %v2010
      %2035 = vmatprep.subr.mxu0 0.0
      %2036 = vmatpush1.msra.mxu0 %v2011
      %2037 = vmatprep.subr.mxu0 0.0
      %2038 = vmatpush1.msra.mxu0 %v2012
      %2039 = vmatprep.subr.mxu0 0.0
      %2040 = vmatpush1.msra.mxu0 %v2013
      %2041 = vmatprep.subr.mxu0 0.0
      %2042 = vmatpush1.msra.mxu0 %v2014
      %2043 = vmatprep.subr.mxu0 0.0
      %2044 = vmatpush1.msra.mxu0 %v2015
      %2045 = vmatprep.subr.mxu0 0.0
      %2046 = vmatpush1.msra.mxu0 %v2016
      %2047 = vmatprep.subr.mxu0 0.0
      %2048 = vmatpush1.msra.mxu0 %v2017
      %2049 = vmatprep.subr.mxu0 0.0
      %2050 = vmatpush1.msra.mxu0 %v2018
      %2051 = vmatprep.subr.mxu0 0.0
      %2052 = vmatpush1.msra.mxu0 0.0
      %2053 = vmatprep.subr.mxu0 0.0
      %2054 = vmatpush1.msra.mxu0 0.0
      %2055 = vmatprep.subr.mxu0 0.0
      %2056 = vmatpush1.msra.mxu0 0.0
      %2057 = vmatprep.subr.mxu0 0.0
      %2058 = vmatpush1.msra.mxu0 0.0
      %2059 = vmatprep.subr.mxu0 0.0
      %2060 = vmatpush1.msra.mxu0 0.0
      %2061 = vmatprep.subr.mxu0 0.0
      %2062 = vmatpush1.msra.mxu0 0.0
      %2063 = vmatprep.subr.mxu0 0.0
      %2064 = vmatpush1.msra.mxu0 0.0
      %2065 = vmatprep.subr.mxu0 0.0
      %2066 = vmatpush1.msra.mxu0 0.0
      %2067 = vmatprep.subr.mxu0 0.0
      %2068 = vmatpush1.msra.mxu0 0.0
      %2069 = vmatprep.subr.mxu0 0.0
      %2070 = vmatpush1.msra.mxu0 0.0
      %2071 = vmatprep.subr.mxu0 0.0
      %2072 = vmatpush1.msra.mxu0 0.0
      %2073 = vmatprep.subr.mxu0 0.0
      %2074 = vmatpush1.msra.mxu0 0.0
      %2075 = vmatprep.subr.mxu0 0.0
      %2076 = vmatpush1.msra.mxu0 0.0
      %2077 = vmatprep.subr.mxu0 0.0
      %2078 = vmatpush1.msra.mxu0 0.0
      %2079 = vmatprep.subr.mxu0 0.0
      %2080 = vmatpush1.msra.mxu0 0.0
      %2081 = vmatprep.subr.mxu0 0.0
      %2082 = vmatpush1.msra.mxu0 0.0
      %2083 = vmatprep.mubr.f32.mxu0 0.0
      %2084 = vmatmul.mubr.f32.gmra.mrb[0].mxu0 %v1977
      %v2085 = vpop.f32.mrb[0].mxu0
      %v2086 = vadd.f32 0.0, %v2085
      %v2087 = vpop.f32.mrb[0].mxu0
      %2088 = vmatprep.mubr.f32.mxu0 0.0
      %2089 = vmatmul.mubr.f32.gmra.mrb[0].mxu0 %v1978
      %v2090 = vpop.f32.mrb[0].mxu0
      %v2091 = vadd.f32 0.0, %v2090
      %v2092 = vpop.f32.mrb[0].mxu0
      %2093 = vmatprep.mubr.f32.mxu0 0.0
      %2094 = vmatmul.mubr.f32.gmra.mrb[0].mxu0 %v1979
      %v2095 = vpop.f32.mrb[0].mxu0
      %v2096 = vadd.f32 0.0, %v2095
      %v2097 = vpop.f32.mrb[0].mxu0
      %2098 = vmatprep.mubr.f32.mxu0 0.0
      %2099 = vmatmul.mubr.f32.gmra.mrb[0].mxu0 %v1980
      %v2100 = vpop.f32.mrb[0].mxu0
      %v2101 = vadd.f32 0.0, %v2100
      %v2102 = vpop.f32.mrb[0].mxu0
      %2103 = vmatprep.mubr.f32.mxu0 0.0
      %2104 = vmatmul.mubr.f32.gmra.mrb[0].mxu0 %v1981
      %v2105 = vpop.f32.mrb[0].mxu0
      %v2106 = vadd.f32 0.0, %v2105
      %v2107 = vpop.f32.mrb[0].mxu0
      %2108 = vmatprep.mubr.f32.mxu0 0.0
      %2109 = vmatmul.mubr.f32.gmra.mrb[0].mxu0 %v1982
      %v2110 = vpop.f32.mrb[0].mxu0
      %v2111 = vadd.f32 0.0, %v2110
      %v2112 = vpop.f32.mrb[0].mxu0
      %2113 = vmatprep.mubr.f32.mxu0 0.0
      %2114 = vmatmul.mubr.f32.gmra.mrb[0].mxu0 %v1983
      %v2115 = vpop.f32.mrb[0].mxu0
      %v2116 = vadd.f32 0.0, %v2115
      %v2117 = vpop.f32.mrb[0].mxu0
      %2118 = vmatprep.mubr.f32.mxu0 0.0
      %2119 = vmatmul.mubr.f32.gmra.mrb[0].mxu0 %v1984
      %v2120 = vpop.f32.mrb[0].mxu0
      %v2121 = vadd.f32 0.0, %v2120
      %v2122 = vpop.f32.mrb[0].mxu0
      %2123 = vmatprep.mubr.f32.mxu0 0.0
      %2124 = vmatmul.mubr.f32.gmra.mrb[0].mxu0 %v1985
      %v2125 = vpop.f32.mrb[0].mxu0
      %v2126 = vadd.f32 0.0, %v2125
      %v2127 = vpop.f32.mrb[0].mxu0
      %2128 = vmatprep.mubr.f32.mxu0 0.0
      %2129 = vmatmul.mubr.f32.gmra.mrb[0].mxu0 %v1986
      %v2130 = vpop.f32.mrb[0].mxu0
      %v2131 = vadd.f32 0.0, %v2130
      %v2132 = vpop.f32.mrb[0].mxu0
      %2133 = vmatprep.mubr.f32.mxu0 0.0
      %2134 = vmatmul.mubr.f32.gmra.mrb[0].mxu0 %v1987
      %v2135 = vpop.f32.mrb[0].mxu0
      %v2136 = vadd.f32 0.0, %v2135
      %v2137 = vpop.f32.mrb[0].mxu0
      %2138 = vmatprep.mubr.f32.mxu0 0.0
      %2139 = vmatmul.mubr.f32.gmra.mrb[0].mxu0 %v1988
      %v2140 = vpop.f32.mrb[0].mxu0
      %v2141 = vadd.f32 0.0, %v2140
      %v2142 = vpop.f32.mrb[0].mxu0
      %2143 = vmatprep.mubr.f32.mxu0 0.0
      %2144 = vmatmul.mubr.f32.gmra.mrb[0].mxu0 %v1989
      %v2145 = vpop.f32.mrb[0].mxu0
      %v2146 = vadd.f32 0.0, %v2145
      %v2147 = vpop.f32.mrb[0].mxu0
      %2148 = vmatprep.mubr.f32.mxu0 0.0
      %2149 = vmatmul.mubr.f32.gmra.mrb[0].mxu0 %v1990
      %v2150 = vpop.f32.mrb[0].mxu0
      %v2151 = vadd.f32 0.0, %v2150
      %v2152 = vpop.f32.mrb[0].mxu0
      %2153 = vmatprep.mubr.f32.mxu0 0.0
      %2154 = vmatmul.mubr.f32.gmra.mrb[0].mxu0 %v1991
      %v2155 = vpop.f32.mrb[0].mxu0
      %v2156 = vadd.f32 0.0, %v2155
      %v2157 = vpop.f32.mrb[0].mxu0
      %2158 = vmatprep.mubr.f32.mxu0 0.0
      %2159 = vmatmul.mubr.f32.gmra.mrb[0].mxu0 %v1992
      %v2160 = vpop.f32.mrb[0].mxu0
      %v2161 = vadd.f32 0.0, %v2160
      %v2162 = vpop.f32.mrb[0].mxu0
      %2163 = vmatprep.mubr.f32.mxu0 0.0
      %2164 = vmatmul.mubr.f32.gmra.mrb[0].mxu0 %v1993
      %v2165 = vpop.f32.mrb[0].mxu0
      %v2166 = vadd.f32 0.0, %v2165
      %v2167 = vpop.f32.mrb[0].mxu0
      %2168 = vmatprep.mubr.f32.mxu0 0.0
      %2169 = vmatmul.mubr.f32.gmra.mrb[0].mxu0 %v1994
      %v2170 = vpop.f32.mrb[0].mxu0
      %v2171 = vadd.f32 0.0, %v2170
      %v2172 = vpop.f32.mrb[0].mxu0
      %2173 = vmatprep.mubr.f32.mxu0 0.0
      %2174 = vmatmul.mubr.f32.gmra.mrb[0].mxu0 %v1995
      %v2175 = vpop.f32.mrb[0].mxu0
      %v2176 = vadd.f32 0.0, %v2175
      %v2177 = vpop.f32.mrb[0].mxu0
      %2178 = vmatprep.mubr.f32.mxu0 0.0
      %2179 = vmatmul.mubr.f32.gmra.mrb[0].mxu0 %v1996
      %v2180 = vpop.f32.mrb[0].mxu0
      %v2181 = vadd.f32 0.0, %v2180
      %v2182 = vpop.f32.mrb[0].mxu0
      %2183 = vmatprep.mubr.f32.mxu0 0.0
      %2184 = vmatmul.mubr.f32.gmra.mrb[0].mxu0 %v1997
      %v2185 = vpop.f32.mrb[0].mxu0
      %v2186 = vadd.f32 0.0, %v2185
      %v2187 = vpop.f32.mrb[0].mxu0
      %2188 = vmatprep.mubr.f32.mxu0 0.0
      %2189 = vmatmul.mubr.f32.gmra.mrb[0].mxu0 %v1998
      %v2190 = vpop.f32.mrb[0].mxu0
      %v2191 = vadd.f32 0.0, %v2190
      %v2192 = vpop.f32.mrb[0].mxu0
      %2193 = vmatprep.mubr.f32.mxu0 0.0
      %2194 = vmatmul.mubr.f32.gmra.mrb[0].mxu0 %v1999
      %v2195 = vpop.f32.mrb[0].mxu0
      %v2196 = vadd.f32 0.0, %v2195
      %v2197 = vpop.f32.mrb[0].mxu0
      %2198 = vmatprep.mubr.f32.mxu0 0.0
      %2199 = vmatmul.mubr.f32.gmra.mrb[0].mxu0 %v2000
      %v2200 = vpop.f32.mrb[0].mxu0
      %v2201 = vadd.f32 0.0, %v2200
      %v2202 = vpop.f32.mrb[0].mxu0
      %2203 = vmatprep.mubr.f32.mxu0 0.0
      %2204 = vmatmul.mubr.f32.gmra.mrb[0].mxu0 %v2001
      %v2205 = vpop.f32.mrb[0].mxu0
      %v2206 = vadd.f32 0.0, %v2205
      %v2207 = vpop.f32.mrb[0].mxu0
      %2208 = vdwg.mxu0
      %v2209 = vadd.f32 %v1854, %v2086
      %v2210 = vadd.f32 %v1859, %v2091
      %v2211 = vadd.f32 %v1864, %v2096
      %v2212 = vadd.f32 %v1869, %v2101
      %v2213 = vadd.f32 %v1874, %v2106
      %v2214 = vadd.f32 %v1879, %v2111
      %v2215 = vadd.f32 %v1884, %v2116
      %v2216 = vadd.f32 %v1889, %v2121
      %v2217 = vadd.f32 %v1894, %v2126
      %v2218 = vadd.f32 %v1899, %v2131
      %v2219 = vadd.f32 %v1904, %v2136
      %v2220 = vadd.f32 %v1909, %v2141
      %v2221 = vadd.f32 %v1914, %v2146
      %v2222 = vadd.f32 %v1919, %v2151
      %v2223 = vadd.f32 %v1924, %v2156
      %v2224 = vadd.f32 %v1929, %v2161
      %v2225 = vadd.f32 %v1934, %v2166
      %v2226 = vadd.f32 %v1939, %v2171
      %v2227 = vadd.f32 %v1944, %v2176
      %v2228 = vadd.f32 %v1949, %v2181
      %v2229 = vadd.f32 %v1954, %v2186
      %v2230 = vadd.f32 %v1959, %v2191
      %v2231 = vadd.f32 %v1964, %v2196
      %v2232 = vadd.f32 %v1969, %v2201
      %v2233 = vadd.f32 %v1974, %v2206
      %v2234 = vld [vmem:[%s4] sm:$0x1]
      %v2236 = vlaneseq
      %v2237 = vshrl.u32 %v2236, 7
      %v2238 = vsub.s32 0, %v2237
      %v2239 = vrot.slane %v2234, %v2238
      %v2241 = vadd.f32 %v2209, %v2239
      %v2242 = vadd.f32 %v2210, %v2239
      %v2243 = vadd.f32 %v2211, %v2239
      %v2244 = vadd.f32 %v2212, %v2239
      %v2245 = vadd.f32 %v2213, %v2239
      %v2246 = vadd.f32 %v2214, %v2239
      %v2247 = vadd.f32 %v2215, %v2239
      %v2248 = vadd.f32 %v2216, %v2239
      %v2249 = vadd.f32 %v2217, %v2239
      %v2250 = vadd.f32 %v2218, %v2239
      %v2251 = vadd.f32 %v2219, %v2239
      %v2252 = vadd.f32 %v2220, %v2239
      %v2253 = vadd.f32 %v2221, %v2239
      %v2254 = vadd.f32 %v2222, %v2239
      %v2255 = vadd.f32 %v2223, %v2239
      %v2256 = vadd.f32 %v2224, %v2239
      %v2257 = vadd.f32 %v2225, %v2239
      %v2258 = vadd.f32 %v2226, %v2239
      %v2259 = vadd.f32 %v2227, %v2239
      %v2260 = vadd.f32 %v2228, %v2239
      %v2261 = vadd.f32 %v2229, %v2239
      %v2262 = vadd.f32 %v2230, %v2239
      %v2263 = vadd.f32 %v2231, %v2239
      %v2264 = vadd.f32 %v2232, %v2239
      %v2265 = vadd.f32 %v2233, %v2239
      %v2266 = vmax.f32 %v2241, 0.0
      %v2267 = vmax.f32 %v2242, 0.0
      %v2268 = vmax.f32 %v2243, 0.0
      %v2269 = vmax.f32 %v2244, 0.0
      %v2270 = vmax.f32 %v2245, 0.0
      %v2271 = vmax.f32 %v2246, 0.0
      %v2272 = vmax.f32 %v2247, 0.0
      %v2273 = vmax.f32 %v2248, 0.0
      %v2274 = vmax.f32 %v2249, 0.0
      %v2275 = vmax.f32 %v2250, 0.0
      %v2276 = vmax.f32 %v2251, 0.0
      %v2277 = vmax.f32 %v2252, 0.0
      %v2278 = vmax.f32 %v2253, 0.0
      %v2279 = vmax.f32 %v2254, 0.0
      %v2280 = vmax.f32 %v2255, 0.0
      %v2281 = vmax.f32 %v2256, 0.0
      %v2282 = vmax.f32 %v2257, 0.0
      %v2283 = vmax.f32 %v2258, 0.0
      %v2284 = vmax.f32 %v2259, 0.0
      %v2285 = vmax.f32 %v2260, 0.0
      %v2286 = vmax.f32 %v2261, 0.0
      %v2287 = vmax.f32 %v2262, 0.0
      %v2288 = vmax.f32 %v2263, 0.0
      %v2289 = vmax.f32 %v2264, 0.0
      %v2290 = vmax.f32 %v2265, 0.0
      %2291 = vst [vmem:[#allocation3] sm:$0xff] %v2266
      %2292 = vst [vmem:[#allocation3 + $0x8] sm:$0xff] %v2267
      %2293 = vst [vmem:[#allocation3 + $0x10] sm:$0xff] %v2268
      %2294 = vst [vmem:[#allocation3 + $0x18] sm:$0xff] %v2269
      %2295 = vst [vmem:[#allocation3 + $0x20] sm:$0xff] %v2270
      %2296 = vst [vmem:[#allocation3 + $0x28] sm:$0xff] %v2271
      %2297 = vst [vmem:[#allocation3 + $0x30] sm:$0xff] %v2272
      %2298 = vst [vmem:[#allocation3 + $0x38] sm:$0xff] %v2273
      %2299 = vst [vmem:[#allocation3 + $0x40] sm:$0xff] %v2274
      %2300 = vst [vmem:[#allocation3 + $0x48] sm:$0xff] %v2275
      %2301 = vst [vmem:[#allocation3 + $0x50] sm:$0xff] %v2276
      %2302 = vst [vmem:[#allocation3 + $0x58] sm:$0xff] %v2277
      %2303 = vst [vmem:[#allocation3 + $0x60] sm:$0xff] %v2278
      %2304 = vst [vmem:[#allocation3 + $0x68] sm:$0xff] %v2279
      %2305 = vst [vmem:[#allocation3 + $0x70] sm:$0xff] %v2280
      %2306 = vst [vmem:[#allocation3 + $0x78] sm:$0xff] %v2281
      %2307 = vst [vmem:[#allocation3 + $0x80] sm:$0xff] %v2282
      %2308 = vst [vmem:[#allocation3 + $0x88] sm:$0xff] %v2283
      %2309 = vst [vmem:[#allocation3 + $0x90] sm:$0xff] %v2284
      %2310 = vst [vmem:[#allocation3 + $0x98] sm:$0xff] %v2285
      %2311 = vst [vmem:[#allocation3 + $0xa0] sm:$0xff] %v2286
      %2312 = vst [vmem:[#allocation3 + $0xa8] sm:$0xff] %v2287
      %2313 = vst [vmem:[#allocation3 + $0xb0] sm:$0xff] %v2288
      %2314 = vst [vmem:[#allocation3 + $0xb8] sm:$0xff] %v2289
      %2315 = vst [vmem:[#allocation3 + $0xc0] sm:$0xff] %v2290
      %v2316 = vld [vmem:[#allocation2 + $0xc8] sm:$0xff]
      %v2317 = vld [vmem:[#allocation2 + $0xd0] sm:$0xff]
      %v2318 = vld [vmem:[#allocation2 + $0xd8] sm:$0xff]
      %v2319 = vld [vmem:[#allocation2 + $0xe0] sm:$0xff]
      %v2320 = vld [vmem:[#allocation2 + $0xe8] sm:$0xff]
      %v2321 = vld [vmem:[#allocation2 + $0xf0] sm:$0xff]
      %v2322 = vld [vmem:[#allocation2 + $0xf8] sm:$0xff]
      %v2323 = vld [vmem:[#allocation2 + $0x100] sm:$0xff]
      %v2324 = vld [vmem:[#allocation2 + $0x108] sm:$0xff]
      %v2325 = vld [vmem:[#allocation2 + $0x110] sm:$0xff]
      %v2326 = vld [vmem:[#allocation2 + $0x118] sm:$0xff]
      %v2327 = vld [vmem:[#allocation2 + $0x120] sm:$0xff]
      %v2328 = vld [vmem:[#allocation2 + $0x128] sm:$0xff]
      %v2329 = vld [vmem:[#allocation2 + $0x130] sm:$0xff]
      %v2330 = vld [vmem:[#allocation2 + $0x138] sm:$0xff]
      %v2331 = vld [vmem:[#allocation2 + $0x140] sm:$0xff]
      %v2332 = vld [vmem:[#allocation2 + $0x148] sm:$0xff]
      %v2333 = vld [vmem:[#allocation2 + $0x150] sm:$0xff]
      %v2334 = vld [vmem:[#allocation2 + $0x158] sm:$0xff]
      %v2335 = vld [vmem:[#allocation2 + $0x160] sm:$0xff]
      %v2336 = vld [vmem:[#allocation2 + $0x168] sm:$0xff]
      %v2337 = vld [vmem:[#allocation2 + $0x170] sm:$0xff]
      %v2338 = vld [vmem:[#allocation2 + $0x178] sm:$0xff]
      %v2339 = vld [vmem:[#allocation2 + $0x180] sm:$0xff]
      %v2340 = vld [vmem:[#allocation2 + $0x188] sm:$0xff]
      %v2341 = vld [vmem:[%s3] sm:$0xff]
      %v2342 = vld [vmem:[%s3 + $0x8] sm:$0xff]
      %v2343 = vld [vmem:[%s3 + $0x10] sm:$0xff]
      %v2344 = vld [vmem:[%s3 + $0x18] sm:$0xff]
      %v2345 = vld [vmem:[%s3 + $0x20] sm:$0xff]
      %v2346 = vld [vmem:[%s3 + $0x28] sm:$0xff]
      %v2347 = vld [vmem:[%s3 + $0x30] sm:$0xff]
      %v2348 = vld [vmem:[%s3 + $0x38] sm:$0xff]
      %v2349 = vld [vmem:[%s3 + $0x40] sm:$0xff]
      %v2350 = vld [vmem:[%s3 + $0x48] sm:$0xff]
      %v2351 = vld [vmem:[%s3 + $0x50] sm:$0xff]
      %v2352 = vld [vmem:[%s3 + $0x58] sm:$0xff]
      %v2353 = vld [vmem:[%s3 + $0x60] sm:$0xff]
      %v2354 = vld [vmem:[%s3 + $0x68] sm:$0xff]
      %v2355 = vld [vmem:[%s3 + $0x70] sm:$0xff]
      %v2356 = vld [vmem:[%s3 + $0x78] sm:$0xff]
      %v2357 = vld [vmem:[#allocation2 + $0x190] sm:$0xff]
      %v2358 = vld [vmem:[#allocation2 + $0x198] sm:$0xff]
      %v2359 = vld [vmem:[#allocation2 + $0x1a0] sm:$0xff]
      %v2360 = vld [vmem:[#allocation2 + $0x1a8] sm:$0xff]
      %v2361 = vld [vmem:[#allocation2 + $0x1b0] sm:$0xff]
      %v2362 = vld [vmem:[#allocation2 + $0x1b8] sm:$0xff]
      %v2363 = vld [vmem:[#allocation2 + $0x1c0] sm:$0xff]
      %v2364 = vld [vmem:[#allocation2 + $0x1c8] sm:$0xff]
      %v2365 = vld [vmem:[#allocation2 + $0x1d0] sm:$0xff]
      %v2366 = vld [vmem:[#allocation2 + $0x1d8] sm:$0xff]
      %v2367 = vld [vmem:[#allocation2 + $0x1e0] sm:$0xff]
      %v2368 = vld [vmem:[#allocation2 + $0x1e8] sm:$0xff]
      %v2369 = vld [vmem:[#allocation2 + $0x1f0] sm:$0xff]
      %v2370 = vld [vmem:[#allocation2 + $0x1f8] sm:$0xff]
      %v2371 = vld [vmem:[#allocation2 + $0x200] sm:$0xff]
      %v2372 = vld [vmem:[#allocation2 + $0x208] sm:$0xff]
      %v2373 = vld [vmem:[#allocation2 + $0x210] sm:$0xff]
      %v2374 = vld [vmem:[#allocation2 + $0x218] sm:$0xff]
      %v2375 = vld [vmem:[#allocation2 + $0x220] sm:$0xff]
      %v2376 = vld [vmem:[#allocation2 + $0x228] sm:$0xff]
      %v2377 = vld [vmem:[#allocation2 + $0x230] sm:$0xff]
      %v2378 = vld [vmem:[#allocation2 + $0x238] sm:$0xff]
      %v2379 = vld [vmem:[#allocation2 + $0x240] sm:$0xff]
      %v2380 = vld [vmem:[#allocation2 + $0x248] sm:$0xff]
      %v2381 = vld [vmem:[#allocation2 + $0x250] sm:$0xff]
      %v2382 = vld [vmem:[%s1580] sm:$0xff]
      %v2383 = vld [vmem:[%s1580 + $0x8] sm:$0xff]
      %v2384 = vld [vmem:[%s1580 + $0x10] sm:$0xff]
      %v2385 = vld [vmem:[%s1580 + $0x18] sm:$0xff]
      %v2386 = vld [vmem:[%s1580 + $0x20] sm:$0xff]
      %v2387 = vld [vmem:[%s1580 + $0x28] sm:$0xff]
      %v2388 = vld [vmem:[%s1580 + $0x30] sm:$0xff]
      %v2389 = vld [vmem:[%s1580 + $0x38] sm:$0xff]
      %v2390 = vld [vmem:[%s1580 + $0x40] sm:$0xff]
      %v2391 = vld [vmem:[%s1580 + $0x48] sm:$0xff]
      %v2392 = vld [vmem:[%s1580 + $0x50] sm:$0xff]
      %v2393 = vld [vmem:[%s1580 + $0x58] sm:$0xff]
      %v2394 = vld [vmem:[%s1580 + $0x60] sm:$0xff]
      %v2395 = vld [vmem:[%s1580 + $0x68] sm:$0xff]
      %v2396 = vld [vmem:[%s1580 + $0x70] sm:$0xff]
      %v2397 = vld [vmem:[%s1580 + $0x78] sm:$0xff]
      %2398 = vmatprep.subr.mxu0 0.0
      %2399 = vmatpush1.msra.mxu0 %v2382
      %2400 = vmatprep.subr.mxu0 0.0
      %2401 = vmatpush1.msra.mxu0 %v2383
      %2402 = vmatprep.subr.mxu0 0.0
      %2403 = vmatpush1.msra.mxu0 %v2384
      %2404 = vmatprep.subr.mxu0 0.0
      %2405 = vmatpush1.msra.mxu0 %v2385
      %2406 = vmatprep.subr.mxu0 0.0
      %2407 = vmatpush1.msra.mxu0 %v2386
      %2408 = vmatprep.subr.mxu0 0.0
      %2409 = vmatpush1.msra.mxu0 %v2387
      %2410 = vmatprep.subr.mxu0 0.0
      %2411 = vmatpush1.msra.mxu0 %v2388
      %2412 = vmatprep.subr.mxu0 0.0
      %2413 = vmatpush1.msra.mxu0 %v2389
      %2414 = vmatprep.subr.mxu0 0.0
      %2415 = vmatpush1.msra.mxu0 %v2390
      %2416 = vmatprep.subr.mxu0 0.0
      %2417 = vmatpush1.msra.mxu0 %v2391
      %2418 = vmatprep.subr.mxu0 0.0
      %2419 = vmatpush1.msra.mxu0 %v2392
      %2420 = vmatprep.subr.mxu0 0.0
      %2421 = vmatpush1.msra.mxu0 %v2393
      %2422 = vmatprep.subr.mxu0 0.0
      %2423 = vmatpush1.msra.mxu0 %v2394
      %2424 = vmatprep.subr.mxu0 0.0
      %2425 = vmatpush1.msra.mxu0 %v2395
      %2426 = vmatprep.subr.mxu0 0.0
      %2427 = vmatpush1.msra.mxu0 %v2396
      %2428 = vmatprep.subr.mxu0 0.0
      %2429 = vmatpush1.msra.mxu0 %v2397
      %2430 = vmatprep.subr.mxu0 0.0
      %2431 = vmatpush1.msra.mxu0 0.0
      %2432 = vmatprep.subr.mxu0 0.0
      %2433 = vmatpush1.msra.mxu0 0.0
      %2434 = vmatprep.subr.mxu0 0.0
      %2435 = vmatpush1.msra.mxu0 0.0
      %2436 = vmatprep.subr.mxu0 0.0
      %2437 = vmatpush1.msra.mxu0 0.0
      %2438 = vmatprep.subr.mxu0 0.0
      %2439 = vmatpush1.msra.mxu0 0.0
      %2440 = vmatprep.subr.mxu0 0.0
      %2441 = vmatpush1.msra.mxu0 0.0
      %2442 = vmatprep.subr.mxu0 0.0
      %2443 = vmatpush1.msra.mxu0 0.0
      %2444 = vmatprep.subr.mxu0 0.0
      %2445 = vmatpush1.msra.mxu0 0.0
      %2446 = vmatprep.subr.mxu0 0.0
      %2447 = vmatpush1.msra.mxu0 0.0
      %2448 = vmatprep.subr.mxu0 0.0
      %2449 = vmatpush1.msra.mxu0 0.0
      %2450 = vmatprep.subr.mxu0 0.0
      %2451 = vmatpush1.msra.mxu0 0.0
      %2452 = vmatprep.subr.mxu0 0.0
      %2453 = vmatpush1.msra.mxu0 0.0
      %2454 = vmatprep.subr.mxu0 0.0
      %2455 = vmatpush1.msra.mxu0 0.0
      %2456 = vmatprep.subr.mxu0 0.0
      %2457 = vmatpush1.msra.mxu0 0.0
      %2458 = vmatprep.subr.mxu0 0.0
      %2459 = vmatpush1.msra.mxu0 0.0
      %2460 = vmatprep.subr.mxu0 0.0
      %2461 = vmatpush1.msra.mxu0 0.0
      %2462 = vmatprep.mubr.f32.mxu0 0.0
      %2463 = vmatmul.mubr.f32.gmra.mrb[0].mxu0 %v2357
      %v2464 = vpop.f32.mrb[0].mxu0
      %v2465 = vadd.f32 0.0, %v2464
      %v2466 = vpop.f32.mrb[0].mxu0
      %2467 = vmatprep.mubr.f32.mxu0 0.0
      %2468 = vmatmul.mubr.f32.gmra.mrb[0].mxu0 %v2358
      %v2469 = vpop.f32.mrb[0].mxu0
      %v2470 = vadd.f32 0.0, %v2469
      %v2471 = vpop.f32.mrb[0].mxu0
      %2472 = vmatprep.mubr.f32.mxu0 0.0
      %2473 = vmatmul.mubr.f32.gmra.mrb[0].mxu0 %v2359
      %v2474 = vpop.f32.mrb[0].mxu0
      %v2475 = vadd.f32 0.0, %v2474
      %v2476 = vpop.f32.mrb[0].mxu0
      %2477 = vmatprep.mubr.f32.mxu0 0.0
      %2478 = vmatmul.mubr.f32.gmra.mrb[0].mxu0 %v2360
      %v2479 = vpop.f32.mrb[0].mxu0
      %v2480 = vadd.f32 0.0, %v2479
      %v2481 = vpop.f32.mrb[0].mxu0
      %2482 = vmatprep.mubr.f32.mxu0 0.0
      %2483 = vmatmul.mubr.f32.gmra.mrb[0].mxu0 %v2361
      %v2484 = vpop.f32.mrb[0].mxu0
      %v2485 = vadd.f32 0.0, %v2484
      %v2486 = vpop.f32.mrb[0].mxu0
      %2487 = vmatprep.mubr.f32.mxu0 0.0
      %2488 = vmatmul.mubr.f32.gmra.mrb[0].mxu0 %v2362
      %v2489 = vpop.f32.mrb[0].mxu0
      %v2490 = vadd.f32 0.0, %v2489
      %v2491 = vpop.f32.mrb[0].mxu0
      %2492 = vmatprep.mubr.f32.mxu0 0.0
      %2493 = vmatmul.mubr.f32.gmra.mrb[0].mxu0 %v2363
      %v2494 = vpop.f32.mrb[0].mxu0
      %v2495 = vadd.f32 0.0, %v2494
      %v2496 = vpop.f32.mrb[0].mxu0
      %2497 = vmatprep.mubr.f32.mxu0 0.0
      %2498 = vmatmul.mubr.f32.gmra.mrb[0].mxu0 %v2364
      %v2499 = vpop.f32.mrb[0].mxu0
      %v2500 = vadd.f32 0.0, %v2499
      %v2501 = vpop.f32.mrb[0].mxu0
      %2502 = vmatprep.mubr.f32.mxu0 0.0
      %2503 = vmatmul.mubr.f32.gmra.mrb[0].mxu0 %v2365
      %v2504 = vpop.f32.mrb[0].mxu0
      %v2505 = vadd.f32 0.0, %v2504
      %v2506 = vpop.f32.mrb[0].mxu0
      %2507 = vmatprep.mubr.f32.mxu0 0.0
      %2508 = vmatmul.mubr.f32.gmra.mrb[0].mxu0 %v2366
      %v2509 = vpop.f32.mrb[0].mxu0
      %v2510 = vadd.f32 0.0, %v2509
      %v2511 = vpop.f32.mrb[0].mxu0
      %2512 = vmatprep.mubr.f32.mxu0 0.0
      %2513 = vmatmul.mubr.f32.gmra.mrb[0].mxu0 %v2367
      %v2514 = vpop.f32.mrb[0].mxu0
      %v2515 = vadd.f32 0.0, %v2514
      %v2516 = vpop.f32.mrb[0].mxu0
      %2517 = vmatprep.mubr.f32.mxu0 0.0
      %2518 = vmatmul.mubr.f32.gmra.mrb[0].mxu0 %v2368
      %v2519 = vpop.f32.mrb[0].mxu0
      %v2520 = vadd.f32 0.0, %v2519
      %v2521 = vpop.f32.mrb[0].mxu0
      %2522 = vmatprep.mubr.f32.mxu0 0.0
      %2523 = vmatmul.mubr.f32.gmra.mrb[0].mxu0 %v2369
      %v2524 = vpop.f32.mrb[0].mxu0
      %v2525 = vadd.f32 0.0, %v2524
      %v2526 = vpop.f32.mrb[0].mxu0
      %2527 = vmatprep.mubr.f32.mxu0 0.0
      %2528 = vmatmul.mubr.f32.gmra.mrb[0].mxu0 %v2370
      %v2529 = vpop.f32.mrb[0].mxu0
      %v2530 = vadd.f32 0.0, %v2529
      %v2531 = vpop.f32.mrb[0].mxu0
      %2532 = vmatprep.mubr.f32.mxu0 0.0
      %2533 = vmatmul.mubr.f32.gmra.mrb[0].mxu0 %v2371
      %v2534 = vpop.f32.mrb[0].mxu0
      %v2535 = vadd.f32 0.0, %v2534
      %v2536 = vpop.f32.mrb[0].mxu0
      %2537 = vmatprep.mubr.f32.mxu0 0.0
      %2538 = vmatmul.mubr.f32.gmra.mrb[0].mxu0 %v2372
      %v2539 = vpop.f32.mrb[0].mxu0
      %v2540 = vadd.f32 0.0, %v2539
      %v2541 = vpop.f32.mrb[0].mxu0
      %2542 = vmatprep.mubr.f32.mxu0 0.0
      %2543 = vmatmul.mubr.f32.gmra.mrb[0].mxu0 %v2373
      %v2544 = vpop.f32.mrb[0].mxu0
      %v2545 = vadd.f32 0.0, %v2544
      %v2546 = vpop.f32.mrb[0].mxu0
      %2547 = vmatprep.mubr.f32.mxu0 0.0
      %2548 = vmatmul.mubr.f32.gmra.mrb[0].mxu0 %v2374
      %v2549 = vpop.f32.mrb[0].mxu0
      %v2550 = vadd.f32 0.0, %v2549
      %v2551 = vpop.f32.mrb[0].mxu0
      %2552 = vmatprep.mubr.f32.mxu0 0.0
      %2553 = vmatmul.mubr.f32.gmra.mrb[0].mxu0 %v2375
      %v2554 = vpop.f32.mrb[0].mxu0
      %v2555 = vadd.f32 0.0, %v2554
      %v2556 = vpop.f32.mrb[0].mxu0
      %2557 = vmatprep.mubr.f32.mxu0 0.0
      %2558 = vmatmul.mubr.f32.gmra.mrb[0].mxu0 %v2376
      %v2559 = vpop.f32.mrb[0].mxu0
      %v2560 = vadd.f32 0.0, %v2559
      %v2561 = vpop.f32.mrb[0].mxu0
      %2562 = vmatprep.mubr.f32.mxu0 0.0
      %2563 = vmatmul.mubr.f32.gmra.mrb[0].mxu0 %v2377
      %v2564 = vpop.f32.mrb[0].mxu0
      %v2565 = vadd.f32 0.0, %v2564
      %v2566 = vpop.f32.mrb[0].mxu0
      %2567 = vmatprep.mubr.f32.mxu0 0.0
      %2568 = vmatmul.mubr.f32.gmra.mrb[0].mxu0 %v2378
      %v2569 = vpop.f32.mrb[0].mxu0
      %v2570 = vadd.f32 0.0, %v2569
      %v2571 = vpop.f32.mrb[0].mxu0
      %2572 = vmatprep.mubr.f32.mxu0 0.0
      %2573 = vmatmul.mubr.f32.gmra.mrb[0].mxu0 %v2379
      %v2574 = vpop.f32.mrb[0].mxu0
      %v2575 = vadd.f32 0.0, %v2574
      %v2576 = vpop.f32.mrb[0].mxu0
      %2577 = vmatprep.mubr.f32.mxu0 0.0
      %2578 = vmatmul.mubr.f32.gmra.mrb[0].mxu0 %v2380
      %v2579 = vpop.f32.mrb[0].mxu0
      %v2580 = vadd.f32 0.0, %v2579
      %v2581 = vpop.f32.mrb[0].mxu0
      %2582 = vmatprep.mubr.f32.mxu0 0.0
      %2583 = vmatmul.mubr.f32.gmra.mrb[0].mxu0 %v2381
      %v2584 = vpop.f32.mrb[0].mxu0
      %v2585 = vadd.f32 0.0, %v2584
      %v2586 = vpop.f32.mrb[0].mxu0
      %2587 = vdwg.mxu0
      %2588 = vmatprep.subr.mxu0 0.0
      %2589 = vmatpush1.msra.mxu0 %v2341
      %2590 = vmatprep.subr.mxu0 0.0
      %2591 = vmatpush1.msra.mxu0 %v2342
      %2592 = vmatprep.subr.mxu0 0.0
      %2593 = vmatpush1.msra.mxu0 %v2343
      %2594 = vmatprep.subr.mxu0 0.0
      %2595 = vmatpush1.msra.mxu0 %v2344
      %2596 = vmatprep.subr.mxu0 0.0
      %2597 = vmatpush1.msra.mxu0 %v2345
      %2598 = vmatprep.subr.mxu0 0.0
      %2599 = vmatpush1.msra.mxu0 %v2346
      %2600 = vmatprep.subr.mxu0 0.0
      %2601 = vmatpush1.msra.mxu0 %v2347
      %2602 = vmatprep.subr.mxu0 0.0
      %2603 = vmatpush1.msra.mxu0 %v2348
      %2604 = vmatprep.subr.mxu0 0.0
      %2605 = vmatpush1.msra.mxu0 %v2349
      %2606 = vmatprep.subr.mxu0 0.0
      %2607 = vmatpush1.msra.mxu0 %v2350
      %2608 = vmatprep.subr.mxu0 0.0
      %2609 = vmatpush1.msra.mxu0 %v2351
      %2610 = vmatprep.subr.mxu0 0.0
      %2611 = vmatpush1.msra.mxu0 %v2352
      %2612 = vmatprep.subr.mxu0 0.0
      %2613 = vmatpush1.msra.mxu0 %v2353
      %2614 = vmatprep.subr.mxu0 0.0
      %2615 = vmatpush1.msra.mxu0 %v2354
      %2616 = vmatprep.subr.mxu0 0.0
      %2617 = vmatpush1.msra.mxu0 %v2355
      %2618 = vmatprep.subr.mxu0 0.0
      %2619 = vmatpush1.msra.mxu0 %v2356
      %2620 = vmatprep.subr.mxu0 0.0
      %2621 = vmatpush1.msra.mxu0 0.0
      %2622 = vmatprep.subr.mxu0 0.0
      %2623 = vmatpush1.msra.mxu0 0.0
      %2624 = vmatprep.subr.mxu0 0.0
      %2625 = vmatpush1.msra.mxu0 0.0
      %2626 = vmatprep.subr.mxu0 0.0
      %2627 = vmatpush1.msra.mxu0 0.0
      %2628 = vmatprep.subr.mxu0 0.0
      %2629 = vmatpush1.msra.mxu0 0.0
      %2630 = vmatprep.subr.mxu0 0.0
      %2631 = vmatpush1.msra.mxu0 0.0
      %2632 = vmatprep.subr.mxu0 0.0
      %2633 = vmatpush1.msra.mxu0 0.0
      %2634 = vmatprep.subr.mxu0 0.0
      %2635 = vmatpush1.msra.mxu0 0.0
      %2636 = vmatprep.subr.mxu0 0.0
      %2637 = vmatpush1.msra.mxu0 0.0
      %2638 = vmatprep.subr.mxu0 0.0
      %2639 = vmatpush1.msra.mxu0 0.0
      %2640 = vmatprep.subr.mxu0 0.0
      %2641 = vmatpush1.msra.mxu0 0.0
      %2642 = vmatprep.subr.mxu0 0.0
      %2643 = vmatpush1.msra.mxu0 0.0
      %2644 = vmatprep.subr.mxu0 0.0
      %2645 = vmatpush1.msra.mxu0 0.0
      %2646 = vmatprep.subr.mxu0 0.0
      %2647 = vmatpush1.msra.mxu0 0.0
      %2648 = vmatprep.subr.mxu0 0.0
      %2649 = vmatpush1.msra.mxu0 0.0
      %2650 = vmatprep.subr.mxu0 0.0
      %2651 = vmatpush1.msra.mxu0 0.0
      %2652 = vmatprep.mubr.f32.mxu0 0.0
      %2653 = vmatmul.mubr.f32.gmra.mrb[0].mxu0 %v2316
      %v2654 = vpop.f32.mrb[0].mxu0
      %v2655 = vadd.f32 %v2465, %v2654
      %v2656 = vpop.f32.mrb[0].mxu0
      %2657 = vmatprep.mubr.f32.mxu0 0.0
      %2658 = vmatmul.mubr.f32.gmra.mrb[0].mxu0 %v2317
      %v2659 = vpop.f32.mrb[0].mxu0
      %v2660 = vadd.f32 %v2470, %v2659
      %v2661 = vpop.f32.mrb[0].mxu0
      %2662 = vmatprep.mubr.f32.mxu0 0.0
      %2663 = vmatmul.mubr.f32.gmra.mrb[0].mxu0 %v2318
      %v2664 = vpop.f32.mrb[0].mxu0
      %v2665 = vadd.f32 %v2475, %v2664
      %v2666 = vpop.f32.mrb[0].mxu0
      %2667 = vmatprep.mubr.f32.mxu0 0.0
      %2668 = vmatmul.mubr.f32.gmra.mrb[0].mxu0 %v2319
      %v2669 = vpop.f32.mrb[0].mxu0
      %v2670 = vadd.f32 %v2480, %v2669
      %v2671 = vpop.f32.mrb[0].mxu0
      %2672 = vmatprep.mubr.f32.mxu0 0.0
      %2673 = vmatmul.mubr.f32.gmra.mrb[0].mxu0 %v2320
      %v2674 = vpop.f32.mrb[0].mxu0
      %v2675 = vadd.f32 %v2485, %v2674
      %v2676 = vpop.f32.mrb[0].mxu0
      %2677 = vmatprep.mubr.f32.mxu0 0.0
      %2678 = vmatmul.mubr.f32.gmra.mrb[0].mxu0 %v2321
      %v2679 = vpop.f32.mrb[0].mxu0
      %v2680 = vadd.f32 %v2490, %v2679
      %v2681 = vpop.f32.mrb[0].mxu0
      %2682 = vmatprep.mubr.f32.mxu0 0.0
      %2683 = vmatmul.mubr.f32.gmra.mrb[0].mxu0 %v2322
      %v2684 = vpop.f32.mrb[0].mxu0
      %v2685 = vadd.f32 %v2495, %v2684
      %v2686 = vpop.f32.mrb[0].mxu0
      %2687 = vmatprep.mubr.f32.mxu0 0.0
      %2688 = vmatmul.mubr.f32.gmra.mrb[0].mxu0 %v2323
      %v2689 = vpop.f32.mrb[0].mxu0
      %v2690 = vadd.f32 %v2500, %v2689
      %v2691 = vpop.f32.mrb[0].mxu0
      %2692 = vmatprep.mubr.f32.mxu0 0.0
      %2693 = vmatmul.mubr.f32.gmra.mrb[0].mxu0 %v2324
      %v2694 = vpop.f32.mrb[0].mxu0
      %v2695 = vadd.f32 %v2505, %v2694
      %v2696 = vpop.f32.mrb[0].mxu0
      %2697 = vmatprep.mubr.f32.mxu0 0.0
      %2698 = vmatmul.mubr.f32.gmra.mrb[0].mxu0 %v2325
      %v2699 = vpop.f32.mrb[0].mxu0
      %v2700 = vadd.f32 %v2510, %v2699
      %v2701 = vpop.f32.mrb[0].mxu0
      %2702 = vmatprep.mubr.f32.mxu0 0.0
      %2703 = vmatmul.mubr.f32.gmra.mrb[0].mxu0 %v2326
      %v2704 = vpop.f32.mrb[0].mxu0
      %v2705 = vadd.f32 %v2515, %v2704
      %v2706 = vpop.f32.mrb[0].mxu0
      %2707 = vmatprep.mubr.f32.mxu0 0.0
      %2708 = vmatmul.mubr.f32.gmra.mrb[0].mxu0 %v2327
      %v2709 = vpop.f32.mrb[0].mxu0
      %v2710 = vadd.f32 %v2520, %v2709
      %v2711 = vpop.f32.mrb[0].mxu0
      %2712 = vmatprep.mubr.f32.mxu0 0.0
      %2713 = vmatmul.mubr.f32.gmra.mrb[0].mxu0 %v2328
      %v2714 = vpop.f32.mrb[0].mxu0
      %v2715 = vadd.f32 %v2525, %v2714
      %v2716 = vpop.f32.mrb[0].mxu0
      %2717 = vmatprep.mubr.f32.mxu0 0.0
      %2718 = vmatmul.mubr.f32.gmra.mrb[0].mxu0 %v2329
      %v2719 = vpop.f32.mrb[0].mxu0
      %v2720 = vadd.f32 %v2530, %v2719
      %v2721 = vpop.f32.mrb[0].mxu0
      %2722 = vmatprep.mubr.f32.mxu0 0.0
      %2723 = vmatmul.mubr.f32.gmra.mrb[0].mxu0 %v2330
      %v2724 = vpop.f32.mrb[0].mxu0
      %v2725 = vadd.f32 %v2535, %v2724
      %v2726 = vpop.f32.mrb[0].mxu0
      %2727 = vmatprep.mubr.f32.mxu0 0.0
      %2728 = vmatmul.mubr.f32.gmra.mrb[0].mxu0 %v2331
      %v2729 = vpop.f32.mrb[0].mxu0
      %v2730 = vadd.f32 %v2540, %v2729
      %v2731 = vpop.f32.mrb[0].mxu0
      %2732 = vmatprep.mubr.f32.mxu0 0.0
      %2733 = vmatmul.mubr.f32.gmra.mrb[0].mxu0 %v2332
      %v2734 = vpop.f32.mrb[0].mxu0
      %v2735 = vadd.f32 %v2545, %v2734
      %v2736 = vpop.f32.mrb[0].mxu0
      %2737 = vmatprep.mubr.f32.mxu0 0.0
      %2738 = vmatmul.mubr.f32.gmra.mrb[0].mxu0 %v2333
      %v2739 = vpop.f32.mrb[0].mxu0
      %v2740 = vadd.f32 %v2550, %v2739
      %v2741 = vpop.f32.mrb[0].mxu0
      %2742 = vmatprep.mubr.f32.mxu0 0.0
      %2743 = vmatmul.mubr.f32.gmra.mrb[0].mxu0 %v2334
      %v2744 = vpop.f32.mrb[0].mxu0
      %v2745 = vadd.f32 %v2555, %v2744
      %v2746 = vpop.f32.mrb[0].mxu0
      %2747 = vmatprep.mubr.f32.mxu0 0.0
      %2748 = vmatmul.mubr.f32.gmra.mrb[0].mxu0 %v2335
      %v2749 = vpop.f32.mrb[0].mxu0
      %v2750 = vadd.f32 %v2560, %v2749
      %v2751 = vpop.f32.mrb[0].mxu0
      %2752 = vmatprep.mubr.f32.mxu0 0.0
      %2753 = vmatmul.mubr.f32.gmra.mrb[0].mxu0 %v2336
      %v2754 = vpop.f32.mrb[0].mxu0
      %v2755 = vadd.f32 %v2565, %v2754
      %v2756 = vpop.f32.mrb[0].mxu0
      %2757 = vmatprep.mubr.f32.mxu0 0.0
      %2758 = vmatmul.mubr.f32.gmra.mrb[0].mxu0 %v2337
      %v2759 = vpop.f32.mrb[0].mxu0
      %v2760 = vadd.f32 %v2570, %v2759
      %v2761 = vpop.f32.mrb[0].mxu0
      %2762 = vmatprep.mubr.f32.mxu0 0.0
      %2763 = vmatmul.mubr.f32.gmra.mrb[0].mxu0 %v2338
      %v2764 = vpop.f32.mrb[0].mxu0
      %v2765 = vadd.f32 %v2575, %v2764
      %v2766 = vpop.f32.mrb[0].mxu0
      %2767 = vmatprep.mubr.f32.mxu0 0.0
      %2768 = vmatmul.mubr.f32.gmra.mrb[0].mxu0 %v2339
      %v2769 = vpop.f32.mrb[0].mxu0
      %v2770 = vadd.f32 %v2580, %v2769
      %v2771 = vpop.f32.mrb[0].mxu0
      %2772 = vmatprep.mubr.f32.mxu0 0.0
      %2773 = vmatmul.mubr.f32.gmra.mrb[0].mxu0 %v2340
      %v2774 = vpop.f32.mrb[0].mxu0
      %v2775 = vadd.f32 %v2585, %v2774
      %v2776 = vpop.f32.mrb[0].mxu0
      %2777 = vdwg.mxu0
      %v2778 = vld [vmem:[#allocation2 + $0x260] sm:$0xff]
      %v2779 = vld [vmem:[#allocation2 + $0x268] sm:$0xff]
      %v2780 = vld [vmem:[#allocation2 + $0x270] sm:$0xff]
      %v2781 = vld [vmem:[#allocation2 + $0x278] sm:$0xff]
      %v2782 = vld [vmem:[#allocation2 + $0x280] sm:$0xff]
      %v2783 = vld [vmem:[#allocation2 + $0x288] sm:$0xff]
      %v2784 = vld [vmem:[#allocation2 + $0x290] sm:$0xff]
      %v2785 = vld [vmem:[#allocation2 + $0x298] sm:$0xff]
      %v2786 = vld [vmem:[#allocation2 + $0x2a0] sm:$0xff]
      %v2787 = vld [vmem:[#allocation2 + $0x2a8] sm:$0xff]
      %v2788 = vld [vmem:[#allocation2 + $0x2b0] sm:$0xff]
      %v2789 = vld [vmem:[#allocation2 + $0x2b8] sm:$0xff]
      %v2790 = vld [vmem:[#allocation2 + $0x2c0] sm:$0xff]
      %v2791 = vld [vmem:[#allocation2 + $0x2c8] sm:$0xff]
      %v2792 = vld [vmem:[#allocation2 + $0x2d0] sm:$0xff]
      %v2793 = vld [vmem:[#allocation2 + $0x2d8] sm:$0xff]
      %v2794 = vld [vmem:[#allocation2 + $0x2e0] sm:$0xff]
      %v2795 = vld [vmem:[#allocation2 + $0x2e8] sm:$0xff]
      %v2796 = vld [vmem:[#allocation2 + $0x2f0] sm:$0xff]
      %v2797 = vld [vmem:[#allocation2 + $0x2f8] sm:$0xff]
      %v2798 = vld [vmem:[#allocation2 + $0x300] sm:$0xff]
      %v2799 = vld [vmem:[#allocation2 + $0x308] sm:$0xff]
      %v2800 = vld [vmem:[#allocation2 + $0x310] sm:$0xff]
      %v2801 = vld [vmem:[#allocation2 + $0x318] sm:$0xff]
      %v2802 = vld [vmem:[#allocation2 + $0x320] sm:$0xff]
      %v2803 = vld [vmem:[%s2002] sm:$0xff]
      %v2804 = vld [vmem:[%s2002 + $0x8] sm:$0xff]
      %v2805 = vld [vmem:[%s2002 + $0x10] sm:$0xff]
      %v2806 = vld [vmem:[%s2002 + $0x18] sm:$0xff]
      %v2807 = vld [vmem:[%s2002 + $0x20] sm:$0xff]
      %v2808 = vld [vmem:[%s2002 + $0x28] sm:$0xff]
      %v2809 = vld [vmem:[%s2002 + $0x30] sm:$0xff]
      %v2810 = vld [vmem:[%s2002 + $0x38] sm:$0xff]
      %v2811 = vld [vmem:[%s2002 + $0x40] sm:$0xff]
      %v2812 = vld [vmem:[%s2002 + $0x48] sm:$0xff]
      %v2813 = vld [vmem:[%s2002 + $0x50] sm:$0xff]
      %v2814 = vld [vmem:[%s2002 + $0x58] sm:$0xff]
      %v2815 = vld [vmem:[%s2002 + $0x60] sm:$0xff]
      %v2816 = vld [vmem:[%s2002 + $0x68] sm:$0xff]
      %v2817 = vld [vmem:[%s2002 + $0x70] sm:$0xff]
      %v2818 = vld [vmem:[%s2002 + $0x78] sm:$0xff]
      %2819 = vmatprep.subr.mxu0 0.0
      %2820 = vmatpush1.msra.mxu0 %v2803
      %2821 = vmatprep.subr.mxu0 0.0
      %2822 = vmatpush1.msra.mxu0 %v2804
      %2823 = vmatprep.subr.mxu0 0.0
      %2824 = vmatpush1.msra.mxu0 %v2805
      %2825 = vmatprep.subr.mxu0 0.0
      %2826 = vmatpush1.msra.mxu0 %v2806
      %2827 = vmatprep.subr.mxu0 0.0
      %2828 = vmatpush1.msra.mxu0 %v2807
      %2829 = vmatprep.subr.mxu0 0.0
      %2830 = vmatpush1.msra.mxu0 %v2808
      %2831 = vmatprep.subr.mxu0 0.0
      %2832 = vmatpush1.msra.mxu0 %v2809
      %2833 = vmatprep.subr.mxu0 0.0
      %2834 = vmatpush1.msra.mxu0 %v2810
      %2835 = vmatprep.subr.mxu0 0.0
      %2836 = vmatpush1.msra.mxu0 %v2811
      %2837 = vmatprep.subr.mxu0 0.0
      %2838 = vmatpush1.msra.mxu0 %v2812
      %2839 = vmatprep.subr.mxu0 0.0
      %2840 = vmatpush1.msra.mxu0 %v2813
      %2841 = vmatprep.subr.mxu0 0.0
      %2842 = vmatpush1.msra.mxu0 %v2814
      %2843 = vmatprep.subr.mxu0 0.0
      %2844 = vmatpush1.msra.mxu0 %v2815
      %2845 = vmatprep.subr.mxu0 0.0
      %2846 = vmatpush1.msra.mxu0 %v2816
      %2847 = vmatprep.subr.mxu0 0.0
      %2848 = vmatpush1.msra.mxu0 %v2817
      %2849 = vmatprep.subr.mxu0 0.0
      %2850 = vmatpush1.msra.mxu0 %v2818
      %2851 = vmatprep.subr.mxu0 0.0
      %2852 = vmatpush1.msra.mxu0 0.0
      %2853 = vmatprep.subr.mxu0 0.0
      %2854 = vmatpush1.msra.mxu0 0.0
      %2855 = vmatprep.subr.mxu0 0.0
      %2856 = vmatpush1.msra.mxu0 0.0
      %2857 = vmatprep.subr.mxu0 0.0
      %2858 = vmatpush1.msra.mxu0 0.0
      %2859 = vmatprep.subr.mxu0 0.0
      %2860 = vmatpush1.msra.mxu0 0.0
      %2861 = vmatprep.subr.mxu0 0.0
      %2862 = vmatpush1.msra.mxu0 0.0
      %2863 = vmatprep.subr.mxu0 0.0
      %2864 = vmatpush1.msra.mxu0 0.0
      %2865 = vmatprep.subr.mxu0 0.0
      %2866 = vmatpush1.msra.mxu0 0.0
      %2867 = vmatprep.subr.mxu0 0.0
      %2868 = vmatpush1.msra.mxu0 0.0
      %2869 = vmatprep.subr.mxu0 0.0
      %2870 = vmatpush1.msra.mxu0 0.0
      %2871 = vmatprep.subr.mxu0 0.0
      %2872 = vmatpush1.msra.mxu0 0.0
      %2873 = vmatprep.subr.mxu0 0.0
      %2874 = vmatpush1.msra.mxu0 0.0
      %2875 = vmatprep.subr.mxu0 0.0
      %2876 = vmatpush1.msra.mxu0 0.0
      %2877 = vmatprep.subr.mxu0 0.0
      %2878 = vmatpush1.msra.mxu0 0.0
      %2879 = vmatprep.subr.mxu0 0.0
      %2880 = vmatpush1.msra.mxu0 0.0
      %2881 = vmatprep.subr.mxu0 0.0
      %2882 = vmatpush1.msra.mxu0 0.0
      %2883 = vmatprep.mubr.f32.mxu0 0.0
      %2884 = vmatmul.mubr.f32.gmra.mrb[0].mxu0 %v2778
      %v2885 = vpop.f32.mrb[0].mxu0
      %v2886 = vadd.f32 0.0, %v2885
      %v2887 = vpop.f32.mrb[0].mxu0
      %2888 = vmatprep.mubr.f32.mxu0 0.0
      %2889 = vmatmul.mubr.f32.gmra.mrb[0].mxu0 %v2779
      %v2890 = vpop.f32.mrb[0].mxu0
      %v2891 = vadd.f32 0.0, %v2890
      %v2892 = vpop.f32.mrb[0].mxu0
      %2893 = vmatprep.mubr.f32.mxu0 0.0
      %2894 = vmatmul.mubr.f32.gmra.mrb[0].mxu0 %v2780
      %v2895 = vpop.f32.mrb[0].mxu0
      %v2896 = vadd.f32 0.0, %v2895
      %v2897 = vpop.f32.mrb[0].mxu0
      %2898 = vmatprep.mubr.f32.mxu0 0.0
      %2899 = vmatmul.mubr.f32.gmra.mrb[0].mxu0 %v2781
      %v2900 = vpop.f32.mrb[0].mxu0
      %v2901 = vadd.f32 0.0, %v2900
      %v2902 = vpop.f32.mrb[0].mxu0
      %2903 = vmatprep.mubr.f32.mxu0 0.0
      %2904 = vmatmul.mubr.f32.gmra.mrb[0].mxu0 %v2782
      %v2905 = vpop.f32.mrb[0].mxu0
      %v2906 = vadd.f32 0.0, %v2905
      %v2907 = vpop.f32.mrb[0].mxu0
      %2908 = vmatprep.mubr.f32.mxu0 0.0
      %2909 = vmatmul.mubr.f32.gmra.mrb[0].mxu0 %v2783
      %v2910 = vpop.f32.mrb[0].mxu0
      %v2911 = vadd.f32 0.0, %v2910
      %v2912 = vpop.f32.mrb[0].mxu0
      %2913 = vmatprep.mubr.f32.mxu0 0.0
      %2914 = vmatmul.mubr.f32.gmra.mrb[0].mxu0 %v2784
      %v2915 = vpop.f32.mrb[0].mxu0
      %v2916 = vadd.f32 0.0, %v2915
      %v2917 = vpop.f32.mrb[0].mxu0
      %2918 = vmatprep.mubr.f32.mxu0 0.0
      %2919 = vmatmul.mubr.f32.gmra.mrb[0].mxu0 %v2785
      %v2920 = vpop.f32.mrb[0].mxu0
      %v2921 = vadd.f32 0.0, %v2920
      %v2922 = vpop.f32.mrb[0].mxu0
      %2923 = vmatprep.mubr.f32.mxu0 0.0
      %2924 = vmatmul.mubr.f32.gmra.mrb[0].mxu0 %v2786
      %v2925 = vpop.f32.mrb[0].mxu0
      %v2926 = vadd.f32 0.0, %v2925
      %v2927 = vpop.f32.mrb[0].mxu0
      %2928 = vmatprep.mubr.f32.mxu0 0.0
      %2929 = vmatmul.mubr.f32.gmra.mrb[0].mxu0 %v2787
      %v2930 = vpop.f32.mrb[0].mxu0
      %v2931 = vadd.f32 0.0, %v2930
      %v2932 = vpop.f32.mrb[0].mxu0
      %2933 = vmatprep.mubr.f32.mxu0 0.0
      %2934 = vmatmul.mubr.f32.gmra.mrb[0].mxu0 %v2788
      %v2935 = vpop.f32.mrb[0].mxu0
      %v2936 = vadd.f32 0.0, %v2935
      %v2937 = vpop.f32.mrb[0].mxu0
      %2938 = vmatprep.mubr.f32.mxu0 0.0
      %2939 = vmatmul.mubr.f32.gmra.mrb[0].mxu0 %v2789
      %v2940 = vpop.f32.mrb[0].mxu0
      %v2941 = vadd.f32 0.0, %v2940
      %v2942 = vpop.f32.mrb[0].mxu0
      %2943 = vmatprep.mubr.f32.mxu0 0.0
      %2944 = vmatmul.mubr.f32.gmra.mrb[0].mxu0 %v2790
      %v2945 = vpop.f32.mrb[0].mxu0
      %v2946 = vadd.f32 0.0, %v2945
      %v2947 = vpop.f32.mrb[0].mxu0
      %2948 = vmatprep.mubr.f32.mxu0 0.0
      %2949 = vmatmul.mubr.f32.gmra.mrb[0].mxu0 %v2791
      %v2950 = vpop.f32.mrb[0].mxu0
      %v2951 = vadd.f32 0.0, %v2950
      %v2952 = vpop.f32.mrb[0].mxu0
      %2953 = vmatprep.mubr.f32.mxu0 0.0
      %2954 = vmatmul.mubr.f32.gmra.mrb[0].mxu0 %v2792
      %v2955 = vpop.f32.mrb[0].mxu0
      %v2956 = vadd.f32 0.0, %v2955
      %v2957 = vpop.f32.mrb[0].mxu0
      %2958 = vmatprep.mubr.f32.mxu0 0.0
      %2959 = vmatmul.mubr.f32.gmra.mrb[0].mxu0 %v2793
      %v2960 = vpop.f32.mrb[0].mxu0
      %v2961 = vadd.f32 0.0, %v2960
      %v2962 = vpop.f32.mrb[0].mxu0
      %2963 = vmatprep.mubr.f32.mxu0 0.0
      %2964 = vmatmul.mubr.f32.gmra.mrb[0].mxu0 %v2794
      %v2965 = vpop.f32.mrb[0].mxu0
      %v2966 = vadd.f32 0.0, %v2965
      %v2967 = vpop.f32.mrb[0].mxu0
      %2968 = vmatprep.mubr.f32.mxu0 0.0
      %2969 = vmatmul.mubr.f32.gmra.mrb[0].mxu0 %v2795
      %v2970 = vpop.f32.mrb[0].mxu0
      %v2971 = vadd.f32 0.0, %v2970
      %v2972 = vpop.f32.mrb[0].mxu0
      %2973 = vmatprep.mubr.f32.mxu0 0.0
      %2974 = vmatmul.mubr.f32.gmra.mrb[0].mxu0 %v2796
      %v2975 = vpop.f32.mrb[0].mxu0
      %v2976 = vadd.f32 0.0, %v2975
      %v2977 = vpop.f32.mrb[0].mxu0
      %2978 = vmatprep.mubr.f32.mxu0 0.0
      %2979 = vmatmul.mubr.f32.gmra.mrb[0].mxu0 %v2797
      %v2980 = vpop.f32.mrb[0].mxu0
      %v2981 = vadd.f32 0.0, %v2980
      %v2982 = vpop.f32.mrb[0].mxu0
      %2983 = vmatprep.mubr.f32.mxu0 0.0
      %2984 = vmatmul.mubr.f32.gmra.mrb[0].mxu0 %v2798
      %v2985 = vpop.f32.mrb[0].mxu0
      %v2986 = vadd.f32 0.0, %v2985
      %v2987 = vpop.f32.mrb[0].mxu0
      %2988 = vmatprep.mubr.f32.mxu0 0.0
      %2989 = vmatmul.mubr.f32.gmra.mrb[0].mxu0 %v2799
      %v2990 = vpop.f32.mrb[0].mxu0
      %v2991 = vadd.f32 0.0, %v2990
      %v2992 = vpop.f32.mrb[0].mxu0
      %2993 = vmatprep.mubr.f32.mxu0 0.0
      %2994 = vmatmul.mubr.f32.gmra.mrb[0].mxu0 %v2800
      %v2995 = vpop.f32.mrb[0].mxu0
      %v2996 = vadd.f32 0.0, %v2995
      %v2997 = vpop.f32.mrb[0].mxu0
      %2998 = vmatprep.mubr.f32.mxu0 0.0
      %2999 = vmatmul.mubr.f32.gmra.mrb[0].mxu0 %v2801
      %v3000 = vpop.f32.mrb[0].mxu0
      %v3001 = vadd.f32 0.0, %v3000
      %v3002 = vpop.f32.mrb[0].mxu0
      %3003 = vmatprep.mubr.f32.mxu0 0.0
      %3004 = vmatmul.mubr.f32.gmra.mrb[0].mxu0 %v2802
      %v3005 = vpop.f32.mrb[0].mxu0
      %v3006 = vadd.f32 0.0, %v3005
      %v3007 = vpop.f32.mrb[0].mxu0
      %3008 = vdwg.mxu0
      %v3009 = vadd.f32 %v2655, %v2886
      %v3010 = vadd.f32 %v2660, %v2891
      %v3011 = vadd.f32 %v2665, %v2896
      %v3012 = vadd.f32 %v2670, %v2901
      %v3013 = vadd.f32 %v2675, %v2906
      %v3014 = vadd.f32 %v2680, %v2911
      %v3015 = vadd.f32 %v2685, %v2916
      %v3016 = vadd.f32 %v2690, %v2921
      %v3017 = vadd.f32 %v2695, %v2926
      %v3018 = vadd.f32 %v2700, %v2931
      %v3019 = vadd.f32 %v2705, %v2936
      %v3020 = vadd.f32 %v2710, %v2941
      %v3021 = vadd.f32 %v2715, %v2946
      %v3022 = vadd.f32 %v2720, %v2951
      %v3023 = vadd.f32 %v2725, %v2956
      %v3024 = vadd.f32 %v2730, %v2961
      %v3025 = vadd.f32 %v2735, %v2966
      %v3026 = vadd.f32 %v2740, %v2971
      %v3027 = vadd.f32 %v2745, %v2976
      %v3028 = vadd.f32 %v2750, %v2981
      %v3029 = vadd.f32 %v2755, %v2986
      %v3030 = vadd.f32 %v2760, %v2991
      %v3031 = vadd.f32 %v2765, %v2996
      %v3032 = vadd.f32 %v2770, %v3001
      %v3033 = vadd.f32 %v2775, %v3006
      %v3034 = vld [vmem:[%s4] sm:$0x1]
      %v3036 = vlaneseq
      %v3037 = vshrl.u32 %v3036, 7
      %v3038 = vsub.s32 0, %v3037
      %v3039 = vrot.slane %v3034, %v3038
      %v3041 = vadd.f32 %v3009, %v3039
      %v3042 = vadd.f32 %v3010, %v3039
      %v3043 = vadd.f32 %v3011, %v3039
      %v3044 = vadd.f32 %v3012, %v3039
      %v3045 = vadd.f32 %v3013, %v3039
      %v3046 = vadd.f32 %v3014, %v3039
      %v3047 = vadd.f32 %v3015, %v3039
      %v3048 = vadd.f32 %v3016, %v3039
      %v3049 = vadd.f32 %v3017, %v3039
      %v3050 = vadd.f32 %v3018, %v3039
      %v3051 = vadd.f32 %v3019, %v3039
      %v3052 = vadd.f32 %v3020, %v3039
      %v3053 = vadd.f32 %v3021, %v3039
      %v3054 = vadd.f32 %v3022, %v3039
      %v3055 = vadd.f32 %v3023, %v3039
      %v3056 = vadd.f32 %v3024, %v3039
      %v3057 = vadd.f32 %v3025, %v3039
      %v3058 = vadd.f32 %v3026, %v3039
      %v3059 = vadd.f32 %v3027, %v3039
      %v3060 = vadd.f32 %v3028, %v3039
      %v3061 = vadd.f32 %v3029, %v3039
      %v3062 = vadd.f32 %v3030, %v3039
      %v3063 = vadd.f32 %v3031, %v3039
      %v3064 = vadd.f32 %v3032, %v3039
      %v3065 = vadd.f32 %v3033, %v3039
      %v3066 = vmax.f32 %v3041, 0.0
      %v3067 = vmax.f32 %v3042, 0.0
      %v3068 = vmax.f32 %v3043, 0.0
      %v3069 = vmax.f32 %v3044, 0.0
      %v3070 = vmax.f32 %v3045, 0.0
      %v3071 = vmax.f32 %v3046, 0.0
      %v3072 = vmax.f32 %v3047, 0.0
      %v3073 = vmax.f32 %v3048, 0.0
      %v3074 = vmax.f32 %v3049, 0.0
      %v3075 = vmax.f32 %v3050, 0.0
      %v3076 = vmax.f32 %v3051, 0.0
      %v3077 = vmax.f32 %v3052, 0.0
      %v3078 = vmax.f32 %v3053, 0.0
      %v3079 = vmax.f32 %v3054, 0.0
      %v3080 = vmax.f32 %v3055, 0.0
      %v3081 = vmax.f32 %v3056, 0.0
      %v3082 = vmax.f32 %v3057, 0.0
      %v3083 = vmax.f32 %v3058, 0.0
      %v3084 = vmax.f32 %v3059, 0.0
      %v3085 = vmax.f32 %v3060, 0.0
      %v3086 = vmax.f32 %v3061, 0.0
      %v3087 = vmax.f32 %v3062, 0.0
      %v3088 = vmax.f32 %v3063, 0.0
      %v3089 = vmax.f32 %v3064, 0.0
      %v3090 = vmax.f32 %v3065, 0.0
      %v3091 = vld [vmem:[#allocation3] sm:$0xff]
      %3092 = vst [vmem:[#allocation4] sm:$0xff] %v3091
      %v3093 = vld [vmem:[#allocation3 + $0x8] sm:$0xff]
      %v3094 = vld [vmem:[#allocation3 + $0x10] sm:$0xff]
      %v3095 = vld [vmem:[#allocation3 + $0x18] sm:$0xff]
      %v3096 = vld [vmem:[#allocation3 + $0x20] sm:$0xff]
      %v3097 = vld [vmem:[#allocation3 + $0x28] sm:$0xff]
      %v3098 = vld [vmem:[#allocation3 + $0x30] sm:$0xff]
      %v3099 = vld [vmem:[#allocation3 + $0x38] sm:$0xff]
      %v3100 = vld [vmem:[#allocation3 + $0x40] sm:$0xff]
      %v3101 = vld [vmem:[#allocation3 + $0x48] sm:$0xff]
      %v3102 = vld [vmem:[#allocation3 + $0x50] sm:$0xff]
      %v3103 = vld [vmem:[#allocation3 + $0x58] sm:$0xff]
      %v3104 = vld [vmem:[#allocation3 + $0x60] sm:$0xff]
      %v3105 = vld [vmem:[#allocation3 + $0x68] sm:$0xff]
      %v3106 = vld [vmem:[#allocation3 + $0x70] sm:$0xff]
      %v3107 = vld [vmem:[#allocation3 + $0x78] sm:$0xff]
      %v3108 = vld [vmem:[#allocation3 + $0x80] sm:$0xff]
      %v3109 = vld [vmem:[#allocation3 + $0x88] sm:$0xff]
      %v3110 = vld [vmem:[#allocation3 + $0x90] sm:$0xff]
      %v3111 = vld [vmem:[#allocation3 + $0x98] sm:$0xff]
      %v3112 = vld [vmem:[#allocation3 + $0xa0] sm:$0xff]
      %v3113 = vld [vmem:[#allocation3 + $0xa8] sm:$0xff]
      %v3114 = vld [vmem:[#allocation3 + $0xb0] sm:$0xff]
      %v3115 = vld [vmem:[#allocation3 + $0xb8] sm:$0xff]
      %v3116 = vld [vmem:[#allocation3 + $0xc0] sm:$0xff]
      %v3117 = vmax.f32 %v3066, %v3093
      %v3118 = vmax.f32 %v3067, %v3094
      %v3119 = vmax.f32 %v3068, %v3095
      %v3120 = vmax.f32 %v3069, %v3096
      %v3121 = vmax.f32 %v3070, %v3097
      %v3122 = vmax.f32 %v3071, %v3098
      %v3123 = vmax.f32 %v3072, %v3099
      %v3124 = vmax.f32 %v3073, %v3100
      %v3125 = vmax.f32 %v3074, %v3101
      %v3126 = vmax.f32 %v3075, %v3102
      %v3127 = vmax.f32 %v3076, %v3103
      %v3128 = vmax.f32 %v3077, %v3104
      %v3129 = vmax.f32 %v3078, %v3105
      %v3130 = vmax.f32 %v3079, %v3106
      %v3131 = vmax.f32 %v3080, %v3107
      %v3132 = vmax.f32 %v3081, %v3108
      %v3133 = vmax.f32 %v3082, %v3109
      %v3134 = vmax.f32 %v3083, %v3110
      %v3135 = vmax.f32 %v3084, %v3111
      %v3136 = vmax.f32 %v3085, %v3112
      %v3137 = vmax.f32 %v3086, %v3113
      %v3138 = vmax.f32 %v3087, %v3114
      %v3139 = vmax.f32 %v3088, %v3115
      %v3140 = vmax.f32 %v3089, %v3116
      %3141 = vst [vmem:[#allocation4 + $0x8] sm:$0xff] %v3117
      %3142 = vst [vmem:[#allocation4 + $0x10] sm:$0xff] %v3118
      %3143 = vst [vmem:[#allocation4 + $0x18] sm:$0xff] %v3119
      %3144 = vst [vmem:[#allocation4 + $0x20] sm:$0xff] %v3120
      %3145 = vst [vmem:[#allocation4 + $0x28] sm:$0xff] %v3121
      %3146 = vst [vmem:[#allocation4 + $0x30] sm:$0xff] %v3122
      %3147 = vst [vmem:[#allocation4 + $0x38] sm:$0xff] %v3123
      %3148 = vst [vmem:[#allocation4 + $0x40] sm:$0xff] %v3124
      %3149 = vst [vmem:[#allocation4 + $0x48] sm:$0xff] %v3125
      %3150 = vst [vmem:[#allocation4 + $0x50] sm:$0xff] %v3126
      %3151 = vst [vmem:[#allocation4 + $0x58] sm:$0xff] %v3127
      %3152 = vst [vmem:[#allocation4 + $0x60] sm:$0xff] %v3128
      %3153 = vst [vmem:[#allocation4 + $0x68] sm:$0xff] %v3129
      %3154 = vst [vmem:[#allocation4 + $0x70] sm:$0xff] %v3130
      %3155 = vst [vmem:[#allocation4 + $0x78] sm:$0xff] %v3131
      %3156 = vst [vmem:[#allocation4 + $0x80] sm:$0xff] %v3132
      %3157 = vst [vmem:[#allocation4 + $0x88] sm:$0xff] %v3133
      %3158 = vst [vmem:[#allocation4 + $0x90] sm:$0xff] %v3134
      %3159 = vst [vmem:[#allocation4 + $0x98] sm:$0xff] %v3135
      %3160 = vst [vmem:[#allocation4 + $0xa0] sm:$0xff] %v3136
      %3161 = vst [vmem:[#allocation4 + $0xa8] sm:$0xff] %v3137
      %3162 = vst [vmem:[#allocation4 + $0xb0] sm:$0xff] %v3138
      %3163 = vst [vmem:[#allocation4 + $0xb8] sm:$0xff] %v3139
      %3164 = vst [vmem:[#allocation4 + $0xc0] sm:$0xff] %v3140
      %3165 = vst [vmem:[#allocation4 + $0xc8] sm:$0xff] %v3090
      %3166 = vst [vmem:[#allocation4 + $0xd0] sm:$0xff] 0.0
      %v3167 = vld [vmem:[#allocation3] sm:$0xff]
      %v3168 = vld [vmem:[#allocation3 + $0x8] sm:$0xff]
      %v3169 = vld [vmem:[#allocation3 + $0x10] sm:$0xff]
      %v3170 = vld [vmem:[#allocation3 + $0x18] sm:$0xff]
      %v3171 = vld [vmem:[#allocation3 + $0x20] sm:$0xff]
      %v3172 = vld [vmem:[#allocation3 + $0x28] sm:$0xff]
      %v3173 = vld [vmem:[#allocation3 + $0x30] sm:$0xff]
      %v3174 = vld [vmem:[#allocation3 + $0x38] sm:$0xff]
      %v3175 = vld [vmem:[#allocation3 + $0x40] sm:$0xff]
      %v3176 = vld [vmem:[#allocation3 + $0x48] sm:$0xff]
      %v3177 = vld [vmem:[#allocation3 + $0x50] sm:$0xff]
      %v3178 = vld [vmem:[#allocation3 + $0x58] sm:$0xff]
      %v3179 = vld [vmem:[#allocation3 + $0x60] sm:$0xff]
      %v3180 = vld [vmem:[#allocation3 + $0x68] sm:$0xff]
      %v3181 = vld [vmem:[#allocation3 + $0x70] sm:$0xff]
      %v3182 = vld [vmem:[#allocation3 + $0x78] sm:$0xff]
      %v3183 = vld [vmem:[#allocation3 + $0x80] sm:$0xff]
      %v3184 = vld [vmem:[#allocation3 + $0x88] sm:$0xff]
      %v3185 = vld [vmem:[#allocation3 + $0x90] sm:$0xff]
      %v3186 = vld [vmem:[#allocation3 + $0x98] sm:$0xff]
      %v3187 = vld [vmem:[#allocation3 + $0xa0] sm:$0xff]
      %v3188 = vld [vmem:[#allocation3 + $0xa8] sm:$0xff]
      %v3189 = vld [vmem:[#allocation3 + $0xb0] sm:$0xff]
      %v3190 = vld [vmem:[#allocation3 + $0xb8] sm:$0xff]
      %v3191 = vld [vmem:[#allocation3 + $0xc0] sm:$0xff]
      %v3192 = vmax.f32 %v3167, %v3066
      %v3193 = vmax.f32 %v3168, %v3067
      %v3194 = vmax.f32 %v3169, %v3068
      %v3195 = vmax.f32 %v3170, %v3069
      %v3196 = vmax.f32 %v3171, %v3070
      %v3197 = vmax.f32 %v3172, %v3071
      %v3198 = vmax.f32 %v3173, %v3072
      %v3199 = vmax.f32 %v3174, %v3073
      %v3200 = vmax.f32 %v3175, %v3074
      %v3201 = vmax.f32 %v3176, %v3075
      %v3202 = vmax.f32 %v3177, %v3076
      %v3203 = vmax.f32 %v3178, %v3077
      %v3204 = vmax.f32 %v3179, %v3078
      %v3205 = vmax.f32 %v3180, %v3079
      %v3206 = vmax.f32 %v3181, %v3080
      %v3207 = vmax.f32 %v3182, %v3081
      %v3208 = vmax.f32 %v3183, %v3082
      %v3209 = vmax.f32 %v3184, %v3083
      %v3210 = vmax.f32 %v3185, %v3084
      %v3211 = vmax.f32 %v3186, %v3085
      %v3212 = vmax.f32 %v3187, %v3086
      %v3213 = vmax.f32 %v3188, %v3087
      %v3214 = vmax.f32 %v3189, %v3088
      %v3215 = vmax.f32 %v3190, %v3089
      %v3216 = vmax.f32 %v3191, %v3090
      %3217 = vst [vmem:[#allocation4 + $0xd8] sm:$0xff] %v3192
      %3218 = vst [vmem:[#allocation4 + $0xe0] sm:$0xff] %v3193
      %3219 = vst [vmem:[#allocation4 + $0xe8] sm:$0xff] %v3194
      %3220 = vst [vmem:[#allocation4 + $0xf0] sm:$0xff] %v3195
      %3221 = vst [vmem:[#allocation4 + $0xf8] sm:$0xff] %v3196
      %3222 = vst [vmem:[#allocation4 + $0x100] sm:$0xff] %v3197
      %3223 = vst [vmem:[#allocation4 + $0x108] sm:$0xff] %v3198
      %3224 = vst [vmem:[#allocation4 + $0x110] sm:$0xff] %v3199
      %3225 = vst [vmem:[#allocation4 + $0x118] sm:$0xff] %v3200
      %3226 = vst [vmem:[#allocation4 + $0x120] sm:$0xff] %v3201
      %3227 = vst [vmem:[#allocation4 + $0x128] sm:$0xff] %v3202
      %3228 = vst [vmem:[#allocation4 + $0x130] sm:$0xff] %v3203
      %3229 = vst [vmem:[#allocation4 + $0x138] sm:$0xff] %v3204
      %3230 = vst [vmem:[#allocation4 + $0x140] sm:$0xff] %v3205
      %3231 = vst [vmem:[#allocation4 + $0x148] sm:$0xff] %v3206
      %3232 = vst [vmem:[#allocation4 + $0x150] sm:$0xff] %v3207
      %3233 = vst [vmem:[#allocation4 + $0x158] sm:$0xff] %v3208
      %3234 = vst [vmem:[#allocation4 + $0x160] sm:$0xff] %v3209
      %3235 = vst [vmem:[#allocation4 + $0x168] sm:$0xff] %v3210
      %3236 = vst [vmem:[#allocation4 + $0x170] sm:$0xff] %v3211
      %3237 = vst [vmem:[#allocation4 + $0x178] sm:$0xff] %v3212
      %3238 = vst [vmem:[#allocation4 + $0x180] sm:$0xff] %v3213
      %3239 = vst [vmem:[#allocation4 + $0x188] sm:$0xff] %v3214
      %3240 = vst [vmem:[#allocation4 + $0x190] sm:$0xff] %v3215
      %3241 = vst [vmem:[#allocation4 + $0x198] sm:$0xff] %v3216
      %3242 = vst [vmem:[#allocation4 + $0x1a0] sm:$0xff] 0.0
      %v3243 = vld [vmem:[#allocation4 + $0xd0] sm:$0xff]
      %v3244 = vld [vmem:[#allocation4 + $0xd8] sm:$0xff]
      %v3245 = vld [vmem:[#allocation4 + $0xe0] sm:$0xff]
      %v3246 = vld [vmem:[#allocation4 + $0xe8] sm:$0xff]
      %v3247 = vld [vmem:[#allocation4 + $0xf0] sm:$0xff]
      %v3248 = vld [vmem:[#allocation4 + $0xf8] sm:$0xff]
      %v3249 = vld [vmem:[#allocation4 + $0x100] sm:$0xff]
      %v3250 = vld [vmem:[#allocation4 + $0x108] sm:$0xff]
      %v3251 = vld [vmem:[#allocation4 + $0x110] sm:$0xff]
      %v3252 = vld [vmem:[#allocation4 + $0x118] sm:$0xff]
      %v3253 = vld [vmem:[#allocation4 + $0x120] sm:$0xff]
      %v3254 = vld [vmem:[#allocation4 + $0x128] sm:$0xff]
      %v3255 = vld [vmem:[#allocation4 + $0x130] sm:$0xff]
      %v3256 = vld [vmem:[#allocation4 + $0x138] sm:$0xff]
      %v3257 = vld [vmem:[#allocation4 + $0x140] sm:$0xff]
      %v3258 = vld [vmem:[#allocation4 + $0x148] sm:$0xff]
      %v3259 = vld [vmem:[#allocation4 + $0x150] sm:$0xff]
      %v3260 = vld [vmem:[#allocation4 + $0x158] sm:$0xff]
      %v3261 = vld [vmem:[#allocation4 + $0x160] sm:$0xff]
      %v3262 = vld [vmem:[#allocation4 + $0x168] sm:$0xff]
      %v3263 = vld [vmem:[#allocation4 + $0x170] sm:$0xff]
      %v3264 = vld [vmem:[#allocation4 + $0x178] sm:$0xff]
      %v3265 = vld [vmem:[#allocation4 + $0x180] sm:$0xff]
      %v3266 = vld [vmem:[#allocation4 + $0x188] sm:$0xff]
      %v3267 = vld [vmem:[#allocation4 + $0x190] sm:$0xff]
      %v3268 = vld [vmem:[#allocation4 + $0x198] sm:$0xff]
      %v3269 = vld [vmem:[%s5] sm:$0xff]
      %v3270 = vld [vmem:[%s5 + $0x8] sm:$0xff]
      %v3271 = vld [vmem:[%s5 + $0x10] sm:$0xff]
      %v3272 = vld [vmem:[%s5 + $0x18] sm:$0xff]
      %v3273 = vld [vmem:[%s5 + $0x20] sm:$0xff]
      %v3274 = vld [vmem:[%s5 + $0x28] sm:$0xff]
      %v3275 = vld [vmem:[%s5 + $0x30] sm:$0xff]
      %v3276 = vld [vmem:[%s5 + $0x38] sm:$0xff]
      %v3277 = vld [vmem:[%s5 + $0x40] sm:$0xff]
      %v3278 = vld [vmem:[%s5 + $0x48] sm:$0xff]
      %v3279 = vld [vmem:[%s5 + $0x50] sm:$0xff]
      %v3280 = vld [vmem:[%s5 + $0x58] sm:$0xff]
      %v3281 = vld [vmem:[%s5 + $0x60] sm:$0xff]
      %v3282 = vld [vmem:[%s5 + $0x68] sm:$0xff]
      %v3283 = vld [vmem:[%s5 + $0x70] sm:$0xff]
      %v3284 = vld [vmem:[%s5 + $0x78] sm:$0xff]
      %v3285 = vld [vmem:[%s5 + $0x80] sm:$0xff]
      %v3286 = vld [vmem:[%s5 + $0x88] sm:$0xff]
      %v3287 = vld [vmem:[%s5 + $0x90] sm:$0xff]
      %v3288 = vld [vmem:[%s5 + $0x98] sm:$0xff]
      %v3289 = vld [vmem:[%s5 + $0xa0] sm:$0xff]
      %v3290 = vld [vmem:[%s5 + $0xa8] sm:$0xff]
      %v3291 = vld [vmem:[%s5 + $0xb0] sm:$0xff]
      %v3292 = vld [vmem:[%s5 + $0xb8] sm:$0xff]
      %v3293 = vld [vmem:[%s5 + $0xc0] sm:$0xff]
      %v3294 = vld [vmem:[%s5 + $0xc8] sm:$0xff]
      %v3295 = vld [vmem:[%s5 + $0xd0] sm:$0xff]
      %v3296 = vld [vmem:[%s5 + $0xd8] sm:$0xff]
      %v3297 = vld [vmem:[%s5 + $0xe0] sm:$0xff]
      %v3298 = vld [vmem:[%s5 + $0xe8] sm:$0xff]
      %v3299 = vld [vmem:[%s5 + $0xf0] sm:$0xff]
      %v3300 = vld [vmem:[%s5 + $0xf8] sm:$0xff]
      %v3301 = vld [vmem:[#allocation4] sm:$0xff]
      %v3302 = vld [vmem:[#allocation4 + $0x8] sm:$0xff]
      %v3303 = vld [vmem:[#allocation4 + $0x10] sm:$0xff]
      %v3304 = vld [vmem:[#allocation4 + $0x18] sm:$0xff]
      %v3305 = vld [vmem:[#allocation4 + $0x20] sm:$0xff]
      %v3306 = vld [vmem:[#allocation4 + $0x28] sm:$0xff]
      %v3307 = vld [vmem:[#allocation4 + $0x30] sm:$0xff]
      %v3308 = vld [vmem:[#allocation4 + $0x38] sm:$0xff]
      %v3309 = vld [vmem:[#allocation4 + $0x40] sm:$0xff]
      %v3310 = vld [vmem:[#allocation4 + $0x48] sm:$0xff]
      %v3311 = vld [vmem:[#allocation4 + $0x50] sm:$0xff]
      %v3312 = vld [vmem:[#allocation4 + $0x58] sm:$0xff]
      %v3313 = vld [vmem:[#allocation4 + $0x60] sm:$0xff]
      %v3314 = vld [vmem:[#allocation4 + $0x68] sm:$0xff]
      %v3315 = vld [vmem:[#allocation4 + $0x70] sm:$0xff]
      %v3316 = vld [vmem:[#allocation4 + $0x78] sm:$0xff]
      %v3317 = vld [vmem:[#allocation4 + $0x80] sm:$0xff]
      %v3318 = vld [vmem:[#allocation4 + $0x88] sm:$0xff]
      %v3319 = vld [vmem:[#allocation4 + $0x90] sm:$0xff]
      %v3320 = vld [vmem:[#allocation4 + $0x98] sm:$0xff]
      %v3321 = vld [vmem:[#allocation4 + $0xa0] sm:$0xff]
      %v3322 = vld [vmem:[#allocation4 + $0xa8] sm:$0xff]
      %v3323 = vld [vmem:[#allocation4 + $0xb0] sm:$0xff]
      %v3324 = vld [vmem:[#allocation4 + $0xb8] sm:$0xff]
      %v3325 = vld [vmem:[#allocation4 + $0xc0] sm:$0xff]
      %v3326 = vld [vmem:[#allocation4 + $0xc8] sm:$0xff]
      %s3327 = scalar_lea.vmem %s5, 256
      %v3328 = vld [vmem:[%s3327] sm:$0xff]
      %v3329 = vld [vmem:[%s3327 + $0x8] sm:$0xff]
      %v3330 = vld [vmem:[%s3327 + $0x10] sm:$0xff]
      %v3331 = vld [vmem:[%s3327 + $0x18] sm:$0xff]
      %v3332 = vld [vmem:[%s3327 + $0x20] sm:$0xff]
      %v3333 = vld [vmem:[%s3327 + $0x28] sm:$0xff]
      %v3334 = vld [vmem:[%s3327 + $0x30] sm:$0xff]
      %v3335 = vld [vmem:[%s3327 + $0x38] sm:$0xff]
      %v3336 = vld [vmem:[%s3327 + $0x40] sm:$0xff]
      %v3337 = vld [vmem:[%s3327 + $0x48] sm:$0xff]
      %v3338 = vld [vmem:[%s3327 + $0x50] sm:$0xff]
      %v3339 = vld [vmem:[%s3327 + $0x58] sm:$0xff]
      %v3340 = vld [vmem:[%s3327 + $0x60] sm:$0xff]
      %v3341 = vld [vmem:[%s3327 + $0x68] sm:$0xff]
      %v3342 = vld [vmem:[%s3327 + $0x70] sm:$0xff]
      %v3343 = vld [vmem:[%s3327 + $0x78] sm:$0xff]
      %v3344 = vld [vmem:[%s3327 + $0x80] sm:$0xff]
      %v3345 = vld [vmem:[%s3327 + $0x88] sm:$0xff]
      %v3346 = vld [vmem:[%s3327 + $0x90] sm:$0xff]
      %v3347 = vld [vmem:[%s3327 + $0x98] sm:$0xff]
      %v3348 = vld [vmem:[%s3327 + $0xa0] sm:$0xff]
      %v3349 = vld [vmem:[%s3327 + $0xa8] sm:$0xff]
      %v3350 = vld [vmem:[%s3327 + $0xb0] sm:$0xff]
      %v3351 = vld [vmem:[%s3327 + $0xb8] sm:$0xff]
      %v3352 = vld [vmem:[%s3327 + $0xc0] sm:$0xff]
      %v3353 = vld [vmem:[%s3327 + $0xc8] sm:$0xff]
      %v3354 = vld [vmem:[%s3327 + $0xd0] sm:$0xff]
      %v3355 = vld [vmem:[%s3327 + $0xd8] sm:$0xff]
      %v3356 = vld [vmem:[%s3327 + $0xe0] sm:$0xff]
      %v3357 = vld [vmem:[%s3327 + $0xe8] sm:$0xff]
      %v3358 = vld [vmem:[%s3327 + $0xf0] sm:$0xff]
      %v3359 = vld [vmem:[%s3327 + $0xf8] sm:$0xff]
      %3360 = vmatprep.subr.mxu0 %v3329
      %3361 = vmatpush1.msra.mxu0 %v3328
      %3362 = vmatprep.subr.mxu0 %v3331
      %3363 = vmatpush1.msra.mxu0 %v3330
      %3364 = vmatprep.subr.mxu0 %v3333
      %3365 = vmatpush1.msra.mxu0 %v3332
      %3366 = vmatprep.subr.mxu0 %v3335
      %3367 = vmatpush1.msra.mxu0 %v3334
      %3368 = vmatprep.subr.mxu0 %v3337
      %3369 = vmatpush1.msra.mxu0 %v3336
      %3370 = vmatprep.subr.mxu0 %v3339
      %3371 = vmatpush1.msra.mxu0 %v3338
      %3372 = vmatprep.subr.mxu0 %v3341
      %3373 = vmatpush1.msra.mxu0 %v3340
      %3374 = vmatprep.subr.mxu0 %v3343
      %3375 = vmatpush1.msra.mxu0 %v3342
      %3376 = vmatprep.subr.mxu0 %v3345
      %3377 = vmatpush1.msra.mxu0 %v3344
      %3378 = vmatprep.subr.mxu0 %v3347
      %3379 = vmatpush1.msra.mxu0 %v3346
      %3380 = vmatprep.subr.mxu0 %v3349
      %3381 = vmatpush1.msra.mxu0 %v3348
      %3382 = vmatprep.subr.mxu0 %v3351
      %3383 = vmatpush1.msra.mxu0 %v3350
      %3384 = vmatprep.subr.mxu0 %v3353
      %3385 = vmatpush1.msra.mxu0 %v3352
      %3386 = vmatprep.subr.mxu0 %v3355
      %3387 = vmatpush1.msra.mxu0 %v3354
      %3388 = vmatprep.subr.mxu0 %v3357
      %3389 = vmatpush1.msra.mxu0 %v3356
      %3390 = vmatprep.subr.mxu0 %v3359
      %3391 = vmatpush1.msra.mxu0 %v3358
      %3392 = vmatprep.subr.mxu0 0.0
      %3393 = vmatpush1.msra.mxu0 0.0
      %3394 = vmatprep.subr.mxu0 0.0
      %3395 = vmatpush1.msra.mxu0 0.0
      %3396 = vmatprep.subr.mxu0 0.0
      %3397 = vmatpush1.msra.mxu0 0.0
      %3398 = vmatprep.subr.mxu0 0.0
      %3399 = vmatpush1.msra.mxu0 0.0
      %3400 = vmatprep.subr.mxu0 0.0
      %3401 = vmatpush1.msra.mxu0 0.0
      %3402 = vmatprep.subr.mxu0 0.0
      %3403 = vmatpush1.msra.mxu0 0.0
      %3404 = vmatprep.subr.mxu0 0.0
      %3405 = vmatpush1.msra.mxu0 0.0
      %3406 = vmatprep.subr.mxu0 0.0
      %3407 = vmatpush1.msra.mxu0 0.0
      %3408 = vmatprep.subr.mxu0 0.0
      %3409 = vmatpush1.msra.mxu0 0.0
      %3410 = vmatprep.subr.mxu0 0.0
      %3411 = vmatpush1.msra.mxu0 0.0
      %3412 = vmatprep.subr.mxu0 0.0
      %3413 = vmatpush1.msra.mxu0 0.0
      %3414 = vmatprep.subr.mxu0 0.0
      %3415 = vmatpush1.msra.mxu0 0.0
      %3416 = vmatprep.subr.mxu0 0.0
      %3417 = vmatpush1.msra.mxu0 0.0
      %3418 = vmatprep.subr.mxu0 0.0
      %3419 = vmatpush1.msra.mxu0 0.0
      %3420 = vmatprep.subr.mxu0 0.0
      %3421 = vmatpush1.msra.mxu0 0.0
      %3422 = vmatprep.subr.mxu0 0.0
      %3423 = vmatpush1.msra.mxu0 0.0
      %3424 = vmatprep.mubr.f32.mxu0 0.0
      %3425 = vmatmul.mubr.f32.gmra.mrb[0].mxu0 %v3301
      %v3426 = vpop.f32.mrb[0].mxu0
      %v3427 = vadd.f32 0.0, %v3426
      %v3428 = vpop.f32.mrb[0].mxu0
      %v3429 = vadd.f32 0.0, %v3428
      %3430 = vmatprep.mubr.f32.mxu0 0.0
      %3431 = vmatmul.mubr.f32.gmra.mrb[0].mxu0 %v3302
      %v3432 = vpop.f32.mrb[0].mxu0
      %v3433 = vadd.f32 0.0, %v3432
      %v3434 = vpop.f32.mrb[0].mxu0
      %v3435 = vadd.f32 0.0, %v3434
      %3436 = vmatprep.mubr.f32.mxu0 0.0
      %3437 = vmatmul.mubr.f32.gmra.mrb[0].mxu0 %v3303
      %v3438 = vpop.f32.mrb[0].mxu0
      %v3439 = vadd.f32 0.0, %v3438
      %v3440 = vpop.f32.mrb[0].mxu0
      %v3441 = vadd.f32 0.0, %v3440
      %3442 = vmatprep.mubr.f32.mxu0 0.0
      %3443 = vmatmul.mubr.f32.gmra.mrb[0].mxu0 %v3304
      %v3444 = vpop.f32.mrb[0].mxu0
      %v3445 = vadd.f32 0.0, %v3444
      %v3446 = vpop.f32.mrb[0].mxu0
      %v3447 = vadd.f32 0.0, %v3446
      %3448 = vmatprep.mubr.f32.mxu0 0.0
      %3449 = vmatmul.mubr.f32.gmra.mrb[0].mxu0 %v3305
      %v3450 = vpop.f32.mrb[0].mxu0
      %v3451 = vadd.f32 0.0, %v3450
      %v3452 = vpop.f32.mrb[0].mxu0
      %v3453 = vadd.f32 0.0, %v3452
      %3454 = vmatprep.mubr.f32.mxu0 0.0
      %3455 = vmatmul.mubr.f32.gmra.mrb[0].mxu0 %v3306
      %v3456 = vpop.f32.mrb[0].mxu0
      %v3457 = vadd.f32 0.0, %v3456
      %v3458 = vpop.f32.mrb[0].mxu0
      %v3459 = vadd.f32 0.0, %v3458
      %3460 = vmatprep.mubr.f32.mxu0 0.0
      %3461 = vmatmul.mubr.f32.gmra.mrb[0].mxu0 %v3307
      %v3462 = vpop.f32.mrb[0].mxu0
      %v3463 = vadd.f32 0.0, %v3462
      %v3464 = vpop.f32.mrb[0].mxu0
      %v3465 = vadd.f32 0.0, %v3464
      %3466 = vmatprep.mubr.f32.mxu0 0.0
      %3467 = vmatmul.mubr.f32.gmra.mrb[0].mxu0 %v3308
      %v3468 = vpop.f32.mrb[0].mxu0
      %v3469 = vadd.f32 0.0, %v3468
      %v3470 = vpop.f32.mrb[0].mxu0
      %v3471 = vadd.f32 0.0, %v3470
      %3472 = vmatprep.mubr.f32.mxu0 0.0
      %3473 = vmatmul.mubr.f32.gmra.mrb[0].mxu0 %v3309
      %v3474 = vpop.f32.mrb[0].mxu0
      %v3475 = vadd.f32 0.0, %v3474
      %v3476 = vpop.f32.mrb[0].mxu0
      %v3477 = vadd.f32 0.0, %v3476
      %3478 = vmatprep.mubr.f32.mxu0 0.0
      %3479 = vmatmul.mubr.f32.gmra.mrb[0].mxu0 %v3310
      %v3480 = vpop.f32.mrb[0].mxu0
      %v3481 = vadd.f32 0.0, %v3480
      %v3482 = vpop.f32.mrb[0].mxu0
      %v3483 = vadd.f32 0.0, %v3482
      %3484 = vmatprep.mubr.f32.mxu0 0.0
      %3485 = vmatmul.mubr.f32.gmra.mrb[0].mxu0 %v3311
      %v3486 = vpop.f32.mrb[0].mxu0
      %v3487 = vadd.f32 0.0, %v3486
      %v3488 = vpop.f32.mrb[0].mxu0
      %v3489 = vadd.f32 0.0, %v3488
      %3490 = vmatprep.mubr.f32.mxu0 0.0
      %3491 = vmatmul.mubr.f32.gmra.mrb[0].mxu0 %v3312
      %v3492 = vpop.f32.mrb[0].mxu0
      %v3493 = vadd.f32 0.0, %v3492
      %v3494 = vpop.f32.mrb[0].mxu0
      %v3495 = vadd.f32 0.0, %v3494
      %3496 = vmatprep.mubr.f32.mxu0 0.0
      %3497 = vmatmul.mubr.f32.gmra.mrb[0].mxu0 %v3313
      %v3498 = vpop.f32.mrb[0].mxu0
      %v3499 = vadd.f32 0.0, %v3498
      %v3500 = vpop.f32.mrb[0].mxu0
      %v3501 = vadd.f32 0.0, %v3500
      %3502 = vmatprep.mubr.f32.mxu0 0.0
      %3503 = vmatmul.mubr.f32.gmra.mrb[0].mxu0 %v3314
      %v3504 = vpop.f32.mrb[0].mxu0
      %v3505 = vadd.f32 0.0, %v3504
      %v3506 = vpop.f32.mrb[0].mxu0
      %v3507 = vadd.f32 0.0, %v3506
      %3508 = vmatprep.mubr.f32.mxu0 0.0
      %3509 = vmatmul.mubr.f32.gmra.mrb[0].mxu0 %v3315
      %v3510 = vpop.f32.mrb[0].mxu0
      %v3511 = vadd.f32 0.0, %v3510
      %v3512 = vpop.f32.mrb[0].mxu0
      %v3513 = vadd.f32 0.0, %v3512
      %3514 = vmatprep.mubr.f32.mxu0 0.0
      %3515 = vmatmul.mubr.f32.gmra.mrb[0].mxu0 %v3316
      %v3516 = vpop.f32.mrb[0].mxu0
      %v3517 = vadd.f32 0.0, %v3516
      %v3518 = vpop.f32.mrb[0].mxu0
      %v3519 = vadd.f32 0.0, %v3518
      %3520 = vmatprep.mubr.f32.mxu0 0.0
      %3521 = vmatmul.mubr.f32.gmra.mrb[0].mxu0 %v3317
      %v3522 = vpop.f32.mrb[0].mxu0
      %v3523 = vadd.f32 0.0, %v3522
      %v3524 = vpop.f32.mrb[0].mxu0
      %v3525 = vadd.f32 0.0, %v3524
      %3526 = vmatprep.mubr.f32.mxu0 0.0
      %3527 = vmatmul.mubr.f32.gmra.mrb[0].mxu0 %v3318
      %v3528 = vpop.f32.mrb[0].mxu0
      %v3529 = vadd.f32 0.0, %v3528
      %v3530 = vpop.f32.mrb[0].mxu0
      %v3531 = vadd.f32 0.0, %v3530
      %3532 = vmatprep.mubr.f32.mxu0 0.0
      %3533 = vmatmul.mubr.f32.gmra.mrb[0].mxu0 %v3319
      %v3534 = vpop.f32.mrb[0].mxu0
      %v3535 = vadd.f32 0.0, %v3534
      %v3536 = vpop.f32.mrb[0].mxu0
      %v3537 = vadd.f32 0.0, %v3536
      %3538 = vmatprep.mubr.f32.mxu0 0.0
      %3539 = vmatmul.mubr.f32.gmra.mrb[0].mxu0 %v3320
      %v3540 = vpop.f32.mrb[0].mxu0
      %v3541 = vadd.f32 0.0, %v3540
      %v3542 = vpop.f32.mrb[0].mxu0
      %v3543 = vadd.f32 0.0, %v3542
      %3544 = vmatprep.mubr.f32.mxu0 0.0
      %3545 = vmatmul.mubr.f32.gmra.mrb[0].mxu0 %v3321
      %v3546 = vpop.f32.mrb[0].mxu0
      %v3547 = vadd.f32 0.0, %v3546
      %v3548 = vpop.f32.mrb[0].mxu0
      %v3549 = vadd.f32 0.0, %v3548
      %3550 = vmatprep.mubr.f32.mxu0 0.0
      %3551 = vmatmul.mubr.f32.gmra.mrb[0].mxu0 %v3322
      %v3552 = vpop.f32.mrb[0].mxu0
      %v3553 = vadd.f32 0.0, %v3552
      %v3554 = vpop.f32.mrb[0].mxu0
      %v3555 = vadd.f32 0.0, %v3554
      %3556 = vmatprep.mubr.f32.mxu0 0.0
      %3557 = vmatmul.mubr.f32.gmra.mrb[0].mxu0 %v3323
      %v3558 = vpop.f32.mrb[0].mxu0
      %v3559 = vadd.f32 0.0, %v3558
      %v3560 = vpop.f32.mrb[0].mxu0
      %v3561 = vadd.f32 0.0, %v3560
      %3562 = vmatprep.mubr.f32.mxu0 0.0
      %3563 = vmatmul.mubr.f32.gmra.mrb[0].mxu0 %v3324
      %v3564 = vpop.f32.mrb[0].mxu0
      %v3565 = vadd.f32 0.0, %v3564
      %v3566 = vpop.f32.mrb[0].mxu0
      %v3567 = vadd.f32 0.0, %v3566
      %3568 = vmatprep.mubr.f32.mxu0 0.0
      %3569 = vmatmul.mubr.f32.gmra.mrb[0].mxu0 %v3325
      %v3570 = vpop.f32.mrb[0].mxu0
      %v3571 = vadd.f32 0.0, %v3570
      %v3572 = vpop.f32.mrb[0].mxu0
      %v3573 = vadd.f32 0.0, %v3572
      %3574 = vmatprep.mubr.f32.mxu0 0.0
      %3575 = vmatmul.mubr.f32.gmra.mrb[0].mxu0 %v3326
      %v3576 = vpop.f32.mrb[0].mxu0
      %v3577 = vadd.f32 0.0, %v3576
      %v3578 = vpop.f32.mrb[0].mxu0
      %v3579 = vadd.f32 0.0, %v3578
      %3580 = vdwg.mxu0
      %3581 = vmatprep.subr.mxu0 %v3270
      %3582 = vmatpush1.msra.mxu0 %v3269
      %3583 = vmatprep.subr.mxu0 %v3272
      %3584 = vmatpush1.msra.mxu0 %v3271
      %3585 = vmatprep.subr.mxu0 %v3274
      %3586 = vmatpush1.msra.mxu0 %v3273
      %3587 = vmatprep.subr.mxu0 %v3276
      %3588 = vmatpush1.msra.mxu0 %v3275
      %3589 = vmatprep.subr.mxu0 %v3278
      %3590 = vmatpush1.msra.mxu0 %v3277
      %3591 = vmatprep.subr.mxu0 %v3280
      %3592 = vmatpush1.msra.mxu0 %v3279
      %3593 = vmatprep.subr.mxu0 %v3282
      %3594 = vmatpush1.msra.mxu0 %v3281
      %3595 = vmatprep.subr.mxu0 %v3284
      %3596 = vmatpush1.msra.mxu0 %v3283
      %3597 = vmatprep.subr.mxu0 %v3286
      %3598 = vmatpush1.msra.mxu0 %v3285
      %3599 = vmatprep.subr.mxu0 %v3288
      %3600 = vmatpush1.msra.mxu0 %v3287
      %3601 = vmatprep.subr.mxu0 %v3290
      %3602 = vmatpush1.msra.mxu0 %v3289
      %3603 = vmatprep.subr.mxu0 %v3292
      %3604 = vmatpush1.msra.mxu0 %v3291
      %3605 = vmatprep.subr.mxu0 %v3294
      %3606 = vmatpush1.msra.mxu0 %v3293
      %3607 = vmatprep.subr.mxu0 %v3296
      %3608 = vmatpush1.msra.mxu0 %v3295
      %3609 = vmatprep.subr.mxu0 %v3298
      %3610 = vmatpush1.msra.mxu0 %v3297
      %3611 = vmatprep.subr.mxu0 %v3300
      %3612 = vmatpush1.msra.mxu0 %v3299
      %3613 = vmatprep.subr.mxu0 0.0
      %3614 = vmatpush1.msra.mxu0 0.0
      %3615 = vmatprep.subr.mxu0 0.0
      %3616 = vmatpush1.msra.mxu0 0.0
      %3617 = vmatprep.subr.mxu0 0.0
      %3618 = vmatpush1.msra.mxu0 0.0
      %3619 = vmatprep.subr.mxu0 0.0
      %3620 = vmatpush1.msra.mxu0 0.0
      %3621 = vmatprep.subr.mxu0 0.0
      %3622 = vmatpush1.msra.mxu0 0.0
      %3623 = vmatprep.subr.mxu0 0.0
      %3624 = vmatpush1.msra.mxu0 0.0
      %3625 = vmatprep.subr.mxu0 0.0
      %3626 = vmatpush1.msra.mxu0 0.0
      %3627 = vmatprep.subr.mxu0 0.0
      %3628 = vmatpush1.msra.mxu0 0.0
      %3629 = vmatprep.subr.mxu0 0.0
      %3630 = vmatpush1.msra.mxu0 0.0
      %3631 = vmatprep.subr.mxu0 0.0
      %3632 = vmatpush1.msra.mxu0 0.0
      %3633 = vmatprep.subr.mxu0 0.0
      %3634 = vmatpush1.msra.mxu0 0.0
      %3635 = vmatprep.subr.mxu0 0.0
      %3636 = vmatpush1.msra.mxu0 0.0
      %3637 = vmatprep.subr.mxu0 0.0
      %3638 = vmatpush1.msra.mxu0 0.0
      %3639 = vmatprep.subr.mxu0 0.0
      %3640 = vmatpush1.msra.mxu0 0.0
      %3641 = vmatprep.subr.mxu0 0.0
      %3642 = vmatpush1.msra.mxu0 0.0
      %3643 = vmatprep.subr.mxu0 0.0
      %3644 = vmatpush1.msra.mxu0 0.0
      %3645 = vmatprep.mubr.f32.mxu0 0.0
      %3646 = vmatmul.mubr.f32.gmra.mrb[0].mxu0 %v3243
      %v3647 = vpop.f32.mrb[0].mxu0
      %v3648 = vadd.f32 %v3427, %v3647
      %v3649 = vpop.f32.mrb[0].mxu0
      %v3650 = vadd.f32 %v3429, %v3649
      %3651 = vmatprep.mubr.f32.mxu0 0.0
      %3652 = vmatmul.mubr.f32.gmra.mrb[0].mxu0 %v3244
      %v3653 = vpop.f32.mrb[0].mxu0
      %v3654 = vadd.f32 %v3433, %v3653
      %v3655 = vpop.f32.mrb[0].mxu0
      %v3656 = vadd.f32 %v3435, %v3655
      %3657 = vmatprep.mubr.f32.mxu0 0.0
      %3658 = vmatmul.mubr.f32.gmra.mrb[0].mxu0 %v3245
      %v3659 = vpop.f32.mrb[0].mxu0
      %v3660 = vadd.f32 %v3439, %v3659
      %v3661 = vpop.f32.mrb[0].mxu0
      %v3662 = vadd.f32 %v3441, %v3661
      %3663 = vmatprep.mubr.f32.mxu0 0.0
      %3664 = vmatmul.mubr.f32.gmra.mrb[0].mxu0 %v3246
      %v3665 = vpop.f32.mrb[0].mxu0
      %v3666 = vadd.f32 %v3445, %v3665
      %v3667 = vpop.f32.mrb[0].mxu0
      %v3668 = vadd.f32 %v3447, %v3667
      %3669 = vmatprep.mubr.f32.mxu0 0.0
      %3670 = vmatmul.mubr.f32.gmra.mrb[0].mxu0 %v3247
      %v3671 = vpop.f32.mrb[0].mxu0
      %v3672 = vadd.f32 %v3451, %v3671
      %v3673 = vpop.f32.mrb[0].mxu0
      %v3674 = vadd.f32 %v3453, %v3673
      %3675 = vmatprep.mubr.f32.mxu0 0.0
      %3676 = vmatmul.mubr.f32.gmra.mrb[0].mxu0 %v3248
      %v3677 = vpop.f32.mrb[0].mxu0
      %v3678 = vadd.f32 %v3457, %v3677
      %v3679 = vpop.f32.mrb[0].mxu0
      %v3680 = vadd.f32 %v3459, %v3679
      %3681 = vmatprep.mubr.f32.mxu0 0.0
      %3682 = vmatmul.mubr.f32.gmra.mrb[0].mxu0 %v3249
      %v3683 = vpop.f32.mrb[0].mxu0
      %v3684 = vadd.f32 %v3463, %v3683
      %v3685 = vpop.f32.mrb[0].mxu0
      %v3686 = vadd.f32 %v3465, %v3685
      %3687 = vmatprep.mubr.f32.mxu0 0.0
      %3688 = vmatmul.mubr.f32.gmra.mrb[0].mxu0 %v3250
      %v3689 = vpop.f32.mrb[0].mxu0
      %v3690 = vadd.f32 %v3469, %v3689
      %v3691 = vpop.f32.mrb[0].mxu0
      %v3692 = vadd.f32 %v3471, %v3691
      %3693 = vmatprep.mubr.f32.mxu0 0.0
      %3694 = vmatmul.mubr.f32.gmra.mrb[0].mxu0 %v3251
      %v3695 = vpop.f32.mrb[0].mxu0
      %v3696 = vadd.f32 %v3475, %v3695
      %v3697 = vpop.f32.mrb[0].mxu0
      %v3698 = vadd.f32 %v3477, %v3697
      %3699 = vmatprep.mubr.f32.mxu0 0.0
      %3700 = vmatmul.mubr.f32.gmra.mrb[0].mxu0 %v3252
      %v3701 = vpop.f32.mrb[0].mxu0
      %v3702 = vadd.f32 %v3481, %v3701
      %v3703 = vpop.f32.mrb[0].mxu0
      %v3704 = vadd.f32 %v3483, %v3703
      %3705 = vmatprep.mubr.f32.mxu0 0.0
      %3706 = vmatmul.mubr.f32.gmra.mrb[0].mxu0 %v3253
      %v3707 = vpop.f32.mrb[0].mxu0
      %v3708 = vadd.f32 %v3487, %v3707
      %v3709 = vpop.f32.mrb[0].mxu0
      %v3710 = vadd.f32 %v3489, %v3709
      %3711 = vmatprep.mubr.f32.mxu0 0.0
      %3712 = vmatmul.mubr.f32.gmra.mrb[0].mxu0 %v3254
      %v3713 = vpop.f32.mrb[0].mxu0
      %v3714 = vadd.f32 %v3493, %v3713
      %v3715 = vpop.f32.mrb[0].mxu0
      %v3716 = vadd.f32 %v3495, %v3715
      %3717 = vmatprep.mubr.f32.mxu0 0.0
      %3718 = vmatmul.mubr.f32.gmra.mrb[0].mxu0 %v3255
      %v3719 = vpop.f32.mrb[0].mxu0
      %v3720 = vadd.f32 %v3499, %v3719
      %v3721 = vpop.f32.mrb[0].mxu0
      %v3722 = vadd.f32 %v3501, %v3721
      %3723 = vmatprep.mubr.f32.mxu0 0.0
      %3724 = vmatmul.mubr.f32.gmra.mrb[0].mxu0 %v3256
      %v3725 = vpop.f32.mrb[0].mxu0
      %v3726 = vadd.f32 %v3505, %v3725
      %v3727 = vpop.f32.mrb[0].mxu0
      %v3728 = vadd.f32 %v3507, %v3727
      %3729 = vmatprep.mubr.f32.mxu0 0.0
      %3730 = vmatmul.mubr.f32.gmra.mrb[0].mxu0 %v3257
      %v3731 = vpop.f32.mrb[0].mxu0
      %v3732 = vadd.f32 %v3511, %v3731
      %v3733 = vpop.f32.mrb[0].mxu0
      %v3734 = vadd.f32 %v3513, %v3733
      %3735 = vmatprep.mubr.f32.mxu0 0.0
      %3736 = vmatmul.mubr.f32.gmra.mrb[0].mxu0 %v3258
      %v3737 = vpop.f32.mrb[0].mxu0
      %v3738 = vadd.f32 %v3517, %v3737
      %v3739 = vpop.f32.mrb[0].mxu0
      %v3740 = vadd.f32 %v3519, %v3739
      %3741 = vmatprep.mubr.f32.mxu0 0.0
      %3742 = vmatmul.mubr.f32.gmra.mrb[0].mxu0 %v3259
      %v3743 = vpop.f32.mrb[0].mxu0
      %v3744 = vadd.f32 %v3523, %v3743
      %v3745 = vpop.f32.mrb[0].mxu0
      %v3746 = vadd.f32 %v3525, %v3745
      %3747 = vmatprep.mubr.f32.mxu0 0.0
      %3748 = vmatmul.mubr.f32.gmra.mrb[0].mxu0 %v3260
      %v3749 = vpop.f32.mrb[0].mxu0
      %v3750 = vadd.f32 %v3529, %v3749
      %v3751 = vpop.f32.mrb[0].mxu0
      %v3752 = vadd.f32 %v3531, %v3751
      %3753 = vmatprep.mubr.f32.mxu0 0.0
      %3754 = vmatmul.mubr.f32.gmra.mrb[0].mxu0 %v3261
      %v3755 = vpop.f32.mrb[0].mxu0
      %v3756 = vadd.f32 %v3535, %v3755
      %v3757 = vpop.f32.mrb[0].mxu0
      %v3758 = vadd.f32 %v3537, %v3757
      %3759 = vmatprep.mubr.f32.mxu0 0.0
      %3760 = vmatmul.mubr.f32.gmra.mrb[0].mxu0 %v3262
      %v3761 = vpop.f32.mrb[0].mxu0
      %v3762 = vadd.f32 %v3541, %v3761
      %v3763 = vpop.f32.mrb[0].mxu0
      %v3764 = vadd.f32 %v3543, %v3763
      %3765 = vmatprep.mubr.f32.mxu0 0.0
      %3766 = vmatmul.mubr.f32.gmra.mrb[0].mxu0 %v3263
      %v3767 = vpop.f32.mrb[0].mxu0
      %v3768 = vadd.f32 %v3547, %v3767
      %v3769 = vpop.f32.mrb[0].mxu0
      %v3770 = vadd.f32 %v3549, %v3769
      %3771 = vmatprep.mubr.f32.mxu0 0.0
      %3772 = vmatmul.mubr.f32.gmra.mrb[0].mxu0 %v3264
      %v3773 = vpop.f32.mrb[0].mxu0
      %v3774 = vadd.f32 %v3553, %v3773
      %v3775 = vpop.f32.mrb[0].mxu0
      %v3776 = vadd.f32 %v3555, %v3775
      %3777 = vmatprep.mubr.f32.mxu0 0.0
      %3778 = vmatmul.mubr.f32.gmra.mrb[0].mxu0 %v3265
      %v3779 = vpop.f32.mrb[0].mxu0
      %v3780 = vadd.f32 %v3559, %v3779
      %v3781 = vpop.f32.mrb[0].mxu0
      %v3782 = vadd.f32 %v3561, %v3781
      %3783 = vmatprep.mubr.f32.mxu0 0.0
      %3784 = vmatmul.mubr.f32.gmra.mrb[0].mxu0 %v3266
      %v3785 = vpop.f32.mrb[0].mxu0
      %v3786 = vadd.f32 %v3565, %v3785
      %v3787 = vpop.f32.mrb[0].mxu0
      %v3788 = vadd.f32 %v3567, %v3787
      %3789 = vmatprep.mubr.f32.mxu0 0.0
      %3790 = vmatmul.mubr.f32.gmra.mrb[0].mxu0 %v3267
      %v3791 = vpop.f32.mrb[0].mxu0
      %v3792 = vadd.f32 %v3571, %v3791
      %v3793 = vpop.f32.mrb[0].mxu0
      %v3794 = vadd.f32 %v3573, %v3793
      %3795 = vmatprep.mubr.f32.mxu0 0.0
      %3796 = vmatmul.mubr.f32.gmra.mrb[0].mxu0 %v3268
      %v3797 = vpop.f32.mrb[0].mxu0
      %v3798 = vadd.f32 %v3577, %v3797
      %v3799 = vpop.f32.mrb[0].mxu0
      %v3800 = vadd.f32 %v3579, %v3799
      %3801 = vdwg.mxu0
      %v3802 = vld [vmem:[#allocation4 + $0xd8] sm:$0xff]
      %v3803 = vld [vmem:[#allocation4 + $0xe0] sm:$0xff]
      %v3804 = vld [vmem:[#allocation4 + $0xe8] sm:$0xff]
      %v3805 = vld [vmem:[#allocation4 + $0xf0] sm:$0xff]
      %v3806 = vld [vmem:[#allocation4 + $0xf8] sm:$0xff]
      %v3807 = vld [vmem:[#allocation4 + $0x100] sm:$0xff]
      %v3808 = vld [vmem:[#allocation4 + $0x108] sm:$0xff]
      %v3809 = vld [vmem:[#allocation4 + $0x110] sm:$0xff]
      %v3810 = vld [vmem:[#allocation4 + $0x118] sm:$0xff]
      %v3811 = vld [vmem:[#allocation4 + $0x120] sm:$0xff]
      %v3812 = vld [vmem:[#allocation4 + $0x128] sm:$0xff]
      %v3813 = vld [vmem:[#allocation4 + $0x130] sm:$0xff]
      %v3814 = vld [vmem:[#allocation4 + $0x138] sm:$0xff]
      %v3815 = vld [vmem:[#allocation4 + $0x140] sm:$0xff]
      %v3816 = vld [vmem:[#allocation4 + $0x148] sm:$0xff]
      %v3817 = vld [vmem:[#allocation4 + $0x150] sm:$0xff]
      %v3818 = vld [vmem:[#allocation4 + $0x158] sm:$0xff]
      %v3819 = vld [vmem:[#allocation4 + $0x160] sm:$0xff]
      %v3820 = vld [vmem:[#allocation4 + $0x168] sm:$0xff]
      %v3821 = vld [vmem:[#allocation4 + $0x170] sm:$0xff]
      %v3822 = vld [vmem:[#allocation4 + $0x178] sm:$0xff]
      %v3823 = vld [vmem:[#allocation4 + $0x180] sm:$0xff]
      %v3824 = vld [vmem:[#allocation4 + $0x188] sm:$0xff]
      %v3825 = vld [vmem:[#allocation4 + $0x190] sm:$0xff]
      %v3826 = vld [vmem:[#allocation4 + $0x198] sm:$0xff]
      %v3827 = vld [vmem:[#allocation4 + $0x1a0] sm:$0xff]
      %s3828 = scalar_lea.vmem %s5, 512
      %v3829 = vld [vmem:[%s3828] sm:$0xff]
      %v3830 = vld [vmem:[%s3828 + $0x8] sm:$0xff]
      %v3831 = vld [vmem:[%s3828 + $0x10] sm:$0xff]
      %v3832 = vld [vmem:[%s3828 + $0x18] sm:$0xff]
      %v3833 = vld [vmem:[%s3828 + $0x20] sm:$0xff]
      %v3834 = vld [vmem:[%s3828 + $0x28] sm:$0xff]
      %v3835 = vld [vmem:[%s3828 + $0x30] sm:$0xff]
      %v3836 = vld [vmem:[%s3828 + $0x38] sm:$0xff]
      %v3837 = vld [vmem:[%s3828 + $0x40] sm:$0xff]
      %v3838 = vld [vmem:[%s3828 + $0x48] sm:$0xff]
      %v3839 = vld [vmem:[%s3828 + $0x50] sm:$0xff]
      %v3840 = vld [vmem:[%s3828 + $0x58] sm:$0xff]
      %v3841 = vld [vmem:[%s3828 + $0x60] sm:$0xff]
      %v3842 = vld [vmem:[%s3828 + $0x68] sm:$0xff]
      %v3843 = vld [vmem:[%s3828 + $0x70] sm:$0xff]
      %v3844 = vld [vmem:[%s3828 + $0x78] sm:$0xff]
      %v3845 = vld [vmem:[%s3828 + $0x80] sm:$0xff]
      %v3846 = vld [vmem:[%s3828 + $0x88] sm:$0xff]
      %v3847 = vld [vmem:[%s3828 + $0x90] sm:$0xff]
      %v3848 = vld [vmem:[%s3828 + $0x98] sm:$0xff]
      %v3849 = vld [vmem:[%s3828 + $0xa0] sm:$0xff]
      %v3850 = vld [vmem:[%s3828 + $0xa8] sm:$0xff]
      %v3851 = vld [vmem:[%s3828 + $0xb0] sm:$0xff]
      %v3852 = vld [vmem:[%s3828 + $0xb8] sm:$0xff]
      %v3853 = vld [vmem:[%s3828 + $0xc0] sm:$0xff]
      %v3854 = vld [vmem:[%s3828 + $0xc8] sm:$0xff]
      %v3855 = vld [vmem:[%s3828 + $0xd0] sm:$0xff]
      %v3856 = vld [vmem:[%s3828 + $0xd8] sm:$0xff]
      %v3857 = vld [vmem:[%s3828 + $0xe0] sm:$0xff]
      %v3858 = vld [vmem:[%s3828 + $0xe8] sm:$0xff]
      %v3859 = vld [vmem:[%s3828 + $0xf0] sm:$0xff]
      %v3860 = vld [vmem:[%s3828 + $0xf8] sm:$0xff]
      %3861 = vmatprep.subr.mxu0 %v3830
      %3862 = vmatpush1.msra.mxu0 %v3829
      %3863 = vmatprep.subr.mxu0 %v3832
      %3864 = vmatpush1.msra.mxu0 %v3831
      %3865 = vmatprep.subr.mxu0 %v3834
      %3866 = vmatpush1.msra.mxu0 %v3833
      %3867 = vmatprep.subr.mxu0 %v3836
      %3868 = vmatpush1.msra.mxu0 %v3835
      %3869 = vmatprep.subr.mxu0 %v3838
      %3870 = vmatpush1.msra.mxu0 %v3837
      %3871 = vmatprep.subr.mxu0 %v3840
      %3872 = vmatpush1.msra.mxu0 %v3839
      %3873 = vmatprep.subr.mxu0 %v3842
      %3874 = vmatpush1.msra.mxu0 %v3841
      %3875 = vmatprep.subr.mxu0 %v3844
      %3876 = vmatpush1.msra.mxu0 %v3843
      %3877 = vmatprep.subr.mxu0 %v3846
      %3878 = vmatpush1.msra.mxu0 %v3845
      %3879 = vmatprep.subr.mxu0 %v3848
      %3880 = vmatpush1.msra.mxu0 %v3847
      %3881 = vmatprep.subr.mxu0 %v3850
      %3882 = vmatpush1.msra.mxu0 %v3849
      %3883 = vmatprep.subr.mxu0 %v3852
      %3884 = vmatpush1.msra.mxu0 %v3851
      %3885 = vmatprep.subr.mxu0 %v3854
      %3886 = vmatpush1.msra.mxu0 %v3853
      %3887 = vmatprep.subr.mxu0 %v3856
      %3888 = vmatpush1.msra.mxu0 %v3855
      %3889 = vmatprep.subr.mxu0 %v3858
      %3890 = vmatpush1.msra.mxu0 %v3857
      %3891 = vmatprep.subr.mxu0 %v3860
      %3892 = vmatpush1.msra.mxu0 %v3859
      %3893 = vmatprep.subr.mxu0 0.0
      %3894 = vmatpush1.msra.mxu0 0.0
      %3895 = vmatprep.subr.mxu0 0.0
      %3896 = vmatpush1.msra.mxu0 0.0
      %3897 = vmatprep.subr.mxu0 0.0
      %3898 = vmatpush1.msra.mxu0 0.0
      %3899 = vmatprep.subr.mxu0 0.0
      %3900 = vmatpush1.msra.mxu0 0.0
      %3901 = vmatprep.subr.mxu0 0.0
      %3902 = vmatpush1.msra.mxu0 0.0
      %3903 = vmatprep.subr.mxu0 0.0
      %3904 = vmatpush1.msra.mxu0 0.0
      %3905 = vmatprep.subr.mxu0 0.0
      %3906 = vmatpush1.msra.mxu0 0.0
      %3907 = vmatprep.subr.mxu0 0.0
      %3908 = vmatpush1.msra.mxu0 0.0
      %3909 = vmatprep.subr.mxu0 0.0
      %3910 = vmatpush1.msra.mxu0 0.0
      %3911 = vmatprep.subr.mxu0 0.0
      %3912 = vmatpush1.msra.mxu0 0.0
      %3913 = vmatprep.subr.mxu0 0.0
      %3914 = vmatpush1.msra.mxu0 0.0
      %3915 = vmatprep.subr.mxu0 0.0
      %3916 = vmatpush1.msra.mxu0 0.0
      %3917 = vmatprep.subr.mxu0 0.0
      %3918 = vmatpush1.msra.mxu0 0.0
      %3919 = vmatprep.subr.mxu0 0.0
      %3920 = vmatpush1.msra.mxu0 0.0
      %3921 = vmatprep.subr.mxu0 0.0
      %3922 = vmatpush1.msra.mxu0 0.0
      %3923 = vmatprep.subr.mxu0 0.0
      %3924 = vmatpush1.msra.mxu0 0.0
      %3925 = vmatprep.mubr.f32.mxu0 0.0
      %3926 = vmatmul.mubr.f32.gmra.mrb[0].mxu0 %v3802
      %v3927 = vpop.f32.mrb[0].mxu0
      %v3928 = vadd.f32 0.0, %v3927
      %v3929 = vpop.f32.mrb[0].mxu0
      %v3930 = vadd.f32 0.0, %v3929
      %3931 = vmatprep.mubr.f32.mxu0 0.0
      %3932 = vmatmul.mubr.f32.gmra.mrb[0].mxu0 %v3803
      %v3933 = vpop.f32.mrb[0].mxu0
      %v3934 = vadd.f32 0.0, %v3933
      %v3935 = vpop.f32.mrb[0].mxu0
      %v3936 = vadd.f32 0.0, %v3935
      %3937 = vmatprep.mubr.f32.mxu0 0.0
      %3938 = vmatmul.mubr.f32.gmra.mrb[0].mxu0 %v3804
      %v3939 = vpop.f32.mrb[0].mxu0
      %v3940 = vadd.f32 0.0, %v3939
      %v3941 = vpop.f32.mrb[0].mxu0
      %v3942 = vadd.f32 0.0, %v3941
      %3943 = vmatprep.mubr.f32.mxu0 0.0
      %3944 = vmatmul.mubr.f32.gmra.mrb[0].mxu0 %v3805
      %v3945 = vpop.f32.mrb[0].mxu0
      %v3946 = vadd.f32 0.0, %v3945
      %v3947 = vpop.f32.mrb[0].mxu0
      %v3948 = vadd.f32 0.0, %v3947
      %3949 = vmatprep.mubr.f32.mxu0 0.0
      %3950 = vmatmul.mubr.f32.gmra.mrb[0].mxu0 %v3806
      %v3951 = vpop.f32.mrb[0].mxu0
      %v3952 = vadd.f32 0.0, %v3951
      %v3953 = vpop.f32.mrb[0].mxu0
      %v3954 = vadd.f32 0.0, %v3953
      %3955 = vmatprep.mubr.f32.mxu0 0.0
      %3956 = vmatmul.mubr.f32.gmra.mrb[0].mxu0 %v3807
      %v3957 = vpop.f32.mrb[0].mxu0
      %v3958 = vadd.f32 0.0, %v3957
      %v3959 = vpop.f32.mrb[0].mxu0
      %v3960 = vadd.f32 0.0, %v3959
      %3961 = vmatprep.mubr.f32.mxu0 0.0
      %3962 = vmatmul.mubr.f32.gmra.mrb[0].mxu0 %v3808
      %v3963 = vpop.f32.mrb[0].mxu0
      %v3964 = vadd.f32 0.0, %v3963
      %v3965 = vpop.f32.mrb[0].mxu0
      %v3966 = vadd.f32 0.0, %v3965
      %3967 = vmatprep.mubr.f32.mxu0 0.0
      %3968 = vmatmul.mubr.f32.gmra.mrb[0].mxu0 %v3809
      %v3969 = vpop.f32.mrb[0].mxu0
      %v3970 = vadd.f32 0.0, %v3969
      %v3971 = vpop.f32.mrb[0].mxu0
      %v3972 = vadd.f32 0.0, %v3971
      %3973 = vmatprep.mubr.f32.mxu0 0.0
      %3974 = vmatmul.mubr.f32.gmra.mrb[0].mxu0 %v3810
      %v3975 = vpop.f32.mrb[0].mxu0
      %v3976 = vadd.f32 0.0, %v3975
      %v3977 = vpop.f32.mrb[0].mxu0
      %v3978 = vadd.f32 0.0, %v3977
      %3979 = vmatprep.mubr.f32.mxu0 0.0
      %3980 = vmatmul.mubr.f32.gmra.mrb[0].mxu0 %v3811
      %v3981 = vpop.f32.mrb[0].mxu0
      %v3982 = vadd.f32 0.0, %v3981
      %v3983 = vpop.f32.mrb[0].mxu0
      %v3984 = vadd.f32 0.0, %v3983
      %3985 = vmatprep.mubr.f32.mxu0 0.0
      %3986 = vmatmul.mubr.f32.gmra.mrb[0].mxu0 %v3812
      %v3987 = vpop.f32.mrb[0].mxu0
      %v3988 = vadd.f32 0.0, %v3987
      %v3989 = vpop.f32.mrb[0].mxu0
      %v3990 = vadd.f32 0.0, %v3989
      %3991 = vmatprep.mubr.f32.mxu0 0.0
      %3992 = vmatmul.mubr.f32.gmra.mrb[0].mxu0 %v3813
      %v3993 = vpop.f32.mrb[0].mxu0
      %v3994 = vadd.f32 0.0, %v3993
      %v3995 = vpop.f32.mrb[0].mxu0
      %v3996 = vadd.f32 0.0, %v3995
      %3997 = vmatprep.mubr.f32.mxu0 0.0
      %3998 = vmatmul.mubr.f32.gmra.mrb[0].mxu0 %v3814
      %v3999 = vpop.f32.mrb[0].mxu0
      %v4000 = vadd.f32 0.0, %v3999
      %v4001 = vpop.f32.mrb[0].mxu0
      %v4002 = vadd.f32 0.0, %v4001
      %4003 = vmatprep.mubr.f32.mxu0 0.0
      %4004 = vmatmul.mubr.f32.gmra.mrb[0].mxu0 %v3815
      %v4005 = vpop.f32.mrb[0].mxu0
      %v4006 = vadd.f32 0.0, %v4005
      %v4007 = vpop.f32.mrb[0].mxu0
      %v4008 = vadd.f32 0.0, %v4007
      %4009 = vmatprep.mubr.f32.mxu0 0.0
      %4010 = vmatmul.mubr.f32.gmra.mrb[0].mxu0 %v3816
      %v4011 = vpop.f32.mrb[0].mxu0
      %v4012 = vadd.f32 0.0, %v4011
      %v4013 = vpop.f32.mrb[0].mxu0
      %v4014 = vadd.f32 0.0, %v4013
      %4015 = vmatprep.mubr.f32.mxu0 0.0
      %4016 = vmatmul.mubr.f32.gmra.mrb[0].mxu0 %v3817
      %v4017 = vpop.f32.mrb[0].mxu0
      %v4018 = vadd.f32 0.0, %v4017
      %v4019 = vpop.f32.mrb[0].mxu0
      %v4020 = vadd.f32 0.0, %v4019
      %4021 = vmatprep.mubr.f32.mxu0 0.0
      %4022 = vmatmul.mubr.f32.gmra.mrb[0].mxu0 %v3818
      %v4023 = vpop.f32.mrb[0].mxu0
      %v4024 = vadd.f32 0.0, %v4023
      %v4025 = vpop.f32.mrb[0].mxu0
      %v4026 = vadd.f32 0.0, %v4025
      %4027 = vmatprep.mubr.f32.mxu0 0.0
      %4028 = vmatmul.mubr.f32.gmra.mrb[0].mxu0 %v3819
      %v4029 = vpop.f32.mrb[0].mxu0
      %v4030 = vadd.f32 0.0, %v4029
      %v4031 = vpop.f32.mrb[0].mxu0
      %v4032 = vadd.f32 0.0, %v4031
      %4033 = vmatprep.mubr.f32.mxu0 0.0
      %4034 = vmatmul.mubr.f32.gmra.mrb[0].mxu0 %v3820
      %v4035 = vpop.f32.mrb[0].mxu0
      %v4036 = vadd.f32 0.0, %v4035
      %v4037 = vpop.f32.mrb[0].mxu0
      %v4038 = vadd.f32 0.0, %v4037
      %4039 = vmatprep.mubr.f32.mxu0 0.0
      %4040 = vmatmul.mubr.f32.gmra.mrb[0].mxu0 %v3821
      %v4041 = vpop.f32.mrb[0].mxu0
      %v4042 = vadd.f32 0.0, %v4041
      %v4043 = vpop.f32.mrb[0].mxu0
      %v4044 = vadd.f32 0.0, %v4043
      %4045 = vmatprep.mubr.f32.mxu0 0.0
      %4046 = vmatmul.mubr.f32.gmra.mrb[0].mxu0 %v3822
      %v4047 = vpop.f32.mrb[0].mxu0
      %v4048 = vadd.f32 0.0, %v4047
      %v4049 = vpop.f32.mrb[0].mxu0
      %v4050 = vadd.f32 0.0, %v4049
      %4051 = vmatprep.mubr.f32.mxu0 0.0
      %4052 = vmatmul.mubr.f32.gmra.mrb[0].mxu0 %v3823
      %v4053 = vpop.f32.mrb[0].mxu0
      %v4054 = vadd.f32 0.0, %v4053
      %v4055 = vpop.f32.mrb[0].mxu0
      %v4056 = vadd.f32 0.0, %v4055
      %4057 = vmatprep.mubr.f32.mxu0 0.0
      %4058 = vmatmul.mubr.f32.gmra.mrb[0].mxu0 %v3824
      %v4059 = vpop.f32.mrb[0].mxu0
      %v4060 = vadd.f32 0.0, %v4059
      %v4061 = vpop.f32.mrb[0].mxu0
      %v4062 = vadd.f32 0.0, %v4061
      %4063 = vmatprep.mubr.f32.mxu0 0.0
      %4064 = vmatmul.mubr.f32.gmra.mrb[0].mxu0 %v3825
      %v4065 = vpop.f32.mrb[0].mxu0
      %v4066 = vadd.f32 0.0, %v4065
      %v4067 = vpop.f32.mrb[0].mxu0
      %v4068 = vadd.f32 0.0, %v4067
      %4069 = vmatprep.mubr.f32.mxu0 0.0
      %4070 = vmatmul.mubr.f32.gmra.mrb[0].mxu0 %v3826
      %v4071 = vpop.f32.mrb[0].mxu0
      %v4072 = vadd.f32 0.0, %v4071
      %v4073 = vpop.f32.mrb[0].mxu0
      %v4074 = vadd.f32 0.0, %v4073
      %4075 = vmatprep.mubr.f32.mxu0 0.0
      %4076 = vmatmul.mubr.f32.gmra.mrb[0].mxu0 %v3827
      %v4077 = vpop.f32.mrb[0].mxu0
      %v4078 = vadd.f32 0.0, %v4077
      %v4079 = vpop.f32.mrb[0].mxu0
      %v4080 = vadd.f32 0.0, %v4079
      %4081 = vdwg.mxu0
      %v4082 = vadd.f32 %v3648, %v3928
      %v4083 = vadd.f32 %v3650, %v3930
      %v4084 = vadd.f32 %v3654, %v3934
      %v4085 = vadd.f32 %v3656, %v3936
      %v4086 = vadd.f32 %v3660, %v3940
      %v4087 = vadd.f32 %v3662, %v3942
      %v4088 = vadd.f32 %v3666, %v3946
      %v4089 = vadd.f32 %v3668, %v3948
      %v4090 = vadd.f32 %v3672, %v3952
      %v4091 = vadd.f32 %v3674, %v3954
      %v4092 = vadd.f32 %v3678, %v3958
      %v4093 = vadd.f32 %v3680, %v3960
      %v4094 = vadd.f32 %v3684, %v3964
      %v4095 = vadd.f32 %v3686, %v3966
      %v4096 = vadd.f32 %v3690, %v3970
      %v4097 = vadd.f32 %v3692, %v3972
      %v4098 = vadd.f32 %v3696, %v3976
      %v4099 = vadd.f32 %v3698, %v3978
      %v4100 = vadd.f32 %v3702, %v3982
      %v4101 = vadd.f32 %v3704, %v3984
      %v4102 = vadd.f32 %v3708, %v3988
      %v4103 = vadd.f32 %v3710, %v3990
      %v4104 = vadd.f32 %v3714, %v3994
      %v4105 = vadd.f32 %v3716, %v3996
      %v4106 = vadd.f32 %v3720, %v4000
      %v4107 = vadd.f32 %v3722, %v4002
      %v4108 = vadd.f32 %v3726, %v4006
      %v4109 = vadd.f32 %v3728, %v4008
      %v4110 = vadd.f32 %v3732, %v4012
      %v4111 = vadd.f32 %v3734, %v4014
      %v4112 = vadd.f32 %v3738, %v4018
      %v4113 = vadd.f32 %v3740, %v4020
      %v4114 = vadd.f32 %v3744, %v4024
      %v4115 = vadd.f32 %v3746, %v4026
      %v4116 = vadd.f32 %v3750, %v4030
      %v4117 = vadd.f32 %v3752, %v4032
      %v4118 = vadd.f32 %v3756, %v4036
      %v4119 = vadd.f32 %v3758, %v4038
      %v4120 = vadd.f32 %v3762, %v4042
      %v4121 = vadd.f32 %v3764, %v4044
      %v4122 = vadd.f32 %v3768, %v4048
      %v4123 = vadd.f32 %v3770, %v4050
      %v4124 = vadd.f32 %v3774, %v4054
      %v4125 = vadd.f32 %v3776, %v4056
      %v4126 = vadd.f32 %v3780, %v4060
      %v4127 = vadd.f32 %v3782, %v4062
      %v4128 = vadd.f32 %v3786, %v4066
      %v4129 = vadd.f32 %v3788, %v4068
      %v4130 = vadd.f32 %v3792, %v4072
      %v4131 = vadd.f32 %v3794, %v4074
      %v4132 = vadd.f32 %v3798, %v4078
      %v4133 = vadd.f32 %v3800, %v4080
      %v4134 = vld [vmem:[%s6] sm:$0x3]
      %v4136 = vlaneseq
      %v4137 = vshrl.u32 %v4136, 7
      %v4138 = vsub.s32 0, %v4137
      %v4139 = vrot.slane %v4134, %v4138
      %v4140 = vlaneseq
      %v4141 = vshrl.u32 %v4140, 7
      %v4142 = vsub.s32 1, %v4141
      %v4143 = vrot.slane %v4134, %v4142
      %v4146 = vadd.f32 %v4082, %v4139
      %v4147 = vadd.f32 %v4083, %v4143
      %v4148 = vadd.f32 %v4084, %v4139
      %v4149 = vadd.f32 %v4085, %v4143
      %v4150 = vadd.f32 %v4086, %v4139
      %v4151 = vadd.f32 %v4087, %v4143
      %v4152 = vadd.f32 %v4088, %v4139
      %v4153 = vadd.f32 %v4089, %v4143
      %v4154 = vadd.f32 %v4090, %v4139
      %v4155 = vadd.f32 %v4091, %v4143
      %v4156 = vadd.f32 %v4092, %v4139
      %v4157 = vadd.f32 %v4093, %v4143
      %v4158 = vadd.f32 %v4094, %v4139
      %v4159 = vadd.f32 %v4095, %v4143
      %v4160 = vadd.f32 %v4096, %v4139
      %v4161 = vadd.f32 %v4097, %v4143
      %v4162 = vadd.f32 %v4098, %v4139
      %v4163 = vadd.f32 %v4099, %v4143
      %v4164 = vadd.f32 %v4100, %v4139
      %v4165 = vadd.f32 %v4101, %v4143
      %v4166 = vadd.f32 %v4102, %v4139
      %v4167 = vadd.f32 %v4103, %v4143
      %v4168 = vadd.f32 %v4104, %v4139
      %v4169 = vadd.f32 %v4105, %v4143
      %v4170 = vadd.f32 %v4106, %v4139
      %v4171 = vadd.f32 %v4107, %v4143
      %v4172 = vadd.f32 %v4108, %v4139
      %v4173 = vadd.f32 %v4109, %v4143
      %v4174 = vadd.f32 %v4110, %v4139
      %v4175 = vadd.f32 %v4111, %v4143
      %v4176 = vadd.f32 %v4112, %v4139
      %v4177 = vadd.f32 %v4113, %v4143
      %v4178 = vadd.f32 %v4114, %v4139
      %v4179 = vadd.f32 %v4115, %v4143
      %v4180 = vadd.f32 %v4116, %v4139
      %v4181 = vadd.f32 %v4117, %v4143
      %v4182 = vadd.f32 %v4118, %v4139
      %v4183 = vadd.f32 %v4119, %v4143
      %v4184 = vadd.f32 %v4120, %v4139
      %v4185 = vadd.f32 %v4121, %v4143
      %v4186 = vadd.f32 %v4122, %v4139
      %v4187 = vadd.f32 %v4123, %v4143
      %v4188 = vadd.f32 %v4124, %v4139
      %v4189 = vadd.f32 %v4125, %v4143
      %v4190 = vadd.f32 %v4126, %v4139
      %v4191 = vadd.f32 %v4127, %v4143
      %v4192 = vadd.f32 %v4128, %v4139
      %v4193 = vadd.f32 %v4129, %v4143
      %v4194 = vadd.f32 %v4130, %v4139
      %v4195 = vadd.f32 %v4131, %v4143
      %v4196 = vadd.f32 %v4132, %v4139
      %v4197 = vadd.f32 %v4133, %v4143
      %v4198 = vmax.f32 %v4146, 0.0
      %v4199 = vmax.f32 %v4147, 0.0
      %v4200 = vmax.f32 %v4148, 0.0
      %v4201 = vmax.f32 %v4149, 0.0
      %v4202 = vmax.f32 %v4150, 0.0
      %v4203 = vmax.f32 %v4151, 0.0
      %v4204 = vmax.f32 %v4152, 0.0
      %v4205 = vmax.f32 %v4153, 0.0
      %v4206 = vmax.f32 %v4154, 0.0
      %v4207 = vmax.f32 %v4155, 0.0
      %v4208 = vmax.f32 %v4156, 0.0
      %v4209 = vmax.f32 %v4157, 0.0
      %v4210 = vmax.f32 %v4158, 0.0
      %v4211 = vmax.f32 %v4159, 0.0
      %v4212 = vmax.f32 %v4160, 0.0
      %v4213 = vmax.f32 %v4161, 0.0
      %v4214 = vmax.f32 %v4162, 0.0
      %v4215 = vmax.f32 %v4163, 0.0
      %v4216 = vmax.f32 %v4164, 0.0
      %v4217 = vmax.f32 %v4165, 0.0
      %v4218 = vmax.f32 %v4166, 0.0
      %v4219 = vmax.f32 %v4167, 0.0
      %v4220 = vmax.f32 %v4168, 0.0
      %v4221 = vmax.f32 %v4169, 0.0
      %v4222 = vmax.f32 %v4170, 0.0
      %v4223 = vmax.f32 %v4171, 0.0
      %v4224 = vmax.f32 %v4172, 0.0
      %v4225 = vmax.f32 %v4173, 0.0
      %v4226 = vmax.f32 %v4174, 0.0
      %v4227 = vmax.f32 %v4175, 0.0
      %v4228 = vmax.f32 %v4176, 0.0
      %v4229 = vmax.f32 %v4177, 0.0
      %v4230 = vmax.f32 %v4178, 0.0
      %v4231 = vmax.f32 %v4179, 0.0
      %v4232 = vmax.f32 %v4180, 0.0
      %v4233 = vmax.f32 %v4181, 0.0
      %v4234 = vmax.f32 %v4182, 0.0
      %v4235 = vmax.f32 %v4183, 0.0
      %v4236 = vmax.f32 %v4184, 0.0
      %v4237 = vmax.f32 %v4185, 0.0
      %v4238 = vmax.f32 %v4186, 0.0
      %v4239 = vmax.f32 %v4187, 0.0
      %v4240 = vmax.f32 %v4188, 0.0
      %v4241 = vmax.f32 %v4189, 0.0
      %v4242 = vmax.f32 %v4190, 0.0
      %v4243 = vmax.f32 %v4191, 0.0
      %v4244 = vmax.f32 %v4192, 0.0
      %v4245 = vmax.f32 %v4193, 0.0
      %v4246 = vmax.f32 %v4194, 0.0
      %v4247 = vmax.f32 %v4195, 0.0
      %v4248 = vmax.f32 %v4196, 0.0
      %v4249 = vmax.f32 %v4197, 0.0
      %4250 = vst [vmem:[#allocation5] sm:$0xff] %v4198
      %4251 = vst [vmem:[#allocation5 + $0x8] sm:$0xff] %v4199
      %4252 = vst [vmem:[#allocation5 + $0x10] sm:$0xff] %v4200
      %4253 = vst [vmem:[#allocation5 + $0x18] sm:$0xff] %v4201
      %4254 = vst [vmem:[#allocation5 + $0x20] sm:$0xff] %v4202
      %4255 = vst [vmem:[#allocation5 + $0x28] sm:$0xff] %v4203
      %4256 = vst [vmem:[#allocation5 + $0x30] sm:$0xff] %v4204
      %4257 = vst [vmem:[#allocation5 + $0x38] sm:$0xff] %v4205
      %4258 = vst [vmem:[#allocation5 + $0x40] sm:$0xff] %v4206
      %4259 = vst [vmem:[#allocation5 + $0x48] sm:$0xff] %v4207
      %4260 = vst [vmem:[#allocation5 + $0x50] sm:$0xff] %v4208
      %4261 = vst [vmem:[#allocation5 + $0x58] sm:$0xff] %v4209
      %4262 = vst [vmem:[#allocation5 + $0x60] sm:$0xff] %v4210
      %4263 = vst [vmem:[#allocation5 + $0x68] sm:$0xff] %v4211
      %4264 = vst [vmem:[#allocation5 + $0x70] sm:$0xff] %v4212
      %4265 = vst [vmem:[#allocation5 + $0x78] sm:$0xff] %v4213
      %4266 = vst [vmem:[#allocation5 + $0x80] sm:$0xff] %v4214
      %4267 = vst [vmem:[#allocation5 + $0x88] sm:$0xff] %v4215
      %4268 = vst [vmem:[#allocation5 + $0x90] sm:$0xff] %v4216
      %4269 = vst [vmem:[#allocation5 + $0x98] sm:$0xff] %v4217
      %4270 = vst [vmem:[#allocation5 + $0xa0] sm:$0xff] %v4218
      %4271 = vst [vmem:[#allocation5 + $0xa8] sm:$0xff] %v4219
      %4272 = vst [vmem:[#allocation5 + $0xb0] sm:$0xff] %v4220
      %4273 = vst [vmem:[#allocation5 + $0xb8] sm:$0xff] %v4221
      %4274 = vst [vmem:[#allocation5 + $0xc0] sm:$0xff] %v4222
      %4275 = vst [vmem:[#allocation5 + $0xc8] sm:$0xff] %v4223
      %4276 = vst [vmem:[#allocation5 + $0xd0] sm:$0xff] %v4224
      %4277 = vst [vmem:[#allocation5 + $0xd8] sm:$0xff] %v4225
      %4278 = vst [vmem:[#allocation5 + $0xe0] sm:$0xff] %v4226
      %4279 = vst [vmem:[#allocation5 + $0xe8] sm:$0xff] %v4227
      %4280 = vst [vmem:[#allocation5 + $0xf0] sm:$0xff] %v4228
      %4281 = vst [vmem:[#allocation5 + $0xf8] sm:$0xff] %v4229
      %4282 = vst [vmem:[#allocation5 + $0x100] sm:$0xff] %v4230
      %4283 = vst [vmem:[#allocation5 + $0x108] sm:$0xff] %v4231
      %4284 = vst [vmem:[#allocation5 + $0x110] sm:$0xff] %v4232
      %4285 = vst [vmem:[#allocation5 + $0x118] sm:$0xff] %v4233
      %4286 = vst [vmem:[#allocation5 + $0x120] sm:$0xff] %v4234
      %4287 = vst [vmem:[#allocation5 + $0x128] sm:$0xff] %v4235
      %4288 = vst [vmem:[#allocation5 + $0x130] sm:$0xff] %v4236
      %4289 = vst [vmem:[#allocation5 + $0x138] sm:$0xff] %v4237
      %4290 = vst [vmem:[#allocation5 + $0x140] sm:$0xff] %v4238
      %4291 = vst [vmem:[#allocation5 + $0x148] sm:$0xff] %v4239
      %4292 = vst [vmem:[#allocation5 + $0x150] sm:$0xff] %v4240
      %4293 = vst [vmem:[#allocation5 + $0x158] sm:$0xff] %v4241
      %4294 = vst [vmem:[#allocation5 + $0x160] sm:$0xff] %v4242
      %4295 = vst [vmem:[#allocation5 + $0x168] sm:$0xff] %v4243
      %4296 = vst [vmem:[#allocation5 + $0x170] sm:$0xff] %v4244
      %4297 = vst [vmem:[#allocation5 + $0x178] sm:$0xff] %v4245
      %4298 = vst [vmem:[#allocation5 + $0x180] sm:$0xff] %v4246
      %4299 = vst [vmem:[#allocation5 + $0x188] sm:$0xff] %v4247
      %4300 = vst [vmem:[#allocation5 + $0x190] sm:$0xff] %v4248
      %4301 = vst [vmem:[#allocation5 + $0x198] sm:$0xff] %v4249
      %v4302 = vld [vmem:[#allocation5] sm:$0xff]
      %v4303 = vld [vmem:[#allocation5 + $0x8] sm:$0xff]
      %v4304 = vld [vmem:[%s7] ss:$8 sm:$0x3]
      %v4306 = vlaneseq
      %v4307 = vshrl.u32 %v4306, 7
      %v4308 = vsub.s32 0, %v4307
      %v4309 = vrot.slane %v4304, %v4308
      %v4310 = vlaneseq
      %v4311 = vshrl.u32 %v4310, 7
      %v4312 = vsub.s32 1, %v4311
      %v4313 = vrot.slane %v4304, %v4312
      %v4316 = vmul.f32 %v4302, %v4309
      %v4317 = vmul.f32 %v4303, %v4313
      %v4318 = vadd.f32 %v4316, 0.0
      %v4319 = vadd.f32 %v4317, 0.0
      %s4320 = scalar_lea.vmem %s7, 51
      %v4321 = vld [vmem:[%s4320] ss:$8 sm:$0x3]
      %v4323 = vlaneseq
      %v4324 = vshrl.u32 %v4323, 7
      %v4325 = vsub.s32 0, %v4324
      %v4326 = vrot.slane %v4321, %v4325
      %v4327 = vlaneseq
      %v4328 = vshrl.u32 %v4327, 7
      %v4329 = vsub.s32 1, %v4328
      %v4330 = vrot.slane %v4321, %v4329
      %v4333 = vmul.f32 %v4302, %v4326
      %v4334 = vmul.f32 %v4303, %v4330
      %v4335 = vadd.f32 %v4333, 0.0
      %v4336 = vadd.f32 %v4334, 0.0
      %s4337 = scalar_lea.vmem %s7, 102
      %v4338 = vld [vmem:[%s4337] ss:$8 sm:$0x3]
      %v4340 = vlaneseq
      %v4341 = vshrl.u32 %v4340, 7
      %v4342 = vsub.s32 0, %v4341
      %v4343 = vrot.slane %v4338, %v4342
      %v4344 = vlaneseq
      %v4345 = vshrl.u32 %v4344, 7
      %v4346 = vsub.s32 1, %v4345
      %v4347 = vrot.slane %v4338, %v4346
      %v4350 = vmul.f32 %v4302, %v4343
      %v4351 = vmul.f32 %v4303, %v4347
      %v4352 = vadd.f32 %v4350, 0.0
      %v4353 = vadd.f32 %v4351, 0.0
      %s4354 = scalar_lea.vmem %s7, 161
      %v4355 = vld [vmem:[%s4354] ss:$8 sm:$0x3]
      %v4357 = vlaneseq
      %v4358 = vshrl.u32 %v4357, 7
      %v4359 = vsub.s32 0, %v4358
      %v4360 = vrot.slane %v4355, %v4359
      %v4361 = vlaneseq
      %v4362 = vshrl.u32 %v4361, 7
      %v4363 = vsub.s32 1, %v4362
      %v4364 = vrot.slane %v4355, %v4363
      %v4367 = vmul.f32 %v4302, %v4360
      %v4368 = vmul.f32 %v4303, %v4364
      %v4369 = vadd.f32 %v4367, 0.0
      %v4370 = vadd.f32 %v4368, 0.0
      %s4371 = scalar_lea.vmem %s7, 212
      %v4372 = vld [vmem:[%s4371] ss:$8 sm:$0x3]
      %v4374 = vlaneseq
      %v4375 = vshrl.u32 %v4374, 7
      %v4376 = vsub.s32 0, %v4375
      %v4377 = vrot.slane %v4372, %v4376
      %v4378 = vlaneseq
      %v4379 = vshrl.u32 %v4378, 7
      %v4380 = vsub.s32 1, %v4379
      %v4381 = vrot.slane %v4372, %v4380
      %v4384 = vmul.f32 %v4302, %v4377
      %v4385 = vmul.f32 %v4303, %v4381
      %v4386 = vadd.f32 %v4384, 0.0
      %v4387 = vadd.f32 %v4385, 0.0
      %s4388 = scalar_lea.vmem %s7, 263
      %v4389 = vld [vmem:[%s4388] ss:$8 sm:$0x3]
      %v4391 = vlaneseq
      %v4392 = vshrl.u32 %v4391, 7
      %v4393 = vsub.s32 0, %v4392
      %v4394 = vrot.slane %v4389, %v4393
      %v4395 = vlaneseq
      %v4396 = vshrl.u32 %v4395, 7
      %v4397 = vsub.s32 1, %v4396
      %v4398 = vrot.slane %v4389, %v4397
      %v4401 = vmul.f32 %v4302, %v4394
      %v4402 = vmul.f32 %v4303, %v4398
      %v4403 = vadd.f32 %v4401, 0.0
      %v4404 = vadd.f32 %v4402, 0.0
      %v4405 = vld [vmem:[#allocation5 + $0x10] sm:$0xff]
      %v4406 = vld [vmem:[#allocation5 + $0x18] sm:$0xff]
      %v4407 = vmax.f32 %v4302, %v4405
      %v4408 = vmax.f32 %v4303, %v4406
      %s4409 = scalar_lea.vmem %s7, 1
      %v4410 = vld [vmem:[%s4409] ss:$8 sm:$0x3]
      %v4412 = vlaneseq
      %v4413 = vshrl.u32 %v4412, 7
      %v4414 = vsub.s32 0, %v4413
      %v4415 = vrot.slane %v4410, %v4414
      %v4416 = vlaneseq
      %v4417 = vshrl.u32 %v4416, 7
      %v4418 = vsub.s32 1, %v4417
      %v4419 = vrot.slane %v4410, %v4418
      %v4422 = vmul.f32 %v4407, %v4415
      %v4423 = vmul.f32 %v4408, %v4419
      %v4424 = vadd.f32 %v4318, %v4422
      %v4425 = vadd.f32 %v4319, %v4423
      %s4426 = scalar_lea.vmem %s7, 52
      %v4427 = vld [vmem:[%s4426] ss:$8 sm:$0x3]
      %v4429 = vlaneseq
      %v4430 = vshrl.u32 %v4429, 7
      %v4431 = vsub.s32 0, %v4430
      %v4432 = vrot.slane %v4427, %v4431
      %v4433 = vlaneseq
      %v4434 = vshrl.u32 %v4433, 7
      %v4435 = vsub.s32 1, %v4434
      %v4436 = vrot.slane %v4427, %v4435
      %v4439 = vmul.f32 %v4407, %v4432
      %v4440 = vmul.f32 %v4408, %v4436
      %v4441 = vadd.f32 %v4335, %v4439
      %v4442 = vadd.f32 %v4336, %v4440
      %s4443 = scalar_lea.vmem %s7, 103
      %v4444 = vld [vmem:[%s4443] ss:$8 sm:$0x3]
      %v4446 = vlaneseq
      %v4447 = vshrl.u32 %v4446, 7
      %v4448 = vsub.s32 0, %v4447
      %v4449 = vrot.slane %v4444, %v4448
      %v4450 = vlaneseq
      %v4451 = vshrl.u32 %v4450, 7
      %v4452 = vsub.s32 1, %v4451
      %v4453 = vrot.slane %v4444, %v4452
      %v4456 = vmul.f32 %v4407, %v4449
      %v4457 = vmul.f32 %v4408, %v4453
      %v4458 = vadd.f32 %v4352, %v4456
      %v4459 = vadd.f32 %v4353, %v4457
      %s4460 = scalar_lea.vmem %s7, 162
      %v4461 = vld [vmem:[%s4460] ss:$8 sm:$0x3]
      %v4463 = vlaneseq
      %v4464 = vshrl.u32 %v4463, 7
      %v4465 = vsub.s32 0, %v4464
      %v4466 = vrot.slane %v4461, %v4465
      %v4467 = vlaneseq
      %v4468 = vshrl.u32 %v4467, 7
      %v4469 = vsub.s32 1, %v4468
      %v4470 = vrot.slane %v4461, %v4469
      %v4473 = vmul.f32 %v4407, %v4466
      %v4474 = vmul.f32 %v4408, %v4470
      %v4475 = vadd.f32 %v4369, %v4473
      %v4476 = vadd.f32 %v4370, %v4474
      %s4477 = scalar_lea.vmem %s7, 213
      %v4478 = vld [vmem:[%s4477] ss:$8 sm:$0x3]
      %v4480 = vlaneseq
      %v4481 = vshrl.u32 %v4480, 7
      %v4482 = vsub.s32 0, %v4481
      %v4483 = vrot.slane %v4478, %v4482
      %v4484 = vlaneseq
      %v4485 = vshrl.u32 %v4484, 7
      %v4486 = vsub.s32 1, %v4485
      %v4487 = vrot.slane %v4478, %v4486
      %v4490 = vmul.f32 %v4407, %v4483
      %v4491 = vmul.f32 %v4408, %v4487
      %v4492 = vadd.f32 %v4386, %v4490
      %v4493 = vadd.f32 %v4387, %v4491
      %s4494 = scalar_lea.vmem %s7, 272
      %v4495 = vld [vmem:[%s4494] ss:$8 sm:$0x3]
      %v4497 = vlaneseq
      %v4498 = vshrl.u32 %v4497, 7
      %v4499 = vsub.s32 0, %v4498
      %v4500 = vrot.slane %v4495, %v4499
      %v4501 = vlaneseq
      %v4502 = vshrl.u32 %v4501, 7
      %v4503 = vsub.s32 1, %v4502
      %v4504 = vrot.slane %v4495, %v4503
      %v4507 = vmul.f32 %v4407, %v4500
      %v4508 = vmul.f32 %v4408, %v4504
      %v4509 = vadd.f32 %v4403, %v4507
      %v4510 = vadd.f32 %v4404, %v4508
      %v4511 = vld [vmem:[#allocation5 + $0x20] sm:$0xff]
      %v4512 = vld [vmem:[#allocation5 + $0x28] sm:$0xff]
      %v4513 = vmax.f32 %v4405, %v4511
      %v4514 = vmax.f32 %v4406, %v4512
      %s4515 = scalar_lea.vmem %s7, 2
      %v4516 = vld [vmem:[%s4515] ss:$8 sm:$0x3]
      %v4518 = vlaneseq
      %v4519 = vshrl.u32 %v4518, 7
      %v4520 = vsub.s32 0, %v4519
      %v4521 = vrot.slane %v4516, %v4520
      %v4522 = vlaneseq
      %v4523 = vshrl.u32 %v4522, 7
      %v4524 = vsub.s32 1, %v4523
      %v4525 = vrot.slane %v4516, %v4524
      %v4528 = vmul.f32 %v4513, %v4521
      %v4529 = vmul.f32 %v4514, %v4525
      %v4530 = vadd.f32 %v4424, %v4528
      %v4531 = vadd.f32 %v4425, %v4529
      %s4532 = scalar_lea.vmem %s7, 53
      %v4533 = vld [vmem:[%s4532] ss:$8 sm:$0x3]
      %v4535 = vlaneseq
      %v4536 = vshrl.u32 %v4535, 7
      %v4537 = vsub.s32 0, %v4536
      %v4538 = vrot.slane %v4533, %v4537
      %v4539 = vlaneseq
      %v4540 = vshrl.u32 %v4539, 7
      %v4541 = vsub.s32 1, %v4540
      %v4542 = vrot.slane %v4533, %v4541
      %v4545 = vmul.f32 %v4513, %v4538
      %v4546 = vmul.f32 %v4514, %v4542
      %v4547 = vadd.f32 %v4441, %v4545
      %v4548 = vadd.f32 %v4442, %v4546
      %s4549 = scalar_lea.vmem %s7, 112
      %v4550 = vld [vmem:[%s4549] ss:$8 sm:$0x3]
      %v4552 = vlaneseq
      %v4553 = vshrl.u32 %v4552, 7
      %v4554 = vsub.s32 0, %v4553
      %v4555 = vrot.slane %v4550, %v4554
      %v4556 = vlaneseq
      %v4557 = vshrl.u32 %v4556, 7
      %v4558 = vsub.s32 1, %v4557
      %v4559 = vrot.slane %v4550, %v4558
      %v4562 = vmul.f32 %v4513, %v4555
      %v4563 = vmul.f32 %v4514, %v4559
      %v4564 = vadd.f32 %v4458, %v4562
      %v4565 = vadd.f32 %v4459, %v4563
      %s4566 = scalar_lea.vmem %s7, 163
      %v4567 = vld [vmem:[%s4566] ss:$8 sm:$0x3]
      %v4569 = vlaneseq
      %v4570 = vshrl.u32 %v4569, 7
      %v4571 = vsub.s32 0, %v4570
      %v4572 = vrot.slane %v4567, %v4571
      %v4573 = vlaneseq
      %v4574 = vshrl.u32 %v4573, 7
      %v4575 = vsub.s32 1, %v4574
      %v4576 = vrot.slane %v4567, %v4575
      %v4579 = vmul.f32 %v4513, %v4572
      %v4580 = vmul.f32 %v4514, %v4576
      %v4581 = vadd.f32 %v4475, %v4579
      %v4582 = vadd.f32 %v4476, %v4580
      %s4583 = scalar_lea.vmem %s7, 214
      %v4584 = vld [vmem:[%s4583] ss:$8 sm:$0x3]
      %v4586 = vlaneseq
      %v4587 = vshrl.u32 %v4586, 7
      %v4588 = vsub.s32 0, %v4587
      %v4589 = vrot.slane %v4584, %v4588
      %v4590 = vlaneseq
      %v4591 = vshrl.u32 %v4590, 7
      %v4592 = vsub.s32 1, %v4591
      %v4593 = vrot.slane %v4584, %v4592
      %v4596 = vmul.f32 %v4513, %v4589
      %v4597 = vmul.f32 %v4514, %v4593
      %v4598 = vadd.f32 %v4492, %v4596
      %v4599 = vadd.f32 %v4493, %v4597
      %s4600 = scalar_lea.vmem %s7, 273
      %v4601 = vld [vmem:[%s4600] ss:$8 sm:$0x3]
      %v4603 = vlaneseq
      %v4604 = vshrl.u32 %v4603, 7
      %v4605 = vsub.s32 0, %v4604
      %v4606 = vrot.slane %v4601, %v4605
      %v4607 = vlaneseq
      %v4608 = vshrl.u32 %v4607, 7
      %v4609 = vsub.s32 1, %v4608
      %v4610 = vrot.slane %v4601, %v4609
      %v4613 = vmul.f32 %v4513, %v4606
      %v4614 = vmul.f32 %v4514, %v4610
      %v4615 = vadd.f32 %v4509, %v4613
      %v4616 = vadd.f32 %v4510, %v4614
      %v4617 = vld [vmem:[#allocation5 + $0x30] sm:$0xff]
      %v4618 = vld [vmem:[#allocation5 + $0x38] sm:$0xff]
      %v4619 = vmax.f32 %v4511, %v4617
      %v4620 = vmax.f32 %v4512, %v4618
      %s4621 = scalar_lea.vmem %s7, 3
      %v4622 = vld [vmem:[%s4621] ss:$8 sm:$0x3]
      %v4624 = vlaneseq
      %v4625 = vshrl.u32 %v4624, 7
      %v4626 = vsub.s32 0, %v4625
      %v4627 = vrot.slane %v4622, %v4626
      %v4628 = vlaneseq
      %v4629 = vshrl.u32 %v4628, 7
      %v4630 = vsub.s32 1, %v4629
      %v4631 = vrot.slane %v4622, %v4630
      %v4634 = vmul.f32 %v4619, %v4627
      %v4635 = vmul.f32 %v4620, %v4631
      %v4636 = vadd.f32 %v4530, %v4634
      %v4637 = vadd.f32 %v4531, %v4635
      %s4638 = scalar_lea.vmem %s7, 54
      %v4639 = vld [vmem:[%s4638] ss:$8 sm:$0x3]
      %v4641 = vlaneseq
      %v4642 = vshrl.u32 %v4641, 7
      %v4643 = vsub.s32 0, %v4642
      %v4644 = vrot.slane %v4639, %v4643
      %v4645 = vlaneseq
      %v4646 = vshrl.u32 %v4645, 7
      %v4647 = vsub.s32 1, %v4646
      %v4648 = vrot.slane %v4639, %v4647
      %v4651 = vmul.f32 %v4619, %v4644
      %v4652 = vmul.f32 %v4620, %v4648
      %v4653 = vadd.f32 %v4547, %v4651
      %v4654 = vadd.f32 %v4548, %v4652
      %s4655 = scalar_lea.vmem %s7, 113
      %v4656 = vld [vmem:[%s4655] ss:$8 sm:$0x3]
      %v4658 = vlaneseq
      %v4659 = vshrl.u32 %v4658, 7
      %v4660 = vsub.s32 0, %v4659
      %v4661 = vrot.slane %v4656, %v4660
      %v4662 = vlaneseq
      %v4663 = vshrl.u32 %v4662, 7
      %v4664 = vsub.s32 1, %v4663
      %v4665 = vrot.slane %v4656, %v4664
      %v4668 = vmul.f32 %v4619, %v4661
      %v4669 = vmul.f32 %v4620, %v4665
      %v4670 = vadd.f32 %v4564, %v4668
      %v4671 = vadd.f32 %v4565, %v4669
      %s4672 = scalar_lea.vmem %s7, 164
      %v4673 = vld [vmem:[%s4672] ss:$8 sm:$0x3]
      %v4675 = vlaneseq
      %v4676 = vshrl.u32 %v4675, 7
      %v4677 = vsub.s32 0, %v4676
      %v4678 = vrot.slane %v4673, %v4677
      %v4679 = vlaneseq
      %v4680 = vshrl.u32 %v4679, 7
      %v4681 = vsub.s32 1, %v4680
      %v4682 = vrot.slane %v4673, %v4681
      %v4685 = vmul.f32 %v4619, %v4678
      %v4686 = vmul.f32 %v4620, %v4682
      %v4687 = vadd.f32 %v4581, %v4685
      %v4688 = vadd.f32 %v4582, %v4686
      %s4689 = scalar_lea.vmem %s7, 215
      %v4690 = vld [vmem:[%s4689] ss:$8 sm:$0x3]
      %v4692 = vlaneseq
      %v4693 = vshrl.u32 %v4692, 7
      %v4694 = vsub.s32 0, %v4693
      %v4695 = vrot.slane %v4690, %v4694
      %v4696 = vlaneseq
      %v4697 = vshrl.u32 %v4696, 7
      %v4698 = vsub.s32 1, %v4697
      %v4699 = vrot.slane %v4690, %v4698
      %v4702 = vmul.f32 %v4619, %v4695
      %v4703 = vmul.f32 %v4620, %v4699
      %v4704 = vadd.f32 %v4598, %v4702
      %v4705 = vadd.f32 %v4599, %v4703
      %s4706 = scalar_lea.vmem %s7, 274
      %v4707 = vld [vmem:[%s4706] ss:$8 sm:$0x3]
      %v4709 = vlaneseq
      %v4710 = vshrl.u32 %v4709, 7
      %v4711 = vsub.s32 0, %v4710
      %v4712 = vrot.slane %v4707, %v4711
      %v4713 = vlaneseq
      %v4714 = vshrl.u32 %v4713, 7
      %v4715 = vsub.s32 1, %v4714
      %v4716 = vrot.slane %v4707, %v4715
      %v4719 = vmul.f32 %v4619, %v4712
      %v4720 = vmul.f32 %v4620, %v4716
      %v4721 = vadd.f32 %v4615, %v4719
      %v4722 = vadd.f32 %v4616, %v4720
      %v4723 = vld [vmem:[#allocation5 + $0x40] sm:$0xff]
      %v4724 = vld [vmem:[#allocation5 + $0x48] sm:$0xff]
      %v4725 = vmax.f32 %v4617, %v4723
      %v4726 = vmax.f32 %v4618, %v4724
      %s4727 = scalar_lea.vmem %s7, 4
      %v4728 = vld [vmem:[%s4727] ss:$8 sm:$0x3]
      %v4730 = vlaneseq
      %v4731 = vshrl.u32 %v4730, 7
      %v4732 = vsub.s32 0, %v4731
      %v4733 = vrot.slane %v4728, %v4732
      %v4734 = vlaneseq
      %v4735 = vshrl.u32 %v4734, 7
      %v4736 = vsub.s32 1, %v4735
      %v4737 = vrot.slane %v4728, %v4736
      %v4740 = vmul.f32 %v4725, %v4733
      %v4741 = vmul.f32 %v4726, %v4737
      %v4742 = vadd.f32 %v4636, %v4740
      %v4743 = vadd.f32 %v4637, %v4741
      %s4744 = scalar_lea.vmem %s7, 55
      %v4745 = vld [vmem:[%s4744] ss:$8 sm:$0x3]
      %v4747 = vlaneseq
      %v4748 = vshrl.u32 %v4747, 7
      %v4749 = vsub.s32 0, %v4748
      %v4750 = vrot.slane %v4745, %v4749
      %v4751 = vlaneseq
      %v4752 = vshrl.u32 %v4751, 7
      %v4753 = vsub.s32 1, %v4752
      %v4754 = vrot.slane %v4745, %v4753
      %v4757 = vmul.f32 %v4725, %v4750
      %v4758 = vmul.f32 %v4726, %v4754
      %v4759 = vadd.f32 %v4653, %v4757
      %v4760 = vadd.f32 %v4654, %v4758
      %s4761 = scalar_lea.vmem %s7, 114
      %v4762 = vld [vmem:[%s4761] ss:$8 sm:$0x3]
      %v4764 = vlaneseq
      %v4765 = vshrl.u32 %v4764, 7
      %v4766 = vsub.s32 0, %v4765
      %v4767 = vrot.slane %v4762, %v4766
      %v4768 = vlaneseq
      %v4769 = vshrl.u32 %v4768, 7
      %v4770 = vsub.s32 1, %v4769
      %v4771 = vrot.slane %v4762, %v4770
      %v4774 = vmul.f32 %v4725, %v4767
      %v4775 = vmul.f32 %v4726, %v4771
      %v4776 = vadd.f32 %v4670, %v4774
      %v4777 = vadd.f32 %v4671, %v4775
      %s4778 = scalar_lea.vmem %s7, 165
      %v4779 = vld [vmem:[%s4778] ss:$8 sm:$0x3]
      %v4781 = vlaneseq
      %v4782 = vshrl.u32 %v4781, 7
      %v4783 = vsub.s32 0, %v4782
      %v4784 = vrot.slane %v4779, %v4783
      %v4785 = vlaneseq
      %v4786 = vshrl.u32 %v4785, 7
      %v4787 = vsub.s32 1, %v4786
      %v4788 = vrot.slane %v4779, %v4787
      %v4791 = vmul.f32 %v4725, %v4784
      %v4792 = vmul.f32 %v4726, %v4788
      %v4793 = vadd.f32 %v4687, %v4791
      %v4794 = vadd.f32 %v4688, %v4792
      %s4795 = scalar_lea.vmem %s7, 224
      %v4796 = vld [vmem:[%s4795] ss:$8 sm:$0x3]
      %v4798 = vlaneseq
      %v4799 = vshrl.u32 %v4798, 7
      %v4800 = vsub.s32 0, %v4799
      %v4801 = vrot.slane %v4796, %v4800
      %v4802 = vlaneseq
      %v4803 = vshrl.u32 %v4802, 7
      %v4804 = vsub.s32 1, %v4803
      %v4805 = vrot.slane %v4796, %v4804
      %v4808 = vmul.f32 %v4725, %v4801
      %v4809 = vmul.f32 %v4726, %v4805
      %v4810 = vadd.f32 %v4704, %v4808
      %v4811 = vadd.f32 %v4705, %v4809
      %s4812 = scalar_lea.vmem %s7, 275
      %v4813 = vld [vmem:[%s4812] ss:$8 sm:$0x3]
      %v4815 = vlaneseq
      %v4816 = vshrl.u32 %v4815, 7
      %v4817 = vsub.s32 0, %v4816
      %v4818 = vrot.slane %v4813, %v4817
      %v4819 = vlaneseq
      %v4820 = vshrl.u32 %v4819, 7
      %v4821 = vsub.s32 1, %v4820
      %v4822 = vrot.slane %v4813, %v4821
      %v4825 = vmul.f32 %v4725, %v4818
      %v4826 = vmul.f32 %v4726, %v4822
      %v4827 = vadd.f32 %v4721, %v4825
      %v4828 = vadd.f32 %v4722, %v4826
      %v4829 = vld [vmem:[#allocation5 + $0x50] sm:$0xff]
      %v4830 = vld [vmem:[#allocation5 + $0x58] sm:$0xff]
      %v4831 = vmax.f32 %v4723, %v4829
      %v4832 = vmax.f32 %v4724, %v4830
      %s4833 = scalar_lea.vmem %s7, 5
      %v4834 = vld [vmem:[%s4833] ss:$8 sm:$0x3]
      %v4836 = vlaneseq
      %v4837 = vshrl.u32 %v4836, 7
      %v4838 = vsub.s32 0, %v4837
      %v4839 = vrot.slane %v4834, %v4838
      %v4840 = vlaneseq
      %v4841 = vshrl.u32 %v4840, 7
      %v4842 = vsub.s32 1, %v4841
      %v4843 = vrot.slane %v4834, %v4842
      %v4846 = vmul.f32 %v4831, %v4839
      %v4847 = vmul.f32 %v4832, %v4843
      %v4848 = vadd.f32 %v4742, %v4846
      %v4849 = vadd.f32 %v4743, %v4847
      %s4850 = scalar_lea.vmem %s7, 64
      %v4851 = vld [vmem:[%s4850] ss:$8 sm:$0x3]
      %v4853 = vlaneseq
      %v4854 = vshrl.u32 %v4853, 7
      %v4855 = vsub.s32 0, %v4854
      %v4856 = vrot.slane %v4851, %v4855
      %v4857 = vlaneseq
      %v4858 = vshrl.u32 %v4857, 7
      %v4859 = vsub.s32 1, %v4858
      %v4860 = vrot.slane %v4851, %v4859
      %v4863 = vmul.f32 %v4831, %v4856
      %v4864 = vmul.f32 %v4832, %v4860
      %v4865 = vadd.f32 %v4759, %v4863
      %v4866 = vadd.f32 %v4760, %v4864
      %s4867 = scalar_lea.vmem %s7, 115
      %v4868 = vld [vmem:[%s4867] ss:$8 sm:$0x3]
      %v4870 = vlaneseq
      %v4871 = vshrl.u32 %v4870, 7
      %v4872 = vsub.s32 0, %v4871
      %v4873 = vrot.slane %v4868, %v4872
      %v4874 = vlaneseq
      %v4875 = vshrl.u32 %v4874, 7
      %v4876 = vsub.s32 1, %v4875
      %v4877 = vrot.slane %v4868, %v4876
      %v4880 = vmul.f32 %v4831, %v4873
      %v4881 = vmul.f32 %v4832, %v4877
      %v4882 = vadd.f32 %v4776, %v4880
      %v4883 = vadd.f32 %v4777, %v4881
      %s4884 = scalar_lea.vmem %s7, 166
      %v4885 = vld [vmem:[%s4884] ss:$8 sm:$0x3]
      %v4887 = vlaneseq
      %v4888 = vshrl.u32 %v4887, 7
      %v4889 = vsub.s32 0, %v4888
      %v4890 = vrot.slane %v4885, %v4889
      %v4891 = vlaneseq
      %v4892 = vshrl.u32 %v4891, 7
      %v4893 = vsub.s32 1, %v4892
      %v4894 = vrot.slane %v4885, %v4893
      %v4897 = vmul.f32 %v4831, %v4890
      %v4898 = vmul.f32 %v4832, %v4894
      %v4899 = vadd.f32 %v4793, %v4897
      %v4900 = vadd.f32 %v4794, %v4898
      %s4901 = scalar_lea.vmem %s7, 225
      %v4902 = vld [vmem:[%s4901] ss:$8 sm:$0x3]
      %v4904 = vlaneseq
      %v4905 = vshrl.u32 %v4904, 7
      %v4906 = vsub.s32 0, %v4905
      %v4907 = vrot.slane %v4902, %v4906
      %v4908 = vlaneseq
      %v4909 = vshrl.u32 %v4908, 7
      %v4910 = vsub.s32 1, %v4909
      %v4911 = vrot.slane %v4902, %v4910
      %v4914 = vmul.f32 %v4831, %v4907
      %v4915 = vmul.f32 %v4832, %v4911
      %v4916 = vadd.f32 %v4810, %v4914
      %v4917 = vadd.f32 %v4811, %v4915
      %s4918 = scalar_lea.vmem %s7, 276
      %v4919 = vld [vmem:[%s4918] ss:$8 sm:$0x3]
      %v4921 = vlaneseq
      %v4922 = vshrl.u32 %v4921, 7
      %v4923 = vsub.s32 0, %v4922
      %v4924 = vrot.slane %v4919, %v4923
      %v4925 = vlaneseq
      %v4926 = vshrl.u32 %v4925, 7
      %v4927 = vsub.s32 1, %v4926
      %v4928 = vrot.slane %v4919, %v4927
      %v4931 = vmul.f32 %v4831, %v4924
      %v4932 = vmul.f32 %v4832, %v4928
      %v4933 = vadd.f32 %v4827, %v4931
      %v4934 = vadd.f32 %v4828, %v4932
      %v4935 = vld [vmem:[#allocation5 + $0x60] sm:$0xff]
      %v4936 = vld [vmem:[#allocation5 + $0x68] sm:$0xff]
      %v4937 = vmax.f32 %v4829, %v4935
      %v4938 = vmax.f32 %v4830, %v4936
      %s4939 = scalar_lea.vmem %s7, 6
      %v4940 = vld [vmem:[%s4939] ss:$8 sm:$0x3]
      %v4942 = vlaneseq
      %v4943 = vshrl.u32 %v4942, 7
      %v4944 = vsub.s32 0, %v4943
      %v4945 = vrot.slane %v4940, %v4944
      %v4946 = vlaneseq
      %v4947 = vshrl.u32 %v4946, 7
      %v4948 = vsub.s32 1, %v4947
      %v4949 = vrot.slane %v4940, %v4948
      %v4952 = vmul.f32 %v4937, %v4945
      %v4953 = vmul.f32 %v4938, %v4949
      %v4954 = vadd.f32 %v4848, %v4952
      %v4955 = vadd.f32 %v4849, %v4953
      %s4956 = scalar_lea.vmem %s7, 65
      %v4957 = vld [vmem:[%s4956] ss:$8 sm:$0x3]
      %v4959 = vlaneseq
      %v4960 = vshrl.u32 %v4959, 7
      %v4961 = vsub.s32 0, %v4960
      %v4962 = vrot.slane %v4957, %v4961
      %v4963 = vlaneseq
      %v4964 = vshrl.u32 %v4963, 7
      %v4965 = vsub.s32 1, %v4964
      %v4966 = vrot.slane %v4957, %v4965
      %v4969 = vmul.f32 %v4937, %v4962
      %v4970 = vmul.f32 %v4938, %v4966
      %v4971 = vadd.f32 %v4865, %v4969
      %v4972 = vadd.f32 %v4866, %v4970
      %s4973 = scalar_lea.vmem %s7, 116
      %v4974 = vld [vmem:[%s4973] ss:$8 sm:$0x3]
      %v4976 = vlaneseq
      %v4977 = vshrl.u32 %v4976, 7
      %v4978 = vsub.s32 0, %v4977
      %v4979 = vrot.slane %v4974, %v4978
      %v4980 = vlaneseq
      %v4981 = vshrl.u32 %v4980, 7
      %v4982 = vsub.s32 1, %v4981
      %v4983 = vrot.slane %v4974, %v4982
      %v4986 = vmul.f32 %v4937, %v4979
      %v4987 = vmul.f32 %v4938, %v4983
      %v4988 = vadd.f32 %v4882, %v4986
      %v4989 = vadd.f32 %v4883, %v4987
      %s4990 = scalar_lea.vmem %s7, 167
      %v4991 = vld [vmem:[%s4990] ss:$8 sm:$0x3]
      %v4993 = vlaneseq
      %v4994 = vshrl.u32 %v4993, 7
      %v4995 = vsub.s32 0, %v4994
      %v4996 = vrot.slane %v4991, %v4995
      %v4997 = vlaneseq
      %v4998 = vshrl.u32 %v4997, 7
      %v4999 = vsub.s32 1, %v4998
      %v5000 = vrot.slane %v4991, %v4999
      %v5003 = vmul.f32 %v4937, %v4996
      %v5004 = vmul.f32 %v4938, %v5000
      %v5005 = vadd.f32 %v4899, %v5003
      %v5006 = vadd.f32 %v4900, %v5004
      %s5007 = scalar_lea.vmem %s7, 226
      %v5008 = vld [vmem:[%s5007] ss:$8 sm:$0x3]
      %v5010 = vlaneseq
      %v5011 = vshrl.u32 %v5010, 7
      %v5012 = vsub.s32 0, %v5011
      %v5013 = vrot.slane %v5008, %v5012
      %v5014 = vlaneseq
      %v5015 = vshrl.u32 %v5014, 7
      %v5016 = vsub.s32 1, %v5015
      %v5017 = vrot.slane %v5008, %v5016
      %v5020 = vmul.f32 %v4937, %v5013
      %v5021 = vmul.f32 %v4938, %v5017
      %v5022 = vadd.f32 %v4916, %v5020
      %v5023 = vadd.f32 %v4917, %v5021
      %s5024 = scalar_lea.vmem %s7, 277
      %v5025 = vld [vmem:[%s5024] ss:$8 sm:$0x3]
      %v5027 = vlaneseq
      %v5028 = vshrl.u32 %v5027, 7
      %v5029 = vsub.s32 0, %v5028
      %v5030 = vrot.slane %v5025, %v5029
      %v5031 = vlaneseq
      %v5032 = vshrl.u32 %v5031, 7
      %v5033 = vsub.s32 1, %v5032
      %v5034 = vrot.slane %v5025, %v5033
      %v5037 = vmul.f32 %v4937, %v5030
      %v5038 = vmul.f32 %v4938, %v5034
      %v5039 = vadd.f32 %v4933, %v5037
      %v5040 = vadd.f32 %v4934, %v5038
      %v5041 = vld [vmem:[#allocation5 + $0x70] sm:$0xff]
      %v5042 = vld [vmem:[#allocation5 + $0x78] sm:$0xff]
      %v5043 = vmax.f32 %v4935, %v5041
      %v5044 = vmax.f32 %v4936, %v5042
      %s5045 = scalar_lea.vmem %s7, 7
      %v5046 = vld [vmem:[%s5045] ss:$8 sm:$0x3]
      %v5048 = vlaneseq
      %v5049 = vshrl.u32 %v5048, 7
      %v5050 = vsub.s32 0, %v5049
      %v5051 = vrot.slane %v5046, %v5050
      %v5052 = vlaneseq
      %v5053 = vshrl.u32 %v5052, 7
      %v5054 = vsub.s32 1, %v5053
      %v5055 = vrot.slane %v5046, %v5054
      %v5058 = vmul.f32 %v5043, %v5051
      %v5059 = vmul.f32 %v5044, %v5055
      %v5060 = vadd.f32 %v4954, %v5058
      %v5061 = vadd.f32 %v4955, %v5059
      %s5062 = scalar_lea.vmem %s7, 66
      %v5063 = vld [vmem:[%s5062] ss:$8 sm:$0x3]
      %v5065 = vlaneseq
      %v5066 = vshrl.u32 %v5065, 7
      %v5067 = vsub.s32 0, %v5066
      %v5068 = vrot.slane %v5063, %v5067
      %v5069 = vlaneseq
      %v5070 = vshrl.u32 %v5069, 7
      %v5071 = vsub.s32 1, %v5070
      %v5072 = vrot.slane %v5063, %v5071
      %v5075 = vmul.f32 %v5043, %v5068
      %v5076 = vmul.f32 %v5044, %v5072
      %v5077 = vadd.f32 %v4971, %v5075
      %v5078 = vadd.f32 %v4972, %v5076
      %s5079 = scalar_lea.vmem %s7, 117
      %v5080 = vld [vmem:[%s5079] ss:$8 sm:$0x3]
      %v5082 = vlaneseq
      %v5083 = vshrl.u32 %v5082, 7
      %v5084 = vsub.s32 0, %v5083
      %v5085 = vrot.slane %v5080, %v5084
      %v5086 = vlaneseq
      %v5087 = vshrl.u32 %v5086, 7
      %v5088 = vsub.s32 1, %v5087
      %v5089 = vrot.slane %v5080, %v5088
      %v5092 = vmul.f32 %v5043, %v5085
      %v5093 = vmul.f32 %v5044, %v5089
      %v5094 = vadd.f32 %v4988, %v5092
      %v5095 = vadd.f32 %v4989, %v5093
      %s5096 = scalar_lea.vmem %s7, 176
      %v5097 = vld [vmem:[%s5096] ss:$8 sm:$0x3]
      %v5099 = vlaneseq
      %v5100 = vshrl.u32 %v5099, 7
      %v5101 = vsub.s32 0, %v5100
      %v5102 = vrot.slane %v5097, %v5101
      %v5103 = vlaneseq
      %v5104 = vshrl.u32 %v5103, 7
      %v5105 = vsub.s32 1, %v5104
      %v5106 = vrot.slane %v5097, %v5105
      %v5109 = vmul.f32 %v5043, %v5102
      %v5110 = vmul.f32 %v5044, %v5106
      %v5111 = vadd.f32 %v5005, %v5109
      %v5112 = vadd.f32 %v5006, %v5110
      %s5113 = scalar_lea.vmem %s7, 227
      %v5114 = vld [vmem:[%s5113] ss:$8 sm:$0x3]
      %v5116 = vlaneseq
      %v5117 = vshrl.u32 %v5116, 7
      %v5118 = vsub.s32 0, %v5117
      %v5119 = vrot.slane %v5114, %v5118
      %v5120 = vlaneseq
      %v5121 = vshrl.u32 %v5120, 7
      %v5122 = vsub.s32 1, %v5121
      %v5123 = vrot.slane %v5114, %v5122
      %v5126 = vmul.f32 %v5043, %v5119
      %v5127 = vmul.f32 %v5044, %v5123
      %v5128 = vadd.f32 %v5022, %v5126
      %v5129 = vadd.f32 %v5023, %v5127
      %s5130 = scalar_lea.vmem %s7, 278
      %v5131 = vld [vmem:[%s5130] ss:$8 sm:$0x3]
      %v5133 = vlaneseq
      %v5134 = vshrl.u32 %v5133, 7
      %v5135 = vsub.s32 0, %v5134
      %v5136 = vrot.slane %v5131, %v5135
      %v5137 = vlaneseq
      %v5138 = vshrl.u32 %v5137, 7
      %v5139 = vsub.s32 1, %v5138
      %v5140 = vrot.slane %v5131, %v5139
      %v5143 = vmul.f32 %v5043, %v5136
      %v5144 = vmul.f32 %v5044, %v5140
      %v5145 = vadd.f32 %v5039, %v5143
      %v5146 = vadd.f32 %v5040, %v5144
      %v5147 = vld [vmem:[#allocation5 + $0x80] sm:$0xff]
      %v5148 = vld [vmem:[#allocation5 + $0x88] sm:$0xff]
      %v5149 = vmax.f32 %v5041, %v5147
      %v5150 = vmax.f32 %v5042, %v5148
      %s5151 = scalar_lea.vmem %s7, 16
      %v5152 = vld [vmem:[%s5151] ss:$8 sm:$0x3]
      %v5154 = vlaneseq
      %v5155 = vshrl.u32 %v5154, 7
      %v5156 = vsub.s32 0, %v5155
      %v5157 = vrot.slane %v5152, %v5156
      %v5158 = vlaneseq
      %v5159 = vshrl.u32 %v5158, 7
      %v5160 = vsub.s32 1, %v5159
      %v5161 = vrot.slane %v5152, %v5160
      %v5164 = vmul.f32 %v5149, %v5157
      %v5165 = vmul.f32 %v5150, %v5161
      %v5166 = vadd.f32 %v5060, %v5164
      %v5167 = vadd.f32 %v5061, %v5165
      %s5168 = scalar_lea.vmem %s7, 67
      %v5169 = vld [vmem:[%s5168] ss:$8 sm:$0x3]
      %v5171 = vlaneseq
      %v5172 = vshrl.u32 %v5171, 7
      %v5173 = vsub.s32 0, %v5172
      %v5174 = vrot.slane %v5169, %v5173
      %v5175 = vlaneseq
      %v5176 = vshrl.u32 %v5175, 7
      %v5177 = vsub.s32 1, %v5176
      %v5178 = vrot.slane %v5169, %v5177
      %v5181 = vmul.f32 %v5149, %v5174
      %v5182 = vmul.f32 %v5150, %v5178
      %v5183 = vadd.f32 %v5077, %v5181
      %v5184 = vadd.f32 %v5078, %v5182
      %s5185 = scalar_lea.vmem %s7, 118
      %v5186 = vld [vmem:[%s5185] ss:$8 sm:$0x3]
      %v5188 = vlaneseq
      %v5189 = vshrl.u32 %v5188, 7
      %v5190 = vsub.s32 0, %v5189
      %v5191 = vrot.slane %v5186, %v5190
      %v5192 = vlaneseq
      %v5193 = vshrl.u32 %v5192, 7
      %v5194 = vsub.s32 1, %v5193
      %v5195 = vrot.slane %v5186, %v5194
      %v5198 = vmul.f32 %v5149, %v5191
      %v5199 = vmul.f32 %v5150, %v5195
      %v5200 = vadd.f32 %v5094, %v5198
      %v5201 = vadd.f32 %v5095, %v5199
      %s5202 = scalar_lea.vmem %s7, 177
      %v5203 = vld [vmem:[%s5202] ss:$8 sm:$0x3]
      %v5205 = vlaneseq
      %v5206 = vshrl.u32 %v5205, 7
      %v5207 = vsub.s32 0, %v5206
      %v5208 = vrot.slane %v5203, %v5207
      %v5209 = vlaneseq
      %v5210 = vshrl.u32 %v5209, 7
      %v5211 = vsub.s32 1, %v5210
      %v5212 = vrot.slane %v5203, %v5211
      %v5215 = vmul.f32 %v5149, %v5208
      %v5216 = vmul.f32 %v5150, %v5212
      %v5217 = vadd.f32 %v5111, %v5215
      %v5218 = vadd.f32 %v5112, %v5216
      %s5219 = scalar_lea.vmem %s7, 228
      %v5220 = vld [vmem:[%s5219] ss:$8 sm:$0x3]
      %v5222 = vlaneseq
      %v5223 = vshrl.u32 %v5222, 7
      %v5224 = vsub.s32 0, %v5223
      %v5225 = vrot.slane %v5220, %v5224
      %v5226 = vlaneseq
      %v5227 = vshrl.u32 %v5226, 7
      %v5228 = vsub.s32 1, %v5227
      %v5229 = vrot.slane %v5220, %v5228
      %v5232 = vmul.f32 %v5149, %v5225
      %v5233 = vmul.f32 %v5150, %v5229
      %v5234 = vadd.f32 %v5128, %v5232
      %v5235 = vadd.f32 %v5129, %v5233
      %s5236 = scalar_lea.vmem %s7, 279
      %v5237 = vld [vmem:[%s5236] ss:$8 sm:$0x3]
      %v5239 = vlaneseq
      %v5240 = vshrl.u32 %v5239, 7
      %v5241 = vsub.s32 0, %v5240
      %v5242 = vrot.slane %v5237, %v5241
      %v5243 = vlaneseq
      %v5244 = vshrl.u32 %v5243, 7
      %v5245 = vsub.s32 1, %v5244
      %v5246 = vrot.slane %v5237, %v5245
      %v5249 = vmul.f32 %v5149, %v5242
      %v5250 = vmul.f32 %v5150, %v5246
      %v5251 = vadd.f32 %v5145, %v5249
      %v5252 = vadd.f32 %v5146, %v5250
      %v5253 = vld [vmem:[#allocation5 + $0x90] sm:$0xff]
      %v5254 = vld [vmem:[#allocation5 + $0x98] sm:$0xff]
      %v5255 = vmax.f32 %v5147, %v5253
      %v5256 = vmax.f32 %v5148, %v5254
      %s5257 = scalar_lea.vmem %s7, 17
      %v5258 = vld [vmem:[%s5257] ss:$8 sm:$0x3]
      %v5260 = vlaneseq
      %v5261 = vshrl.u32 %v5260, 7
      %v5262 = vsub.s32 0, %v5261
      %v5263 = vrot.slane %v5258, %v5262
      %v5264 = vlaneseq
      %v5265 = vshrl.u32 %v5264, 7
      %v5266 = vsub.s32 1, %v5265
      %v5267 = vrot.slane %v5258, %v5266
      %v5270 = vmul.f32 %v5255, %v5263
      %v5271 = vmul.f32 %v5256, %v5267
      %v5272 = vadd.f32 %v5166, %v5270
      %v5273 = vadd.f32 %v5167, %v5271
      %s5274 = scalar_lea.vmem %s7, 68
      %v5275 = vld [vmem:[%s5274] ss:$8 sm:$0x3]
      %v5277 = vlaneseq
      %v5278 = vshrl.u32 %v5277, 7
      %v5279 = vsub.s32 0, %v5278
      %v5280 = vrot.slane %v5275, %v5279
      %v5281 = vlaneseq
      %v5282 = vshrl.u32 %v5281, 7
      %v5283 = vsub.s32 1, %v5282
      %v5284 = vrot.slane %v5275, %v5283
      %v5287 = vmul.f32 %v5255, %v5280
      %v5288 = vmul.f32 %v5256, %v5284
      %v5289 = vadd.f32 %v5183, %v5287
      %v5290 = vadd.f32 %v5184, %v5288
      %s5291 = scalar_lea.vmem %s7, 119
      %v5292 = vld [vmem:[%s5291] ss:$8 sm:$0x3]
      %v5294 = vlaneseq
      %v5295 = vshrl.u32 %v5294, 7
      %v5296 = vsub.s32 0, %v5295
      %v5297 = vrot.slane %v5292, %v5296
      %v5298 = vlaneseq
      %v5299 = vshrl.u32 %v5298, 7
      %v5300 = vsub.s32 1, %v5299
      %v5301 = vrot.slane %v5292, %v5300
      %v5304 = vmul.f32 %v5255, %v5297
      %v5305 = vmul.f32 %v5256, %v5301
      %v5306 = vadd.f32 %v5200, %v5304
      %v5307 = vadd.f32 %v5201, %v5305
      %s5308 = scalar_lea.vmem %s7, 178
      %v5309 = vld [vmem:[%s5308] ss:$8 sm:$0x3]
      %v5311 = vlaneseq
      %v5312 = vshrl.u32 %v5311, 7
      %v5313 = vsub.s32 0, %v5312
      %v5314 = vrot.slane %v5309, %v5313
      %v5315 = vlaneseq
      %v5316 = vshrl.u32 %v5315, 7
      %v5317 = vsub.s32 1, %v5316
      %v5318 = vrot.slane %v5309, %v5317
      %v5321 = vmul.f32 %v5255, %v5314
      %v5322 = vmul.f32 %v5256, %v5318
      %v5323 = vadd.f32 %v5217, %v5321
      %v5324 = vadd.f32 %v5218, %v5322
      %s5325 = scalar_lea.vmem %s7, 229
      %v5326 = vld [vmem:[%s5325] ss:$8 sm:$0x3]
      %v5328 = vlaneseq
      %v5329 = vshrl.u32 %v5328, 7
      %v5330 = vsub.s32 0, %v5329
      %v5331 = vrot.slane %v5326, %v5330
      %v5332 = vlaneseq
      %v5333 = vshrl.u32 %v5332, 7
      %v5334 = vsub.s32 1, %v5333
      %v5335 = vrot.slane %v5326, %v5334
      %v5338 = vmul.f32 %v5255, %v5331
      %v5339 = vmul.f32 %v5256, %v5335
      %v5340 = vadd.f32 %v5234, %v5338
      %v5341 = vadd.f32 %v5235, %v5339
      %s5342 = scalar_lea.vmem %s7, 288
      %v5343 = vld [vmem:[%s5342] ss:$8 sm:$0x3]
      %v5345 = vlaneseq
      %v5346 = vshrl.u32 %v5345, 7
      %v5347 = vsub.s32 0, %v5346
      %v5348 = vrot.slane %v5343, %v5347
      %v5349 = vlaneseq
      %v5350 = vshrl.u32 %v5349, 7
      %v5351 = vsub.s32 1, %v5350
      %v5352 = vrot.slane %v5343, %v5351
      %v5355 = vmul.f32 %v5255, %v5348
      %v5356 = vmul.f32 %v5256, %v5352
      %v5357 = vadd.f32 %v5251, %v5355
      %v5358 = vadd.f32 %v5252, %v5356
      %v5359 = vld [vmem:[#allocation5 + $0xa0] sm:$0xff]
      %v5360 = vld [vmem:[#allocation5 + $0xa8] sm:$0xff]
      %v5361 = vmax.f32 %v5253, %v5359
      %v5362 = vmax.f32 %v5254, %v5360
      %s5363 = scalar_lea.vmem %s7, 18
      %v5364 = vld [vmem:[%s5363] ss:$8 sm:$0x3]
      %v5366 = vlaneseq
      %v5367 = vshrl.u32 %v5366, 7
      %v5368 = vsub.s32 0, %v5367
      %v5369 = vrot.slane %v5364, %v5368
      %v5370 = vlaneseq
      %v5371 = vshrl.u32 %v5370, 7
      %v5372 = vsub.s32 1, %v5371
      %v5373 = vrot.slane %v5364, %v5372
      %v5376 = vmul.f32 %v5361, %v5369
      %v5377 = vmul.f32 %v5362, %v5373
      %v5378 = vadd.f32 %v5272, %v5376
      %v5379 = vadd.f32 %v5273, %v5377
      %s5380 = scalar_lea.vmem %s7, 69
      %v5381 = vld [vmem:[%s5380] ss:$8 sm:$0x3]
      %v5383 = vlaneseq
      %v5384 = vshrl.u32 %v5383, 7
      %v5385 = vsub.s32 0, %v5384
      %v5386 = vrot.slane %v5381, %v5385
      %v5387 = vlaneseq
      %v5388 = vshrl.u32 %v5387, 7
      %v5389 = vsub.s32 1, %v5388
      %v5390 = vrot.slane %v5381, %v5389
      %v5393 = vmul.f32 %v5361, %v5386
      %v5394 = vmul.f32 %v5362, %v5390
      %v5395 = vadd.f32 %v5289, %v5393
      %v5396 = vadd.f32 %v5290, %v5394
      %s5397 = scalar_lea.vmem %s7, 128
      %v5398 = vld [vmem:[%s5397] ss:$8 sm:$0x3]
      %v5400 = vlaneseq
      %v5401 = vshrl.u32 %v5400, 7
      %v5402 = vsub.s32 0, %v5401
      %v5403 = vrot.slane %v5398, %v5402
      %v5404 = vlaneseq
      %v5405 = vshrl.u32 %v5404, 7
      %v5406 = vsub.s32 1, %v5405
      %v5407 = vrot.slane %v5398, %v5406
      %v5410 = vmul.f32 %v5361, %v5403
      %v5411 = vmul.f32 %v5362, %v5407
      %v5412 = vadd.f32 %v5306, %v5410
      %v5413 = vadd.f32 %v5307, %v5411
      %s5414 = scalar_lea.vmem %s7, 179
      %v5415 = vld [vmem:[%s5414] ss:$8 sm:$0x3]
      %v5417 = vlaneseq
      %v5418 = vshrl.u32 %v5417, 7
      %v5419 = vsub.s32 0, %v5418
      %v5420 = vrot.slane %v5415, %v5419
      %v5421 = vlaneseq
      %v5422 = vshrl.u32 %v5421, 7
      %v5423 = vsub.s32 1, %v5422
      %v5424 = vrot.slane %v5415, %v5423
      %v5427 = vmul.f32 %v5361, %v5420
      %v5428 = vmul.f32 %v5362, %v5424
      %v5429 = vadd.f32 %v5323, %v5427
      %v5430 = vadd.f32 %v5324, %v5428
      %s5431 = scalar_lea.vmem %s7, 230
      %v5432 = vld [vmem:[%s5431] ss:$8 sm:$0x3]
      %v5434 = vlaneseq
      %v5435 = vshrl.u32 %v5434, 7
      %v5436 = vsub.s32 0, %v5435
      %v5437 = vrot.slane %v5432, %v5436
      %v5438 = vlaneseq
      %v5439 = vshrl.u32 %v5438, 7
      %v5440 = vsub.s32 1, %v5439
      %v5441 = vrot.slane %v5432, %v5440
      %v5444 = vmul.f32 %v5361, %v5437
      %v5445 = vmul.f32 %v5362, %v5441
      %v5446 = vadd.f32 %v5340, %v5444
      %v5447 = vadd.f32 %v5341, %v5445
      %s5448 = scalar_lea.vmem %s7, 289
      %v5449 = vld [vmem:[%s5448] ss:$8 sm:$0x3]
      %v5451 = vlaneseq
      %v5452 = vshrl.u32 %v5451, 7
      %v5453 = vsub.s32 0, %v5452
      %v5454 = vrot.slane %v5449, %v5453
      %v5455 = vlaneseq
      %v5456 = vshrl.u32 %v5455, 7
      %v5457 = vsub.s32 1, %v5456
      %v5458 = vrot.slane %v5449, %v5457
      %v5461 = vmul.f32 %v5361, %v5454
      %v5462 = vmul.f32 %v5362, %v5458
      %v5463 = vadd.f32 %v5357, %v5461
      %v5464 = vadd.f32 %v5358, %v5462
      %v5465 = vld [vmem:[#allocation5 + $0xb0] sm:$0xff]
      %v5466 = vld [vmem:[#allocation5 + $0xb8] sm:$0xff]
      %v5467 = vmax.f32 %v5359, %v5465
      %v5468 = vmax.f32 %v5360, %v5466
      %s5469 = scalar_lea.vmem %s7, 19
      %v5470 = vld [vmem:[%s5469] ss:$8 sm:$0x3]
      %v5472 = vlaneseq
      %v5473 = vshrl.u32 %v5472, 7
      %v5474 = vsub.s32 0, %v5473
      %v5475 = vrot.slane %v5470, %v5474
      %v5476 = vlaneseq
      %v5477 = vshrl.u32 %v5476, 7
      %v5478 = vsub.s32 1, %v5477
      %v5479 = vrot.slane %v5470, %v5478
      %v5482 = vmul.f32 %v5467, %v5475
      %v5483 = vmul.f32 %v5468, %v5479
      %v5484 = vadd.f32 %v5378, %v5482
      %v5485 = vadd.f32 %v5379, %v5483
      %s5486 = scalar_lea.vmem %s7, 70
      %v5487 = vld [vmem:[%s5486] ss:$8 sm:$0x3]
      %v5489 = vlaneseq
      %v5490 = vshrl.u32 %v5489, 7
      %v5491 = vsub.s32 0, %v5490
      %v5492 = vrot.slane %v5487, %v5491
      %v5493 = vlaneseq
      %v5494 = vshrl.u32 %v5493, 7
      %v5495 = vsub.s32 1, %v5494
      %v5496 = vrot.slane %v5487, %v5495
      %v5499 = vmul.f32 %v5467, %v5492
      %v5500 = vmul.f32 %v5468, %v5496
      %v5501 = vadd.f32 %v5395, %v5499
      %v5502 = vadd.f32 %v5396, %v5500
      %s5503 = scalar_lea.vmem %s7, 129
      %v5504 = vld [vmem:[%s5503] ss:$8 sm:$0x3]
      %v5506 = vlaneseq
      %v5507 = vshrl.u32 %v5506, 7
      %v5508 = vsub.s32 0, %v5507
      %v5509 = vrot.slane %v5504, %v5508
      %v5510 = vlaneseq
      %v5511 = vshrl.u32 %v5510, 7
      %v5512 = vsub.s32 1, %v5511
      %v5513 = vrot.slane %v5504, %v5512
      %v5516 = vmul.f32 %v5467, %v5509
      %v5517 = vmul.f32 %v5468, %v5513
      %v5518 = vadd.f32 %v5412, %v5516
      %v5519 = vadd.f32 %v5413, %v5517
      %s5520 = scalar_lea.vmem %s7, 180
      %v5521 = vld [vmem:[%s5520] ss:$8 sm:$0x3]
      %v5523 = vlaneseq
      %v5524 = vshrl.u32 %v5523, 7
      %v5525 = vsub.s32 0, %v5524
      %v5526 = vrot.slane %v5521, %v5525
      %v5527 = vlaneseq
      %v5528 = vshrl.u32 %v5527, 7
      %v5529 = vsub.s32 1, %v5528
      %v5530 = vrot.slane %v5521, %v5529
      %v5533 = vmul.f32 %v5467, %v5526
      %v5534 = vmul.f32 %v5468, %v5530
      %v5535 = vadd.f32 %v5429, %v5533
      %v5536 = vadd.f32 %v5430, %v5534
      %s5537 = scalar_lea.vmem %s7, 231
      %v5538 = vld [vmem:[%s5537] ss:$8 sm:$0x3]
      %v5540 = vlaneseq
      %v5541 = vshrl.u32 %v5540, 7
      %v5542 = vsub.s32 0, %v5541
      %v5543 = vrot.slane %v5538, %v5542
      %v5544 = vlaneseq
      %v5545 = vshrl.u32 %v5544, 7
      %v5546 = vsub.s32 1, %v5545
      %v5547 = vrot.slane %v5538, %v5546
      %v5550 = vmul.f32 %v5467, %v5543
      %v5551 = vmul.f32 %v5468, %v5547
      %v5552 = vadd.f32 %v5446, %v5550
      %v5553 = vadd.f32 %v5447, %v5551
      %s5554 = scalar_lea.vmem %s7, 290
      %v5555 = vld [vmem:[%s5554] ss:$8 sm:$0x3]
      %v5557 = vlaneseq
      %v5558 = vshrl.u32 %v5557, 7
      %v5559 = vsub.s32 0, %v5558
      %v5560 = vrot.slane %v5555, %v5559
      %v5561 = vlaneseq
      %v5562 = vshrl.u32 %v5561, 7
      %v5563 = vsub.s32 1, %v5562
      %v5564 = vrot.slane %v5555, %v5563
      %v5567 = vmul.f32 %v5467, %v5560
      %v5568 = vmul.f32 %v5468, %v5564
      %v5569 = vadd.f32 %v5463, %v5567
      %v5570 = vadd.f32 %v5464, %v5568
      %v5571 = vld [vmem:[#allocation5 + $0xc0] sm:$0xff]
      %v5572 = vld [vmem:[#allocation5 + $0xc8] sm:$0xff]
      %v5573 = vmax.f32 %v5465, %v5571
      %v5574 = vmax.f32 %v5466, %v5572
      %s5575 = scalar_lea.vmem %s7, 20
      %v5576 = vld [vmem:[%s5575] ss:$8 sm:$0x3]
      %v5578 = vlaneseq
      %v5579 = vshrl.u32 %v5578, 7
      %v5580 = vsub.s32 0, %v5579
      %v5581 = vrot.slane %v5576, %v5580
      %v5582 = vlaneseq
      %v5583 = vshrl.u32 %v5582, 7
      %v5584 = vsub.s32 1, %v5583
      %v5585 = vrot.slane %v5576, %v5584
      %v5588 = vmul.f32 %v5573, %v5581
      %v5589 = vmul.f32 %v5574, %v5585
      %v5590 = vadd.f32 %v5484, %v5588
      %v5591 = vadd.f32 %v5485, %v5589
      %s5592 = scalar_lea.vmem %s7, 71
      %v5593 = vld [vmem:[%s5592] ss:$8 sm:$0x3]
      %v5595 = vlaneseq
      %v5596 = vshrl.u32 %v5595, 7
      %v5597 = vsub.s32 0, %v5596
      %v5598 = vrot.slane %v5593, %v5597
      %v5599 = vlaneseq
      %v5600 = vshrl.u32 %v5599, 7
      %v5601 = vsub.s32 1, %v5600
      %v5602 = vrot.slane %v5593, %v5601
      %v5605 = vmul.f32 %v5573, %v5598
      %v5606 = vmul.f32 %v5574, %v5602
      %v5607 = vadd.f32 %v5501, %v5605
      %v5608 = vadd.f32 %v5502, %v5606
      %s5609 = scalar_lea.vmem %s7, 130
      %v5610 = vld [vmem:[%s5609] ss:$8 sm:$0x3]
      %v5612 = vlaneseq
      %v5613 = vshrl.u32 %v5612, 7
      %v5614 = vsub.s32 0, %v5613
      %v5615 = vrot.slane %v5610, %v5614
      %v5616 = vlaneseq
      %v5617 = vshrl.u32 %v5616, 7
      %v5618 = vsub.s32 1, %v5617
      %v5619 = vrot.slane %v5610, %v5618
      %v5622 = vmul.f32 %v5573, %v5615
      %v5623 = vmul.f32 %v5574, %v5619
      %v5624 = vadd.f32 %v5518, %v5622
      %v5625 = vadd.f32 %v5519, %v5623
      %s5626 = scalar_lea.vmem %s7, 181
      %v5627 = vld [vmem:[%s5626] ss:$8 sm:$0x3]
      %v5629 = vlaneseq
      %v5630 = vshrl.u32 %v5629, 7
      %v5631 = vsub.s32 0, %v5630
      %v5632 = vrot.slane %v5627, %v5631
      %v5633 = vlaneseq
      %v5634 = vshrl.u32 %v5633, 7
      %v5635 = vsub.s32 1, %v5634
      %v5636 = vrot.slane %v5627, %v5635
      %v5639 = vmul.f32 %v5573, %v5632
      %v5640 = vmul.f32 %v5574, %v5636
      %v5641 = vadd.f32 %v5535, %v5639
      %v5642 = vadd.f32 %v5536, %v5640
      %s5643 = scalar_lea.vmem %s7, 240
      %v5644 = vld [vmem:[%s5643] ss:$8 sm:$0x3]
      %v5646 = vlaneseq
      %v5647 = vshrl.u32 %v5646, 7
      %v5648 = vsub.s32 0, %v5647
      %v5649 = vrot.slane %v5644, %v5648
      %v5650 = vlaneseq
      %v5651 = vshrl.u32 %v5650, 7
      %v5652 = vsub.s32 1, %v5651
      %v5653 = vrot.slane %v5644, %v5652
      %v5656 = vmul.f32 %v5573, %v5649
      %v5657 = vmul.f32 %v5574, %v5653
      %v5658 = vadd.f32 %v5552, %v5656
      %v5659 = vadd.f32 %v5553, %v5657
      %s5660 = scalar_lea.vmem %s7, 291
      %v5661 = vld [vmem:[%s5660] ss:$8 sm:$0x3]
      %v5663 = vlaneseq
      %v5664 = vshrl.u32 %v5663, 7
      %v5665 = vsub.s32 0, %v5664
      %v5666 = vrot.slane %v5661, %v5665
      %v5667 = vlaneseq
      %v5668 = vshrl.u32 %v5667, 7
      %v5669 = vsub.s32 1, %v5668
      %v5670 = vrot.slane %v5661, %v5669
      %v5673 = vmul.f32 %v5573, %v5666
      %v5674 = vmul.f32 %v5574, %v5670
      %v5675 = vadd.f32 %v5569, %v5673
      %v5676 = vadd.f32 %v5570, %v5674
      %v5677 = vld [vmem:[#allocation5 + $0xd0] sm:$0xff]
      %v5678 = vld [vmem:[#allocation5 + $0xd8] sm:$0xff]
      %v5679 = vmax.f32 %v5571, %v5677
      %v5680 = vmax.f32 %v5572, %v5678
      %s5681 = scalar_lea.vmem %s7, 21
      %v5682 = vld [vmem:[%s5681] ss:$8 sm:$0x3]
      %v5684 = vlaneseq
      %v5685 = vshrl.u32 %v5684, 7
      %v5686 = vsub.s32 0, %v5685
      %v5687 = vrot.slane %v5682, %v5686
      %v5688 = vlaneseq
      %v5689 = vshrl.u32 %v5688, 7
      %v5690 = vsub.s32 1, %v5689
      %v5691 = vrot.slane %v5682, %v5690
      %v5694 = vmul.f32 %v5679, %v5687
      %v5695 = vmul.f32 %v5680, %v5691
      %v5696 = vadd.f32 %v5590, %v5694
      %v5697 = vadd.f32 %v5591, %v5695
      %s5698 = scalar_lea.vmem %s7, 80
      %v5699 = vld [vmem:[%s5698] ss:$8 sm:$0x3]
      %v5701 = vlaneseq
      %v5702 = vshrl.u32 %v5701, 7
      %v5703 = vsub.s32 0, %v5702
      %v5704 = vrot.slane %v5699, %v5703
      %v5705 = vlaneseq
      %v5706 = vshrl.u32 %v5705, 7
      %v5707 = vsub.s32 1, %v5706
      %v5708 = vrot.slane %v5699, %v5707
      %v5711 = vmul.f32 %v5679, %v5704
      %v5712 = vmul.f32 %v5680, %v5708
      %v5713 = vadd.f32 %v5607, %v5711
      %v5714 = vadd.f32 %v5608, %v5712
      %s5715 = scalar_lea.vmem %s7, 131
      %v5716 = vld [vmem:[%s5715] ss:$8 sm:$0x3]
      %v5718 = vlaneseq
      %v5719 = vshrl.u32 %v5718, 7
      %v5720 = vsub.s32 0, %v5719
      %v5721 = vrot.slane %v5716, %v5720
      %v5722 = vlaneseq
      %v5723 = vshrl.u32 %v5722, 7
      %v5724 = vsub.s32 1, %v5723
      %v5725 = vrot.slane %v5716, %v5724
      %v5728 = vmul.f32 %v5679, %v5721
      %v5729 = vmul.f32 %v5680, %v5725
      %v5730 = vadd.f32 %v5624, %v5728
      %v5731 = vadd.f32 %v5625, %v5729
      %s5732 = scalar_lea.vmem %s7, 182
      %v5733 = vld [vmem:[%s5732] ss:$8 sm:$0x3]
      %v5735 = vlaneseq
      %v5736 = vshrl.u32 %v5735, 7
      %v5737 = vsub.s32 0, %v5736
      %v5738 = vrot.slane %v5733, %v5737
      %v5739 = vlaneseq
      %v5740 = vshrl.u32 %v5739, 7
      %v5741 = vsub.s32 1, %v5740
      %v5742 = vrot.slane %v5733, %v5741
      %v5745 = vmul.f32 %v5679, %v5738
      %v5746 = vmul.f32 %v5680, %v5742
      %v5747 = vadd.f32 %v5641, %v5745
      %v5748 = vadd.f32 %v5642, %v5746
      %s5749 = scalar_lea.vmem %s7, 241
      %v5750 = vld [vmem:[%s5749] ss:$8 sm:$0x3]
      %v5752 = vlaneseq
      %v5753 = vshrl.u32 %v5752, 7
      %v5754 = vsub.s32 0, %v5753
      %v5755 = vrot.slane %v5750, %v5754
      %v5756 = vlaneseq
      %v5757 = vshrl.u32 %v5756, 7
      %v5758 = vsub.s32 1, %v5757
      %v5759 = vrot.slane %v5750, %v5758
      %v5762 = vmul.f32 %v5679, %v5755
      %v5763 = vmul.f32 %v5680, %v5759
      %v5764 = vadd.f32 %v5658, %v5762
      %v5765 = vadd.f32 %v5659, %v5763
      %s5766 = scalar_lea.vmem %s7, 292
      %v5767 = vld [vmem:[%s5766] ss:$8 sm:$0x3]
      %v5769 = vlaneseq
      %v5770 = vshrl.u32 %v5769, 7
      %v5771 = vsub.s32 0, %v5770
      %v5772 = vrot.slane %v5767, %v5771
      %v5773 = vlaneseq
      %v5774 = vshrl.u32 %v5773, 7
      %v5775 = vsub.s32 1, %v5774
      %v5776 = vrot.slane %v5767, %v5775
      %v5779 = vmul.f32 %v5679, %v5772
      %v5780 = vmul.f32 %v5680, %v5776
      %v5781 = vadd.f32 %v5675, %v5779
      %v5782 = vadd.f32 %v5676, %v5780
      %v5783 = vld [vmem:[#allocation5 + $0xe0] sm:$0xff]
      %v5784 = vld [vmem:[#allocation5 + $0xe8] sm:$0xff]
      %v5785 = vmax.f32 %v5677, %v5783
      %v5786 = vmax.f32 %v5678, %v5784
      %s5787 = scalar_lea.vmem %s7, 22
      %v5788 = vld [vmem:[%s5787] ss:$8 sm:$0x3]
      %v5790 = vlaneseq
      %v5791 = vshrl.u32 %v5790, 7
      %v5792 = vsub.s32 0, %v5791
      %v5793 = vrot.slane %v5788, %v5792
      %v5794 = vlaneseq
      %v5795 = vshrl.u32 %v5794, 7
      %v5796 = vsub.s32 1, %v5795
      %v5797 = vrot.slane %v5788, %v5796
      %v5800 = vmul.f32 %v5785, %v5793
      %v5801 = vmul.f32 %v5786, %v5797
      %v5802 = vadd.f32 %v5696, %v5800
      %v5803 = vadd.f32 %v5697, %v5801
      %s5804 = scalar_lea.vmem %s7, 81
      %v5805 = vld [vmem:[%s5804] ss:$8 sm:$0x3]
      %v5807 = vlaneseq
      %v5808 = vshrl.u32 %v5807, 7
      %v5809 = vsub.s32 0, %v5808
      %v5810 = vrot.slane %v5805, %v5809
      %v5811 = vlaneseq
      %v5812 = vshrl.u32 %v5811, 7
      %v5813 = vsub.s32 1, %v5812
      %v5814 = vrot.slane %v5805, %v5813
      %v5817 = vmul.f32 %v5785, %v5810
      %v5818 = vmul.f32 %v5786, %v5814
      %v5819 = vadd.f32 %v5713, %v5817
      %v5820 = vadd.f32 %v5714, %v5818
      %s5821 = scalar_lea.vmem %s7, 132
      %v5822 = vld [vmem:[%s5821] ss:$8 sm:$0x3]
      %v5824 = vlaneseq
      %v5825 = vshrl.u32 %v5824, 7
      %v5826 = vsub.s32 0, %v5825
      %v5827 = vrot.slane %v5822, %v5826
      %v5828 = vlaneseq
      %v5829 = vshrl.u32 %v5828, 7
      %v5830 = vsub.s32 1, %v5829
      %v5831 = vrot.slane %v5822, %v5830
      %v5834 = vmul.f32 %v5785, %v5827
      %v5835 = vmul.f32 %v5786, %v5831
      %v5836 = vadd.f32 %v5730, %v5834
      %v5837 = vadd.f32 %v5731, %v5835
      %s5838 = scalar_lea.vmem %s7, 183
      %v5839 = vld [vmem:[%s5838] ss:$8 sm:$0x3]
      %v5841 = vlaneseq
      %v5842 = vshrl.u32 %v5841, 7
      %v5843 = vsub.s32 0, %v5842
      %v5844 = vrot.slane %v5839, %v5843
      %v5845 = vlaneseq
      %v5846 = vshrl.u32 %v5845, 7
      %v5847 = vsub.s32 1, %v5846
      %v5848 = vrot.slane %v5839, %v5847
      %v5851 = vmul.f32 %v5785, %v5844
      %v5852 = vmul.f32 %v5786, %v5848
      %v5853 = vadd.f32 %v5747, %v5851
      %v5854 = vadd.f32 %v5748, %v5852
      %s5855 = scalar_lea.vmem %s7, 242
      %v5856 = vld [vmem:[%s5855] ss:$8 sm:$0x3]
      %v5858 = vlaneseq
      %v5859 = vshrl.u32 %v5858, 7
      %v5860 = vsub.s32 0, %v5859
      %v5861 = vrot.slane %v5856, %v5860
      %v5862 = vlaneseq
      %v5863 = vshrl.u32 %v5862, 7
      %v5864 = vsub.s32 1, %v5863
      %v5865 = vrot.slane %v5856, %v5864
      %v5868 = vmul.f32 %v5785, %v5861
      %v5869 = vmul.f32 %v5786, %v5865
      %v5870 = vadd.f32 %v5764, %v5868
      %v5871 = vadd.f32 %v5765, %v5869
      %s5872 = scalar_lea.vmem %s7, 293
      %v5873 = vld [vmem:[%s5872] ss:$8 sm:$0x3]
      %v5875 = vlaneseq
      %v5876 = vshrl.u32 %v5875, 7
      %v5877 = vsub.s32 0, %v5876
      %v5878 = vrot.slane %v5873, %v5877
      %v5879 = vlaneseq
      %v5880 = vshrl.u32 %v5879, 7
      %v5881 = vsub.s32 1, %v5880
      %v5882 = vrot.slane %v5873, %v5881
      %v5885 = vmul.f32 %v5785, %v5878
      %v5886 = vmul.f32 %v5786, %v5882
      %v5887 = vadd.f32 %v5781, %v5885
      %v5888 = vadd.f32 %v5782, %v5886
      %v5889 = vld [vmem:[#allocation5 + $0xf0] sm:$0xff]
      %v5890 = vld [vmem:[#allocation5 + $0xf8] sm:$0xff]
      %v5891 = vmax.f32 %v5783, %v5889
      %v5892 = vmax.f32 %v5784, %v5890
      %s5893 = scalar_lea.vmem %s7, 23
      %v5894 = vld [vmem:[%s5893] ss:$8 sm:$0x3]
      %v5896 = vlaneseq
      %v5897 = vshrl.u32 %v5896, 7
      %v5898 = vsub.s32 0, %v5897
      %v5899 = vrot.slane %v5894, %v5898
      %v5900 = vlaneseq
      %v5901 = vshrl.u32 %v5900, 7
      %v5902 = vsub.s32 1, %v5901
      %v5903 = vrot.slane %v5894, %v5902
      %v5906 = vmul.f32 %v5891, %v5899
      %v5907 = vmul.f32 %v5892, %v5903
      %v5908 = vadd.f32 %v5802, %v5906
      %v5909 = vadd.f32 %v5803, %v5907
      %s5910 = scalar_lea.vmem %s7, 82
      %v5911 = vld [vmem:[%s5910] ss:$8 sm:$0x3]
      %v5913 = vlaneseq
      %v5914 = vshrl.u32 %v5913, 7
      %v5915 = vsub.s32 0, %v5914
      %v5916 = vrot.slane %v5911, %v5915
      %v5917 = vlaneseq
      %v5918 = vshrl.u32 %v5917, 7
      %v5919 = vsub.s32 1, %v5918
      %v5920 = vrot.slane %v5911, %v5919
      %v5923 = vmul.f32 %v5891, %v5916
      %v5924 = vmul.f32 %v5892, %v5920
      %v5925 = vadd.f32 %v5819, %v5923
      %v5926 = vadd.f32 %v5820, %v5924
      %s5927 = scalar_lea.vmem %s7, 133
      %v5928 = vld [vmem:[%s5927] ss:$8 sm:$0x3]
      %v5930 = vlaneseq
      %v5931 = vshrl.u32 %v5930, 7
      %v5932 = vsub.s32 0, %v5931
      %v5933 = vrot.slane %v5928, %v5932
      %v5934 = vlaneseq
      %v5935 = vshrl.u32 %v5934, 7
      %v5936 = vsub.s32 1, %v5935
      %v5937 = vrot.slane %v5928, %v5936
      %v5940 = vmul.f32 %v5891, %v5933
      %v5941 = vmul.f32 %v5892, %v5937
      %v5942 = vadd.f32 %v5836, %v5940
      %v5943 = vadd.f32 %v5837, %v5941
      %s5944 = scalar_lea.vmem %s7, 192
      %v5945 = vld [vmem:[%s5944] ss:$8 sm:$0x3]
      %v5947 = vlaneseq
      %v5948 = vshrl.u32 %v5947, 7
      %v5949 = vsub.s32 0, %v5948
      %v5950 = vrot.slane %v5945, %v5949
      %v5951 = vlaneseq
      %v5952 = vshrl.u32 %v5951, 7
      %v5953 = vsub.s32 1, %v5952
      %v5954 = vrot.slane %v5945, %v5953
      %v5957 = vmul.f32 %v5891, %v5950
      %v5958 = vmul.f32 %v5892, %v5954
      %v5959 = vadd.f32 %v5853, %v5957
      %v5960 = vadd.f32 %v5854, %v5958
      %s5961 = scalar_lea.vmem %s7, 243
      %v5962 = vld [vmem:[%s5961] ss:$8 sm:$0x3]
      %v5964 = vlaneseq
      %v5965 = vshrl.u32 %v5964, 7
      %v5966 = vsub.s32 0, %v5965
      %v5967 = vrot.slane %v5962, %v5966
      %v5968 = vlaneseq
      %v5969 = vshrl.u32 %v5968, 7
      %v5970 = vsub.s32 1, %v5969
      %v5971 = vrot.slane %v5962, %v5970
      %v5974 = vmul.f32 %v5891, %v5967
      %v5975 = vmul.f32 %v5892, %v5971
      %v5976 = vadd.f32 %v5870, %v5974
      %v5977 = vadd.f32 %v5871, %v5975
      %s5978 = scalar_lea.vmem %s7, 294
      %v5979 = vld [vmem:[%s5978] ss:$8 sm:$0x3]
      %v5981 = vlaneseq
      %v5982 = vshrl.u32 %v5981, 7
      %v5983 = vsub.s32 0, %v5982
      %v5984 = vrot.slane %v5979, %v5983
      %v5985 = vlaneseq
      %v5986 = vshrl.u32 %v5985, 7
      %v5987 = vsub.s32 1, %v5986
      %v5988 = vrot.slane %v5979, %v5987
      %v5991 = vmul.f32 %v5891, %v5984
      %v5992 = vmul.f32 %v5892, %v5988
      %v5993 = vadd.f32 %v5887, %v5991
      %v5994 = vadd.f32 %v5888, %v5992
      %v5995 = vld [vmem:[#allocation5 + $0x100] sm:$0xff]
      %v5996 = vld [vmem:[#allocation5 + $0x108] sm:$0xff]
      %v5997 = vmax.f32 %v5889, %v5995
      %v5998 = vmax.f32 %v5890, %v5996
      %s5999 = scalar_lea.vmem %s7, 32
      %v6000 = vld [vmem:[%s5999] ss:$8 sm:$0x3]
      %v6002 = vlaneseq
      %v6003 = vshrl.u32 %v6002, 7
      %v6004 = vsub.s32 0, %v6003
      %v6005 = vrot.slane %v6000, %v6004
      %v6006 = vlaneseq
      %v6007 = vshrl.u32 %v6006, 7
      %v6008 = vsub.s32 1, %v6007
      %v6009 = vrot.slane %v6000, %v6008
      %v6012 = vmul.f32 %v5997, %v6005
      %v6013 = vmul.f32 %v5998, %v6009
      %v6014 = vadd.f32 %v5908, %v6012
      %v6015 = vadd.f32 %v5909, %v6013
      %s6016 = scalar_lea.vmem %s7, 83
      %v6017 = vld [vmem:[%s6016] ss:$8 sm:$0x3]
      %v6019 = vlaneseq
      %v6020 = vshrl.u32 %v6019, 7
      %v6021 = vsub.s32 0, %v6020
      %v6022 = vrot.slane %v6017, %v6021
      %v6023 = vlaneseq
      %v6024 = vshrl.u32 %v6023, 7
      %v6025 = vsub.s32 1, %v6024
      %v6026 = vrot.slane %v6017, %v6025
      %v6029 = vmul.f32 %v5997, %v6022
      %v6030 = vmul.f32 %v5998, %v6026
      %v6031 = vadd.f32 %v5925, %v6029
      %v6032 = vadd.f32 %v5926, %v6030
      %s6033 = scalar_lea.vmem %s7, 134
      %v6034 = vld [vmem:[%s6033] ss:$8 sm:$0x3]
      %v6036 = vlaneseq
      %v6037 = vshrl.u32 %v6036, 7
      %v6038 = vsub.s32 0, %v6037
      %v6039 = vrot.slane %v6034, %v6038
      %v6040 = vlaneseq
      %v6041 = vshrl.u32 %v6040, 7
      %v6042 = vsub.s32 1, %v6041
      %v6043 = vrot.slane %v6034, %v6042
      %v6046 = vmul.f32 %v5997, %v6039
      %v6047 = vmul.f32 %v5998, %v6043
      %v6048 = vadd.f32 %v5942, %v6046
      %v6049 = vadd.f32 %v5943, %v6047
      %s6050 = scalar_lea.vmem %s7, 193
      %v6051 = vld [vmem:[%s6050] ss:$8 sm:$0x3]
      %v6053 = vlaneseq
      %v6054 = vshrl.u32 %v6053, 7
      %v6055 = vsub.s32 0, %v6054
      %v6056 = vrot.slane %v6051, %v6055
      %v6057 = vlaneseq
      %v6058 = vshrl.u32 %v6057, 7
      %v6059 = vsub.s32 1, %v6058
      %v6060 = vrot.slane %v6051, %v6059
      %v6063 = vmul.f32 %v5997, %v6056
      %v6064 = vmul.f32 %v5998, %v6060
      %v6065 = vadd.f32 %v5959, %v6063
      %v6066 = vadd.f32 %v5960, %v6064
      %s6067 = scalar_lea.vmem %s7, 244
      %v6068 = vld [vmem:[%s6067] ss:$8 sm:$0x3]
      %v6070 = vlaneseq
      %v6071 = vshrl.u32 %v6070, 7
      %v6072 = vsub.s32 0, %v6071
      %v6073 = vrot.slane %v6068, %v6072
      %v6074 = vlaneseq
      %v6075 = vshrl.u32 %v6074, 7
      %v6076 = vsub.s32 1, %v6075
      %v6077 = vrot.slane %v6068, %v6076
      %v6080 = vmul.f32 %v5997, %v6073
      %v6081 = vmul.f32 %v5998, %v6077
      %v6082 = vadd.f32 %v5976, %v6080
      %v6083 = vadd.f32 %v5977, %v6081
      %s6084 = scalar_lea.vmem %s7, 295
      %v6085 = vld [vmem:[%s6084] ss:$8 sm:$0x3]
      %v6087 = vlaneseq
      %v6088 = vshrl.u32 %v6087, 7
      %v6089 = vsub.s32 0, %v6088
      %v6090 = vrot.slane %v6085, %v6089
      %v6091 = vlaneseq
      %v6092 = vshrl.u32 %v6091, 7
      %v6093 = vsub.s32 1, %v6092
      %v6094 = vrot.slane %v6085, %v6093
      %v6097 = vmul.f32 %v5997, %v6090
      %v6098 = vmul.f32 %v5998, %v6094
      %v6099 = vadd.f32 %v5993, %v6097
      %v6100 = vadd.f32 %v5994, %v6098
      %v6101 = vld [vmem:[#allocation5 + $0x110] sm:$0xff]
      %v6102 = vld [vmem:[#allocation5 + $0x118] sm:$0xff]
      %v6103 = vmax.f32 %v5995, %v6101
      %v6104 = vmax.f32 %v5996, %v6102
      %s6105 = scalar_lea.vmem %s7, 33
      %v6106 = vld [vmem:[%s6105] ss:$8 sm:$0x3]
      %v6108 = vlaneseq
      %v6109 = vshrl.u32 %v6108, 7
      %v6110 = vsub.s32 0, %v6109
      %v6111 = vrot.slane %v6106, %v6110
      %v6112 = vlaneseq
      %v6113 = vshrl.u32 %v6112, 7
      %v6114 = vsub.s32 1, %v6113
      %v6115 = vrot.slane %v6106, %v6114
      %v6118 = vmul.f32 %v6103, %v6111
      %v6119 = vmul.f32 %v6104, %v6115
      %v6120 = vadd.f32 %v6014, %v6118
      %v6121 = vadd.f32 %v6015, %v6119
      %s6122 = scalar_lea.vmem %s7, 84
      %v6123 = vld [vmem:[%s6122] ss:$8 sm:$0x3]
      %v6125 = vlaneseq
      %v6126 = vshrl.u32 %v6125, 7
      %v6127 = vsub.s32 0, %v6126
      %v6128 = vrot.slane %v6123, %v6127
      %v6129 = vlaneseq
      %v6130 = vshrl.u32 %v6129, 7
      %v6131 = vsub.s32 1, %v6130
      %v6132 = vrot.slane %v6123, %v6131
      %v6135 = vmul.f32 %v6103, %v6128
      %v6136 = vmul.f32 %v6104, %v6132
      %v6137 = vadd.f32 %v6031, %v6135
      %v6138 = vadd.f32 %v6032, %v6136
      %s6139 = scalar_lea.vmem %s7, 135
      %v6140 = vld [vmem:[%s6139] ss:$8 sm:$0x3]
      %v6142 = vlaneseq
      %v6143 = vshrl.u32 %v6142, 7
      %v6144 = vsub.s32 0, %v6143
      %v6145 = vrot.slane %v6140, %v6144
      %v6146 = vlaneseq
      %v6147 = vshrl.u32 %v6146, 7
      %v6148 = vsub.s32 1, %v6147
      %v6149 = vrot.slane %v6140, %v6148
      %v6152 = vmul.f32 %v6103, %v6145
      %v6153 = vmul.f32 %v6104, %v6149
      %v6154 = vadd.f32 %v6048, %v6152
      %v6155 = vadd.f32 %v6049, %v6153
      %s6156 = scalar_lea.vmem %s7, 194
      %v6157 = vld [vmem:[%s6156] ss:$8 sm:$0x3]
      %v6159 = vlaneseq
      %v6160 = vshrl.u32 %v6159, 7
      %v6161 = vsub.s32 0, %v6160
      %v6162 = vrot.slane %v6157, %v6161
      %v6163 = vlaneseq
      %v6164 = vshrl.u32 %v6163, 7
      %v6165 = vsub.s32 1, %v6164
      %v6166 = vrot.slane %v6157, %v6165
      %v6169 = vmul.f32 %v6103, %v6162
      %v6170 = vmul.f32 %v6104, %v6166
      %v6171 = vadd.f32 %v6065, %v6169
      %v6172 = vadd.f32 %v6066, %v6170
      %s6173 = scalar_lea.vmem %s7, 245
      %v6174 = vld [vmem:[%s6173] ss:$8 sm:$0x3]
      %v6176 = vlaneseq
      %v6177 = vshrl.u32 %v6176, 7
      %v6178 = vsub.s32 0, %v6177
      %v6179 = vrot.slane %v6174, %v6178
      %v6180 = vlaneseq
      %v6181 = vshrl.u32 %v6180, 7
      %v6182 = vsub.s32 1, %v6181
      %v6183 = vrot.slane %v6174, %v6182
      %v6186 = vmul.f32 %v6103, %v6179
      %v6187 = vmul.f32 %v6104, %v6183
      %v6188 = vadd.f32 %v6082, %v6186
      %v6189 = vadd.f32 %v6083, %v6187
      %s6190 = scalar_lea.vmem %s7, 304
      %v6191 = vld [vmem:[%s6190] ss:$8 sm:$0x3]
      %v6193 = vlaneseq
      %v6194 = vshrl.u32 %v6193, 7
      %v6195 = vsub.s32 0, %v6194
      %v6196 = vrot.slane %v6191, %v6195
      %v6197 = vlaneseq
      %v6198 = vshrl.u32 %v6197, 7
      %v6199 = vsub.s32 1, %v6198
      %v6200 = vrot.slane %v6191, %v6199
      %v6203 = vmul.f32 %v6103, %v6196
      %v6204 = vmul.f32 %v6104, %v6200
      %v6205 = vadd.f32 %v6099, %v6203
      %v6206 = vadd.f32 %v6100, %v6204
      %v6207 = vld [vmem:[#allocation5 + $0x120] sm:$0xff]
      %v6208 = vld [vmem:[#allocation5 + $0x128] sm:$0xff]
      %v6209 = vmax.f32 %v6101, %v6207
      %v6210 = vmax.f32 %v6102, %v6208
      %s6211 = scalar_lea.vmem %s7, 34
      %v6212 = vld [vmem:[%s6211] ss:$8 sm:$0x3]
      %v6214 = vlaneseq
      %v6215 = vshrl.u32 %v6214, 7
      %v6216 = vsub.s32 0, %v6215
      %v6217 = vrot.slane %v6212, %v6216
      %v6218 = vlaneseq
      %v6219 = vshrl.u32 %v6218, 7
      %v6220 = vsub.s32 1, %v6219
      %v6221 = vrot.slane %v6212, %v6220
      %v6224 = vmul.f32 %v6209, %v6217
      %v6225 = vmul.f32 %v6210, %v6221
      %v6226 = vadd.f32 %v6120, %v6224
      %v6227 = vadd.f32 %v6121, %v6225
      %s6228 = scalar_lea.vmem %s7, 85
      %v6229 = vld [vmem:[%s6228] ss:$8 sm:$0x3]
      %v6231 = vlaneseq
      %v6232 = vshrl.u32 %v6231, 7
      %v6233 = vsub.s32 0, %v6232
      %v6234 = vrot.slane %v6229, %v6233
      %v6235 = vlaneseq
      %v6236 = vshrl.u32 %v6235, 7
      %v6237 = vsub.s32 1, %v6236
      %v6238 = vrot.slane %v6229, %v6237
      %v6241 = vmul.f32 %v6209, %v6234
      %v6242 = vmul.f32 %v6210, %v6238
      %v6243 = vadd.f32 %v6137, %v6241
      %v6244 = vadd.f32 %v6138, %v6242
      %s6245 = scalar_lea.vmem %s7, 144
      %v6246 = vld [vmem:[%s6245] ss:$8 sm:$0x3]
      %v6248 = vlaneseq
      %v6249 = vshrl.u32 %v6248, 7
      %v6250 = vsub.s32 0, %v6249
      %v6251 = vrot.slane %v6246, %v6250
      %v6252 = vlaneseq
      %v6253 = vshrl.u32 %v6252, 7
      %v6254 = vsub.s32 1, %v6253
      %v6255 = vrot.slane %v6246, %v6254
      %v6258 = vmul.f32 %v6209, %v6251
      %v6259 = vmul.f32 %v6210, %v6255
      %v6260 = vadd.f32 %v6154, %v6258
      %v6261 = vadd.f32 %v6155, %v6259
      %s6262 = scalar_lea.vmem %s7, 195
      %v6263 = vld [vmem:[%s6262] ss:$8 sm:$0x3]
      %v6265 = vlaneseq
      %v6266 = vshrl.u32 %v6265, 7
      %v6267 = vsub.s32 0, %v6266
      %v6268 = vrot.slane %v6263, %v6267
      %v6269 = vlaneseq
      %v6270 = vshrl.u32 %v6269, 7
      %v6271 = vsub.s32 1, %v6270
      %v6272 = vrot.slane %v6263, %v6271
      %v6275 = vmul.f32 %v6209, %v6268
      %v6276 = vmul.f32 %v6210, %v6272
      %v6277 = vadd.f32 %v6171, %v6275
      %v6278 = vadd.f32 %v6172, %v6276
      %s6279 = scalar_lea.vmem %s7, 246
      %v6280 = vld [vmem:[%s6279] ss:$8 sm:$0x3]
      %v6282 = vlaneseq
      %v6283 = vshrl.u32 %v6282, 7
      %v6284 = vsub.s32 0, %v6283
      %v6285 = vrot.slane %v6280, %v6284
      %v6286 = vlaneseq
      %v6287 = vshrl.u32 %v6286, 7
      %v6288 = vsub.s32 1, %v6287
      %v6289 = vrot.slane %v6280, %v6288
      %v6292 = vmul.f32 %v6209, %v6285
      %v6293 = vmul.f32 %v6210, %v6289
      %v6294 = vadd.f32 %v6188, %v6292
      %v6295 = vadd.f32 %v6189, %v6293
      %s6296 = scalar_lea.vmem %s7, 305
      %v6297 = vld [vmem:[%s6296] ss:$8 sm:$0x3]
      %v6299 = vlaneseq
      %v6300 = vshrl.u32 %v6299, 7
      %v6301 = vsub.s32 0, %v6300
      %v6302 = vrot.slane %v6297, %v6301
      %v6303 = vlaneseq
      %v6304 = vshrl.u32 %v6303, 7
      %v6305 = vsub.s32 1, %v6304
      %v6306 = vrot.slane %v6297, %v6305
      %v6309 = vmul.f32 %v6209, %v6302
      %v6310 = vmul.f32 %v6210, %v6306
      %v6311 = vadd.f32 %v6205, %v6309
      %v6312 = vadd.f32 %v6206, %v6310
      %v6313 = vld [vmem:[#allocation5 + $0x130] sm:$0xff]
      %v6314 = vld [vmem:[#allocation5 + $0x138] sm:$0xff]
      %v6315 = vmax.f32 %v6207, %v6313
      %v6316 = vmax.f32 %v6208, %v6314
      %s6317 = scalar_lea.vmem %s7, 35
      %v6318 = vld [vmem:[%s6317] ss:$8 sm:$0x3]
      %v6320 = vlaneseq
      %v6321 = vshrl.u32 %v6320, 7
      %v6322 = vsub.s32 0, %v6321
      %v6323 = vrot.slane %v6318, %v6322
      %v6324 = vlaneseq
      %v6325 = vshrl.u32 %v6324, 7
      %v6326 = vsub.s32 1, %v6325
      %v6327 = vrot.slane %v6318, %v6326
      %v6330 = vmul.f32 %v6315, %v6323
      %v6331 = vmul.f32 %v6316, %v6327
      %v6332 = vadd.f32 %v6226, %v6330
      %v6333 = vadd.f32 %v6227, %v6331
      %s6334 = scalar_lea.vmem %s7, 86
      %v6335 = vld [vmem:[%s6334] ss:$8 sm:$0x3]
      %v6337 = vlaneseq
      %v6338 = vshrl.u32 %v6337, 7
      %v6339 = vsub.s32 0, %v6338
      %v6340 = vrot.slane %v6335, %v6339
      %v6341 = vlaneseq
      %v6342 = vshrl.u32 %v6341, 7
      %v6343 = vsub.s32 1, %v6342
      %v6344 = vrot.slane %v6335, %v6343
      %v6347 = vmul.f32 %v6315, %v6340
      %v6348 = vmul.f32 %v6316, %v6344
      %v6349 = vadd.f32 %v6243, %v6347
      %v6350 = vadd.f32 %v6244, %v6348
      %s6351 = scalar_lea.vmem %s7, 145
      %v6352 = vld [vmem:[%s6351] ss:$8 sm:$0x3]
      %v6354 = vlaneseq
      %v6355 = vshrl.u32 %v6354, 7
      %v6356 = vsub.s32 0, %v6355
      %v6357 = vrot.slane %v6352, %v6356
      %v6358 = vlaneseq
      %v6359 = vshrl.u32 %v6358, 7
      %v6360 = vsub.s32 1, %v6359
      %v6361 = vrot.slane %v6352, %v6360
      %v6364 = vmul.f32 %v6315, %v6357
      %v6365 = vmul.f32 %v6316, %v6361
      %v6366 = vadd.f32 %v6260, %v6364
      %v6367 = vadd.f32 %v6261, %v6365
      %s6368 = scalar_lea.vmem %s7, 196
      %v6369 = vld [vmem:[%s6368] ss:$8 sm:$0x3]
      %v6371 = vlaneseq
      %v6372 = vshrl.u32 %v6371, 7
      %v6373 = vsub.s32 0, %v6372
      %v6374 = vrot.slane %v6369, %v6373
      %v6375 = vlaneseq
      %v6376 = vshrl.u32 %v6375, 7
      %v6377 = vsub.s32 1, %v6376
      %v6378 = vrot.slane %v6369, %v6377
      %v6381 = vmul.f32 %v6315, %v6374
      %v6382 = vmul.f32 %v6316, %v6378
      %v6383 = vadd.f32 %v6277, %v6381
      %v6384 = vadd.f32 %v6278, %v6382
      %s6385 = scalar_lea.vmem %s7, 247
      %v6386 = vld [vmem:[%s6385] ss:$8 sm:$0x3]
      %v6388 = vlaneseq
      %v6389 = vshrl.u32 %v6388, 7
      %v6390 = vsub.s32 0, %v6389
      %v6391 = vrot.slane %v6386, %v6390
      %v6392 = vlaneseq
      %v6393 = vshrl.u32 %v6392, 7
      %v6394 = vsub.s32 1, %v6393
      %v6395 = vrot.slane %v6386, %v6394
      %v6398 = vmul.f32 %v6315, %v6391
      %v6399 = vmul.f32 %v6316, %v6395
      %v6400 = vadd.f32 %v6294, %v6398
      %v6401 = vadd.f32 %v6295, %v6399
      %s6402 = scalar_lea.vmem %s7, 306
      %v6403 = vld [vmem:[%s6402] ss:$8 sm:$0x3]
      %v6405 = vlaneseq
      %v6406 = vshrl.u32 %v6405, 7
      %v6407 = vsub.s32 0, %v6406
      %v6408 = vrot.slane %v6403, %v6407
      %v6409 = vlaneseq
      %v6410 = vshrl.u32 %v6409, 7
      %v6411 = vsub.s32 1, %v6410
      %v6412 = vrot.slane %v6403, %v6411
      %v6415 = vmul.f32 %v6315, %v6408
      %v6416 = vmul.f32 %v6316, %v6412
      %v6417 = vadd.f32 %v6311, %v6415
      %v6418 = vadd.f32 %v6312, %v6416
      %v6419 = vld [vmem:[#allocation5 + $0x140] sm:$0xff]
      %v6420 = vld [vmem:[#allocation5 + $0x148] sm:$0xff]
      %v6421 = vmax.f32 %v6313, %v6419
      %v6422 = vmax.f32 %v6314, %v6420
      %s6423 = scalar_lea.vmem %s7, 36
      %v6424 = vld [vmem:[%s6423] ss:$8 sm:$0x3]
      %v6426 = vlaneseq
      %v6427 = vshrl.u32 %v6426, 7
      %v6428 = vsub.s32 0, %v6427
      %v6429 = vrot.slane %v6424, %v6428
      %v6430 = vlaneseq
      %v6431 = vshrl.u32 %v6430, 7
      %v6432 = vsub.s32 1, %v6431
      %v6433 = vrot.slane %v6424, %v6432
      %v6436 = vmul.f32 %v6421, %v6429
      %v6437 = vmul.f32 %v6422, %v6433
      %v6438 = vadd.f32 %v6332, %v6436
      %v6439 = vadd.f32 %v6333, %v6437
      %s6440 = scalar_lea.vmem %s7, 87
      %v6441 = vld [vmem:[%s6440] ss:$8 sm:$0x3]
      %v6443 = vlaneseq
      %v6444 = vshrl.u32 %v6443, 7
      %v6445 = vsub.s32 0, %v6444
      %v6446 = vrot.slane %v6441, %v6445
      %v6447 = vlaneseq
      %v6448 = vshrl.u32 %v6447, 7
      %v6449 = vsub.s32 1, %v6448
      %v6450 = vrot.slane %v6441, %v6449
      %v6453 = vmul.f32 %v6421, %v6446
      %v6454 = vmul.f32 %v6422, %v6450
      %v6455 = vadd.f32 %v6349, %v6453
      %v6456 = vadd.f32 %v6350, %v6454
      %s6457 = scalar_lea.vmem %s7, 146
      %v6458 = vld [vmem:[%s6457] ss:$8 sm:$0x3]
      %v6460 = vlaneseq
      %v6461 = vshrl.u32 %v6460, 7
      %v6462 = vsub.s32 0, %v6461
      %v6463 = vrot.slane %v6458, %v6462
      %v6464 = vlaneseq
      %v6465 = vshrl.u32 %v6464, 7
      %v6466 = vsub.s32 1, %v6465
      %v6467 = vrot.slane %v6458, %v6466
      %v6470 = vmul.f32 %v6421, %v6463
      %v6471 = vmul.f32 %v6422, %v6467
      %v6472 = vadd.f32 %v6366, %v6470
      %v6473 = vadd.f32 %v6367, %v6471
      %s6474 = scalar_lea.vmem %s7, 197
      %v6475 = vld [vmem:[%s6474] ss:$8 sm:$0x3]
      %v6477 = vlaneseq
      %v6478 = vshrl.u32 %v6477, 7
      %v6479 = vsub.s32 0, %v6478
      %v6480 = vrot.slane %v6475, %v6479
      %v6481 = vlaneseq
      %v6482 = vshrl.u32 %v6481, 7
      %v6483 = vsub.s32 1, %v6482
      %v6484 = vrot.slane %v6475, %v6483
      %v6487 = vmul.f32 %v6421, %v6480
      %v6488 = vmul.f32 %v6422, %v6484
      %v6489 = vadd.f32 %v6383, %v6487
      %v6490 = vadd.f32 %v6384, %v6488
      %s6491 = scalar_lea.vmem %s7, 256
      %v6492 = vld [vmem:[%s6491] ss:$8 sm:$0x3]
      %v6494 = vlaneseq
      %v6495 = vshrl.u32 %v6494, 7
      %v6496 = vsub.s32 0, %v6495
      %v6497 = vrot.slane %v6492, %v6496
      %v6498 = vlaneseq
      %v6499 = vshrl.u32 %v6498, 7
      %v6500 = vsub.s32 1, %v6499
      %v6501 = vrot.slane %v6492, %v6500
      %v6504 = vmul.f32 %v6421, %v6497
      %v6505 = vmul.f32 %v6422, %v6501
      %v6506 = vadd.f32 %v6400, %v6504
      %v6507 = vadd.f32 %v6401, %v6505
      %s6508 = scalar_lea.vmem %s7, 307
      %v6509 = vld [vmem:[%s6508] ss:$8 sm:$0x3]
      %v6511 = vlaneseq
      %v6512 = vshrl.u32 %v6511, 7
      %v6513 = vsub.s32 0, %v6512
      %v6514 = vrot.slane %v6509, %v6513
      %v6515 = vlaneseq
      %v6516 = vshrl.u32 %v6515, 7
      %v6517 = vsub.s32 1, %v6516
      %v6518 = vrot.slane %v6509, %v6517
      %v6521 = vmul.f32 %v6421, %v6514
      %v6522 = vmul.f32 %v6422, %v6518
      %v6523 = vadd.f32 %v6417, %v6521
      %v6524 = vadd.f32 %v6418, %v6522
      %v6525 = vld [vmem:[#allocation5 + $0x150] sm:$0xff]
      %v6526 = vld [vmem:[#allocation5 + $0x158] sm:$0xff]
      %v6527 = vmax.f32 %v6419, %v6525
      %v6528 = vmax.f32 %v6420, %v6526
      %s6529 = scalar_lea.vmem %s7, 37
      %v6530 = vld [vmem:[%s6529] ss:$8 sm:$0x3]
      %v6532 = vlaneseq
      %v6533 = vshrl.u32 %v6532, 7
      %v6534 = vsub.s32 0, %v6533
      %v6535 = vrot.slane %v6530, %v6534
      %v6536 = vlaneseq
      %v6537 = vshrl.u32 %v6536, 7
      %v6538 = vsub.s32 1, %v6537
      %v6539 = vrot.slane %v6530, %v6538
      %v6542 = vmul.f32 %v6527, %v6535
      %v6543 = vmul.f32 %v6528, %v6539
      %v6544 = vadd.f32 %v6438, %v6542
      %v6545 = vadd.f32 %v6439, %v6543
      %s6546 = scalar_lea.vmem %s7, 96
      %v6547 = vld [vmem:[%s6546] ss:$8 sm:$0x3]
      %v6549 = vlaneseq
      %v6550 = vshrl.u32 %v6549, 7
      %v6551 = vsub.s32 0, %v6550
      %v6552 = vrot.slane %v6547, %v6551
      %v6553 = vlaneseq
      %v6554 = vshrl.u32 %v6553, 7
      %v6555 = vsub.s32 1, %v6554
      %v6556 = vrot.slane %v6547, %v6555
      %v6559 = vmul.f32 %v6527, %v6552
      %v6560 = vmul.f32 %v6528, %v6556
      %v6561 = vadd.f32 %v6455, %v6559
      %v6562 = vadd.f32 %v6456, %v6560
      %s6563 = scalar_lea.vmem %s7, 147
      %v6564 = vld [vmem:[%s6563] ss:$8 sm:$0x3]
      %v6566 = vlaneseq
      %v6567 = vshrl.u32 %v6566, 7
      %v6568 = vsub.s32 0, %v6567
      %v6569 = vrot.slane %v6564, %v6568
      %v6570 = vlaneseq
      %v6571 = vshrl.u32 %v6570, 7
      %v6572 = vsub.s32 1, %v6571
      %v6573 = vrot.slane %v6564, %v6572
      %v6576 = vmul.f32 %v6527, %v6569
      %v6577 = vmul.f32 %v6528, %v6573
      %v6578 = vadd.f32 %v6472, %v6576
      %v6579 = vadd.f32 %v6473, %v6577
      %s6580 = scalar_lea.vmem %s7, 198
      %v6581 = vld [vmem:[%s6580] ss:$8 sm:$0x3]
      %v6583 = vlaneseq
      %v6584 = vshrl.u32 %v6583, 7
      %v6585 = vsub.s32 0, %v6584
      %v6586 = vrot.slane %v6581, %v6585
      %v6587 = vlaneseq
      %v6588 = vshrl.u32 %v6587, 7
      %v6589 = vsub.s32 1, %v6588
      %v6590 = vrot.slane %v6581, %v6589
      %v6593 = vmul.f32 %v6527, %v6586
      %v6594 = vmul.f32 %v6528, %v6590
      %v6595 = vadd.f32 %v6489, %v6593
      %v6596 = vadd.f32 %v6490, %v6594
      %s6597 = scalar_lea.vmem %s7, 257
      %v6598 = vld [vmem:[%s6597] ss:$8 sm:$0x3]
      %v6600 = vlaneseq
      %v6601 = vshrl.u32 %v6600, 7
      %v6602 = vsub.s32 0, %v6601
      %v6603 = vrot.slane %v6598, %v6602
      %v6604 = vlaneseq
      %v6605 = vshrl.u32 %v6604, 7
      %v6606 = vsub.s32 1, %v6605
      %v6607 = vrot.slane %v6598, %v6606
      %v6610 = vmul.f32 %v6527, %v6603
      %v6611 = vmul.f32 %v6528, %v6607
      %v6612 = vadd.f32 %v6506, %v6610
      %v6613 = vadd.f32 %v6507, %v6611
      %s6614 = scalar_lea.vmem %s7, 308
      %v6615 = vld [vmem:[%s6614] ss:$8 sm:$0x3]
      %v6617 = vlaneseq
      %v6618 = vshrl.u32 %v6617, 7
      %v6619 = vsub.s32 0, %v6618
      %v6620 = vrot.slane %v6615, %v6619
      %v6621 = vlaneseq
      %v6622 = vshrl.u32 %v6621, 7
      %v6623 = vsub.s32 1, %v6622
      %v6624 = vrot.slane %v6615, %v6623
      %v6627 = vmul.f32 %v6527, %v6620
      %v6628 = vmul.f32 %v6528, %v6624
      %v6629 = vadd.f32 %v6523, %v6627
      %v6630 = vadd.f32 %v6524, %v6628
      %v6631 = vld [vmem:[#allocation5 + $0x160] sm:$0xff]
      %v6632 = vld [vmem:[#allocation5 + $0x168] sm:$0xff]
      %v6633 = vmax.f32 %v6525, %v6631
      %v6634 = vmax.f32 %v6526, %v6632
      %s6635 = scalar_lea.vmem %s7, 38
      %v6636 = vld [vmem:[%s6635] ss:$8 sm:$0x3]
      %v6638 = vlaneseq
      %v6639 = vshrl.u32 %v6638, 7
      %v6640 = vsub.s32 0, %v6639
      %v6641 = vrot.slane %v6636, %v6640
      %v6642 = vlaneseq
      %v6643 = vshrl.u32 %v6642, 7
      %v6644 = vsub.s32 1, %v6643
      %v6645 = vrot.slane %v6636, %v6644
      %v6648 = vmul.f32 %v6633, %v6641
      %v6649 = vmul.f32 %v6634, %v6645
      %v6650 = vadd.f32 %v6544, %v6648
      %v6651 = vadd.f32 %v6545, %v6649
      %s6652 = scalar_lea.vmem %s7, 97
      %v6653 = vld [vmem:[%s6652] ss:$8 sm:$0x3]
      %v6655 = vlaneseq
      %v6656 = vshrl.u32 %v6655, 7
      %v6657 = vsub.s32 0, %v6656
      %v6658 = vrot.slane %v6653, %v6657
      %v6659 = vlaneseq
      %v6660 = vshrl.u32 %v6659, 7
      %v6661 = vsub.s32 1, %v6660
      %v6662 = vrot.slane %v6653, %v6661
      %v6665 = vmul.f32 %v6633, %v6658
      %v6666 = vmul.f32 %v6634, %v6662
      %v6667 = vadd.f32 %v6561, %v6665
      %v6668 = vadd.f32 %v6562, %v6666
      %s6669 = scalar_lea.vmem %s7, 148
      %v6670 = vld [vmem:[%s6669] ss:$8 sm:$0x3]
      %v6672 = vlaneseq
      %v6673 = vshrl.u32 %v6672, 7
      %v6674 = vsub.s32 0, %v6673
      %v6675 = vrot.slane %v6670, %v6674
      %v6676 = vlaneseq
      %v6677 = vshrl.u32 %v6676, 7
      %v6678 = vsub.s32 1, %v6677
      %v6679 = vrot.slane %v6670, %v6678
      %v6682 = vmul.f32 %v6633, %v6675
      %v6683 = vmul.f32 %v6634, %v6679
      %v6684 = vadd.f32 %v6578, %v6682
      %v6685 = vadd.f32 %v6579, %v6683
      %s6686 = scalar_lea.vmem %s7, 199
      %v6687 = vld [vmem:[%s6686] ss:$8 sm:$0x3]
      %v6689 = vlaneseq
      %v6690 = vshrl.u32 %v6689, 7
      %v6691 = vsub.s32 0, %v6690
      %v6692 = vrot.slane %v6687, %v6691
      %v6693 = vlaneseq
      %v6694 = vshrl.u32 %v6693, 7
      %v6695 = vsub.s32 1, %v6694
      %v6696 = vrot.slane %v6687, %v6695
      %v6699 = vmul.f32 %v6633, %v6692
      %v6700 = vmul.f32 %v6634, %v6696
      %v6701 = vadd.f32 %v6595, %v6699
      %v6702 = vadd.f32 %v6596, %v6700
      %s6703 = scalar_lea.vmem %s7, 258
      %v6704 = vld [vmem:[%s6703] ss:$8 sm:$0x3]
      %v6706 = vlaneseq
      %v6707 = vshrl.u32 %v6706, 7
      %v6708 = vsub.s32 0, %v6707
      %v6709 = vrot.slane %v6704, %v6708
      %v6710 = vlaneseq
      %v6711 = vshrl.u32 %v6710, 7
      %v6712 = vsub.s32 1, %v6711
      %v6713 = vrot.slane %v6704, %v6712
      %v6716 = vmul.f32 %v6633, %v6709
      %v6717 = vmul.f32 %v6634, %v6713
      %v6718 = vadd.f32 %v6612, %v6716
      %v6719 = vadd.f32 %v6613, %v6717
      %s6720 = scalar_lea.vmem %s7, 309
      %v6721 = vld [vmem:[%s6720] ss:$8 sm:$0x3]
      %v6723 = vlaneseq
      %v6724 = vshrl.u32 %v6723, 7
      %v6725 = vsub.s32 0, %v6724
      %v6726 = vrot.slane %v6721, %v6725
      %v6727 = vlaneseq
      %v6728 = vshrl.u32 %v6727, 7
      %v6729 = vsub.s32 1, %v6728
      %v6730 = vrot.slane %v6721, %v6729
      %v6733 = vmul.f32 %v6633, %v6726
      %v6734 = vmul.f32 %v6634, %v6730
      %v6735 = vadd.f32 %v6629, %v6733
      %v6736 = vadd.f32 %v6630, %v6734
      %v6737 = vld [vmem:[#allocation5 + $0x170] sm:$0xff]
      %v6738 = vld [vmem:[#allocation5 + $0x178] sm:$0xff]
      %v6739 = vmax.f32 %v6631, %v6737
      %v6740 = vmax.f32 %v6632, %v6738
      %s6741 = scalar_lea.vmem %s7, 39
      %v6742 = vld [vmem:[%s6741] ss:$8 sm:$0x3]
      %v6744 = vlaneseq
      %v6745 = vshrl.u32 %v6744, 7
      %v6746 = vsub.s32 0, %v6745
      %v6747 = vrot.slane %v6742, %v6746
      %v6748 = vlaneseq
      %v6749 = vshrl.u32 %v6748, 7
      %v6750 = vsub.s32 1, %v6749
      %v6751 = vrot.slane %v6742, %v6750
      %v6754 = vmul.f32 %v6739, %v6747
      %v6755 = vmul.f32 %v6740, %v6751
      %v6756 = vadd.f32 %v6650, %v6754
      %v6757 = vadd.f32 %v6651, %v6755
      %s6758 = scalar_lea.vmem %s7, 98
      %v6759 = vld [vmem:[%s6758] ss:$8 sm:$0x3]
      %v6761 = vlaneseq
      %v6762 = vshrl.u32 %v6761, 7
      %v6763 = vsub.s32 0, %v6762
      %v6764 = vrot.slane %v6759, %v6763
      %v6765 = vlaneseq
      %v6766 = vshrl.u32 %v6765, 7
      %v6767 = vsub.s32 1, %v6766
      %v6768 = vrot.slane %v6759, %v6767
      %v6771 = vmul.f32 %v6739, %v6764
      %v6772 = vmul.f32 %v6740, %v6768
      %v6773 = vadd.f32 %v6667, %v6771
      %v6774 = vadd.f32 %v6668, %v6772
      %s6775 = scalar_lea.vmem %s7, 149
      %v6776 = vld [vmem:[%s6775] ss:$8 sm:$0x3]
      %v6778 = vlaneseq
      %v6779 = vshrl.u32 %v6778, 7
      %v6780 = vsub.s32 0, %v6779
      %v6781 = vrot.slane %v6776, %v6780
      %v6782 = vlaneseq
      %v6783 = vshrl.u32 %v6782, 7
      %v6784 = vsub.s32 1, %v6783
      %v6785 = vrot.slane %v6776, %v6784
      %v6788 = vmul.f32 %v6739, %v6781
      %v6789 = vmul.f32 %v6740, %v6785
      %v6790 = vadd.f32 %v6684, %v6788
      %v6791 = vadd.f32 %v6685, %v6789
      %s6792 = scalar_lea.vmem %s7, 208
      %v6793 = vld [vmem:[%s6792] ss:$8 sm:$0x3]
      %v6795 = vlaneseq
      %v6796 = vshrl.u32 %v6795, 7
      %v6797 = vsub.s32 0, %v6796
      %v6798 = vrot.slane %v6793, %v6797
      %v6799 = vlaneseq
      %v6800 = vshrl.u32 %v6799, 7
      %v6801 = vsub.s32 1, %v6800
      %v6802 = vrot.slane %v6793, %v6801
      %v6805 = vmul.f32 %v6739, %v6798
      %v6806 = vmul.f32 %v6740, %v6802
      %v6807 = vadd.f32 %v6701, %v6805
      %v6808 = vadd.f32 %v6702, %v6806
      %s6809 = scalar_lea.vmem %s7, 259
      %v6810 = vld [vmem:[%s6809] ss:$8 sm:$0x3]
      %v6812 = vlaneseq
      %v6813 = vshrl.u32 %v6812, 7
      %v6814 = vsub.s32 0, %v6813
      %v6815 = vrot.slane %v6810, %v6814
      %v6816 = vlaneseq
      %v6817 = vshrl.u32 %v6816, 7
      %v6818 = vsub.s32 1, %v6817
      %v6819 = vrot.slane %v6810, %v6818
      %v6822 = vmul.f32 %v6739, %v6815
      %v6823 = vmul.f32 %v6740, %v6819
      %v6824 = vadd.f32 %v6718, %v6822
      %v6825 = vadd.f32 %v6719, %v6823
      %s6826 = scalar_lea.vmem %s7, 310
      %v6827 = vld [vmem:[%s6826] ss:$8 sm:$0x3]
      %v6829 = vlaneseq
      %v6830 = vshrl.u32 %v6829, 7
      %v6831 = vsub.s32 0, %v6830
      %v6832 = vrot.slane %v6827, %v6831
      %v6833 = vlaneseq
      %v6834 = vshrl.u32 %v6833, 7
      %v6835 = vsub.s32 1, %v6834
      %v6836 = vrot.slane %v6827, %v6835
      %v6839 = vmul.f32 %v6739, %v6832
      %v6840 = vmul.f32 %v6740, %v6836
      %v6841 = vadd.f32 %v6735, %v6839
      %v6842 = vadd.f32 %v6736, %v6840
      %v6843 = vld [vmem:[#allocation5 + $0x180] sm:$0xff]
      %v6844 = vld [vmem:[#allocation5 + $0x188] sm:$0xff]
      %v6845 = vmax.f32 %v6737, %v6843
      %v6846 = vmax.f32 %v6738, %v6844
      %s6847 = scalar_lea.vmem %s7, 48
      %v6848 = vld [vmem:[%s6847] ss:$8 sm:$0x3]
      %v6850 = vlaneseq
      %v6851 = vshrl.u32 %v6850, 7
      %v6852 = vsub.s32 0, %v6851
      %v6853 = vrot.slane %v6848, %v6852
      %v6854 = vlaneseq
      %v6855 = vshrl.u32 %v6854, 7
      %v6856 = vsub.s32 1, %v6855
      %v6857 = vrot.slane %v6848, %v6856
      %v6860 = vmul.f32 %v6845, %v6853
      %v6861 = vmul.f32 %v6846, %v6857
      %v6862 = vadd.f32 %v6756, %v6860
      %v6863 = vadd.f32 %v6757, %v6861
      %s6864 = scalar_lea.vmem %s7, 99
      %v6865 = vld [vmem:[%s6864] ss:$8 sm:$0x3]
      %v6867 = vlaneseq
      %v6868 = vshrl.u32 %v6867, 7
      %v6869 = vsub.s32 0, %v6868
      %v6870 = vrot.slane %v6865, %v6869
      %v6871 = vlaneseq
      %v6872 = vshrl.u32 %v6871, 7
      %v6873 = vsub.s32 1, %v6872
      %v6874 = vrot.slane %v6865, %v6873
      %v6877 = vmul.f32 %v6845, %v6870
      %v6878 = vmul.f32 %v6846, %v6874
      %v6879 = vadd.f32 %v6773, %v6877
      %v6880 = vadd.f32 %v6774, %v6878
      %s6881 = scalar_lea.vmem %s7, 150
      %v6882 = vld [vmem:[%s6881] ss:$8 sm:$0x3]
      %v6884 = vlaneseq
      %v6885 = vshrl.u32 %v6884, 7
      %v6886 = vsub.s32 0, %v6885
      %v6887 = vrot.slane %v6882, %v6886
      %v6888 = vlaneseq
      %v6889 = vshrl.u32 %v6888, 7
      %v6890 = vsub.s32 1, %v6889
      %v6891 = vrot.slane %v6882, %v6890
      %v6894 = vmul.f32 %v6845, %v6887
      %v6895 = vmul.f32 %v6846, %v6891
      %v6896 = vadd.f32 %v6790, %v6894
      %v6897 = vadd.f32 %v6791, %v6895
      %s6898 = scalar_lea.vmem %s7, 209
      %v6899 = vld [vmem:[%s6898] ss:$8 sm:$0x3]
      %v6901 = vlaneseq
      %v6902 = vshrl.u32 %v6901, 7
      %v6903 = vsub.s32 0, %v6902
      %v6904 = vrot.slane %v6899, %v6903
      %v6905 = vlaneseq
      %v6906 = vshrl.u32 %v6905, 7
      %v6907 = vsub.s32 1, %v6906
      %v6908 = vrot.slane %v6899, %v6907
      %v6911 = vmul.f32 %v6845, %v6904
      %v6912 = vmul.f32 %v6846, %v6908
      %v6913 = vadd.f32 %v6807, %v6911
      %v6914 = vadd.f32 %v6808, %v6912
      %s6915 = scalar_lea.vmem %s7, 260
      %v6916 = vld [vmem:[%s6915] ss:$8 sm:$0x3]
      %v6918 = vlaneseq
      %v6919 = vshrl.u32 %v6918, 7
      %v6920 = vsub.s32 0, %v6919
      %v6921 = vrot.slane %v6916, %v6920
      %v6922 = vlaneseq
      %v6923 = vshrl.u32 %v6922, 7
      %v6924 = vsub.s32 1, %v6923
      %v6925 = vrot.slane %v6916, %v6924
      %v6928 = vmul.f32 %v6845, %v6921
      %v6929 = vmul.f32 %v6846, %v6925
      %v6930 = vadd.f32 %v6824, %v6928
      %v6931 = vadd.f32 %v6825, %v6929
      %s6932 = scalar_lea.vmem %s7, 311
      %v6933 = vld [vmem:[%s6932] ss:$8 sm:$0x3]
      %v6935 = vlaneseq
      %v6936 = vshrl.u32 %v6935, 7
      %v6937 = vsub.s32 0, %v6936
      %v6938 = vrot.slane %v6933, %v6937
      %v6939 = vlaneseq
      %v6940 = vshrl.u32 %v6939, 7
      %v6941 = vsub.s32 1, %v6940
      %v6942 = vrot.slane %v6933, %v6941
      %v6945 = vmul.f32 %v6845, %v6938
      %v6946 = vmul.f32 %v6846, %v6942
      %v6947 = vadd.f32 %v6841, %v6945
      %v6948 = vadd.f32 %v6842, %v6946
      %v6949 = vld [vmem:[#allocation5 + $0x190] sm:$0xff]
      %v6950 = vld [vmem:[#allocation5 + $0x198] sm:$0xff]
      %v6951 = vmax.f32 %v6843, %v6949
      %v6952 = vmax.f32 %v6844, %v6950
      %s6953 = scalar_lea.vmem %s7, 49
      %v6954 = vld [vmem:[%s6953] ss:$8 sm:$0x3]
      %v6956 = vlaneseq
      %v6957 = vshrl.u32 %v6956, 7
      %v6958 = vsub.s32 0, %v6957
      %v6959 = vrot.slane %v6954, %v6958
      %v6960 = vlaneseq
      %v6961 = vshrl.u32 %v6960, 7
      %v6962 = vsub.s32 1, %v6961
      %v6963 = vrot.slane %v6954, %v6962
      %v6966 = vmul.f32 %v6951, %v6959
      %v6967 = vmul.f32 %v6952, %v6963
      %v6968 = vadd.f32 %v6862, %v6966
      %v6969 = vadd.f32 %v6863, %v6967
      %s6970 = scalar_lea.vmem %s7, 100
      %v6971 = vld [vmem:[%s6970] ss:$8 sm:$0x3]
      %v6973 = vlaneseq
      %v6974 = vshrl.u32 %v6973, 7
      %v6975 = vsub.s32 0, %v6974
      %v6976 = vrot.slane %v6971, %v6975
      %v6977 = vlaneseq
      %v6978 = vshrl.u32 %v6977, 7
      %v6979 = vsub.s32 1, %v6978
      %v6980 = vrot.slane %v6971, %v6979
      %v6983 = vmul.f32 %v6951, %v6976
      %v6984 = vmul.f32 %v6952, %v6980
      %v6985 = vadd.f32 %v6879, %v6983
      %v6986 = vadd.f32 %v6880, %v6984
      %s6987 = scalar_lea.vmem %s7, 151
      %v6988 = vld [vmem:[%s6987] ss:$8 sm:$0x3]
      %v6990 = vlaneseq
      %v6991 = vshrl.u32 %v6990, 7
      %v6992 = vsub.s32 0, %v6991
      %v6993 = vrot.slane %v6988, %v6992
      %v6994 = vlaneseq
      %v6995 = vshrl.u32 %v6994, 7
      %v6996 = vsub.s32 1, %v6995
      %v6997 = vrot.slane %v6988, %v6996
      %v7000 = vmul.f32 %v6951, %v6993
      %v7001 = vmul.f32 %v6952, %v6997
      %v7002 = vadd.f32 %v6896, %v7000
      %v7003 = vadd.f32 %v6897, %v7001
      %s7004 = scalar_lea.vmem %s7, 210
      %v7005 = vld [vmem:[%s7004] ss:$8 sm:$0x3]
      %v7007 = vlaneseq
      %v7008 = vshrl.u32 %v7007, 7
      %v7009 = vsub.s32 0, %v7008
      %v7010 = vrot.slane %v7005, %v7009
      %v7011 = vlaneseq
      %v7012 = vshrl.u32 %v7011, 7
      %v7013 = vsub.s32 1, %v7012
      %v7014 = vrot.slane %v7005, %v7013
      %v7017 = vmul.f32 %v6951, %v7010
      %v7018 = vmul.f32 %v6952, %v7014
      %v7019 = vadd.f32 %v6913, %v7017
      %v7020 = vadd.f32 %v6914, %v7018
      %s7021 = scalar_lea.vmem %s7, 261
      %v7022 = vld [vmem:[%s7021] ss:$8 sm:$0x3]
      %v7024 = vlaneseq
      %v7025 = vshrl.u32 %v7024, 7
      %v7026 = vsub.s32 0, %v7025
      %v7027 = vrot.slane %v7022, %v7026
      %v7028 = vlaneseq
      %v7029 = vshrl.u32 %v7028, 7
      %v7030 = vsub.s32 1, %v7029
      %v7031 = vrot.slane %v7022, %v7030
      %v7034 = vmul.f32 %v6951, %v7027
      %v7035 = vmul.f32 %v6952, %v7031
      %v7036 = vadd.f32 %v6930, %v7034
      %v7037 = vadd.f32 %v6931, %v7035
      %s7038 = scalar_lea.vmem %s7, 320
      %v7039 = vld [vmem:[%s7038] ss:$8 sm:$0x3]
      %v7041 = vlaneseq
      %v7042 = vshrl.u32 %v7041, 7
      %v7043 = vsub.s32 0, %v7042
      %v7044 = vrot.slane %v7039, %v7043
      %v7045 = vlaneseq
      %v7046 = vshrl.u32 %v7045, 7
      %v7047 = vsub.s32 1, %v7046
      %v7048 = vrot.slane %v7039, %v7047
      %v7051 = vmul.f32 %v6951, %v7044
      %v7052 = vmul.f32 %v6952, %v7048
      %v7053 = vadd.f32 %v6947, %v7051
      %v7054 = vadd.f32 %v6948, %v7052
      %s7055 = scalar_lea.vmem %s7, 50
      %v7056 = vld [vmem:[%s7055] ss:$8 sm:$0x3]
      %v7058 = vlaneseq
      %v7059 = vshrl.u32 %v7058, 7
      %v7060 = vsub.s32 0, %v7059
      %v7061 = vrot.slane %v7056, %v7060
      %v7062 = vlaneseq
      %v7063 = vshrl.u32 %v7062, 7
      %v7064 = vsub.s32 1, %v7063
      %v7065 = vrot.slane %v7056, %v7064
      %v7068 = vmul.f32 %v6949, %v7061
      %v7069 = vmul.f32 %v6950, %v7065
      %v7070 = vadd.f32 %v6968, %v7068
      %v7071 = vadd.f32 %v6969, %v7069
      %s7072 = scalar_lea.vmem %s7, 101
      %v7073 = vld [vmem:[%s7072] ss:$8 sm:$0x3]
      %v7075 = vlaneseq
      %v7076 = vshrl.u32 %v7075, 7
      %v7077 = vsub.s32 0, %v7076
      %v7078 = vrot.slane %v7073, %v7077
      %v7079 = vlaneseq
      %v7080 = vshrl.u32 %v7079, 7
      %v7081 = vsub.s32 1, %v7080
      %v7082 = vrot.slane %v7073, %v7081
      %v7085 = vmul.f32 %v6949, %v7078
      %v7086 = vmul.f32 %v6950, %v7082
      %v7087 = vadd.f32 %v6985, %v7085
      %v7088 = vadd.f32 %v6986, %v7086
      %s7089 = scalar_lea.vmem %s7, 160
      %v7090 = vld [vmem:[%s7089] ss:$8 sm:$0x3]
      %v7092 = vlaneseq
      %v7093 = vshrl.u32 %v7092, 7
      %v7094 = vsub.s32 0, %v7093
      %v7095 = vrot.slane %v7090, %v7094
      %v7096 = vlaneseq
      %v7097 = vshrl.u32 %v7096, 7
      %v7098 = vsub.s32 1, %v7097
      %v7099 = vrot.slane %v7090, %v7098
      %v7102 = vmul.f32 %v6949, %v7095
      %v7103 = vmul.f32 %v6950, %v7099
      %v7104 = vadd.f32 %v7002, %v7102
      %v7105 = vadd.f32 %v7003, %v7103
      %s7106 = scalar_lea.vmem %s7, 211
      %v7107 = vld [vmem:[%s7106] ss:$8 sm:$0x3]
      %v7109 = vlaneseq
      %v7110 = vshrl.u32 %v7109, 7
      %v7111 = vsub.s32 0, %v7110
      %v7112 = vrot.slane %v7107, %v7111
      %v7113 = vlaneseq
      %v7114 = vshrl.u32 %v7113, 7
      %v7115 = vsub.s32 1, %v7114
      %v7116 = vrot.slane %v7107, %v7115
      %v7119 = vmul.f32 %v6949, %v7112
      %v7120 = vmul.f32 %v6950, %v7116
      %v7121 = vadd.f32 %v7019, %v7119
      %v7122 = vadd.f32 %v7020, %v7120
      %s7123 = scalar_lea.vmem %s7, 262
      %v7124 = vld [vmem:[%s7123] ss:$8 sm:$0x3]
      %v7126 = vlaneseq
      %v7127 = vshrl.u32 %v7126, 7
      %v7128 = vsub.s32 0, %v7127
      %v7129 = vrot.slane %v7124, %v7128
      %v7130 = vlaneseq
      %v7131 = vshrl.u32 %v7130, 7
      %v7132 = vsub.s32 1, %v7131
      %v7133 = vrot.slane %v7124, %v7132
      %v7136 = vmul.f32 %v6949, %v7129
      %v7137 = vmul.f32 %v6950, %v7133
      %v7138 = vadd.f32 %v7036, %v7136
      %v7139 = vadd.f32 %v7037, %v7137
      %s7140 = scalar_lea.vmem %s7, 321
      %v7141 = vld [vmem:[%s7140] ss:$8 sm:$0x3]
      %v7143 = vlaneseq
      %v7144 = vshrl.u32 %v7143, 7
      %v7145 = vsub.s32 0, %v7144
      %v7146 = vrot.slane %v7141, %v7145
      %v7147 = vlaneseq
      %v7148 = vshrl.u32 %v7147, 7
      %v7149 = vsub.s32 1, %v7148
      %v7150 = vrot.slane %v7141, %v7149
      %v7153 = vmul.f32 %v6949, %v7146
      %v7154 = vmul.f32 %v6950, %v7150
      %v7155 = vadd.f32 %v7053, %v7153
      %v7156 = vadd.f32 %v7054, %v7154
      %v7157 = vlaneseq
      %v7158 = vand.u32 %v7157, 127
      %v7159 = vadd.f32 %v7070, %v7071
      %7160 = vadd.xlane.f32.xlu0 %v7159
      %v7161 = vpop.xlane.xlu0 %7160
      %vm7162 = vcmp.eq.s32.totalorder %v7158, 0
      %v7163 = vsel %vm7162, %v7161, 0.0
      %v7164 = vadd.f32 %v7087, %v7088
      %7165 = vadd.xlane.f32.xlu0 %v7164
      %v7166 = vpop.xlane.xlu0 %7165
      %vm7167 = vcmp.eq.s32.totalorder %v7158, 1
      %v7168 = vsel %vm7167, %v7166, %v7163
      %v7169 = vadd.f32 %v7104, %v7105
      %7170 = vadd.xlane.f32.xlu0 %v7169
      %v7171 = vpop.xlane.xlu0 %7170
      %vm7172 = vcmp.eq.s32.totalorder %v7158, 2
      %v7173 = vsel %vm7172, %v7171, %v7168
      %v7174 = vadd.f32 %v7121, %v7122
      %7175 = vadd.xlane.f32.xlu0 %v7174
      %v7176 = vpop.xlane.xlu0 %7175
      %vm7177 = vcmp.eq.s32.totalorder %v7158, 3
      %v7178 = vsel %vm7177, %v7176, %v7173
      %v7179 = vadd.f32 %v7138, %v7139
      %7180 = vadd.xlane.f32.xlu0 %v7179
      %v7181 = vpop.xlane.xlu0 %7180
      %vm7182 = vcmp.eq.s32.totalorder %v7158, 4
      %v7183 = vsel %vm7182, %v7181, %v7178
      %v7184 = vadd.f32 %v7155, %v7156
      %7185 = vadd.xlane.f32.xlu0 %v7184
      %v7186 = vpop.xlane.xlu0 %7185
      %vm7187 = vcmp.eq.s32.totalorder %v7158, 5
      %v7188 = vsel %vm7187, %v7186, %v7183
      %v7189 = vld [vmem:[%s8] sm:$0x1]
      %v7191 = vlaneseq
      %v7192 = vshrl.u32 %v7191, 7
      %v7193 = vsub.s32 0, %v7192
      %v7194 = vrot.slane %v7189, %v7193
      %v7196 = vadd.f32 %v7188, %v7194
      %7197 = vst [vmem:[%s332] sm:$0xff] %v7196
      %p7198 = scmp.lt.s32.totalorder %s20, 1
      %s7199 = scalar_select %p7198, %s20, 1
      %s7200 = smul.addr %s7199, 8
      %s7201 = scalar_lea.vmem %s9, %s7200
      // Predicated region
      $region57: #{_lambda_.1} parent=55 // pred_check
        %p7202 = pneg %p232
      $region58: #{_lambda_.1} parent=55 // pred_check_branch
        %7204 = sbr.rel (%p7202) target = $region60
      $region59: #{_lambda_.1} parent=55 // pred_region
        _
      $region60: #{_lambda_.1} parent=55 // pred_fallthru
        _
    $region56: #{_lambda_.1} parent=5 // pred_fallthru
      _
    %p7205 = scmp.le.s32.totalorder 2, %s15
    // Predicated region
    $region61: #{_lambda_.1} parent=5 // pred_check
      %p7206 = pneg %p7205
    $region62: #{_lambda_.1} parent=5 // pred_check_branch
      %7208 = sbr.rel (%p7206) target = $region64
    $region63: #{_lambda_.1} parent=5 // pred_region
      %s7209 = ssub.s32 %s15, 2
      // Predicated region
      $region65: #{_lambda_.1} parent=63 // pred_check
        %p7210 = pneg %p238
      $region66: #{_lambda_.1} parent=63 // pred_check_branch
        %7212 = sbr.rel (%p7210) target = $region68
      $region67: #{_lambda_.1} parent=63 // pred_region
        %p7213 = scmp.lt.s32.totalorder %s21, 1
        %s7214 = scalar_select %p7213, %s21, 1
        %s7215 = smul.addr %s7214, 8
        %s7216 = scalar_lea.vmem %s9, %s7215
      $region68: #{_lambda_.1} parent=63 // pred_fallthru
        _
    $region64: #{_lambda_.1} parent=5 // pred_fallthru
      _
  $region6: #{_lambda_.1} parent=0 // loop_footer
    %s19 = sadd.s32 1, %s15
  $region7: #{_lambda_.1} parent=0 // loop_footer_branch
    %14 = sbr.rel target = $region3
  $region8: #{_lambda_.1} parent=0 // loop_exit
    _

</llo_original>
